<compile_context>
chip_gen: v7x
topology: tpu7x:2x2x1
jax: 0.10.0
libtpu: 0.0.40
codegen_flags: <defaults>
</compile_context>

<pallas_src>
import functools

import jax
import jax.numpy as jnp
from jax.experimental import pallas as pl
from jax.experimental.pallas import tpu as pltpu


_PL = 16   # left pad (sublane dim): interior writes land tile-aligned (bf16)
_PR = 16   # right pad: keeps the padded width a multiple of 16


def _ca_kernel(x_ref, w1_ref, b1_ref, w2_ref, b2_ref,
               wd1_ref, bd1_ref, wd2_ref, bd2_ref,
               o_ref, pad_sc, *, H, W, C):
    f32 = jnp.float32
    Bblk = x_ref.shape[0]
    Wp = pad_sc.shape[2]
    M = Bblk * H * W

    x = x_ref[...].astype(f32)                          # (Bblk, H, W, C)

    # --- zero the halo of the padded scratch --------------------------------
    # Scratch is per-core uninitialized and the batch axis is "parallel", so a
    # program_id==0 guard would be unsafe; zero every step (idempotent, tiny --
    # only the halo rows/columns, never the interior).
    zrow = jnp.zeros((Bblk, 1, Wp, C), pad_sc.dtype)
    pad_sc[:, 0:1, :, :] = zrow                         # top halo row    (dy=0)
    pad_sc[:, H + 1:H + 2, :, :] = zrow                 # bottom halo row (dy=2)
    zcol = jnp.zeros((Bblk, H + 2, 2, C), pad_sc.dtype)
    pad_sc[:, :, _PL - 2:_PL, :] = zcol                 # left halo col   (dx=0)
    pad_sc[:, :, _PL + W:_PL + W + 2, :] = zcol         # right halo col  (dx=2)

    def conv3x3(w_ref):
        # Nine (C, C) tap matmuls, bf16 operands, f32 accumulation.  dy slices
        # an untiled leading dim (free); dx slices sublanes; C (lanes) is K.
        acc = None
        for dy in range(3):
            for dx in range(3):
                lhs = pad_sc[:, dy:dy + H, _PL - 1 + dx:_PL - 1 + dx + W, :]
                t = jnp.dot(lhs.reshape(M, C), w_ref[3 * dy + dx],
                            preferred_element_type=f32)
                acc = t if acc is None else acc + t
        return acc                                      # (M, C) f32

    # --- process[0]: conv3x3 + bias + ReLU -----------------------------------
    pad_sc[:, 1:H + 1, _PL:_PL + W, :] = x.astype(pad_sc.dtype)
    y1 = jnp.maximum(conv3x3(w1_ref) + b1_ref[...], 0.0)          # (M, C)

    # --- process[2]: conv3x3 (bias folded into the pooled mean below) --------
    pad_sc[:, 1:H + 1, _PL:_PL + W, :] = (
        y1.reshape(Bblk, H, W, C).astype(pad_sc.dtype))
    y2 = conv3x3(w2_ref)                                           # (M, C)

    # --- AdaptiveAvgPool2d(1) + folded conv2 bias -----------------------------
    ypool = (jnp.sum(y2.reshape(Bblk, H * W, C), axis=1) * (1.0 / (H * W))
             + b2_ref[...])                                        # (Bblk, C)

    # --- conv_du: 1x1 -> ReLU -> 1x1 -> Sigmoid (tiny, kept in f32) -----------
    h = jnp.maximum(jnp.dot(ypool, wd1_ref[...], preferred_element_type=f32)
                    + bd1_ref[...], 0.0)
    logits = jnp.dot(h, wd2_ref[...], preferred_element_type=f32) + bd2_ref[...]
    z = 1.0 / (1.0 + jnp.exp(-logits))                             # (Bblk, C)

    # --- out = z * y_pool + x  (per-(b,c) scalar broadcast over H, W) ---------
    scale = z * ypool                                              # (Bblk, C)
    o_ref[...] = (x + scale[:, None, None, :]).astype(o_ref.dtype)


def _vmem_capacity_bytes():
    try:
        cap = int(pltpu.get_tpu_info().vmem_capacity_bytes)
        if cap > 0:
            return cap
    except Exception:
        pass
    return 64 * 1024 * 1024          # conservative fallback (v7x per-core VMEM)


def _pick_batch_block(B, H, W, C, Cr, vmem_cap):
    """Largest per-step batch block whose VMEM footprint (including the
    single-buffered constants) fits half the chip's VMEM, capped at B//2 so the
    'parallel' grid axis keeps >= 2 steps for v7x's two TensorCores."""
    def rup(v, m):
        return -(-v // m) * m
    lane = rup(C, 128)
    img_f32 = H * rup(W, 8) * lane * 4                  # one (H, W, C) f32 image
    io = 4 * img_f32                                    # in + out, double-buffered
    live = 4 * H * W * lane * 4                         # x / y1 / acc / tap temps
    pad = (H + 2) * rup(_PL + W + _PR, 16) * lane * 2   # bf16 padded scratch
    per_img = io + live + pad
    consts = (2 * 9 * rup(C, 16) * lane * 2             # conv taps (bf16, 1-buf)
              + 4 * rup(max(C, Cr), 8) * lane * 4)      # conv_du weights/biases
    budget = max(int(vmem_cap * 0.5) - consts, per_img)
    bmax = max(1, budget // per_img)
    bmax = min(bmax, 16)                                # diminishing returns
    bmax = min(bmax, max(1, B // 2))                    # keep nB >= 2 (megacore)
    return max(1, int(bmax))


def ca_layer(x_nchw, w1, b1, w2, b2, wd1, bd1, wd2, bd2):
    """x_nchw: (B, C, H, W).  w1/w2: HWIO (3,3,C,C); wd1: (C, Cr); wd2: (Cr, C)."""
    B, C, H, W = x_nchw.shape
    Cr = wd1.shape[1]
    f32, bf16 = jnp.float32, jnp.bfloat16

    vmem_cap = _vmem_capacity_bytes()
    Bblk = _pick_batch_block(B, H, W, C, Cr, vmem_cap)
    nB = -(-B // Bblk)
    Bpad = nB * Bblk

    # NCHW -> channel-minor NHWC; pad batch so it is a multiple of Bblk.
    x = jnp.transpose(x_nchw, (0, 2, 3, 1))
    if Bpad != B:
        x = jnp.concatenate([x, jnp.zeros((Bpad - B, H, W, C), x.dtype)], axis=0)

    # 3x3 taps as 9 (C, C) matrices (bf16 MXU operands); 1x1 chain stays f32.
    w1t = w1.astype(bf16).reshape(9, C, C)
    w2t = w2.astype(bf16).reshape(9, C, C)
    b1v = b1.reshape(1, C).astype(f32)
    b2v = b2.reshape(1, C).astype(f32)
    wd1v = wd1.astype(f32)
    bd1v = bd1.reshape(1, Cr).astype(f32)
    wd2v = wd2.astype(f32)
    bd2v = bd2.reshape(1, C).astype(f32)

    def const_spec(shape):
        # Grid-invariant operand: single VMEM buffer instead of double-buffering.
        imap = (lambda i: (0, 0)) if len(shape) == 2 else (lambda i: (0, 0, 0))
        return pl.BlockSpec(shape, imap, pipeline_mode=pl.Buffered(1))

    kernel = functools.partial(_ca_kernel, H=H, W=W, C=C)

    out = pl.pallas_call(
        kernel,
        out_shape=jax.ShapeDtypeStruct((Bpad, H, W, C), x_nchw.dtype),
        grid_spec=pltpu.PrefetchScalarGridSpec(
            num_scalar_prefetch=0,
            grid=(nB,),
            in_specs=[
                pl.BlockSpec((Bblk, H, W, C), lambda i: (i, 0, 0, 0)),
                const_spec((9, C, C)),      # conv1 taps
                const_spec((1, C)),         # conv1 bias
                const_spec((9, C, C)),      # conv2 taps
                const_spec((1, C)),         # conv2 bias (folded into pooled mean)
                const_spec((C, Cr)),        # conv_du 1x1 #1
                const_spec((1, Cr)),
                const_spec((Cr, C)),        # conv_du 1x1 #2
                const_spec((1, C)),
            ],
            out_specs=pl.BlockSpec((Bblk, H, W, C), lambda i: (i, 0, 0, 0)),
            scratch_shapes=[pltpu.VMEM((Bblk, H + 2, _PL + W + _PR, C), bf16)],
        ),
        compiler_params=pltpu.CompilerParams(
            dimension_semantics=("parallel",),           # megacore split on v7x
            vmem_limit_bytes=int(vmem_cap * 3 // 4)),    # ~96 MiB v5e/v6e, ~48 MiB v7x
    )(x, w1t, b1v, w2t, b2v, wd1v, bd1v, wd2v, bd2v)

    out = out[:B]
    return jnp.transpose(out, (0, 3, 1, 2))              # back to NCHW


def _reference(x, w1, b1, w2, b2, wd1, bd1, wd2, bd2):
    # Pure-JAX NCHW reference mirroring the PyTorch module (note: the module
    # multiplies z by the POOLED y, then adds the residual x).
    dn = ('NCHW', 'HWIO', 'NCHW')
    prec = jax.lax.Precision.HIGHEST
    y = jax.lax.conv_general_dilated(x, w1, (1, 1), 'SAME',
                                     dimension_numbers=dn, precision=prec)
    y = jnp.maximum(y + b1[None, :, None, None], 0.0)
    y = jax.lax.conv_general_dilated(y, w2, (1, 1), 'SAME',
                                     dimension_numbers=dn, precision=prec)
    y = y + b2[None, :, None, None]
    yp = jnp.mean(y, axis=(2, 3), keepdims=True)                  # (B,C,1,1)
    h = jnp.maximum(jnp.einsum('bcxy,cr->brxy', yp, wd1, precision=prec)
                    + bd1[None, :, None, None], 0.0)
    z = jax.nn.sigmoid(jnp.einsum('brxy,rc->bcxy', h, wd2, precision=prec)
                       + bd2[None, :, None, None])
    return z * yp + x


if __name__ == "__main__":
    B, C, H, W = 2, 4, 16, 16
    reduction = 2
    Cr = C // reduction

    key = jax.random.PRNGKey(0)
    ks = jax.random.split(key, 9)
    x = jax.random.normal(ks[0], (B, C, H, W), jnp.float32)

    # Deterministic synthetic parameters (HWIO conv weights / matmul-form 1x1s).
    w1 = 0.1 * jax.random.normal(ks[1], (3, 3, C, C), jnp.float32)
    b1 = 0.05 * jax.random.normal(ks[2], (C,), jnp.float32)
    w2 = 0.1 * jax.random.normal(ks[3], (3, 3, C, C), jnp.float32)
    b2 = 0.05 * jax.random.normal(ks[4], (C,), jnp.float32)
    wd1 = 0.1 * jax.random.normal(ks[5], (C, Cr), jnp.float32)
    bd1 = 0.05 * jax.random.normal(ks[6], (Cr,), jnp.float32)
    wd2 = 0.1 * jax.random.normal(ks[7], (Cr, C), jnp.float32)
    bd2 = 0.05 * jax.random.normal(ks[8], (C,), jnp.float32)

    out = jax.block_until_ready(ca_layer(x, w1, b1, w2, b2, wd1, bd1, wd2, bd2))

    ref = _reference(x, w1, b1, w2, b2, wd1, bd1, wd2, bd2)
    assert out.shape == ref.shape == (B, C, H, W)
    err = float(jnp.max(jnp.abs(out - ref)))
    if err > 1e-3:
        raise AssertionError(f"mismatch vs reference, max abs err = {err}")

    print("KERNEL_OK")
</pallas_src>

<mosaic_0001>
module attributes {stable_mosaic.version = 11 : i64} {
  func.func @_ca_kernel(%arg0: i32, %arg1: memref<1x16x16x4xf32, #tpu.memory_space<vmem>>, %arg2: memref<9x4x4xbf16, #tpu.memory_space<vmem>>, %arg3: memref<1x4xf32, #tpu.memory_space<vmem>>, %arg4: memref<9x4x4xbf16, #tpu.memory_space<vmem>>, %arg5: memref<1x4xf32, #tpu.memory_space<vmem>>, %arg6: memref<4x2xf32, #tpu.memory_space<vmem>>, %arg7: memref<1x2xf32, #tpu.memory_space<vmem>>, %arg8: memref<2x4xf32, #tpu.memory_space<vmem>>, %arg9: memref<1x4xf32, #tpu.memory_space<vmem>>, %arg10: memref<1x16x16x4xf32, #tpu.memory_space<vmem>>, %arg11: memref<1x18x48x4xbf16, #tpu.memory_space<vmem>>) attributes {dimension_semantics = [#tpu.dimension_semantics<parallel>], iteration_bounds = array<i64: 2>, scalar_prefetch = 0 : i64, scratch_operands = 1 : i64, tpu.core_type = #tpu.core_type<tc>, window_params = [{transform_indices = @transform_0, window_bounds = array<i64: 1, 16, 16, 4>}, {pipeline_mode = #tpu.pipeline_mode<synchronous>, transform_indices = @transform_1, window_bounds = array<i64: 9, 4, 4>}, {pipeline_mode = #tpu.pipeline_mode<synchronous>, transform_indices = @transform_2, window_bounds = array<i64: 1, 4>}, {pipeline_mode = #tpu.pipeline_mode<synchronous>, transform_indices = @transform_3, window_bounds = array<i64: 9, 4, 4>}, {pipeline_mode = #tpu.pipeline_mode<synchronous>, transform_indices = @transform_4, window_bounds = array<i64: 1, 4>}, {pipeline_mode = #tpu.pipeline_mode<synchronous>, transform_indices = @transform_5, window_bounds = array<i64: 4, 2>}, {pipeline_mode = #tpu.pipeline_mode<synchronous>, transform_indices = @transform_6, window_bounds = array<i64: 1, 2>}, {pipeline_mode = #tpu.pipeline_mode<synchronous>, transform_indices = @transform_7, window_bounds = array<i64: 2, 4>}, {pipeline_mode = #tpu.pipeline_mode<synchronous>, transform_indices = @transform_8, window_bounds = array<i64: 1, 4>}, {transform_indices = @transform_9, window_bounds = array<i64: 1, 16, 16, 4>}]} {
    %c0 = arith.constant 0 : index
    %c0_0 = arith.constant 0 : index
    %c0_1 = arith.constant 0 : index
    %c0_2 = arith.constant 0 : index
    %0 = vector.load %arg1[%c0, %c0_0, %c0_1, %c0_2] : memref<1x16x16x4xf32, #tpu.memory_space<vmem>>, vector<1x16x16x4xf32>
    %cst = arith.constant 0.000000e+00 : bf16
    %1 = vector.broadcast %cst : bf16 to vector<1x1x48x4xbf16>
    %c0_3 = arith.constant 0 : index
    %c0_4 = arith.constant 0 : index
    %c0_5 = arith.constant 0 : index
    %c0_6 = arith.constant 0 : index
    %2 = vector.load %arg11[%c0_3, %c0_4, %c0_5, %c0_6] : memref<1x18x48x4xbf16, #tpu.memory_space<vmem>>, vector<1x1x48x4xbf16>
    tpu.vector_store %arg11[%c0_3, %c0_4, %c0_5, %c0_6], %1 {strides = array<i32>} : memref<1x18x48x4xbf16, #tpu.memory_space<vmem>>, vector<1x1x48x4xbf16>,
    %c0_7 = arith.constant 0 : index
    %c17 = arith.constant 17 : index
    %c0_8 = arith.constant 0 : index
    %c0_9 = arith.constant 0 : index
    %3 = vector.load %arg11[%c0_7, %c17, %c0_8, %c0_9] : memref<1x18x48x4xbf16, #tpu.memory_space<vmem>>, vector<1x1x48x4xbf16>
    tpu.vector_store %arg11[%c0_7, %c17, %c0_8, %c0_9], %1 {strides = array<i32>} : memref<1x18x48x4xbf16, #tpu.memory_space<vmem>>, vector<1x1x48x4xbf16>,
    %cst_10 = arith.constant 0.000000e+00 : bf16
    %4 = vector.broadcast %cst_10 : bf16 to vector<1x18x2x4xbf16>
    %c0_11 = arith.constant 0 : index
    %c0_12 = arith.constant 0 : index
    %c14 = arith.constant 14 : index
    %c0_13 = arith.constant 0 : index
    %5 = vector.load %arg11[%c0_11, %c0_12, %c14, %c0_13] : memref<1x18x48x4xbf16, #tpu.memory_space<vmem>>, vector<1x18x2x4xbf16>
    tpu.vector_store %arg11[%c0_11, %c0_12, %c14, %c0_13], %4 {strides = array<i32>} : memref<1x18x48x4xbf16, #tpu.memory_space<vmem>>, vector<1x18x2x4xbf16>,
    %c0_14 = arith.constant 0 : index
    %c0_15 = arith.constant 0 : index
    %c32 = arith.constant 32 : index
    %c0_16 = arith.constant 0 : index
    %6 = vector.load %arg11[%c0_14, %c0_15, %c32, %c0_16] : memref<1x18x48x4xbf16, #tpu.memory_space<vmem>>, vector<1x18x2x4xbf16>
    tpu.vector_store %arg11[%c0_14, %c0_15, %c32, %c0_16], %4 {strides = array<i32>} : memref<1x18x48x4xbf16, #tpu.memory_space<vmem>>, vector<1x18x2x4xbf16>,
    %7 = arith.truncf %0 : vector<1x16x16x4xf32> to vector<1x16x16x4xbf16>
    %c0_17 = arith.constant 0 : index
    %c1 = arith.constant 1 : index
    %c16 = arith.constant 16 : index
    %c0_18 = arith.constant 0 : index
    %8 = vector.load %arg11[%c0_17, %c1, %c16, %c0_18] : memref<1x18x48x4xbf16, #tpu.memory_space<vmem>>, vector<1x16x16x4xbf16>
    tpu.vector_store %arg11[%c0_17, %c1, %c16, %c0_18], %7 {strides = array<i32>} : memref<1x18x48x4xbf16, #tpu.memory_space<vmem>>, vector<1x16x16x4xbf16>,
    %c0_19 = arith.constant 0 : index
    %c0_20 = arith.constant 0 : index
    %c15 = arith.constant 15 : index
    %c0_21 = arith.constant 0 : index
    %9 = vector.load %arg11[%c0_19, %c0_20, %c15, %c0_21] : memref<1x18x48x4xbf16, #tpu.memory_space<vmem>>, vector<1x16x16x4xbf16>
    %10 = vector.shape_cast %9 : vector<1x16x16x4xbf16> to vector<256x4xbf16>
    %c0_22 = arith.constant 0 : index
    %c0_23 = arith.constant 0 : index
    %c0_24 = arith.constant 0 : index
    %11 = vector.load %arg2[%c0_22, %c0_23, %c0_24] : memref<9x4x4xbf16, #tpu.memory_space<vmem>>, vector<1x4x4xbf16>
    %12 = vector.shape_cast %11 : vector<1x4x4xbf16> to vector<4x4xbf16>
    %cst_25 = arith.constant dense<0.000000e+00> : vector<256x4xf32>
    %13 = tpu.matmul %10, %12, %cst_25 {dimension_numbers = #tpu.dot_dimension_numbers<[1], [0], [0], [1], [0, 0, 1, 1], [], []>} : vector<256x4xbf16>, vector<4x4xbf16>, vector<256x4xf32> -> vector<256x4xf32>
    %c0_26 = arith.constant 0 : index
    %c0_27 = arith.constant 0 : index
    %c16_28 = arith.constant 16 : index
    %c0_29 = arith.constant 0 : index
    %14 = vector.load %arg11[%c0_26, %c0_27, %c16_28, %c0_29] : memref<1x18x48x4xbf16, #tpu.memory_space<vmem>>, vector<1x16x16x4xbf16>
    %15 = vector.shape_cast %14 : vector<1x16x16x4xbf16> to vector<256x4xbf16>
    %c1_30 = arith.constant 1 : index
    %c0_31 = arith.constant 0 : index
    %c0_32 = arith.constant 0 : index
    %16 = vector.load %arg2[%c1_30, %c0_31, %c0_32] : memref<9x4x4xbf16, #tpu.memory_space<vmem>>, vector<1x4x4xbf16>
    %17 = vector.shape_cast %16 : vector<1x4x4xbf16> to vector<4x4xbf16>
    %cst_33 = arith.constant dense<0.000000e+00> : vector<256x4xf32>
    %18 = tpu.matmul %15, %17, %cst_33 {dimension_numbers = #tpu.dot_dimension_numbers<[1], [0], [0], [1], [0, 0, 1, 1], [], []>} : vector<256x4xbf16>, vector<4x4xbf16>, vector<256x4xf32> -> vector<256x4xf32>
    %19 = arith.addf %13, %18 : vector<256x4xf32>
    %c0_34 = arith.constant 0 : index
    %c0_35 = arith.constant 0 : index
    %c17_36 = arith.constant 17 : index
    %c0_37 = arith.constant 0 : index
    %20 = vector.load %arg11[%c0_34, %c0_35, %c17_36, %c0_37] : memref<1x18x48x4xbf16, #tpu.memory_space<vmem>>, vector<1x16x16x4xbf16>
    %21 = vector.shape_cast %20 : vector<1x16x16x4xbf16> to vector<256x4xbf16>
    %c2 = arith.constant 2 : index
    %c0_38 = arith.constant 0 : index
    %c0_39 = arith.constant 0 : index
    %22 = vector.load %arg2[%c2, %c0_38, %c0_39] : memref<9x4x4xbf16, #tpu.memory_space<vmem>>, vector<1x4x4xbf16>
    %23 = vector.shape_cast %22 : vector<1x4x4xbf16> to vector<4x4xbf16>
    %cst_40 = arith.constant dense<0.000000e+00> : vector<256x4xf32>
    %24 = tpu.matmul %21, %23, %cst_40 {dimension_numbers = #tpu.dot_dimension_numbers<[1], [0], [0], [1], [0, 0, 1, 1], [], []>} : vector<256x4xbf16>, vector<4x4xbf16>, vector<256x4xf32> -> vector<256x4xf32>
    %25 = arith.addf %19, %24 : vector<256x4xf32>
    %c0_41 = arith.constant 0 : index
    %c1_42 = arith.constant 1 : index
    %c15_43 = arith.constant 15 : index
    %c0_44 = arith.constant 0 : index
    %26 = vector.load %arg11[%c0_41, %c1_42, %c15_43, %c0_44] : memref<1x18x48x4xbf16, #tpu.memory_space<vmem>>, vector<1x16x16x4xbf16>
    %27 = vector.shape_cast %26 : vector<1x16x16x4xbf16> to vector<256x4xbf16>
    %c3 = arith.constant 3 : index
    %c0_45 = arith.constant 0 : index
    %c0_46 = arith.constant 0 : index
    %28 = vector.load %arg2[%c3, %c0_45, %c0_46] : memref<9x4x4xbf16, #tpu.memory_space<vmem>>, vector<1x4x4xbf16>
    %29 = vector.shape_cast %28 : vector<1x4x4xbf16> to vector<4x4xbf16>
    %cst_47 = arith.constant dense<0.000000e+00> : vector<256x4xf32>
    %30 = tpu.matmul %27, %29, %cst_47 {dimension_numbers = #tpu.dot_dimension_numbers<[1], [0], [0], [1], [0, 0, 1, 1], [], []>} : vector<256x4xbf16>, vector<4x4xbf16>, vector<256x4xf32> -> vector<256x4xf32>
    %31 = arith.addf %25, %30 : vector<256x4xf32>
    %c0_48 = arith.constant 0 : index
    %c1_49 = arith.constant 1 : index
    %c16_50 = arith.constant 16 : index
    %c0_51 = arith.constant 0 : index
    %32 = vector.load %arg11[%c0_48, %c1_49, %c16_50, %c0_51] : memref<1x18x48x4xbf16, #tpu.memory_space<vmem>>, vector<1x16x16x4xbf16>
    %33 = vector.shape_cast %32 : vector<1x16x16x4xbf16> to vector<256x4xbf16>
    %c4 = arith.constant 4 : index
    %c0_52 = arith.constant 0 : index
    %c0_53 = arith.constant 0 : index
    %34 = vector.load %arg2[%c4, %c0_52, %c0_53] : memref<9x4x4xbf16, #tpu.memory_space<vmem>>, vector<1x4x4xbf16>
    %35 = vector.shape_cast %34 : vector<1x4x4xbf16> to vector<4x4xbf16>
    %cst_54 = arith.constant dense<0.000000e+00> : vector<256x4xf32>
    %36 = tpu.matmul %33, %35, %cst_54 {dimension_numbers = #tpu.dot_dimension_numbers<[1], [0], [0], [1], [0, 0, 1, 1], [], []>} : vector<256x4xbf16>, vector<4x4xbf16>, vector<256x4xf32> -> vector<256x4xf32>
    %37 = arith.addf %31, %36 : vector<256x4xf32>
    %c0_55 = arith.constant 0 : index
    %c1_56 = arith.constant 1 : index
    %c17_57 = arith.constant 17 : index
    %c0_58 = arith.constant 0 : index
    %38 = vector.load %arg11[%c0_55, %c1_56, %c17_57, %c0_58] : memref<1x18x48x4xbf16, #tpu.memory_space<vmem>>, vector<1x16x16x4xbf16>
    %39 = vector.shape_cast %38 : vector<1x16x16x4xbf16> to vector<256x4xbf16>
    %c5 = arith.constant 5 : index
    %c0_59 = arith.constant 0 : index
    %c0_60 = arith.constant 0 : index
    %40 = vector.load %arg2[%c5, %c0_59, %c0_60] : memref<9x4x4xbf16, #tpu.memory_space<vmem>>, vector<1x4x4xbf16>
    %41 = vector.shape_cast %40 : vector<1x4x4xbf16> to vector<4x4xbf16>
    %cst_61 = arith.constant dense<0.000000e+00> : vector<256x4xf32>
    %42 = tpu.matmul %39, %41, %cst_61 {dimension_numbers = #tpu.dot_dimension_numbers<[1], [0], [0], [1], [0, 0, 1, 1], [], []>} : vector<256x4xbf16>, vector<4x4xbf16>, vector<256x4xf32> -> vector<256x4xf32>
    %43 = arith.addf %37, %42 : vector<256x4xf32>
    %c0_62 = arith.constant 0 : index
    %c2_63 = arith.constant 2 : index
    %c15_64 = arith.constant 15 : index
    %c0_65 = arith.constant 0 : index
    %44 = vector.load %arg11[%c0_62, %c2_63, %c15_64, %c0_65] : memref<1x18x48x4xbf16, #tpu.memory_space<vmem>>, vector<1x16x16x4xbf16>
    %45 = vector.shape_cast %44 : vector<1x16x16x4xbf16> to vector<256x4xbf16>
    %c6 = arith.constant 6 : index
    %c0_66 = arith.constant 0 : index
    %c0_67 = arith.constant 0 : index
    %46 = vector.load %arg2[%c6, %c0_66, %c0_67] : memref<9x4x4xbf16, #tpu.memory_space<vmem>>, vector<1x4x4xbf16>
    %47 = vector.shape_cast %46 : vector<1x4x4xbf16> to vector<4x4xbf16>
    %cst_68 = arith.constant dense<0.000000e+00> : vector<256x4xf32>
    %48 = tpu.matmul %45, %47, %cst_68 {dimension_numbers = #tpu.dot_dimension_numbers<[1], [0], [0], [1], [0, 0, 1, 1], [], []>} : vector<256x4xbf16>, vector<4x4xbf16>, vector<256x4xf32> -> vector<256x4xf32>
    %49 = arith.addf %43, %48 : vector<256x4xf32>
    %c0_69 = arith.constant 0 : index
    %c2_70 = arith.constant 2 : index
    %c16_71 = arith.constant 16 : index
    %c0_72 = arith.constant 0 : index
    %50 = vector.load %arg11[%c0_69, %c2_70, %c16_71, %c0_72] : memref<1x18x48x4xbf16, #tpu.memory_space<vmem>>, vector<1x16x16x4xbf16>
    %51 = vector.shape_cast %50 : vector<1x16x16x4xbf16> to vector<256x4xbf16>
    %c7 = arith.constant 7 : index
    %c0_73 = arith.constant 0 : index
    %c0_74 = arith.constant 0 : index
    %52 = vector.load %arg2[%c7, %c0_73, %c0_74] : memref<9x4x4xbf16, #tpu.memory_space<vmem>>, vector<1x4x4xbf16>
    %53 = vector.shape_cast %52 : vector<1x4x4xbf16> to vector<4x4xbf16>
    %cst_75 = arith.constant dense<0.000000e+00> : vector<256x4xf32>
    %54 = tpu.matmul %51, %53, %cst_75 {dimension_numbers = #tpu.dot_dimension_numbers<[1], [0], [0], [1], [0, 0, 1, 1], [], []>} : vector<256x4xbf16>, vector<4x4xbf16>, vector<256x4xf32> -> vector<256x4xf32>
    %55 = arith.addf %49, %54 : vector<256x4xf32>
    %c0_76 = arith.constant 0 : index
    %c2_77 = arith.constant 2 : index
    %c17_78 = arith.constant 17 : index
    %c0_79 = arith.constant 0 : index
    %56 = vector.load %arg11[%c0_76, %c2_77, %c17_78, %c0_79] : memref<1x18x48x4xbf16, #tpu.memory_space<vmem>>, vector<1x16x16x4xbf16>
    %57 = vector.shape_cast %56 : vector<1x16x16x4xbf16> to vector<256x4xbf16>
    %c8 = arith.constant 8 : index
    %c0_80 = arith.constant 0 : index
    %c0_81 = arith.constant 0 : index
    %58 = vector.load %arg2[%c8, %c0_80, %c0_81] : memref<9x4x4xbf16, #tpu.memory_space<vmem>>, vector<1x4x4xbf16>
    %59 = vector.shape_cast %58 : vector<1x4x4xbf16> to vector<4x4xbf16>
    %cst_82 = arith.constant dense<0.000000e+00> : vector<256x4xf32>
    %60 = tpu.matmul %57, %59, %cst_82 {dimension_numbers = #tpu.dot_dimension_numbers<[1], [0], [0], [1], [0, 0, 1, 1], [], []>} : vector<256x4xbf16>, vector<4x4xbf16>, vector<256x4xf32> -> vector<256x4xf32>
    %61 = arith.addf %55, %60 : vector<256x4xf32>
    %c0_83 = arith.constant 0 : index
    %c0_84 = arith.constant 0 : index
    %62 = vector.load %arg3[%c0_83, %c0_84] : memref<1x4xf32, #tpu.memory_space<vmem>>, vector<1x4xf32>
    %63 = vector.broadcast %62 : vector<1x4xf32> to vector<256x4xf32>
    %64 = arith.addf %61, %63 : vector<256x4xf32>
    %cst_85 = arith.constant 0.000000e+00 : f32
    %65 = vector.broadcast %cst_85 : f32 to vector<256x4xf32>
    %66 = arith.maximumf %64, %65 : vector<256x4xf32>
    %67 = vector.shape_cast %66 : vector<256x4xf32> to vector<1x16x16x4xf32>
    %68 = arith.truncf %67 : vector<1x16x16x4xf32> to vector<1x16x16x4xbf16>
    %c0_86 = arith.constant 0 : index
    %c1_87 = arith.constant 1 : index
    %c16_88 = arith.constant 16 : index
    %c0_89 = arith.constant 0 : index
    %69 = vector.load %arg11[%c0_86, %c1_87, %c16_88, %c0_89] : memref<1x18x48x4xbf16, #tpu.memory_space<vmem>>, vector<1x16x16x4xbf16>
    tpu.vector_store %arg11[%c0_86, %c1_87, %c16_88, %c0_89], %68 {strides = array<i32>} : memref<1x18x48x4xbf16, #tpu.memory_space<vmem>>, vector<1x16x16x4xbf16>,
    %c0_90 = arith.constant 0 : index
    %c0_91 = arith.constant 0 : index
    %c15_92 = arith.constant 15 : index
    %c0_93 = arith.constant 0 : index
    %70 = vector.load %arg11[%c0_90, %c0_91, %c15_92, %c0_93] : memref<1x18x48x4xbf16, #tpu.memory_space<vmem>>, vector<1x16x16x4xbf16>
    %71 = vector.shape_cast %70 : vector<1x16x16x4xbf16> to vector<256x4xbf16>
    %c0_94 = arith.constant 0 : index
    %c0_95 = arith.constant 0 : index
    %c0_96 = arith.constant 0 : index
    %72 = vector.load %arg4[%c0_94, %c0_95, %c0_96] : memref<9x4x4xbf16, #tpu.memory_space<vmem>>, vector<1x4x4xbf16>
    %73 = vector.shape_cast %72 : vector<1x4x4xbf16> to vector<4x4xbf16>
    %cst_97 = arith.constant dense<0.000000e+00> : vector<256x4xf32>
    %74 = tpu.matmul %71, %73, %cst_97 {dimension_numbers = #tpu.dot_dimension_numbers<[1], [0], [0], [1], [0, 0, 1, 1], [], []>} : vector<256x4xbf16>, vector<4x4xbf16>, vector<256x4xf32> -> vector<256x4xf32>
    %c0_98 = arith.constant 0 : index
    %c0_99 = arith.constant 0 : index
    %c16_100 = arith.constant 16 : index
    %c0_101 = arith.constant 0 : index
    %75 = vector.load %arg11[%c0_98, %c0_99, %c16_100, %c0_101] : memref<1x18x48x4xbf16, #tpu.memory_space<vmem>>, vector<1x16x16x4xbf16>
    %76 = vector.shape_cast %75 : vector<1x16x16x4xbf16> to vector<256x4xbf16>
    %c1_102 = arith.constant 1 : index
    %c0_103 = arith.constant 0 : index
    %c0_104 = arith.constant 0 : index
    %77 = vector.load %arg4[%c1_102, %c0_103, %c0_104] : memref<9x4x4xbf16, #tpu.memory_space<vmem>>, vector<1x4x4xbf16>
    %78 = vector.shape_cast %77 : vector<1x4x4xbf16> to vector<4x4xbf16>
    %cst_105 = arith.constant dense<0.000000e+00> : vector<256x4xf32>
    %79 = tpu.matmul %76, %78, %cst_105 {dimension_numbers = #tpu.dot_dimension_numbers<[1], [0], [0], [1], [0, 0, 1, 1], [], []>} : vector<256x4xbf16>, vector<4x4xbf16>, vector<256x4xf32> -> vector<256x4xf32>
    %80 = arith.addf %74, %79 : vector<256x4xf32>
    %c0_106 = arith.constant 0 : index
    %c0_107 = arith.constant 0 : index
    %c17_108 = arith.constant 17 : index
    %c0_109 = arith.constant 0 : index
    %81 = vector.load %arg11[%c0_106, %c0_107, %c17_108, %c0_109] : memref<1x18x48x4xbf16, #tpu.memory_space<vmem>>, vector<1x16x16x4xbf16>
    %82 = vector.shape_cast %81 : vector<1x16x16x4xbf16> to vector<256x4xbf16>
    %c2_110 = arith.constant 2 : index
    %c0_111 = arith.constant 0 : index
    %c0_112 = arith.constant 0 : index
    %83 = vector.load %arg4[%c2_110, %c0_111, %c0_112] : memref<9x4x4xbf16, #tpu.memory_space<vmem>>, vector<1x4x4xbf16>
    %84 = vector.shape_cast %83 : vector<1x4x4xbf16> to vector<4x4xbf16>
    %cst_113 = arith.constant dense<0.000000e+00> : vector<256x4xf32>
    %85 = tpu.matmul %82, %84, %cst_113 {dimension_numbers = #tpu.dot_dimension_numbers<[1], [0], [0], [1], [0, 0, 1, 1], [], []>} : vector<256x4xbf16>, vector<4x4xbf16>, vector<256x4xf32> -> vector<256x4xf32>
    %86 = arith.addf %80, %85 : vector<256x4xf32>
    %c0_114 = arith.constant 0 : index
    %c1_115 = arith.constant 1 : index
    %c15_116 = arith.constant 15 : index
    %c0_117 = arith.constant 0 : index
    %87 = vector.load %arg11[%c0_114, %c1_115, %c15_116, %c0_117] : memref<1x18x48x4xbf16, #tpu.memory_space<vmem>>, vector<1x16x16x4xbf16>
    %88 = vector.shape_cast %87 : vector<1x16x16x4xbf16> to vector<256x4xbf16>
    %c3_118 = arith.constant 3 : index
    %c0_119 = arith.constant 0 : index
    %c0_120 = arith.constant 0 : index
    %89 = vector.load %arg4[%c3_118, %c0_119, %c0_120] : memref<9x4x4xbf16, #tpu.memory_space<vmem>>, vector<1x4x4xbf16>
    %90 = vector.shape_cast %89 : vector<1x4x4xbf16> to vector<4x4xbf16>
    %cst_121 = arith.constant dense<0.000000e+00> : vector<256x4xf32>
    %91 = tpu.matmul %88, %90, %cst_121 {dimension_numbers = #tpu.dot_dimension_numbers<[1], [0], [0], [1], [0, 0, 1, 1], [], []>} : vector<256x4xbf16>, vector<4x4xbf16>, vector<256x4xf32> -> vector<256x4xf32>
    %92 = arith.addf %86, %91 : vector<256x4xf32>
    %c0_122 = arith.constant 0 : index
    %c1_123 = arith.constant 1 : index
    %c16_124 = arith.constant 16 : index
    %c0_125 = arith.constant 0 : index
    %93 = vector.load %arg11[%c0_122, %c1_123, %c16_124, %c0_125] : memref<1x18x48x4xbf16, #tpu.memory_space<vmem>>, vector<1x16x16x4xbf16>
    %94 = vector.shape_cast %93 : vector<1x16x16x4xbf16> to vector<256x4xbf16>
    %c4_126 = arith.constant 4 : index
    %c0_127 = arith.constant 0 : index
    %c0_128 = arith.constant 0 : index
    %95 = vector.load %arg4[%c4_126, %c0_127, %c0_128] : memref<9x4x4xbf16, #tpu.memory_space<vmem>>, vector<1x4x4xbf16>
    %96 = vector.shape_cast %95 : vector<1x4x4xbf16> to vector<4x4xbf16>
    %cst_129 = arith.constant dense<0.000000e+00> : vector<256x4xf32>
    %97 = tpu.matmul %94, %96, %cst_129 {dimension_numbers = #tpu.dot_dimension_numbers<[1], [0], [0], [1], [0, 0, 1, 1], [], []>} : vector<256x4xbf16>, vector<4x4xbf16>, vector<256x4xf32> -> vector<256x4xf32>
    %98 = arith.addf %92, %97 : vector<256x4xf32>
    %c0_130 = arith.constant 0 : index
    %c1_131 = arith.constant 1 : index
    %c17_132 = arith.constant 17 : index
    %c0_133 = arith.constant 0 : index
    %99 = vector.load %arg11[%c0_130, %c1_131, %c17_132, %c0_133] : memref<1x18x48x4xbf16, #tpu.memory_space<vmem>>, vector<1x16x16x4xbf16>
    %100 = vector.shape_cast %99 : vector<1x16x16x4xbf16> to vector<256x4xbf16>
    %c5_134 = arith.constant 5 : index
    %c0_135 = arith.constant 0 : index
    %c0_136 = arith.constant 0 : index
    %101 = vector.load %arg4[%c5_134, %c0_135, %c0_136] : memref<9x4x4xbf16, #tpu.memory_space<vmem>>, vector<1x4x4xbf16>
    %102 = vector.shape_cast %101 : vector<1x4x4xbf16> to vector<4x4xbf16>
    %cst_137 = arith.constant dense<0.000000e+00> : vector<256x4xf32>
    %103 = tpu.matmul %100, %102, %cst_137 {dimension_numbers = #tpu.dot_dimension_numbers<[1], [0], [0], [1], [0, 0, 1, 1], [], []>} : vector<256x4xbf16>, vector<4x4xbf16>, vector<256x4xf32> -> vector<256x4xf32>
    %104 = arith.addf %98, %103 : vector<256x4xf32>
    %c0_138 = arith.constant 0 : index
    %c2_139 = arith.constant 2 : index
    %c15_140 = arith.constant 15 : index
    %c0_141 = arith.constant 0 : index
    %105 = vector.load %arg11[%c0_138, %c2_139, %c15_140, %c0_141] : memref<1x18x48x4xbf16, #tpu.memory_space<vmem>>, vector<1x16x16x4xbf16>
    %106 = vector.shape_cast %105 : vector<1x16x16x4xbf16> to vector<256x4xbf16>
    %c6_142 = arith.constant 6 : index
    %c0_143 = arith.constant 0 : index
    %c0_144 = arith.constant 0 : index
    %107 = vector.load %arg4[%c6_142, %c0_143, %c0_144] : memref<9x4x4xbf16, #tpu.memory_space<vmem>>, vector<1x4x4xbf16>
    %108 = vector.shape_cast %107 : vector<1x4x4xbf16> to vector<4x4xbf16>
    %cst_145 = arith.constant dense<0.000000e+00> : vector<256x4xf32>
    %109 = tpu.matmul %106, %108, %cst_145 {dimension_numbers = #tpu.dot_dimension_numbers<[1], [0], [0], [1], [0, 0, 1, 1], [], []>} : vector<256x4xbf16>, vector<4x4xbf16>, vector<256x4xf32> -> vector<256x4xf32>
    %110 = arith.addf %104, %109 : vector<256x4xf32>
    %c0_146 = arith.constant 0 : index
    %c2_147 = arith.constant 2 : index
    %c16_148 = arith.constant 16 : index
    %c0_149 = arith.constant 0 : index
    %111 = vector.load %arg11[%c0_146, %c2_147, %c16_148, %c0_149] : memref<1x18x48x4xbf16, #tpu.memory_space<vmem>>, vector<1x16x16x4xbf16>
    %112 = vector.shape_cast %111 : vector<1x16x16x4xbf16> to vector<256x4xbf16>
    %c7_150 = arith.constant 7 : index
    %c0_151 = arith.constant 0 : index
    %c0_152 = arith.constant 0 : index
    %113 = vector.load %arg4[%c7_150, %c0_151, %c0_152] : memref<9x4x4xbf16, #tpu.memory_space<vmem>>, vector<1x4x4xbf16>
    %114 = vector.shape_cast %113 : vector<1x4x4xbf16> to vector<4x4xbf16>
    %cst_153 = arith.constant dense<0.000000e+00> : vector<256x4xf32>
    %115 = tpu.matmul %112, %114, %cst_153 {dimension_numbers = #tpu.dot_dimension_numbers<[1], [0], [0], [1], [0, 0, 1, 1], [], []>} : vector<256x4xbf16>, vector<4x4xbf16>, vector<256x4xf32> -> vector<256x4xf32>
    %116 = arith.addf %110, %115 : vector<256x4xf32>
    %c0_154 = arith.constant 0 : index
    %c2_155 = arith.constant 2 : index
    %c17_156 = arith.constant 17 : index
    %c0_157 = arith.constant 0 : index
    %117 = vector.load %arg11[%c0_154, %c2_155, %c17_156, %c0_157] : memref<1x18x48x4xbf16, #tpu.memory_space<vmem>>, vector<1x16x16x4xbf16>
    %118 = vector.shape_cast %117 : vector<1x16x16x4xbf16> to vector<256x4xbf16>
    %c8_158 = arith.constant 8 : index
    %c0_159 = arith.constant 0 : index
    %c0_160 = arith.constant 0 : index
    %119 = vector.load %arg4[%c8_158, %c0_159, %c0_160] : memref<9x4x4xbf16, #tpu.memory_space<vmem>>, vector<1x4x4xbf16>
    %120 = vector.shape_cast %119 : vector<1x4x4xbf16> to vector<4x4xbf16>
    %cst_161 = arith.constant dense<0.000000e+00> : vector<256x4xf32>
    %121 = tpu.matmul %118, %120, %cst_161 {dimension_numbers = #tpu.dot_dimension_numbers<[1], [0], [0], [1], [0, 0, 1, 1], [], []>} : vector<256x4xbf16>, vector<4x4xbf16>, vector<256x4xf32> -> vector<256x4xf32>
    %122 = arith.addf %116, %121 : vector<256x4xf32>
    %123 = vector.shape_cast %122 : vector<256x4xf32> to vector<1x256x4xf32>
    %cst_162 = arith.constant dense<0.000000e+00> : vector<1x4xf32>
    %124 = vector.multi_reduction <add>, %123, %cst_162 [1] : vector<1x256x4xf32> to vector<1x4xf32>
    %cst_163 = arith.constant 3.906250e-03 : f32
    %125 = vector.broadcast %cst_163 : f32 to vector<1x4xf32>
    %126 = arith.mulf %124, %125 : vector<1x4xf32>
    %c0_164 = arith.constant 0 : index
    %c0_165 = arith.constant 0 : index
    %127 = vector.load %arg5[%c0_164, %c0_165] : memref<1x4xf32, #tpu.memory_space<vmem>>, vector<1x4xf32>
    %128 = arith.addf %126, %127 : vector<1x4xf32>
    %c0_166 = arith.constant 0 : index
    %c0_167 = arith.constant 0 : index
    %129 = vector.load %arg6[%c0_166, %c0_167] : memref<4x2xf32, #tpu.memory_space<vmem>>, vector<4x2xf32>
    %cst_168 = arith.constant dense<0.000000e+00> : vector<1x2xf32>
    %130 = tpu.matmul %128, %129, %cst_168 {dimension_numbers = #tpu.dot_dimension_numbers<[1], [0], [0], [1], [0, 0, 1, 1], [], []>} : vector<1x4xf32>, vector<4x2xf32>, vector<1x2xf32> -> vector<1x2xf32>
    %c0_169 = arith.constant 0 : index
    %c0_170 = arith.constant 0 : index
    %131 = vector.load %arg7[%c0_169, %c0_170] : memref<1x2xf32, #tpu.memory_space<vmem>>, vector<1x2xf32>
    %132 = arith.addf %130, %131 : vector<1x2xf32>
    %cst_171 = arith.constant 0.000000e+00 : f32
    %133 = vector.broadcast %cst_171 : f32 to vector<1x2xf32>
    %134 = arith.maximumf %132, %133 : vector<1x2xf32>
    %c0_172 = arith.constant 0 : index
    %c0_173 = arith.constant 0 : index
    %135 = vector.load %arg8[%c0_172, %c0_173] : memref<2x4xf32, #tpu.memory_space<vmem>>, vector<2x4xf32>
    %cst_174 = arith.constant dense<0.000000e+00> : vector<1x4xf32>
    %136 = tpu.matmul %134, %135, %cst_174 {dimension_numbers = #tpu.dot_dimension_numbers<[1], [0], [0], [1], [0, 0, 1, 1], [], []>} : vector<1x2xf32>, vector<2x4xf32>, vector<1x4xf32> -> vector<1x4xf32>
    %c0_175 = arith.constant 0 : index
    %c0_176 = arith.constant 0 : index
    %137 = vector.load %arg9[%c0_175, %c0_176] : memref<1x4xf32, #tpu.memory_space<vmem>>, vector<1x4xf32>
    %138 = arith.addf %136, %137 : vector<1x4xf32>
    %cst_177 = arith.constant 0.000000e+00 : f32
    %139 = vector.broadcast %cst_177 : f32 to vector<1x4xf32>
    %140 = arith.subf %139, %138 : vector<1x4xf32>
    %141 = math.exp %140 : vector<1x4xf32>
    %cst_178 = arith.constant 1.000000e+00 : f32
    %142 = vector.broadcast %cst_178 : f32 to vector<1x4xf32>
    %143 = arith.addf %142, %141 : vector<1x4xf32>
    %cst_179 = arith.constant 1.000000e+00 : f32
    %144 = vector.broadcast %cst_179 : f32 to vector<1x4xf32>
    %145 = arith.divf %144, %143 : vector<1x4xf32>
    %146 = arith.mulf %145, %128 : vector<1x4xf32>
    %147 = vector.shape_cast %146 : vector<1x4xf32> to vector<1x1x1x4xf32>
    %148 = vector.broadcast %147 : vector<1x1x1x4xf32> to vector<1x16x16x4xf32>
    %149 = arith.addf %0, %148 : vector<1x16x16x4xf32>
    %c0_180 = arith.constant 0 : index
    %c0_181 = arith.constant 0 : index
    %c0_182 = arith.constant 0 : index
    %c0_183 = arith.constant 0 : index
    %150 = vector.load %arg10[%c0_180, %c0_181, %c0_182, %c0_183] : memref<1x16x16x4xf32, #tpu.memory_space<vmem>>, vector<1x16x16x4xf32>
    tpu.vector_store %arg10[%c0_180, %c0_181, %c0_182, %c0_183], %149 {strides = array<i32>} : memref<1x16x16x4xf32, #tpu.memory_space<vmem>>, vector<1x16x16x4xf32>,
    return
  }
  func.func @transform_0(%arg0: i32) -> (i32, i32, i32, i32) {
    %c0_i32 = arith.constant 0 : i32
    %c0_i32_0 = arith.constant 0 : i32
    %c0_i32_1 = arith.constant 0 : i32
    %c0_i32_2 = arith.constant 0 : i32
    return %arg0, %c0_i32, %c0_i32_0, %c0_i32_1 : i32, i32, i32, i32
  }
  func.func @transform_1(%arg0: i32) -> (i32, i32, i32) {
    %c0_i32 = arith.constant 0 : i32
    %c0_i32_0 = arith.constant 0 : i32
    %c0_i32_1 = arith.constant 0 : i32
    %c0_i32_2 = arith.constant 0 : i32
    return %c0_i32, %c0_i32_0, %c0_i32_1 : i32, i32, i32
  }
  func.func @transform_2(%arg0: i32) -> (i32, i32) {
    %c0_i32 = arith.constant 0 : i32
    %c0_i32_0 = arith.constant 0 : i32
    %c0_i32_1 = arith.constant 0 : i32
    return %c0_i32, %c0_i32_0 : i32, i32
  }
  func.func @transform_3(%arg0: i32) -> (i32, i32, i32) {
    %c0_i32 = arith.constant 0 : i32
    %c0_i32_0 = arith.constant 0 : i32
    %c0_i32_1 = arith.constant 0 : i32
    %c0_i32_2 = arith.constant 0 : i32
    return %c0_i32, %c0_i32_0, %c0_i32_1 : i32, i32, i32
  }
  func.func @transform_4(%arg0: i32) -> (i32, i32) {
    %c0_i32 = arith.constant 0 : i32
    %c0_i32_0 = arith.constant 0 : i32
    %c0_i32_1 = arith.constant 0 : i32
    return %c0_i32, %c0_i32_0 : i32, i32
  }
  func.func @transform_5(%arg0: i32) -> (i32, i32) {
    %c0_i32 = arith.constant 0 : i32
    %c0_i32_0 = arith.constant 0 : i32
    %c0_i32_1 = arith.constant 0 : i32
    return %c0_i32, %c0_i32_0 : i32, i32
  }
  func.func @transform_6(%arg0: i32) -> (i32, i32) {
    %c0_i32 = arith.constant 0 : i32
    %c0_i32_0 = arith.constant 0 : i32
    %c0_i32_1 = arith.constant 0 : i32
    return %c0_i32, %c0_i32_0 : i32, i32
  }
  func.func @transform_7(%arg0: i32) -> (i32, i32) {
    %c0_i32 = arith.constant 0 : i32
    %c0_i32_0 = arith.constant 0 : i32
    %c0_i32_1 = arith.constant 0 : i32
    return %c0_i32, %c0_i32_0 : i32, i32
  }
  func.func @transform_8(%arg0: i32) -> (i32, i32) {
    %c0_i32 = arith.constant 0 : i32
    %c0_i32_0 = arith.constant 0 : i32
    %c0_i32_1 = arith.constant 0 : i32
    return %c0_i32, %c0_i32_0 : i32, i32
  }
  func.func @transform_9(%arg0: i32) -> (i32, i32, i32, i32) {
    %c0_i32 = arith.constant 0 : i32
    %c0_i32_0 = arith.constant 0 : i32
    %c0_i32_1 = arith.constant 0 : i32
    %c0_i32_2 = arith.constant 0 : i32
    return %arg0, %c0_i32, %c0_i32_0, %c0_i32_1 : i32, i32, i32, i32
  }
}

</mosaic_0001>

<llo_original>
// kernel: tpu_custom_call.1
$region0: #{tpu_custom_call.1}
  #allocation0 [shape = 'u32[]', space=smem, size = 0x4, offset = 0x4, fixed_abs, tag = 'smem constant byte address 0x4 - core index']
  #allocation1 [shape = 'u32[144,128]{1,0:T(1,128)}', space=vmem, size = 0x12000, scoped, tag = 'internal scratch']
  #allocation2 [shape = 'bf16[1,18,48,4]{3,2,1,0:T(16,128)(2,1)}', space=vmem, size = 0x36000, scoped, tag = 'scratch operand']
  %s0 = inlined_call_operand.vmem [shape: f32[2,16,16,4], index: 0, kind: input, shape index: {}]
  %s1 = inlined_call_operand.vmem [shape: bf16[9,4,4], index: 1, kind: input, shape index: {}]
  %s2 = inlined_call_operand.vmem [shape: f32[1,4], index: 2, kind: input, shape index: {}]
  %s3 = inlined_call_operand.vmem [shape: bf16[9,4,4], index: 3, kind: input, shape index: {}]
  %s4 = inlined_call_operand.vmem [shape: f32[1,4], index: 4, kind: input, shape index: {}]
  %s5 = inlined_call_operand.vmem [shape: f32[4,2], index: 5, kind: input, shape index: {}]
  %s6 = inlined_call_operand.vmem [shape: f32[1,2], index: 6, kind: input, shape index: {}]
  %s7 = inlined_call_operand.vmem [shape: f32[2,4], index: 7, kind: input, shape index: {}]
  %s8 = inlined_call_operand.vmem [shape: f32[1,4], index: 8, kind: input, shape index: {}]
  %s9 = inlined_call_operand.vmem [shape: f32[2,16,16,4], index: 9, kind: output, shape index: {}]
  %s10 = sld [smem:[#allocation0]]
  $region69: #{tpu_custom_call.1} parent=0
    _
  %s12 = ssub.s32 1, %s10
  %s13 = scalar_select 0, %s12, %s10
  loop: start=0, step=1, limit=4
  $region2: #{tpu_custom_call.1} parent=0 // loop_pre_header
    _
  $region3: #{tpu_custom_call.1} parent=0 // loop_header
    %s15 = sphi 0, %s19
    %p16 = scmp.ge.s32.totalorder %s15, 4
    %s25 = sphi 0, %s27
    %s28 = sphi 0, %s25
    %s29 = sphi 0, %s28
    %s45 = sphi 0, %s29
    %s49 = sphi 0, %s49
    %s51 = sphi 0, %s49
    %s52 = sphi 0, %s51
    %s66 = sphi 0, %s52
    %s70 = sphi 0, %s70
    %s72 = sphi 0, %s70
    %s73 = sphi 0, %s72
    %s87 = sphi 0, %s73
    %s91 = sphi 0, %s91
    %s93 = sphi 0, %s91
    %s94 = sphi 0, %s93
    %s108 = sphi 0, %s94
    %s112 = sphi 0, %s112
    %s114 = sphi 0, %s112
    %s115 = sphi 0, %s114
    %s129 = sphi 0, %s115
    %s133 = sphi 0, %s133
    %s135 = sphi 0, %s133
    %s136 = sphi 0, %s135
    %s150 = sphi 0, %s136
    %s154 = sphi 0, %s154
    %s156 = sphi 0, %s154
    %s157 = sphi 0, %s156
    %s171 = sphi 0, %s157
    %s175 = sphi 0, %s175
    %s177 = sphi 0, %s175
    %s178 = sphi 0, %s177
    %s192 = sphi 0, %s178
    %s196 = sphi 0, %s196
    %s198 = sphi 0, %s196
    %s199 = sphi 0, %s198
    %s213 = sphi 0, %s199
    %s219 = sphi 0, %s221
    %s222 = sphi 0, %s219
    %s223 = sphi 0, %s222
    %s239 = sphi 0, %s223
  $region4: #{tpu_custom_call.1} parent=0 // loop_header_branch
    %18 = sbr.rel (%p16) target = $region8
  $region5: #{tpu_custom_call.1} parent=0 // loop_body
    %s20 = ssub.s32 %s15, 1
    %s21 = ssub.s32 %s15, 2
    %s22 = sadd.s32 %s15, 1
    %s23 = ssub.s32 %s15, %s22
    %p24 = scmp.eq.s32.totalorder %s23, 0
    %s26 = sadd.s32 %s25, 1
    %s27 = scalar_select %p24, %s25, %s26
    %p30 = pneg %p24
    %p31 = scmp.eq.s32.totalorder %s15, 1
    %p32 = por %p30, %p31
    %p33 = scmp.ne.s32.totalorder %s25, %s28
    %p34 = scmp.eq.s32.totalorder %s15, 0
    %p35 = por %p33, %p34
    %p36 = scmp.ne.s32.totalorder %s25, %s28
    %p37 = scmp.eq.s32.totalorder %s20, 1
    %p38 = por %p36, %p37
    %p39 = scmp.ne.s32.totalorder %s28, %s29
    %p40 = scmp.eq.s32.totalorder %s20, 0
    %p41 = por %p39, %p40
    %p42 = scmp.ne.s32.totalorder %s28, %s29
    %p43 = scmp.eq.s32.totalorder %s21, 1
    %p44 = por %p42, %p43
    %p46 = scmp.ne.s32.totalorder %s29, %s45
    %p47 = scmp.eq.s32.totalorder %s21, 0
    %p48 = por %p46, %p47
    %s50 = sadd.s32 %s49, 1
    %p53 = scmp.eq.s32.totalorder %s15, 1
    %p54 = scmp.ne.s32.totalorder %s49, %s51
    %p55 = scmp.eq.s32.totalorder %s15, 0
    %p56 = por %p54, %p55
    %p57 = scmp.ne.s32.totalorder %s49, %s51
    %p58 = scmp.eq.s32.totalorder %s20, 1
    %p59 = por %p57, %p58
    %p60 = scmp.ne.s32.totalorder %s51, %s52
    %p61 = scmp.eq.s32.totalorder %s20, 0
    %p62 = por %p60, %p61
    %p63 = scmp.ne.s32.totalorder %s51, %s52
    %p64 = scmp.eq.s32.totalorder %s21, 1
    %p65 = por %p63, %p64
    %p67 = scmp.ne.s32.totalorder %s52, %s66
    %p68 = scmp.eq.s32.totalorder %s21, 0
    %p69 = por %p67, %p68
    %s71 = sadd.s32 %s70, 1
    %p74 = scmp.eq.s32.totalorder %s15, 1
    %p75 = scmp.ne.s32.totalorder %s70, %s72
    %p76 = scmp.eq.s32.totalorder %s15, 0
    %p77 = por %p75, %p76
    %p78 = scmp.ne.s32.totalorder %s70, %s72
    %p79 = scmp.eq.s32.totalorder %s20, 1
    %p80 = por %p78, %p79
    %p81 = scmp.ne.s32.totalorder %s72, %s73
    %p82 = scmp.eq.s32.totalorder %s20, 0
    %p83 = por %p81, %p82
    %p84 = scmp.ne.s32.totalorder %s72, %s73
    %p85 = scmp.eq.s32.totalorder %s21, 1
    %p86 = por %p84, %p85
    %p88 = scmp.ne.s32.totalorder %s73, %s87
    %p89 = scmp.eq.s32.totalorder %s21, 0
    %p90 = por %p88, %p89
    %s92 = sadd.s32 %s91, 1
    %p95 = scmp.eq.s32.totalorder %s15, 1
    %p96 = scmp.ne.s32.totalorder %s91, %s93
    %p97 = scmp.eq.s32.totalorder %s15, 0
    %p98 = por %p96, %p97
    %p99 = scmp.ne.s32.totalorder %s91, %s93
    %p100 = scmp.eq.s32.totalorder %s20, 1
    %p101 = por %p99, %p100
    %p102 = scmp.ne.s32.totalorder %s93, %s94
    %p103 = scmp.eq.s32.totalorder %s20, 0
    %p104 = por %p102, %p103
    %p105 = scmp.ne.s32.totalorder %s93, %s94
    %p106 = scmp.eq.s32.totalorder %s21, 1
    %p107 = por %p105, %p106
    %p109 = scmp.ne.s32.totalorder %s94, %s108
    %p110 = scmp.eq.s32.totalorder %s21, 0
    %p111 = por %p109, %p110
    %s113 = sadd.s32 %s112, 1
    %p116 = scmp.eq.s32.totalorder %s15, 1
    %p117 = scmp.ne.s32.totalorder %s112, %s114
    %p118 = scmp.eq.s32.totalorder %s15, 0
    %p119 = por %p117, %p118
    %p120 = scmp.ne.s32.totalorder %s112, %s114
    %p121 = scmp.eq.s32.totalorder %s20, 1
    %p122 = por %p120, %p121
    %p123 = scmp.ne.s32.totalorder %s114, %s115
    %p124 = scmp.eq.s32.totalorder %s20, 0
    %p125 = por %p123, %p124
    %p126 = scmp.ne.s32.totalorder %s114, %s115
    %p127 = scmp.eq.s32.totalorder %s21, 1
    %p128 = por %p126, %p127
    %p130 = scmp.ne.s32.totalorder %s115, %s129
    %p131 = scmp.eq.s32.totalorder %s21, 0
    %p132 = por %p130, %p131
    %s134 = sadd.s32 %s133, 1
    %p137 = scmp.eq.s32.totalorder %s15, 1
    %p138 = scmp.ne.s32.totalorder %s133, %s135
    %p139 = scmp.eq.s32.totalorder %s15, 0
    %p140 = por %p138, %p139
    %p141 = scmp.ne.s32.totalorder %s133, %s135
    %p142 = scmp.eq.s32.totalorder %s20, 1
    %p143 = por %p141, %p142
    %p144 = scmp.ne.s32.totalorder %s135, %s136
    %p145 = scmp.eq.s32.totalorder %s20, 0
    %p146 = por %p144, %p145
    %p147 = scmp.ne.s32.totalorder %s135, %s136
    %p148 = scmp.eq.s32.totalorder %s21, 1
    %p149 = por %p147, %p148
    %p151 = scmp.ne.s32.totalorder %s136, %s150
    %p152 = scmp.eq.s32.totalorder %s21, 0
    %p153 = por %p151, %p152
    %s155 = sadd.s32 %s154, 1
    %p158 = scmp.eq.s32.totalorder %s15, 1
    %p159 = scmp.ne.s32.totalorder %s154, %s156
    %p160 = scmp.eq.s32.totalorder %s15, 0
    %p161 = por %p159, %p160
    %p162 = scmp.ne.s32.totalorder %s154, %s156
    %p163 = scmp.eq.s32.totalorder %s20, 1
    %p164 = por %p162, %p163
    %p165 = scmp.ne.s32.totalorder %s156, %s157
    %p166 = scmp.eq.s32.totalorder %s20, 0
    %p167 = por %p165, %p166
    %p168 = scmp.ne.s32.totalorder %s156, %s157
    %p169 = scmp.eq.s32.totalorder %s21, 1
    %p170 = por %p168, %p169
    %p172 = scmp.ne.s32.totalorder %s157, %s171
    %p173 = scmp.eq.s32.totalorder %s21, 0
    %p174 = por %p172, %p173
    %s176 = sadd.s32 %s175, 1
    %p179 = scmp.eq.s32.totalorder %s15, 1
    %p180 = scmp.ne.s32.totalorder %s175, %s177
    %p181 = scmp.eq.s32.totalorder %s15, 0
    %p182 = por %p180, %p181
    %p183 = scmp.ne.s32.totalorder %s175, %s177
    %p184 = scmp.eq.s32.totalorder %s20, 1
    %p185 = por %p183, %p184
    %p186 = scmp.ne.s32.totalorder %s177, %s178
    %p187 = scmp.eq.s32.totalorder %s20, 0
    %p188 = por %p186, %p187
    %p189 = scmp.ne.s32.totalorder %s177, %s178
    %p190 = scmp.eq.s32.totalorder %s21, 1
    %p191 = por %p189, %p190
    %p193 = scmp.ne.s32.totalorder %s178, %s192
    %p194 = scmp.eq.s32.totalorder %s21, 0
    %p195 = por %p193, %p194
    %s197 = sadd.s32 %s196, 1
    %p200 = scmp.eq.s32.totalorder %s15, 1
    %p201 = scmp.ne.s32.totalorder %s196, %s198
    %p202 = scmp.eq.s32.totalorder %s15, 0
    %p203 = por %p201, %p202
    %p204 = scmp.ne.s32.totalorder %s196, %s198
    %p205 = scmp.eq.s32.totalorder %s20, 1
    %p206 = por %p204, %p205
    %p207 = scmp.ne.s32.totalorder %s198, %s199
    %p208 = scmp.eq.s32.totalorder %s20, 0
    %p209 = por %p207, %p208
    %p210 = scmp.ne.s32.totalorder %s198, %s199
    %p211 = scmp.eq.s32.totalorder %s21, 1
    %p212 = por %p210, %p211
    %p214 = scmp.ne.s32.totalorder %s199, %s213
    %p215 = scmp.eq.s32.totalorder %s21, 0
    %p216 = por %p214, %p215
    %s217 = ssub.s32 %s15, %s22
    %p218 = scmp.eq.s32.totalorder %s217, 0
    %s220 = sadd.s32 %s219, 1
    %s221 = scalar_select %p218, %s219, %s220
    %p224 = pneg %p218
    %p225 = scmp.eq.s32.totalorder %s15, 1
    %p226 = por %p224, %p225
    %p227 = scmp.ne.s32.totalorder %s219, %s222
    %p228 = scmp.eq.s32.totalorder %s15, 0
    %p229 = por %p227, %p228
    %p230 = scmp.ne.s32.totalorder %s219, %s222
    %p231 = scmp.eq.s32.totalorder %s20, 1
    %p232 = por %p230, %p231
    %p233 = scmp.ne.s32.totalorder %s222, %s223
    %p234 = scmp.eq.s32.totalorder %s20, 0
    %p235 = por %p233, %p234
    %p236 = scmp.ne.s32.totalorder %s222, %s223
    %p237 = scmp.eq.s32.totalorder %s21, 1
    %p238 = por %p236, %p237
    %p240 = scmp.ne.s32.totalorder %s223, %s239
    %p241 = scmp.eq.s32.totalorder %s21, 0
    %p242 = por %p240, %p241
    %p243 = scmp.le.s32.totalorder 1, %s15
    %p244 = scmp.lt.s32.totalorder %s15, 3
    %p245 = pnand %p243, %p244
    %p246 = pneg %p245
    // Predicated region
    $region9: #{tpu_custom_call.1} parent=5 // pred_check
      _
    $region10: #{tpu_custom_call.1} parent=5 // pred_check_branch
      %248 = sbr.rel (%p245) target = $region12
    $region11: #{tpu_custom_call.1} parent=5 // pred_region
      %s249 = ssub.s32 %s15, 1
      // Predicated region
      $region13: #{tpu_custom_call.1} parent=11 // pred_check
        %p250 = pneg %p62
      $region14: #{tpu_custom_call.1} parent=11 // pred_check_branch
        %252 = sbr.rel (%p250) target = $region16
      $region15: #{tpu_custom_call.1} parent=11 // pred_region
        _
      $region16: #{tpu_custom_call.1} parent=11 // pred_fallthru
        _
      // Predicated region
      $region17: #{tpu_custom_call.1} parent=11 // pred_check
        %p253 = pneg %p83
      $region18: #{tpu_custom_call.1} parent=11 // pred_check_branch
        %255 = sbr.rel (%p253) target = $region20
      $region19: #{tpu_custom_call.1} parent=11 // pred_region
        _
      $region20: #{tpu_custom_call.1} parent=11 // pred_fallthru
        _
      // Predicated region
      $region21: #{tpu_custom_call.1} parent=11 // pred_check
        %p256 = pneg %p104
      $region22: #{tpu_custom_call.1} parent=11 // pred_check_branch
        %258 = sbr.rel (%p256) target = $region24
      $region23: #{tpu_custom_call.1} parent=11 // pred_region
        _
      $region24: #{tpu_custom_call.1} parent=11 // pred_fallthru
        _
      // Predicated region
      $region25: #{tpu_custom_call.1} parent=11 // pred_check
        %p259 = pneg %p125
      $region26: #{tpu_custom_call.1} parent=11 // pred_check_branch
        %261 = sbr.rel (%p259) target = $region28
      $region27: #{tpu_custom_call.1} parent=11 // pred_region
        _
      $region28: #{tpu_custom_call.1} parent=11 // pred_fallthru
        _
      // Predicated region
      $region29: #{tpu_custom_call.1} parent=11 // pred_check
        %p262 = pneg %p146
      $region30: #{tpu_custom_call.1} parent=11 // pred_check_branch
        %264 = sbr.rel (%p262) target = $region32
      $region31: #{tpu_custom_call.1} parent=11 // pred_region
        _
      $region32: #{tpu_custom_call.1} parent=11 // pred_fallthru
        _
      // Predicated region
      $region33: #{tpu_custom_call.1} parent=11 // pred_check
        %p265 = pneg %p167
      $region34: #{tpu_custom_call.1} parent=11 // pred_check_branch
        %267 = sbr.rel (%p265) target = $region36
      $region35: #{tpu_custom_call.1} parent=11 // pred_region
        _
      $region36: #{tpu_custom_call.1} parent=11 // pred_fallthru
        _
      // Predicated region
      $region37: #{tpu_custom_call.1} parent=11 // pred_check
        %p268 = pneg %p188
      $region38: #{tpu_custom_call.1} parent=11 // pred_check_branch
        %270 = sbr.rel (%p268) target = $region40
      $region39: #{tpu_custom_call.1} parent=11 // pred_region
        _
      $region40: #{tpu_custom_call.1} parent=11 // pred_fallthru
        _
      // Predicated region
      $region41: #{tpu_custom_call.1} parent=11 // pred_check
        %p271 = pneg %p209
      $region42: #{tpu_custom_call.1} parent=11 // pred_check_branch
        %273 = sbr.rel (%p271) target = $region44
      $region43: #{tpu_custom_call.1} parent=11 // pred_region
        _
      $region44: #{tpu_custom_call.1} parent=11 // pred_fallthru
        _
    $region12: #{tpu_custom_call.1} parent=5 // pred_fallthru
      _
    %p274 = scmp.lt.s32.totalorder %s15, 2
    // Predicated region
    $region45: #{tpu_custom_call.1} parent=5 // pred_check
      %p275 = pneg %p274
    $region46: #{tpu_custom_call.1} parent=5 // pred_check_branch
      %277 = sbr.rel (%p275) target = $region48
    $region47: #{tpu_custom_call.1} parent=5 // pred_region
      // Predicated region
      $region49: #{tpu_custom_call.1} parent=47 // pred_check
        %p278 = pneg %p35
      $region50: #{tpu_custom_call.1} parent=47 // pred_check_branch
        %280 = sbr.rel (%p278) target = $region52
      $region51: #{tpu_custom_call.1} parent=47 // pred_region
        %p281 = scmp.lt.s32.totalorder %s15, 1
        %s282 = scalar_select %p281, %s15, 1
        %s283 = smul.addr %s282, 32
        %s284 = smul.addr %s283, 8
        %s285 = scalar_lea.vmem %s0, %s284
      $region52: #{tpu_custom_call.1} parent=47 // pred_fallthru
        _
    $region48: #{tpu_custom_call.1} parent=5 // pred_fallthru
      _
    %p286 = scmp.le.s32.totalorder 1, %s15
    %p287 = scmp.lt.s32.totalorder %s15, 3
    %p288 = pnand %p286, %p287
    %p289 = pneg %p288
    // Predicated region
    $region53: #{tpu_custom_call.1} parent=5 // pred_check
      _
    $region54: #{tpu_custom_call.1} parent=5 // pred_check_branch
      %291 = sbr.rel (%p288) target = $region56
    $region55: #{tpu_custom_call.1} parent=5 // pred_region
      %s292 = ssub.s32 %s15, 1
      %p293 = scmp.lt.s32.totalorder %s20, 1
      %s294 = scalar_select %p293, %s20, 1
      %s295 = smul.addr %s294, 32
      %s296 = smul.addr %s295, 8
      %s297 = scalar_lea.vmem %s0, %s296
      %p298 = pneg %p41
      %p299 = pneg %p38
      %p300 = pneg %p62
      %p301 = pneg %p59
      %p302 = pneg %p83
      %p303 = pneg %p80
      %p304 = pneg %p104
      %p305 = pneg %p101
      %p306 = pneg %p125
      %p307 = pneg %p122
      %p308 = pneg %p146
      %p309 = pneg %p143
      %p310 = pneg %p167
      %p311 = pneg %p164
      %p312 = pneg %p188
      %p313 = pneg %p185
      %p314 = pneg %p209
      %p315 = pneg %p206
      %p316 = pneg %p235
      %p317 = pneg %p232
      %p318 = scmp.lt.s32.totalorder %s20, 1
      %s319 = scalar_select %p318, %s20, 1
      %s320 = smul.addr %s319, 32
      %s321 = smul.addr %s320, 8
      %s322 = scalar_lea.vmem %s9, %s321
      %p323 = scmp.lt.s32.totalorder %s20, 1
      %s324 = scalar_select %p323, %s20, 1
      %s325 = smul.addr %s324, 32
      %s326 = smul.addr %s325, 8
      %s327 = scalar_lea.vmem %s0, %s326
      %p328 = scmp.lt.s32.totalorder %s20, 1
      %s329 = scalar_select %p328, %s20, 1
      %s330 = smul.addr %s329, 32
      %s331 = smul.addr %s330, 8
      %s332 = scalar_lea.vmem %s9, %s331
      %v334 = vld [vmem:[%s327] sm:$0xff]
      %v335 = vld [vmem:[%s327 + $0x8] sm:$0xff]
      %v336 = vld [vmem:[%s327 + $0x10] sm:$0xff]
      %v337 = vld [vmem:[%s327 + $0x18] sm:$0xff]
      %v338 = vld [vmem:[%s327 + $0x20] sm:$0xff]
      %v339 = vld [vmem:[%s327 + $0x28] sm:$0xff]
      %v340 = vld [vmem:[%s327 + $0x30] sm:$0xff]
      %v341 = vld [vmem:[%s327 + $0x38] sm:$0xff]
      %v342 = vld [vmem:[%s327 + $0x40] sm:$0xff]
      %v343 = vld [vmem:[%s327 + $0x48] sm:$0xff]
      %v344 = vld [vmem:[%s327 + $0x50] sm:$0xff]
      %v345 = vld [vmem:[%s327 + $0x58] sm:$0xff]
      %v346 = vld [vmem:[%s327 + $0x60] sm:$0xff]
      %v347 = vld [vmem:[%s327 + $0x68] sm:$0xff]
      %v348 = vld [vmem:[%s327 + $0x70] sm:$0xff]
      %v349 = vld [vmem:[%s327 + $0x78] sm:$0xff]
      %v350 = vld [vmem:[%s327 + $0x80] sm:$0xff]
      %v351 = vld [vmem:[%s327 + $0x88] sm:$0xff]
      %v352 = vld [vmem:[%s327 + $0x90] sm:$0xff]
      %v353 = vld [vmem:[%s327 + $0x98] sm:$0xff]
      %v354 = vld [vmem:[%s327 + $0xa0] sm:$0xff]
      %v355 = vld [vmem:[%s327 + $0xa8] sm:$0xff]
      %v356 = vld [vmem:[%s327 + $0xb0] sm:$0xff]
      %v357 = vld [vmem:[%s327 + $0xb8] sm:$0xff]
      %v358 = vld [vmem:[%s327 + $0xc0] sm:$0xff]
      %v359 = vld [vmem:[%s327 + $0xc8] sm:$0xff]
      %v360 = vld [vmem:[%s327 + $0xd0] sm:$0xff]
      %v361 = vld [vmem:[%s327 + $0xd8] sm:$0xff]
      %v362 = vld [vmem:[%s327 + $0xe0] sm:$0xff]
      %v363 = vld [vmem:[%s327 + $0xe8] sm:$0xff]
      %v364 = vld [vmem:[%s327 + $0xf0] sm:$0xff]
      %v365 = vld [vmem:[%s327 + $0xf8] sm:$0xff]
      %vm366 = vcmask 31744
      %367 = vst.msk [vmem:[#allocation2] sm:$0xff] %vm366, 0
      %368 = vst.msk [vmem:[#allocation2 + $0x8] sm:$0xff] %vm366, 0
      %369 = vst.msk [vmem:[#allocation2 + $0x10] sm:$0xff] %vm366, 0
      %s370 = scalar_lea.vmem [#allocation2], 408
      %371 = vst.msk [vmem:[%s370] sm:$0xff] %vm366, 0
      %372 = vst.msk [vmem:[%s370 + $0x8] sm:$0xff] %vm366, 0
      %373 = vst.msk [vmem:[%s370 + $0x10] sm:$0xff] %vm366, 0
      %vm374 = vcmask 31751
      %375 = vst.msk [vmem:[#allocation2] sm:$0x80] %vm374, 0
      %376 = vst.msk [vmem:[#allocation2 + $0x18] sm:$0x80] %vm374, 0
      %377 = vst.msk [vmem:[#allocation2 + $0x30] sm:$0x80] %vm374, 0
      %378 = vst.msk [vmem:[#allocation2 + $0x48] sm:$0x80] %vm374, 0
      %379 = vst.msk [vmem:[#allocation2 + $0x60] sm:$0x80] %vm374, 0
      %380 = vst.msk [vmem:[#allocation2 + $0x78] sm:$0x80] %vm374, 0
      %381 = vst.msk [vmem:[#allocation2 + $0x90] sm:$0x80] %vm374, 0
      %382 = vst.msk [vmem:[#allocation2 + $0xa8] sm:$0x80] %vm374, 0
      %383 = vst.msk [vmem:[#allocation2 + $0xc0] sm:$0x80] %vm374, 0
      %384 = vst.msk [vmem:[#allocation2 + $0xd8] sm:$0x80] %vm374, 0
      %385 = vst.msk [vmem:[#allocation2 + $0xf0] sm:$0x80] %vm374, 0
      %386 = vst.msk [vmem:[#allocation2 + $0x108] sm:$0x80] %vm374, 0
      %387 = vst.msk [vmem:[#allocation2 + $0x120] sm:$0x80] %vm374, 0
      %388 = vst.msk [vmem:[#allocation2 + $0x138] sm:$0x80] %vm374, 0
      %389 = vst.msk [vmem:[#allocation2 + $0x150] sm:$0x80] %vm374, 0
      %390 = vst.msk [vmem:[#allocation2 + $0x168] sm:$0x80] %vm374, 0
      %391 = vst.msk [vmem:[#allocation2 + $0x180] sm:$0x80] %vm374, 0
      %392 = vst.msk [vmem:[#allocation2 + $0x198] sm:$0x80] %vm374, 0
      %vm393 = vcmask 24576
      %394 = vst.msk [vmem:[#allocation2 + $0x10] sm:$0x1] %vm393, 0
      %395 = vst.msk [vmem:[#allocation2 + $0x28] sm:$0x1] %vm393, 0
      %396 = vst.msk [vmem:[#allocation2 + $0x40] sm:$0x1] %vm393, 0
      %397 = vst.msk [vmem:[#allocation2 + $0x58] sm:$0x1] %vm393, 0
      %398 = vst.msk [vmem:[#allocation2 + $0x70] sm:$0x1] %vm393, 0
      %399 = vst.msk [vmem:[#allocation2 + $0x88] sm:$0x1] %vm393, 0
      %400 = vst.msk [vmem:[#allocation2 + $0xa0] sm:$0x1] %vm393, 0
      %401 = vst.msk [vmem:[#allocation2 + $0xb8] sm:$0x1] %vm393, 0
      %402 = vst.msk [vmem:[#allocation2 + $0xd0] sm:$0x1] %vm393, 0
      %403 = vst.msk [vmem:[#allocation2 + $0xe8] sm:$0x1] %vm393, 0
      %404 = vst.msk [vmem:[#allocation2 + $0x100] sm:$0x1] %vm393, 0
      %405 = vst.msk [vmem:[#allocation2 + $0x118] sm:$0x1] %vm393, 0
      %406 = vst.msk [vmem:[#allocation2 + $0x130] sm:$0x1] %vm393, 0
      %407 = vst.msk [vmem:[#allocation2 + $0x148] sm:$0x1] %vm393, 0
      %408 = vst.msk [vmem:[#allocation2 + $0x160] sm:$0x1] %vm393, 0
      %409 = vst.msk [vmem:[#allocation2 + $0x178] sm:$0x1] %vm393, 0
      %410 = vst.msk [vmem:[#allocation2 + $0x190] sm:$0x1] %vm393, 0
      %411 = vst.msk [vmem:[#allocation2 + $0x1a8] sm:$0x1] %vm393, 0
      %v412 = vpack.c.bf16 %v335, %v334
      %v413 = vpack.c.bf16 %v337, %v336
      %v414 = vpack.c.bf16 %v339, %v338
      %v415 = vpack.c.bf16 %v341, %v340
      %v416 = vpack.c.bf16 %v343, %v342
      %v417 = vpack.c.bf16 %v345, %v344
      %v418 = vpack.c.bf16 %v347, %v346
      %v419 = vpack.c.bf16 %v349, %v348
      %v420 = vpack.c.bf16 %v351, %v350
      %v421 = vpack.c.bf16 %v353, %v352
      %v422 = vpack.c.bf16 %v355, %v354
      %v423 = vpack.c.bf16 %v357, %v356
      %v424 = vpack.c.bf16 %v359, %v358
      %v425 = vpack.c.bf16 %v361, %v360
      %v426 = vpack.c.bf16 %v363, %v362
      %v427 = vpack.c.bf16 %v365, %v364
      %s428 = scalar_lea.vmem [#allocation2], 24
      %429 = vst.msk [vmem:[%s428 + $0x8] sm:$0xff] %vm366, %v412
      %430 = vst.msk [vmem:[%s428 + $0x20] sm:$0xff] %vm366, %v413
      %431 = vst.msk [vmem:[%s428 + $0x38] sm:$0xff] %vm366, %v414
      %432 = vst.msk [vmem:[%s428 + $0x50] sm:$0xff] %vm366, %v415
      %433 = vst.msk [vmem:[%s428 + $0x68] sm:$0xff] %vm366, %v416
      %434 = vst.msk [vmem:[%s428 + $0x80] sm:$0xff] %vm366, %v417
      %435 = vst.msk [vmem:[%s428 + $0x98] sm:$0xff] %vm366, %v418
      %436 = vst.msk [vmem:[%s428 + $0xb0] sm:$0xff] %vm366, %v419
      %437 = vst.msk [vmem:[%s428 + $0xc8] sm:$0xff] %vm366, %v420
      %438 = vst.msk [vmem:[%s428 + $0xe0] sm:$0xff] %vm366, %v421
      %439 = vst.msk [vmem:[%s428 + $0xf8] sm:$0xff] %vm366, %v422
      %440 = vst.msk [vmem:[%s428 + $0x110] sm:$0xff] %vm366, %v423
      %441 = vst.msk [vmem:[%s428 + $0x128] sm:$0xff] %vm366, %v424
      %442 = vst.msk [vmem:[%s428 + $0x140] sm:$0xff] %vm366, %v425
      %443 = vst.msk [vmem:[%s428 + $0x158] sm:$0xff] %vm366, %v426
      %444 = vst.msk [vmem:[%s428 + $0x170] sm:$0xff] %vm366, %v427
      %v445 = vld [vmem:[#allocation2] sm:$0x80]
      %v446 = vld [vmem:[#allocation2 + $0x8] sm:$0xff]
      %v447 = vld [vmem:[#allocation2 + $0x18] sm:$0x80]
      %v448 = vld [vmem:[#allocation2 + $0x20] sm:$0xff]
      %v449 = vld [vmem:[#allocation2 + $0x30] sm:$0x80]
      %v450 = vld [vmem:[#allocation2 + $0x38] sm:$0xff]
      %v451 = vld [vmem:[#allocation2 + $0x48] sm:$0x80]
      %v452 = vld [vmem:[#allocation2 + $0x50] sm:$0xff]
      %v453 = vld [vmem:[#allocation2 + $0x60] sm:$0x80]
      %v454 = vld [vmem:[#allocation2 + $0x68] sm:$0xff]
      %v455 = vld [vmem:[#allocation2 + $0x78] sm:$0x80]
      %v456 = vld [vmem:[#allocation2 + $0x80] sm:$0xff]
      %v457 = vld [vmem:[#allocation2 + $0x90] sm:$0x80]
      %v458 = vld [vmem:[#allocation2 + $0x98] sm:$0xff]
      %v459 = vld [vmem:[#allocation2 + $0xa8] sm:$0x80]
      %v460 = vld [vmem:[#allocation2 + $0xb0] sm:$0xff]
      %v461 = vld [vmem:[#allocation2 + $0xc0] sm:$0x80]
      %v462 = vld [vmem:[#allocation2 + $0xc8] sm:$0xff]
      %v463 = vld [vmem:[#allocation2 + $0xd8] sm:$0x80]
      %v464 = vld [vmem:[#allocation2 + $0xe0] sm:$0xff]
      %v465 = vld [vmem:[#allocation2 + $0xf0] sm:$0x80]
      %v466 = vld [vmem:[#allocation2 + $0xf8] sm:$0xff]
      %v467 = vld [vmem:[#allocation2 + $0x108] sm:$0x80]
      %v468 = vld [vmem:[#allocation2 + $0x110] sm:$0xff]
      %v469 = vld [vmem:[#allocation2 + $0x120] sm:$0x80]
      %v470 = vld [vmem:[#allocation2 + $0x128] sm:$0xff]
      %v471 = vld [vmem:[#allocation2 + $0x138] sm:$0x80]
      %v472 = vld [vmem:[#allocation2 + $0x140] sm:$0xff]
      %v473 = vld [vmem:[#allocation2 + $0x150] sm:$0x80]
      %v474 = vld [vmem:[#allocation2 + $0x158] sm:$0xff]
      %v475 = vld [vmem:[#allocation2 + $0x168] sm:$0x80]
      %v476 = vld [vmem:[#allocation2 + $0x170] sm:$0xff]
      %vm477 = vsmask.f32 256
      %v479 = vshrl.u32 %v445, 16
      %v481 = vrot.slane %v479, 7
      %v483 = vshrl.u32 %v446, 16
      %v485 = vrot.slane %v483, 7
      %v486 = vshll.u32 %v446, 16
      %v488 = vor.u32 %v485, %v486
      %v489 = vsel %vm477, %v481, %v488
      %v491 = vshrl.u32 %v447, 16
      %v493 = vrot.slane %v491, 7
      %v495 = vshrl.u32 %v448, 16
      %v497 = vrot.slane %v495, 7
      %v498 = vshll.u32 %v448, 16
      %v500 = vor.u32 %v497, %v498
      %v501 = vsel %vm477, %v493, %v500
      %v503 = vshrl.u32 %v449, 16
      %v505 = vrot.slane %v503, 7
      %v507 = vshrl.u32 %v450, 16
      %v509 = vrot.slane %v507, 7
      %v510 = vshll.u32 %v450, 16
      %v512 = vor.u32 %v509, %v510
      %v513 = vsel %vm477, %v505, %v512
      %v515 = vshrl.u32 %v451, 16
      %v517 = vrot.slane %v515, 7
      %v519 = vshrl.u32 %v452, 16
      %v521 = vrot.slane %v519, 7
      %v522 = vshll.u32 %v452, 16
      %v524 = vor.u32 %v521, %v522
      %v525 = vsel %vm477, %v517, %v524
      %v527 = vshrl.u32 %v453, 16
      %v529 = vrot.slane %v527, 7
      %v531 = vshrl.u32 %v454, 16
      %v533 = vrot.slane %v531, 7
      %v534 = vshll.u32 %v454, 16
      %v536 = vor.u32 %v533, %v534
      %v537 = vsel %vm477, %v529, %v536
      %v539 = vshrl.u32 %v455, 16
      %v541 = vrot.slane %v539, 7
      %v543 = vshrl.u32 %v456, 16
      %v545 = vrot.slane %v543, 7
      %v546 = vshll.u32 %v456, 16
      %v548 = vor.u32 %v545, %v546
      %v549 = vsel %vm477, %v541, %v548
      %v551 = vshrl.u32 %v457, 16
      %v553 = vrot.slane %v551, 7
      %v555 = vshrl.u32 %v458, 16
      %v557 = vrot.slane %v555, 7
      %v558 = vshll.u32 %v458, 16
      %v560 = vor.u32 %v557, %v558
      %v561 = vsel %vm477, %v553, %v560
      %v563 = vshrl.u32 %v459, 16
      %v565 = vrot.slane %v563, 7
      %v567 = vshrl.u32 %v460, 16
      %v569 = vrot.slane %v567, 7
      %v570 = vshll.u32 %v460, 16
      %v572 = vor.u32 %v569, %v570
      %v573 = vsel %vm477, %v565, %v572
      %v575 = vshrl.u32 %v461, 16
      %v577 = vrot.slane %v575, 7
      %v579 = vshrl.u32 %v462, 16
      %v581 = vrot.slane %v579, 7
      %v582 = vshll.u32 %v462, 16
      %v584 = vor.u32 %v581, %v582
      %v585 = vsel %vm477, %v577, %v584
      %v587 = vshrl.u32 %v463, 16
      %v589 = vrot.slane %v587, 7
      %v591 = vshrl.u32 %v464, 16
      %v593 = vrot.slane %v591, 7
      %v594 = vshll.u32 %v464, 16
      %v596 = vor.u32 %v593, %v594
      %v597 = vsel %vm477, %v589, %v596
      %v599 = vshrl.u32 %v465, 16
      %v601 = vrot.slane %v599, 7
      %v603 = vshrl.u32 %v466, 16
      %v605 = vrot.slane %v603, 7
      %v606 = vshll.u32 %v466, 16
      %v608 = vor.u32 %v605, %v606
      %v609 = vsel %vm477, %v601, %v608
      %v611 = vshrl.u32 %v467, 16
      %v613 = vrot.slane %v611, 7
      %v615 = vshrl.u32 %v468, 16
      %v617 = vrot.slane %v615, 7
      %v618 = vshll.u32 %v468, 16
      %v620 = vor.u32 %v617, %v618
      %v621 = vsel %vm477, %v613, %v620
      %v623 = vshrl.u32 %v469, 16
      %v625 = vrot.slane %v623, 7
      %v627 = vshrl.u32 %v470, 16
      %v629 = vrot.slane %v627, 7
      %v630 = vshll.u32 %v470, 16
      %v632 = vor.u32 %v629, %v630
      %v633 = vsel %vm477, %v625, %v632
      %v635 = vshrl.u32 %v471, 16
      %v637 = vrot.slane %v635, 7
      %v639 = vshrl.u32 %v472, 16
      %v641 = vrot.slane %v639, 7
      %v642 = vshll.u32 %v472, 16
      %v644 = vor.u32 %v641, %v642
      %v645 = vsel %vm477, %v637, %v644
      %v647 = vshrl.u32 %v473, 16
      %v649 = vrot.slane %v647, 7
      %v651 = vshrl.u32 %v474, 16
      %v653 = vrot.slane %v651, 7
      %v654 = vshll.u32 %v474, 16
      %v656 = vor.u32 %v653, %v654
      %v657 = vsel %vm477, %v649, %v656
      %v659 = vshrl.u32 %v475, 16
      %v661 = vrot.slane %v659, 7
      %v663 = vshrl.u32 %v476, 16
      %v665 = vrot.slane %v663, 7
      %v666 = vshll.u32 %v476, 16
      %v668 = vor.u32 %v665, %v666
      %v669 = vsel %vm477, %v661, %v668
      %v670 = vld [vmem:[%s1] sm:$0x3]
      %s671 = scalar_lea.vmem %s1, 2
      %v672 = vld [vmem:[%s671] sm:$0x3]
      %v673 = vsel %vm366, %v446, 0
      %v675 = vsel %vm366, %v448, 0
      %v677 = vsel %vm366, %v450, 0
      %v679 = vsel %vm366, %v452, 0
      %v681 = vsel %vm366, %v454, 0
      %v683 = vsel %vm366, %v456, 0
      %v685 = vsel %vm366, %v458, 0
      %v687 = vsel %vm366, %v460, 0
      %v689 = vsel %vm366, %v462, 0
      %v691 = vsel %vm366, %v464, 0
      %v693 = vsel %vm366, %v466, 0
      %v695 = vsel %vm366, %v468, 0
      %v697 = vsel %vm366, %v470, 0
      %v699 = vsel %vm366, %v472, 0
      %v701 = vsel %vm366, %v474, 0
      %v703 = vsel %vm366, %v476, 0
      %vm705 = vcmask 1041408
      %v707 = vsel %vm705, %v672, 0
      %709 = vmatprep.subr.bf16.mxu0 0
      %710 = vmatpush1.bf16.msra.mxu0 %v707
      %711 = vmatprep.subr.bf16.mxu0 0
      %712 = vmatpush1.bf16.msra.mxu0 0
      %713 = vmatprep.subr.bf16.mxu0 0
      %714 = vmatpush1.bf16.msra.mxu0 0
      %715 = vmatprep.subr.bf16.mxu0 0
      %716 = vmatpush1.bf16.msra.mxu0 0
      %717 = vmatprep.subr.bf16.mxu0 0
      %718 = vmatpush1.bf16.msra.mxu0 0
      %719 = vmatprep.subr.bf16.mxu0 0
      %720 = vmatpush1.bf16.msra.mxu0 0
      %721 = vmatprep.subr.bf16.mxu0 0
      %722 = vmatpush1.bf16.msra.mxu0 0
      %723 = vmatprep.subr.bf16.mxu0 0
      %724 = vmatpush1.bf16.msra.mxu0 0
      %725 = vmatprep.subr.bf16.mxu0 0
      %726 = vmatpush1.bf16.msra.mxu0 0
      %727 = vmatprep.subr.bf16.mxu0 0
      %728 = vmatpush1.bf16.msra.mxu0 0
      %729 = vmatprep.subr.bf16.mxu0 0
      %730 = vmatpush1.bf16.msra.mxu0 0
      %731 = vmatprep.subr.bf16.mxu0 0
      %732 = vmatpush1.bf16.msra.mxu0 0
      %733 = vmatprep.subr.bf16.mxu0 0
      %734 = vmatpush1.bf16.msra.mxu0 0
      %735 = vmatprep.subr.bf16.mxu0 0
      %736 = vmatpush1.bf16.msra.mxu0 0
      %737 = vmatprep.subr.bf16.mxu0 0
      %738 = vmatpush1.bf16.msra.mxu0 0
      %739 = vmatprep.subr.bf16.mxu0 0
      %740 = vmatpush1.bf16.msra.mxu0 0
      %741 = vmatprep.mubr.bf16.mxu0 0
      %742 = vmatmul.mubr.bf16.gmra.mrb[0].mxu0 %v673
      %v743 = vpop.f32.mrb[0].mxu0
      %v744 = vadd.f32 0.0, %v743
      %v745 = vpop.f32.mrb[0].mxu0
      %v746 = vpop.f32.mrb[0].mxu0
      %v747 = vadd.f32 0.0, %v746
      %v748 = vpop.f32.mrb[0].mxu0
      %749 = vmatprep.mubr.bf16.mxu0 0
      %750 = vmatmul.mubr.bf16.gmra.mrb[0].mxu0 %v675
      %v751 = vpop.f32.mrb[0].mxu0
      %v752 = vadd.f32 0.0, %v751
      %v753 = vpop.f32.mrb[0].mxu0
      %v754 = vpop.f32.mrb[0].mxu0
      %v755 = vadd.f32 0.0, %v754
      %v756 = vpop.f32.mrb[0].mxu0
      %757 = vmatprep.mubr.bf16.mxu0 0
      %758 = vmatmul.mubr.bf16.gmra.mrb[0].mxu0 %v677
      %v759 = vpop.f32.mrb[0].mxu0
      %v760 = vadd.f32 0.0, %v759
      %v761 = vpop.f32.mrb[0].mxu0
      %v762 = vpop.f32.mrb[0].mxu0
      %v763 = vadd.f32 0.0, %v762
      %v764 = vpop.f32.mrb[0].mxu0
      %765 = vmatprep.mubr.bf16.mxu0 0
      %766 = vmatmul.mubr.bf16.gmra.mrb[0].mxu0 %v679
      %v767 = vpop.f32.mrb[0].mxu0
      %v768 = vadd.f32 0.0, %v767
      %v769 = vpop.f32.mrb[0].mxu0
      %v770 = vpop.f32.mrb[0].mxu0
      %v771 = vadd.f32 0.0, %v770
      %v772 = vpop.f32.mrb[0].mxu0
      %773 = vmatprep.mubr.bf16.mxu0 0
      %774 = vmatmul.mubr.bf16.gmra.mrb[0].mxu0 %v681
      %v775 = vpop.f32.mrb[0].mxu0
      %v776 = vadd.f32 0.0, %v775
      %v777 = vpop.f32.mrb[0].mxu0
      %v778 = vpop.f32.mrb[0].mxu0
      %v779 = vadd.f32 0.0, %v778
      %v780 = vpop.f32.mrb[0].mxu0
      %781 = vmatprep.mubr.bf16.mxu0 0
      %782 = vmatmul.mubr.bf16.gmra.mrb[0].mxu0 %v683
      %v783 = vpop.f32.mrb[0].mxu0
      %v784 = vadd.f32 0.0, %v783
      %v785 = vpop.f32.mrb[0].mxu0
      %v786 = vpop.f32.mrb[0].mxu0
      %v787 = vadd.f32 0.0, %v786
      %v788 = vpop.f32.mrb[0].mxu0
      %789 = vmatprep.mubr.bf16.mxu0 0
      %790 = vmatmul.mubr.bf16.gmra.mrb[0].mxu0 %v685
      %v791 = vpop.f32.mrb[0].mxu0
      %v792 = vadd.f32 0.0, %v791
      %v793 = vpop.f32.mrb[0].mxu0
      %v794 = vpop.f32.mrb[0].mxu0
      %v795 = vadd.f32 0.0, %v794
      %v796 = vpop.f32.mrb[0].mxu0
      %797 = vmatprep.mubr.bf16.mxu0 0
      %798 = vmatmul.mubr.bf16.gmra.mrb[0].mxu0 %v687
      %v799 = vpop.f32.mrb[0].mxu0
      %v800 = vadd.f32 0.0, %v799
      %v801 = vpop.f32.mrb[0].mxu0
      %v802 = vpop.f32.mrb[0].mxu0
      %v803 = vadd.f32 0.0, %v802
      %v804 = vpop.f32.mrb[0].mxu0
      %805 = vmatprep.mubr.bf16.mxu0 0
      %806 = vmatmul.mubr.bf16.gmra.mrb[0].mxu0 %v689
      %v807 = vpop.f32.mrb[0].mxu0
      %v808 = vadd.f32 0.0, %v807
      %v809 = vpop.f32.mrb[0].mxu0
      %v810 = vpop.f32.mrb[0].mxu0
      %v811 = vadd.f32 0.0, %v810
      %v812 = vpop.f32.mrb[0].mxu0
      %813 = vmatprep.mubr.bf16.mxu0 0
      %814 = vmatmul.mubr.bf16.gmra.mrb[0].mxu0 %v691
      %v815 = vpop.f32.mrb[0].mxu0
      %v816 = vadd.f32 0.0, %v815
      %v817 = vpop.f32.mrb[0].mxu0
      %v818 = vpop.f32.mrb[0].mxu0
      %v819 = vadd.f32 0.0, %v818
      %v820 = vpop.f32.mrb[0].mxu0
      %821 = vmatprep.mubr.bf16.mxu0 0
      %822 = vmatmul.mubr.bf16.gmra.mrb[0].mxu0 %v693
      %v823 = vpop.f32.mrb[0].mxu0
      %v824 = vadd.f32 0.0, %v823
      %v825 = vpop.f32.mrb[0].mxu0
      %v826 = vpop.f32.mrb[0].mxu0
      %v827 = vadd.f32 0.0, %v826
      %v828 = vpop.f32.mrb[0].mxu0
      %829 = vmatprep.mubr.bf16.mxu0 0
      %830 = vmatmul.mubr.bf16.gmra.mrb[0].mxu0 %v695
      %v831 = vpop.f32.mrb[0].mxu0
      %v832 = vadd.f32 0.0, %v831
      %v833 = vpop.f32.mrb[0].mxu0
      %v834 = vpop.f32.mrb[0].mxu0
      %v835 = vadd.f32 0.0, %v834
      %v836 = vpop.f32.mrb[0].mxu0
      %837 = vmatprep.mubr.bf16.mxu0 0
      %838 = vmatmul.mubr.bf16.gmra.mrb[0].mxu0 %v697
      %v839 = vpop.f32.mrb[0].mxu0
      %v840 = vadd.f32 0.0, %v839
      %v841 = vpop.f32.mrb[0].mxu0
      %v842 = vpop.f32.mrb[0].mxu0
      %v843 = vadd.f32 0.0, %v842
      %v844 = vpop.f32.mrb[0].mxu0
      %845 = vmatprep.mubr.bf16.mxu0 0
      %846 = vmatmul.mubr.bf16.gmra.mrb[0].mxu0 %v699
      %v847 = vpop.f32.mrb[0].mxu0
      %v848 = vadd.f32 0.0, %v847
      %v849 = vpop.f32.mrb[0].mxu0
      %v850 = vpop.f32.mrb[0].mxu0
      %v851 = vadd.f32 0.0, %v850
      %v852 = vpop.f32.mrb[0].mxu0
      %853 = vmatprep.mubr.bf16.mxu0 0
      %854 = vmatmul.mubr.bf16.gmra.mrb[0].mxu0 %v701
      %v855 = vpop.f32.mrb[0].mxu0
      %v856 = vadd.f32 0.0, %v855
      %v857 = vpop.f32.mrb[0].mxu0
      %v858 = vpop.f32.mrb[0].mxu0
      %v859 = vadd.f32 0.0, %v858
      %v860 = vpop.f32.mrb[0].mxu0
      %861 = vmatprep.mubr.bf16.mxu0 0
      %862 = vmatmul.mubr.bf16.gmra.mrb[0].mxu0 %v703
      %v863 = vpop.f32.mrb[0].mxu0
      %v864 = vadd.f32 0.0, %v863
      %v865 = vpop.f32.mrb[0].mxu0
      %v866 = vpop.f32.mrb[0].mxu0
      %v867 = vadd.f32 0.0, %v866
      %v868 = vpop.f32.mrb[0].mxu0
      %869 = vdwg.mxu0
      %v871 = vsel %vm366, %v489, 0
      %v874 = vsel %vm366, %v501, 0
      %v877 = vsel %vm366, %v513, 0
      %v880 = vsel %vm366, %v525, 0
      %v883 = vsel %vm366, %v537, 0
      %v886 = vsel %vm366, %v549, 0
      %v889 = vsel %vm366, %v561, 0
      %v892 = vsel %vm366, %v573, 0
      %v895 = vsel %vm366, %v585, 0
      %v898 = vsel %vm366, %v597, 0
      %v901 = vsel %vm366, %v609, 0
      %v904 = vsel %vm366, %v621, 0
      %v907 = vsel %vm366, %v633, 0
      %v910 = vsel %vm366, %v645, 0
      %v913 = vsel %vm366, %v657, 0
      %v916 = vsel %vm366, %v669, 0
      %v919 = vsel %vm705, %v670, 0
      %921 = vmatprep.subr.bf16.mxu0 0
      %922 = vmatpush1.bf16.msra.mxu0 %v919
      %923 = vmatprep.subr.bf16.mxu0 0
      %924 = vmatpush1.bf16.msra.mxu0 0
      %925 = vmatprep.subr.bf16.mxu0 0
      %926 = vmatpush1.bf16.msra.mxu0 0
      %927 = vmatprep.subr.bf16.mxu0 0
      %928 = vmatpush1.bf16.msra.mxu0 0
      %929 = vmatprep.subr.bf16.mxu0 0
      %930 = vmatpush1.bf16.msra.mxu0 0
      %931 = vmatprep.subr.bf16.mxu0 0
      %932 = vmatpush1.bf16.msra.mxu0 0
      %933 = vmatprep.subr.bf16.mxu0 0
      %934 = vmatpush1.bf16.msra.mxu0 0
      %935 = vmatprep.subr.bf16.mxu0 0
      %936 = vmatpush1.bf16.msra.mxu0 0
      %937 = vmatprep.subr.bf16.mxu0 0
      %938 = vmatpush1.bf16.msra.mxu0 0
      %939 = vmatprep.subr.bf16.mxu0 0
      %940 = vmatpush1.bf16.msra.mxu0 0
      %941 = vmatprep.subr.bf16.mxu0 0
      %942 = vmatpush1.bf16.msra.mxu0 0
      %943 = vmatprep.subr.bf16.mxu0 0
      %944 = vmatpush1.bf16.msra.mxu0 0
      %945 = vmatprep.subr.bf16.mxu0 0
      %946 = vmatpush1.bf16.msra.mxu0 0
      %947 = vmatprep.subr.bf16.mxu0 0
      %948 = vmatpush1.bf16.msra.mxu0 0
      %949 = vmatprep.subr.bf16.mxu0 0
      %950 = vmatpush1.bf16.msra.mxu0 0
      %951 = vmatprep.subr.bf16.mxu0 0
      %952 = vmatpush1.bf16.msra.mxu0 0
      %953 = vmatprep.mubr.bf16.mxu0 0
      %954 = vmatmul.mubr.bf16.gmra.mrb[0].mxu0 %v871
      %v955 = vpop.f32.mrb[0].mxu0
      %v956 = vadd.f32 %v744, %v955
      %v957 = vpop.f32.mrb[0].mxu0
      %v958 = vpop.f32.mrb[0].mxu0
      %v959 = vadd.f32 %v747, %v958
      %v960 = vpop.f32.mrb[0].mxu0
      %961 = vmatprep.mubr.bf16.mxu0 0
      %962 = vmatmul.mubr.bf16.gmra.mrb[0].mxu0 %v874
      %v963 = vpop.f32.mrb[0].mxu0
      %v964 = vadd.f32 %v752, %v963
      %v965 = vpop.f32.mrb[0].mxu0
      %v966 = vpop.f32.mrb[0].mxu0
      %v967 = vadd.f32 %v755, %v966
      %v968 = vpop.f32.mrb[0].mxu0
      %969 = vmatprep.mubr.bf16.mxu0 0
      %970 = vmatmul.mubr.bf16.gmra.mrb[0].mxu0 %v877
      %v971 = vpop.f32.mrb[0].mxu0
      %v972 = vadd.f32 %v760, %v971
      %v973 = vpop.f32.mrb[0].mxu0
      %v974 = vpop.f32.mrb[0].mxu0
      %v975 = vadd.f32 %v763, %v974
      %v976 = vpop.f32.mrb[0].mxu0
      %977 = vmatprep.mubr.bf16.mxu0 0
      %978 = vmatmul.mubr.bf16.gmra.mrb[0].mxu0 %v880
      %v979 = vpop.f32.mrb[0].mxu0
      %v980 = vadd.f32 %v768, %v979
      %v981 = vpop.f32.mrb[0].mxu0
      %v982 = vpop.f32.mrb[0].mxu0
      %v983 = vadd.f32 %v771, %v982
      %v984 = vpop.f32.mrb[0].mxu0
      %985 = vmatprep.mubr.bf16.mxu0 0
      %986 = vmatmul.mubr.bf16.gmra.mrb[0].mxu0 %v883
      %v987 = vpop.f32.mrb[0].mxu0
      %v988 = vadd.f32 %v776, %v987
      %v989 = vpop.f32.mrb[0].mxu0
      %v990 = vpop.f32.mrb[0].mxu0
      %v991 = vadd.f32 %v779, %v990
      %v992 = vpop.f32.mrb[0].mxu0
      %993 = vmatprep.mubr.bf16.mxu0 0
      %994 = vmatmul.mubr.bf16.gmra.mrb[0].mxu0 %v886
      %v995 = vpop.f32.mrb[0].mxu0
      %v996 = vadd.f32 %v784, %v995
      %v997 = vpop.f32.mrb[0].mxu0
      %v998 = vpop.f32.mrb[0].mxu0
      %v999 = vadd.f32 %v787, %v998
      %v1000 = vpop.f32.mrb[0].mxu0
      %1001 = vmatprep.mubr.bf16.mxu0 0
      %1002 = vmatmul.mubr.bf16.gmra.mrb[0].mxu0 %v889
      %v1003 = vpop.f32.mrb[0].mxu0
      %v1004 = vadd.f32 %v792, %v1003
      %v1005 = vpop.f32.mrb[0].mxu0
      %v1006 = vpop.f32.mrb[0].mxu0
      %v1007 = vadd.f32 %v795, %v1006
      %v1008 = vpop.f32.mrb[0].mxu0
      %1009 = vmatprep.mubr.bf16.mxu0 0
      %1010 = vmatmul.mubr.bf16.gmra.mrb[0].mxu0 %v892
      %v1011 = vpop.f32.mrb[0].mxu0
      %v1012 = vadd.f32 %v800, %v1011
      %v1013 = vpop.f32.mrb[0].mxu0
      %v1014 = vpop.f32.mrb[0].mxu0
      %v1015 = vadd.f32 %v803, %v1014
      %v1016 = vpop.f32.mrb[0].mxu0
      %1017 = vmatprep.mubr.bf16.mxu0 0
      %1018 = vmatmul.mubr.bf16.gmra.mrb[0].mxu0 %v895
      %v1019 = vpop.f32.mrb[0].mxu0
      %v1020 = vadd.f32 %v808, %v1019
      %v1021 = vpop.f32.mrb[0].mxu0
      %v1022 = vpop.f32.mrb[0].mxu0
      %v1023 = vadd.f32 %v811, %v1022
      %v1024 = vpop.f32.mrb[0].mxu0
      %1025 = vmatprep.mubr.bf16.mxu0 0
      %1026 = vmatmul.mubr.bf16.gmra.mrb[0].mxu0 %v898
      %v1027 = vpop.f32.mrb[0].mxu0
      %v1028 = vadd.f32 %v816, %v1027
      %v1029 = vpop.f32.mrb[0].mxu0
      %v1030 = vpop.f32.mrb[0].mxu0
      %v1031 = vadd.f32 %v819, %v1030
      %v1032 = vpop.f32.mrb[0].mxu0
      %1033 = vmatprep.mubr.bf16.mxu0 0
      %1034 = vmatmul.mubr.bf16.gmra.mrb[0].mxu0 %v901
      %v1035 = vpop.f32.mrb[0].mxu0
      %v1036 = vadd.f32 %v824, %v1035
      %v1037 = vpop.f32.mrb[0].mxu0
      %v1038 = vpop.f32.mrb[0].mxu0
      %v1039 = vadd.f32 %v827, %v1038
      %v1040 = vpop.f32.mrb[0].mxu0
      %1041 = vmatprep.mubr.bf16.mxu0 0
      %1042 = vmatmul.mubr.bf16.gmra.mrb[0].mxu0 %v904
      %v1043 = vpop.f32.mrb[0].mxu0
      %v1044 = vadd.f32 %v832, %v1043
      %v1045 = vpop.f32.mrb[0].mxu0
      %v1046 = vpop.f32.mrb[0].mxu0
      %v1047 = vadd.f32 %v835, %v1046
      %v1048 = vpop.f32.mrb[0].mxu0
      %1049 = vmatprep.mubr.bf16.mxu0 0
      %1050 = vmatmul.mubr.bf16.gmra.mrb[0].mxu0 %v907
      %v1051 = vpop.f32.mrb[0].mxu0
      %v1052 = vadd.f32 %v840, %v1051
      %v1053 = vpop.f32.mrb[0].mxu0
      %v1054 = vpop.f32.mrb[0].mxu0
      %v1055 = vadd.f32 %v843, %v1054
      %v1056 = vpop.f32.mrb[0].mxu0
      %1057 = vmatprep.mubr.bf16.mxu0 0
      %1058 = vmatmul.mubr.bf16.gmra.mrb[0].mxu0 %v910
      %v1059 = vpop.f32.mrb[0].mxu0
      %v1060 = vadd.f32 %v848, %v1059
      %v1061 = vpop.f32.mrb[0].mxu0
      %v1062 = vpop.f32.mrb[0].mxu0
      %v1063 = vadd.f32 %v851, %v1062
      %v1064 = vpop.f32.mrb[0].mxu0
      %1065 = vmatprep.mubr.bf16.mxu0 0
      %1066 = vmatmul.mubr.bf16.gmra.mrb[0].mxu0 %v913
      %v1067 = vpop.f32.mrb[0].mxu0
      %v1068 = vadd.f32 %v856, %v1067
      %v1069 = vpop.f32.mrb[0].mxu0
      %v1070 = vpop.f32.mrb[0].mxu0
      %v1071 = vadd.f32 %v859, %v1070
      %v1072 = vpop.f32.mrb[0].mxu0
      %1073 = vmatprep.mubr.bf16.mxu0 0
      %1074 = vmatmul.mubr.bf16.gmra.mrb[0].mxu0 %v916
      %v1075 = vpop.f32.mrb[0].mxu0
      %v1076 = vadd.f32 %v864, %v1075
      %v1077 = vpop.f32.mrb[0].mxu0
      %v1078 = vpop.f32.mrb[0].mxu0
      %v1079 = vadd.f32 %v867, %v1078
      %v1080 = vpop.f32.mrb[0].mxu0
      %1081 = vdwg.mxu0
      %v1082 = vld [vmem:[#allocation2 + $0x8] sm:$0xff]
      %v1083 = vld [vmem:[#allocation2 + $0x10] sm:$0x1]
      %v1084 = vld [vmem:[#allocation2 + $0x20] sm:$0xff]
      %v1085 = vld [vmem:[#allocation2 + $0x28] sm:$0x1]
      %v1086 = vld [vmem:[#allocation2 + $0x38] sm:$0xff]
      %v1087 = vld [vmem:[#allocation2 + $0x40] sm:$0x1]
      %v1088 = vld [vmem:[#allocation2 + $0x50] sm:$0xff]
      %v1089 = vld [vmem:[#allocation2 + $0x58] sm:$0x1]
      %v1090 = vld [vmem:[#allocation2 + $0x68] sm:$0xff]
      %v1091 = vld [vmem:[#allocation2 + $0x70] sm:$0x1]
      %v1092 = vld [vmem:[#allocation2 + $0x80] sm:$0xff]
      %v1093 = vld [vmem:[#allocation2 + $0x88] sm:$0x1]
      %v1094 = vld [vmem:[#allocation2 + $0x98] sm:$0xff]
      %v1095 = vld [vmem:[#allocation2 + $0xa0] sm:$0x1]
      %v1096 = vld [vmem:[#allocation2 + $0xb0] sm:$0xff]
      %v1097 = vld [vmem:[#allocation2 + $0xb8] sm:$0x1]
      %v1098 = vld [vmem:[#allocation2 + $0xc8] sm:$0xff]
      %v1099 = vld [vmem:[#allocation2 + $0xd0] sm:$0x1]
      %v1100 = vld [vmem:[#allocation2 + $0xe0] sm:$0xff]
      %v1101 = vld [vmem:[#allocation2 + $0xe8] sm:$0x1]
      %v1102 = vld [vmem:[#allocation2 + $0xf8] sm:$0xff]
      %v1103 = vld [vmem:[#allocation2 + $0x100] sm:$0x1]
      %v1104 = vld [vmem:[#allocation2 + $0x110] sm:$0xff]
      %v1105 = vld [vmem:[#allocation2 + $0x118] sm:$0x1]
      %v1106 = vld [vmem:[#allocation2 + $0x128] sm:$0xff]
      %v1107 = vld [vmem:[#allocation2 + $0x130] sm:$0x1]
      %v1108 = vld [vmem:[#allocation2 + $0x140] sm:$0xff]
      %v1109 = vld [vmem:[#allocation2 + $0x148] sm:$0x1]
      %v1110 = vld [vmem:[#allocation2 + $0x158] sm:$0xff]
      %v1111 = vld [vmem:[#allocation2 + $0x160] sm:$0x1]
      %v1112 = vld [vmem:[#allocation2 + $0x170] sm:$0xff]
      %v1113 = vld [vmem:[#allocation2 + $0x178] sm:$0x1]
      %vm1114 = vsmask.f32 7424
      %v1116 = vshrl.u32 %v1082, 16
      %v1118 = vshll.u32 %v1082, 16
      %v1120 = vrot.slane %v1118, 1
      %v1121 = vor.u32 %v1116, %v1120
      %v1123 = vshll.u32 %v1083, 16
      %v1125 = vrot.slane %v1123, 1
      %v1126 = vsel %vm1114, %v1121, %v1125
      %v1128 = vshrl.u32 %v1084, 16
      %v1130 = vshll.u32 %v1084, 16
      %v1132 = vrot.slane %v1130, 1
      %v1133 = vor.u32 %v1128, %v1132
      %v1135 = vshll.u32 %v1085, 16
      %v1137 = vrot.slane %v1135, 1
      %v1138 = vsel %vm1114, %v1133, %v1137
      %v1140 = vshrl.u32 %v1086, 16
      %v1142 = vshll.u32 %v1086, 16
      %v1144 = vrot.slane %v1142, 1
      %v1145 = vor.u32 %v1140, %v1144
      %v1147 = vshll.u32 %v1087, 16
      %v1149 = vrot.slane %v1147, 1
      %v1150 = vsel %vm1114, %v1145, %v1149
      %v1152 = vshrl.u32 %v1088, 16
      %v1154 = vshll.u32 %v1088, 16
      %v1156 = vrot.slane %v1154, 1
      %v1157 = vor.u32 %v1152, %v1156
      %v1159 = vshll.u32 %v1089, 16
      %v1161 = vrot.slane %v1159, 1
      %v1162 = vsel %vm1114, %v1157, %v1161
      %v1164 = vshrl.u32 %v1090, 16
      %v1166 = vshll.u32 %v1090, 16
      %v1168 = vrot.slane %v1166, 1
      %v1169 = vor.u32 %v1164, %v1168
      %v1171 = vshll.u32 %v1091, 16
      %v1173 = vrot.slane %v1171, 1
      %v1174 = vsel %vm1114, %v1169, %v1173
      %v1176 = vshrl.u32 %v1092, 16
      %v1178 = vshll.u32 %v1092, 16
      %v1180 = vrot.slane %v1178, 1
      %v1181 = vor.u32 %v1176, %v1180
      %v1183 = vshll.u32 %v1093, 16
      %v1185 = vrot.slane %v1183, 1
      %v1186 = vsel %vm1114, %v1181, %v1185
      %v1188 = vshrl.u32 %v1094, 16
      %v1190 = vshll.u32 %v1094, 16
      %v1192 = vrot.slane %v1190, 1
      %v1193 = vor.u32 %v1188, %v1192
      %v1195 = vshll.u32 %v1095, 16
      %v1197 = vrot.slane %v1195, 1
      %v1198 = vsel %vm1114, %v1193, %v1197
      %v1200 = vshrl.u32 %v1096, 16
      %v1202 = vshll.u32 %v1096, 16
      %v1204 = vrot.slane %v1202, 1
      %v1205 = vor.u32 %v1200, %v1204
      %v1207 = vshll.u32 %v1097, 16
      %v1209 = vrot.slane %v1207, 1
      %v1210 = vsel %vm1114, %v1205, %v1209
      %v1212 = vshrl.u32 %v1098, 16
      %v1214 = vshll.u32 %v1098, 16
      %v1216 = vrot.slane %v1214, 1
      %v1217 = vor.u32 %v1212, %v1216
      %v1219 = vshll.u32 %v1099, 16
      %v1221 = vrot.slane %v1219, 1
      %v1222 = vsel %vm1114, %v1217, %v1221
      %v1224 = vshrl.u32 %v1100, 16
      %v1226 = vshll.u32 %v1100, 16
      %v1228 = vrot.slane %v1226, 1
      %v1229 = vor.u32 %v1224, %v1228
      %v1231 = vshll.u32 %v1101, 16
      %v1233 = vrot.slane %v1231, 1
      %v1234 = vsel %vm1114, %v1229, %v1233
      %v1236 = vshrl.u32 %v1102, 16
      %v1238 = vshll.u32 %v1102, 16
      %v1240 = vrot.slane %v1238, 1
      %v1241 = vor.u32 %v1236, %v1240
      %v1243 = vshll.u32 %v1103, 16
      %v1245 = vrot.slane %v1243, 1
      %v1246 = vsel %vm1114, %v1241, %v1245
      %v1248 = vshrl.u32 %v1104, 16
      %v1250 = vshll.u32 %v1104, 16
      %v1252 = vrot.slane %v1250, 1
      %v1253 = vor.u32 %v1248, %v1252
      %v1255 = vshll.u32 %v1105, 16
      %v1257 = vrot.slane %v1255, 1
      %v1258 = vsel %vm1114, %v1253, %v1257
      %v1260 = vshrl.u32 %v1106, 16
      %v1262 = vshll.u32 %v1106, 16
      %v1264 = vrot.slane %v1262, 1
      %v1265 = vor.u32 %v1260, %v1264
      %v1267 = vshll.u32 %v1107, 16
      %v1269 = vrot.slane %v1267, 1
      %v1270 = vsel %vm1114, %v1265, %v1269
      %v1272 = vshrl.u32 %v1108, 16
      %v1274 = vshll.u32 %v1108, 16
      %v1276 = vrot.slane %v1274, 1
      %v1277 = vor.u32 %v1272, %v1276
      %v1279 = vshll.u32 %v1109, 16
      %v1281 = vrot.slane %v1279, 1
      %v1282 = vsel %vm1114, %v1277, %v1281
      %v1284 = vshrl.u32 %v1110, 16
      %v1286 = vshll.u32 %v1110, 16
      %v1288 = vrot.slane %v1286, 1
      %v1289 = vor.u32 %v1284, %v1288
      %v1291 = vshll.u32 %v1111, 16
      %v1293 = vrot.slane %v1291, 1
      %v1294 = vsel %vm1114, %v1289, %v1293
      %v1296 = vshrl.u32 %v1112, 16
      %v1298 = vshll.u32 %v1112, 16
      %v1300 = vrot.slane %v1298, 1
      %v1301 = vor.u32 %v1296, %v1300
      %v1303 = vshll.u32 %v1113, 16
      %v1305 = vrot.slane %v1303, 1
      %v1306 = vsel %vm1114, %v1301, %v1305
      %s1307 = scalar_lea.vmem %s1, 4
      %v1308 = vld [vmem:[%s1307] sm:$0x3]
      %v1310 = vsel %vm366, %v1126, 0
      %v1313 = vsel %vm366, %v1138, 0
      %v1316 = vsel %vm366, %v1150, 0
      %v1319 = vsel %vm366, %v1162, 0
      %v1322 = vsel %vm366, %v1174, 0
      %v1325 = vsel %vm366, %v1186, 0
      %v1328 = vsel %vm366, %v1198, 0
      %v1331 = vsel %vm366, %v1210, 0
      %v1334 = vsel %vm366, %v1222, 0
      %v1337 = vsel %vm366, %v1234, 0
      %v1340 = vsel %vm366, %v1246, 0
      %v1343 = vsel %vm366, %v1258, 0
      %v1346 = vsel %vm366, %v1270, 0
      %v1349 = vsel %vm366, %v1282, 0
      %v1352 = vsel %vm366, %v1294, 0
      %v1355 = vsel %vm366, %v1306, 0
      %v1358 = vsel %vm705, %v1308, 0
      %1360 = vmatprep.subr.bf16.mxu0 0
      %1361 = vmatpush1.bf16.msra.mxu0 %v1358
      %1362 = vmatprep.subr.bf16.mxu0 0
      %1363 = vmatpush1.bf16.msra.mxu0 0
      %1364 = vmatprep.subr.bf16.mxu0 0
      %1365 = vmatpush1.bf16.msra.mxu0 0
      %1366 = vmatprep.subr.bf16.mxu0 0
      %1367 = vmatpush1.bf16.msra.mxu0 0
      %1368 = vmatprep.subr.bf16.mxu0 0
      %1369 = vmatpush1.bf16.msra.mxu0 0
      %1370 = vmatprep.subr.bf16.mxu0 0
      %1371 = vmatpush1.bf16.msra.mxu0 0
      %1372 = vmatprep.subr.bf16.mxu0 0
      %1373 = vmatpush1.bf16.msra.mxu0 0
      %1374 = vmatprep.subr.bf16.mxu0 0
      %1375 = vmatpush1.bf16.msra.mxu0 0
      %1376 = vmatprep.subr.bf16.mxu0 0
      %1377 = vmatpush1.bf16.msra.mxu0 0
      %1378 = vmatprep.subr.bf16.mxu0 0
      %1379 = vmatpush1.bf16.msra.mxu0 0
      %1380 = vmatprep.subr.bf16.mxu0 0
      %1381 = vmatpush1.bf16.msra.mxu0 0
      %1382 = vmatprep.subr.bf16.mxu0 0
      %1383 = vmatpush1.bf16.msra.mxu0 0
      %1384 = vmatprep.subr.bf16.mxu0 0
      %1385 = vmatpush1.bf16.msra.mxu0 0
      %1386 = vmatprep.subr.bf16.mxu0 0
      %1387 = vmatpush1.bf16.msra.mxu0 0
      %1388 = vmatprep.subr.bf16.mxu0 0
      %1389 = vmatpush1.bf16.msra.mxu0 0
      %1390 = vmatprep.subr.bf16.mxu0 0
      %1391 = vmatpush1.bf16.msra.mxu0 0
      %1392 = vmatprep.mubr.bf16.mxu0 0
      %1393 = vmatmul.mubr.bf16.gmra.mrb[0].mxu0 %v1310
      %v1394 = vpop.f32.mrb[0].mxu0
      %v1395 = vadd.f32 0.0, %v1394
      %v1396 = vpop.f32.mrb[0].mxu0
      %v1397 = vpop.f32.mrb[0].mxu0
      %v1398 = vadd.f32 0.0, %v1397
      %v1399 = vpop.f32.mrb[0].mxu0
      %1400 = vmatprep.mubr.bf16.mxu0 0
      %1401 = vmatmul.mubr.bf16.gmra.mrb[0].mxu0 %v1313
      %v1402 = vpop.f32.mrb[0].mxu0
      %v1403 = vadd.f32 0.0, %v1402
      %v1404 = vpop.f32.mrb[0].mxu0
      %v1405 = vpop.f32.mrb[0].mxu0
      %v1406 = vadd.f32 0.0, %v1405
      %v1407 = vpop.f32.mrb[0].mxu0
      %1408 = vmatprep.mubr.bf16.mxu0 0
      %1409 = vmatmul.mubr.bf16.gmra.mrb[0].mxu0 %v1316
      %v1410 = vpop.f32.mrb[0].mxu0
      %v1411 = vadd.f32 0.0, %v1410
      %v1412 = vpop.f32.mrb[0].mxu0
      %v1413 = vpop.f32.mrb[0].mxu0
      %v1414 = vadd.f32 0.0, %v1413
      %v1415 = vpop.f32.mrb[0].mxu0
      %1416 = vmatprep.mubr.bf16.mxu0 0
      %1417 = vmatmul.mubr.bf16.gmra.mrb[0].mxu0 %v1319
      %v1418 = vpop.f32.mrb[0].mxu0
      %v1419 = vadd.f32 0.0, %v1418
      %v1420 = vpop.f32.mrb[0].mxu0
      %v1421 = vpop.f32.mrb[0].mxu0
      %v1422 = vadd.f32 0.0, %v1421
      %v1423 = vpop.f32.mrb[0].mxu0
      %1424 = vmatprep.mubr.bf16.mxu0 0
      %1425 = vmatmul.mubr.bf16.gmra.mrb[0].mxu0 %v1322
      %v1426 = vpop.f32.mrb[0].mxu0
      %v1427 = vadd.f32 0.0, %v1426
      %v1428 = vpop.f32.mrb[0].mxu0
      %v1429 = vpop.f32.mrb[0].mxu0
      %v1430 = vadd.f32 0.0, %v1429
      %v1431 = vpop.f32.mrb[0].mxu0
      %1432 = vmatprep.mubr.bf16.mxu0 0
      %1433 = vmatmul.mubr.bf16.gmra.mrb[0].mxu0 %v1325
      %v1434 = vpop.f32.mrb[0].mxu0
      %v1435 = vadd.f32 0.0, %v1434
      %v1436 = vpop.f32.mrb[0].mxu0
      %v1437 = vpop.f32.mrb[0].mxu0
      %v1438 = vadd.f32 0.0, %v1437
      %v1439 = vpop.f32.mrb[0].mxu0
      %1440 = vmatprep.mubr.bf16.mxu0 0
      %1441 = vmatmul.mubr.bf16.gmra.mrb[0].mxu0 %v1328
      %v1442 = vpop.f32.mrb[0].mxu0
      %v1443 = vadd.f32 0.0, %v1442
      %v1444 = vpop.f32.mrb[0].mxu0
      %v1445 = vpop.f32.mrb[0].mxu0
      %v1446 = vadd.f32 0.0, %v1445
      %v1447 = vpop.f32.mrb[0].mxu0
      %1448 = vmatprep.mubr.bf16.mxu0 0
      %1449 = vmatmul.mubr.bf16.gmra.mrb[0].mxu0 %v1331
      %v1450 = vpop.f32.mrb[0].mxu0
      %v1451 = vadd.f32 0.0, %v1450
      %v1452 = vpop.f32.mrb[0].mxu0
      %v1453 = vpop.f32.mrb[0].mxu0
      %v1454 = vadd.f32 0.0, %v1453
      %v1455 = vpop.f32.mrb[0].mxu0
      %1456 = vmatprep.mubr.bf16.mxu0 0
      %1457 = vmatmul.mubr.bf16.gmra.mrb[0].mxu0 %v1334
      %v1458 = vpop.f32.mrb[0].mxu0
      %v1459 = vadd.f32 0.0, %v1458
      %v1460 = vpop.f32.mrb[0].mxu0
      %v1461 = vpop.f32.mrb[0].mxu0
      %v1462 = vadd.f32 0.0, %v1461
      %v1463 = vpop.f32.mrb[0].mxu0
      %1464 = vmatprep.mubr.bf16.mxu0 0
      %1465 = vmatmul.mubr.bf16.gmra.mrb[0].mxu0 %v1337
      %v1466 = vpop.f32.mrb[0].mxu0
      %v1467 = vadd.f32 0.0, %v1466
      %v1468 = vpop.f32.mrb[0].mxu0
      %v1469 = vpop.f32.mrb[0].mxu0
      %v1470 = vadd.f32 0.0, %v1469
      %v1471 = vpop.f32.mrb[0].mxu0
      %1472 = vmatprep.mubr.bf16.mxu0 0
      %1473 = vmatmul.mubr.bf16.gmra.mrb[0].mxu0 %v1340
      %v1474 = vpop.f32.mrb[0].mxu0
      %v1475 = vadd.f32 0.0, %v1474
      %v1476 = vpop.f32.mrb[0].mxu0
      %v1477 = vpop.f32.mrb[0].mxu0
      %v1478 = vadd.f32 0.0, %v1477
      %v1479 = vpop.f32.mrb[0].mxu0
      %1480 = vmatprep.mubr.bf16.mxu0 0
      %1481 = vmatmul.mubr.bf16.gmra.mrb[0].mxu0 %v1343
      %v1482 = vpop.f32.mrb[0].mxu0
      %v1483 = vadd.f32 0.0, %v1482
      %v1484 = vpop.f32.mrb[0].mxu0
      %v1485 = vpop.f32.mrb[0].mxu0
      %v1486 = vadd.f32 0.0, %v1485
      %v1487 = vpop.f32.mrb[0].mxu0
      %1488 = vmatprep.mubr.bf16.mxu0 0
      %1489 = vmatmul.mubr.bf16.gmra.mrb[0].mxu0 %v1346
      %v1490 = vpop.f32.mrb[0].mxu0
      %v1491 = vadd.f32 0.0, %v1490
      %v1492 = vpop.f32.mrb[0].mxu0
      %v1493 = vpop.f32.mrb[0].mxu0
      %v1494 = vadd.f32 0.0, %v1493
      %v1495 = vpop.f32.mrb[0].mxu0
      %1496 = vmatprep.mubr.bf16.mxu0 0
      %1497 = vmatmul.mubr.bf16.gmra.mrb[0].mxu0 %v1349
      %v1498 = vpop.f32.mrb[0].mxu0
      %v1499 = vadd.f32 0.0, %v1498
      %v1500 = vpop.f32.mrb[0].mxu0
      %v1501 = vpop.f32.mrb[0].mxu0
      %v1502 = vadd.f32 0.0, %v1501
      %v1503 = vpop.f32.mrb[0].mxu0
      %1504 = vmatprep.mubr.bf16.mxu0 0
      %1505 = vmatmul.mubr.bf16.gmra.mrb[0].mxu0 %v1352
      %v1506 = vpop.f32.mrb[0].mxu0
      %v1507 = vadd.f32 0.0, %v1506
      %v1508 = vpop.f32.mrb[0].mxu0
      %v1509 = vpop.f32.mrb[0].mxu0
      %v1510 = vadd.f32 0.0, %v1509
      %v1511 = vpop.f32.mrb[0].mxu0
      %1512 = vmatprep.mubr.bf16.mxu0 0
      %1513 = vmatmul.mubr.bf16.gmra.mrb[0].mxu0 %v1355
      %v1514 = vpop.f32.mrb[0].mxu0
      %v1515 = vadd.f32 0.0, %v1514
      %v1516 = vpop.f32.mrb[0].mxu0
      %v1517 = vpop.f32.mrb[0].mxu0
      %v1518 = vadd.f32 0.0, %v1517
      %v1519 = vpop.f32.mrb[0].mxu0
      %1520 = vdwg.mxu0
      %v1521 = vadd.f32 %v956, %v1395
      %v1522 = vadd.f32 %v959, %v1398
      %v1523 = vadd.f32 %v964, %v1403
      %v1524 = vadd.f32 %v967, %v1406
      %v1525 = vadd.f32 %v972, %v1411
      %v1526 = vadd.f32 %v975, %v1414
      %v1527 = vadd.f32 %v980, %v1419
      %v1528 = vadd.f32 %v983, %v1422
      %v1529 = vadd.f32 %v988, %v1427
      %v1530 = vadd.f32 %v991, %v1430
      %v1531 = vadd.f32 %v996, %v1435
      %v1532 = vadd.f32 %v999, %v1438
      %v1533 = vadd.f32 %v1004, %v1443
      %v1534 = vadd.f32 %v1007, %v1446
      %v1535 = vadd.f32 %v1012, %v1451
      %v1536 = vadd.f32 %v1015, %v1454
      %v1537 = vadd.f32 %v1020, %v1459
      %v1538 = vadd.f32 %v1023, %v1462
      %v1539 = vadd.f32 %v1028, %v1467
      %v1540 = vadd.f32 %v1031, %v1470
      %v1541 = vadd.f32 %v1036, %v1475
      %v1542 = vadd.f32 %v1039, %v1478
      %v1543 = vadd.f32 %v1044, %v1483
      %v1544 = vadd.f32 %v1047, %v1486
      %v1545 = vadd.f32 %v1052, %v1491
      %v1546 = vadd.f32 %v1055, %v1494
      %v1547 = vadd.f32 %v1060, %v1499
      %v1548 = vadd.f32 %v1063, %v1502
      %v1549 = vadd.f32 %v1068, %v1507
      %v1550 = vadd.f32 %v1071, %v1510
      %v1551 = vadd.f32 %v1076, %v1515
      %v1552 = vadd.f32 %v1079, %v1518
      %v1553 = vld [vmem:[%s428] sm:$0x80]
      %v1554 = vld [vmem:[%s428 + $0x8] sm:$0xff]
      %v1555 = vld [vmem:[%s428 + $0x18] sm:$0x80]
      %v1556 = vld [vmem:[%s428 + $0x20] sm:$0xff]
      %v1557 = vld [vmem:[%s428 + $0x30] sm:$0x80]
      %v1558 = vld [vmem:[%s428 + $0x38] sm:$0xff]
      %v1559 = vld [vmem:[%s428 + $0x48] sm:$0x80]
      %v1560 = vld [vmem:[%s428 + $0x50] sm:$0xff]
      %v1561 = vld [vmem:[%s428 + $0x60] sm:$0x80]
      %v1562 = vld [vmem:[%s428 + $0x68] sm:$0xff]
      %v1563 = vld [vmem:[%s428 + $0x78] sm:$0x80]
      %v1564 = vld [vmem:[%s428 + $0x80] sm:$0xff]
      %v1565 = vld [vmem:[%s428 + $0x90] sm:$0x80]
      %v1566 = vld [vmem:[%s428 + $0x98] sm:$0xff]
      %v1567 = vld [vmem:[%s428 + $0xa8] sm:$0x80]
      %v1568 = vld [vmem:[%s428 + $0xb0] sm:$0xff]
      %v1569 = vld [vmem:[%s428 + $0xc0] sm:$0x80]
      %v1570 = vld [vmem:[%s428 + $0xc8] sm:$0xff]
      %v1571 = vld [vmem:[%s428 + $0xd8] sm:$0x80]
      %v1572 = vld [vmem:[%s428 + $0xe0] sm:$0xff]
      %v1573 = vld [vmem:[%s428 + $0xf0] sm:$0x80]
      %v1574 = vld [vmem:[%s428 + $0xf8] sm:$0xff]
      %v1575 = vld [vmem:[%s428 + $0x108] sm:$0x80]
      %v1576 = vld [vmem:[%s428 + $0x110] sm:$0xff]
      %v1577 = vld [vmem:[%s428 + $0x120] sm:$0x80]
      %v1578 = vld [vmem:[%s428 + $0x128] sm:$0xff]
      %v1579 = vld [vmem:[%s428 + $0x138] sm:$0x80]
      %v1580 = vld [vmem:[%s428 + $0x140] sm:$0xff]
      %v1581 = vld [vmem:[%s428 + $0x150] sm:$0x80]
      %v1582 = vld [vmem:[%s428 + $0x158] sm:$0xff]
      %v1583 = vld [vmem:[%s428 + $0x168] sm:$0x80]
      %v1584 = vld [vmem:[%s428 + $0x170] sm:$0xff]
      %v1586 = vshrl.u32 %v1553, 16
      %v1588 = vrot.slane %v1586, 7
      %v1590 = vshrl.u32 %v1554, 16
      %v1592 = vrot.slane %v1590, 7
      %v1593 = vshll.u32 %v1554, 16
      %v1595 = vor.u32 %v1592, %v1593
      %v1596 = vsel %vm477, %v1588, %v1595
      %v1598 = vshrl.u32 %v1555, 16
      %v1600 = vrot.slane %v1598, 7
      %v1602 = vshrl.u32 %v1556, 16
      %v1604 = vrot.slane %v1602, 7
      %v1605 = vshll.u32 %v1556, 16
      %v1607 = vor.u32 %v1604, %v1605
      %v1608 = vsel %vm477, %v1600, %v1607
      %v1610 = vshrl.u32 %v1557, 16
      %v1612 = vrot.slane %v1610, 7
      %v1614 = vshrl.u32 %v1558, 16
      %v1616 = vrot.slane %v1614, 7
      %v1617 = vshll.u32 %v1558, 16
      %v1619 = vor.u32 %v1616, %v1617
      %v1620 = vsel %vm477, %v1612, %v1619
      %v1622 = vshrl.u32 %v1559, 16
      %v1624 = vrot.slane %v1622, 7
      %v1626 = vshrl.u32 %v1560, 16
      %v1628 = vrot.slane %v1626, 7
      %v1629 = vshll.u32 %v1560, 16
      %v1631 = vor.u32 %v1628, %v1629
      %v1632 = vsel %vm477, %v1624, %v1631
      %v1634 = vshrl.u32 %v1561, 16
      %v1636 = vrot.slane %v1634, 7
      %v1638 = vshrl.u32 %v1562, 16
      %v1640 = vrot.slane %v1638, 7
      %v1641 = vshll.u32 %v1562, 16
      %v1643 = vor.u32 %v1640, %v1641
      %v1644 = vsel %vm477, %v1636, %v1643
      %v1646 = vshrl.u32 %v1563, 16
      %v1648 = vrot.slane %v1646, 7
      %v1650 = vshrl.u32 %v1564, 16
      %v1652 = vrot.slane %v1650, 7
      %v1653 = vshll.u32 %v1564, 16
      %v1655 = vor.u32 %v1652, %v1653
      %v1656 = vsel %vm477, %v1648, %v1655
      %v1658 = vshrl.u32 %v1565, 16
      %v1660 = vrot.slane %v1658, 7
      %v1662 = vshrl.u32 %v1566, 16
      %v1664 = vrot.slane %v1662, 7
      %v1665 = vshll.u32 %v1566, 16
      %v1667 = vor.u32 %v1664, %v1665
      %v1668 = vsel %vm477, %v1660, %v1667
      %v1670 = vshrl.u32 %v1567, 16
      %v1672 = vrot.slane %v1670, 7
      %v1674 = vshrl.u32 %v1568, 16
      %v1676 = vrot.slane %v1674, 7
      %v1677 = vshll.u32 %v1568, 16
      %v1679 = vor.u32 %v1676, %v1677
      %v1680 = vsel %vm477, %v1672, %v1679
      %v1682 = vshrl.u32 %v1569, 16
      %v1684 = vrot.slane %v1682, 7
      %v1686 = vshrl.u32 %v1570, 16
      %v1688 = vrot.slane %v1686, 7
      %v1689 = vshll.u32 %v1570, 16
      %v1691 = vor.u32 %v1688, %v1689
      %v1692 = vsel %vm477, %v1684, %v1691
      %v1694 = vshrl.u32 %v1571, 16
      %v1696 = vrot.slane %v1694, 7
      %v1698 = vshrl.u32 %v1572, 16
      %v1700 = vrot.slane %v1698, 7
      %v1701 = vshll.u32 %v1572, 16
      %v1703 = vor.u32 %v1700, %v1701
      %v1704 = vsel %vm477, %v1696, %v1703
      %v1706 = vshrl.u32 %v1573, 16
      %v1708 = vrot.slane %v1706, 7
      %v1710 = vshrl.u32 %v1574, 16
      %v1712 = vrot.slane %v1710, 7
      %v1713 = vshll.u32 %v1574, 16
      %v1715 = vor.u32 %v1712, %v1713
      %v1716 = vsel %vm477, %v1708, %v1715
      %v1718 = vshrl.u32 %v1575, 16
      %v1720 = vrot.slane %v1718, 7
      %v1722 = vshrl.u32 %v1576, 16
      %v1724 = vrot.slane %v1722, 7
      %v1725 = vshll.u32 %v1576, 16
      %v1727 = vor.u32 %v1724, %v1725
      %v1728 = vsel %vm477, %v1720, %v1727
      %v1730 = vshrl.u32 %v1577, 16
      %v1732 = vrot.slane %v1730, 7
      %v1734 = vshrl.u32 %v1578, 16
      %v1736 = vrot.slane %v1734, 7
      %v1737 = vshll.u32 %v1578, 16
      %v1739 = vor.u32 %v1736, %v1737
      %v1740 = vsel %vm477, %v1732, %v1739
      %v1742 = vshrl.u32 %v1579, 16
      %v1744 = vrot.slane %v1742, 7
      %v1746 = vshrl.u32 %v1580, 16
      %v1748 = vrot.slane %v1746, 7
      %v1749 = vshll.u32 %v1580, 16
      %v1751 = vor.u32 %v1748, %v1749
      %v1752 = vsel %vm477, %v1744, %v1751
      %v1754 = vshrl.u32 %v1581, 16
      %v1756 = vrot.slane %v1754, 7
      %v1758 = vshrl.u32 %v1582, 16
      %v1760 = vrot.slane %v1758, 7
      %v1761 = vshll.u32 %v1582, 16
      %v1763 = vor.u32 %v1760, %v1761
      %v1764 = vsel %vm477, %v1756, %v1763
      %v1766 = vshrl.u32 %v1583, 16
      %v1768 = vrot.slane %v1766, 7
      %v1770 = vshrl.u32 %v1584, 16
      %v1772 = vrot.slane %v1770, 7
      %v1773 = vshll.u32 %v1584, 16
      %v1775 = vor.u32 %v1772, %v1773
      %v1776 = vsel %vm477, %v1768, %v1775
      %s1777 = scalar_lea.vmem %s1, 6
      %v1778 = vld [vmem:[%s1777] sm:$0x3]
      %v1780 = vsel %vm366, %v1596, 0
      %v1783 = vsel %vm366, %v1608, 0
      %v1786 = vsel %vm366, %v1620, 0
      %v1789 = vsel %vm366, %v1632, 0
      %v1792 = vsel %vm366, %v1644, 0
      %v1795 = vsel %vm366, %v1656, 0
      %v1798 = vsel %vm366, %v1668, 0
      %v1801 = vsel %vm366, %v1680, 0
      %v1804 = vsel %vm366, %v1692, 0
      %v1807 = vsel %vm366, %v1704, 0
      %v1810 = vsel %vm366, %v1716, 0
      %v1813 = vsel %vm366, %v1728, 0
      %v1816 = vsel %vm366, %v1740, 0
      %v1819 = vsel %vm366, %v1752, 0
      %v1822 = vsel %vm366, %v1764, 0
      %v1825 = vsel %vm366, %v1776, 0
      %v1828 = vsel %vm705, %v1778, 0
      %1830 = vmatprep.subr.bf16.mxu0 0
      %1831 = vmatpush1.bf16.msra.mxu0 %v1828
      %1832 = vmatprep.subr.bf16.mxu0 0
      %1833 = vmatpush1.bf16.msra.mxu0 0
      %1834 = vmatprep.subr.bf16.mxu0 0
      %1835 = vmatpush1.bf16.msra.mxu0 0
      %1836 = vmatprep.subr.bf16.mxu0 0
      %1837 = vmatpush1.bf16.msra.mxu0 0
      %1838 = vmatprep.subr.bf16.mxu0 0
      %1839 = vmatpush1.bf16.msra.mxu0 0
      %1840 = vmatprep.subr.bf16.mxu0 0
      %1841 = vmatpush1.bf16.msra.mxu0 0
      %1842 = vmatprep.subr.bf16.mxu0 0
      %1843 = vmatpush1.bf16.msra.mxu0 0
      %1844 = vmatprep.subr.bf16.mxu0 0
      %1845 = vmatpush1.bf16.msra.mxu0 0
      %1846 = vmatprep.subr.bf16.mxu0 0
      %1847 = vmatpush1.bf16.msra.mxu0 0
      %1848 = vmatprep.subr.bf16.mxu0 0
      %1849 = vmatpush1.bf16.msra.mxu0 0
      %1850 = vmatprep.subr.bf16.mxu0 0
      %1851 = vmatpush1.bf16.msra.mxu0 0
      %1852 = vmatprep.subr.bf16.mxu0 0
      %1853 = vmatpush1.bf16.msra.mxu0 0
      %1854 = vmatprep.subr.bf16.mxu0 0
      %1855 = vmatpush1.bf16.msra.mxu0 0
      %1856 = vmatprep.subr.bf16.mxu0 0
      %1857 = vmatpush1.bf16.msra.mxu0 0
      %1858 = vmatprep.subr.bf16.mxu0 0
      %1859 = vmatpush1.bf16.msra.mxu0 0
      %1860 = vmatprep.subr.bf16.mxu0 0
      %1861 = vmatpush1.bf16.msra.mxu0 0
      %1862 = vmatprep.mubr.bf16.mxu0 0
      %1863 = vmatmul.mubr.bf16.gmra.mrb[0].mxu0 %v1780
      %v1864 = vpop.f32.mrb[0].mxu0
      %v1865 = vadd.f32 0.0, %v1864
      %v1866 = vpop.f32.mrb[0].mxu0
      %v1867 = vpop.f32.mrb[0].mxu0
      %v1868 = vadd.f32 0.0, %v1867
      %v1869 = vpop.f32.mrb[0].mxu0
      %1870 = vmatprep.mubr.bf16.mxu0 0
      %1871 = vmatmul.mubr.bf16.gmra.mrb[0].mxu0 %v1783
      %v1872 = vpop.f32.mrb[0].mxu0
      %v1873 = vadd.f32 0.0, %v1872
      %v1874 = vpop.f32.mrb[0].mxu0
      %v1875 = vpop.f32.mrb[0].mxu0
      %v1876 = vadd.f32 0.0, %v1875
      %v1877 = vpop.f32.mrb[0].mxu0
      %1878 = vmatprep.mubr.bf16.mxu0 0
      %1879 = vmatmul.mubr.bf16.gmra.mrb[0].mxu0 %v1786
      %v1880 = vpop.f32.mrb[0].mxu0
      %v1881 = vadd.f32 0.0, %v1880
      %v1882 = vpop.f32.mrb[0].mxu0
      %v1883 = vpop.f32.mrb[0].mxu0
      %v1884 = vadd.f32 0.0, %v1883
      %v1885 = vpop.f32.mrb[0].mxu0
      %1886 = vmatprep.mubr.bf16.mxu0 0
      %1887 = vmatmul.mubr.bf16.gmra.mrb[0].mxu0 %v1789
      %v1888 = vpop.f32.mrb[0].mxu0
      %v1889 = vadd.f32 0.0, %v1888
      %v1890 = vpop.f32.mrb[0].mxu0
      %v1891 = vpop.f32.mrb[0].mxu0
      %v1892 = vadd.f32 0.0, %v1891
      %v1893 = vpop.f32.mrb[0].mxu0
      %1894 = vmatprep.mubr.bf16.mxu0 0
      %1895 = vmatmul.mubr.bf16.gmra.mrb[0].mxu0 %v1792
      %v1896 = vpop.f32.mrb[0].mxu0
      %v1897 = vadd.f32 0.0, %v1896
      %v1898 = vpop.f32.mrb[0].mxu0
      %v1899 = vpop.f32.mrb[0].mxu0
      %v1900 = vadd.f32 0.0, %v1899
      %v1901 = vpop.f32.mrb[0].mxu0
      %1902 = vmatprep.mubr.bf16.mxu0 0
      %1903 = vmatmul.mubr.bf16.gmra.mrb[0].mxu0 %v1795
      %v1904 = vpop.f32.mrb[0].mxu0
      %v1905 = vadd.f32 0.0, %v1904
      %v1906 = vpop.f32.mrb[0].mxu0
      %v1907 = vpop.f32.mrb[0].mxu0
      %v1908 = vadd.f32 0.0, %v1907
      %v1909 = vpop.f32.mrb[0].mxu0
      %1910 = vmatprep.mubr.bf16.mxu0 0
      %1911 = vmatmul.mubr.bf16.gmra.mrb[0].mxu0 %v1798
      %v1912 = vpop.f32.mrb[0].mxu0
      %v1913 = vadd.f32 0.0, %v1912
      %v1914 = vpop.f32.mrb[0].mxu0
      %v1915 = vpop.f32.mrb[0].mxu0
      %v1916 = vadd.f32 0.0, %v1915
      %v1917 = vpop.f32.mrb[0].mxu0
      %1918 = vmatprep.mubr.bf16.mxu0 0
      %1919 = vmatmul.mubr.bf16.gmra.mrb[0].mxu0 %v1801
      %v1920 = vpop.f32.mrb[0].mxu0
      %v1921 = vadd.f32 0.0, %v1920
      %v1922 = vpop.f32.mrb[0].mxu0
      %v1923 = vpop.f32.mrb[0].mxu0
      %v1924 = vadd.f32 0.0, %v1923
      %v1925 = vpop.f32.mrb[0].mxu0
      %1926 = vmatprep.mubr.bf16.mxu0 0
      %1927 = vmatmul.mubr.bf16.gmra.mrb[0].mxu0 %v1804
      %v1928 = vpop.f32.mrb[0].mxu0
      %v1929 = vadd.f32 0.0, %v1928
      %v1930 = vpop.f32.mrb[0].mxu0
      %v1931 = vpop.f32.mrb[0].mxu0
      %v1932 = vadd.f32 0.0, %v1931
      %v1933 = vpop.f32.mrb[0].mxu0
      %1934 = vmatprep.mubr.bf16.mxu0 0
      %1935 = vmatmul.mubr.bf16.gmra.mrb[0].mxu0 %v1807
      %v1936 = vpop.f32.mrb[0].mxu0
      %v1937 = vadd.f32 0.0, %v1936
      %v1938 = vpop.f32.mrb[0].mxu0
      %v1939 = vpop.f32.mrb[0].mxu0
      %v1940 = vadd.f32 0.0, %v1939
      %v1941 = vpop.f32.mrb[0].mxu0
      %1942 = vmatprep.mubr.bf16.mxu0 0
      %1943 = vmatmul.mubr.bf16.gmra.mrb[0].mxu0 %v1810
      %v1944 = vpop.f32.mrb[0].mxu0
      %v1945 = vadd.f32 0.0, %v1944
      %v1946 = vpop.f32.mrb[0].mxu0
      %v1947 = vpop.f32.mrb[0].mxu0
      %v1948 = vadd.f32 0.0, %v1947
      %v1949 = vpop.f32.mrb[0].mxu0
      %1950 = vmatprep.mubr.bf16.mxu0 0
      %1951 = vmatmul.mubr.bf16.gmra.mrb[0].mxu0 %v1813
      %v1952 = vpop.f32.mrb[0].mxu0
      %v1953 = vadd.f32 0.0, %v1952
      %v1954 = vpop.f32.mrb[0].mxu0
      %v1955 = vpop.f32.mrb[0].mxu0
      %v1956 = vadd.f32 0.0, %v1955
      %v1957 = vpop.f32.mrb[0].mxu0
      %1958 = vmatprep.mubr.bf16.mxu0 0
      %1959 = vmatmul.mubr.bf16.gmra.mrb[0].mxu0 %v1816
      %v1960 = vpop.f32.mrb[0].mxu0
      %v1961 = vadd.f32 0.0, %v1960
      %v1962 = vpop.f32.mrb[0].mxu0
      %v1963 = vpop.f32.mrb[0].mxu0
      %v1964 = vadd.f32 0.0, %v1963
      %v1965 = vpop.f32.mrb[0].mxu0
      %1966 = vmatprep.mubr.bf16.mxu0 0
      %1967 = vmatmul.mubr.bf16.gmra.mrb[0].mxu0 %v1819
      %v1968 = vpop.f32.mrb[0].mxu0
      %v1969 = vadd.f32 0.0, %v1968
      %v1970 = vpop.f32.mrb[0].mxu0
      %v1971 = vpop.f32.mrb[0].mxu0
      %v1972 = vadd.f32 0.0, %v1971
      %v1973 = vpop.f32.mrb[0].mxu0
      %1974 = vmatprep.mubr.bf16.mxu0 0
      %1975 = vmatmul.mubr.bf16.gmra.mrb[0].mxu0 %v1822
      %v1976 = vpop.f32.mrb[0].mxu0
      %v1977 = vadd.f32 0.0, %v1976
      %v1978 = vpop.f32.mrb[0].mxu0
      %v1979 = vpop.f32.mrb[0].mxu0
      %v1980 = vadd.f32 0.0, %v1979
      %v1981 = vpop.f32.mrb[0].mxu0
      %1982 = vmatprep.mubr.bf16.mxu0 0
      %1983 = vmatmul.mubr.bf16.gmra.mrb[0].mxu0 %v1825
      %v1984 = vpop.f32.mrb[0].mxu0
      %v1985 = vadd.f32 0.0, %v1984
      %v1986 = vpop.f32.mrb[0].mxu0
      %v1987 = vpop.f32.mrb[0].mxu0
      %v1988 = vadd.f32 0.0, %v1987
      %v1989 = vpop.f32.mrb[0].mxu0
      %1990 = vdwg.mxu0
      %v1991 = vadd.f32 %v1521, %v1865
      %v1992 = vadd.f32 %v1522, %v1868
      %v1993 = vadd.f32 %v1523, %v1873
      %v1994 = vadd.f32 %v1524, %v1876
      %v1995 = vadd.f32 %v1525, %v1881
      %v1996 = vadd.f32 %v1526, %v1884
      %v1997 = vadd.f32 %v1527, %v1889
      %v1998 = vadd.f32 %v1528, %v1892
      %v1999 = vadd.f32 %v1529, %v1897
      %v2000 = vadd.f32 %v1530, %v1900
      %v2001 = vadd.f32 %v1531, %v1905
      %v2002 = vadd.f32 %v1532, %v1908
      %v2003 = vadd.f32 %v1533, %v1913
      %v2004 = vadd.f32 %v1534, %v1916
      %v2005 = vadd.f32 %v1535, %v1921
      %v2006 = vadd.f32 %v1536, %v1924
      %v2007 = vadd.f32 %v1537, %v1929
      %v2008 = vadd.f32 %v1538, %v1932
      %v2009 = vadd.f32 %v1539, %v1937
      %v2010 = vadd.f32 %v1540, %v1940
      %v2011 = vadd.f32 %v1541, %v1945
      %v2012 = vadd.f32 %v1542, %v1948
      %v2013 = vadd.f32 %v1543, %v1953
      %v2014 = vadd.f32 %v1544, %v1956
      %v2015 = vadd.f32 %v1545, %v1961
      %v2016 = vadd.f32 %v1546, %v1964
      %v2017 = vadd.f32 %v1547, %v1969
      %v2018 = vadd.f32 %v1548, %v1972
      %v2019 = vadd.f32 %v1549, %v1977
      %v2020 = vadd.f32 %v1550, %v1980
      %v2021 = vadd.f32 %v1551, %v1985
      %v2022 = vadd.f32 %v1552, %v1988
      %s2023 = scalar_lea.vmem %s1, 8
      %v2024 = vld [vmem:[%s2023] sm:$0x3]
      %v2025 = vsel %vm366, %v1554, 0
      %v2027 = vsel %vm366, %v1556, 0
      %v2029 = vsel %vm366, %v1558, 0
      %v2031 = vsel %vm366, %v1560, 0
      %v2033 = vsel %vm366, %v1562, 0
      %v2035 = vsel %vm366, %v1564, 0
      %v2037 = vsel %vm366, %v1566, 0
      %v2039 = vsel %vm366, %v1568, 0
      %v2041 = vsel %vm366, %v1570, 0
      %v2043 = vsel %vm366, %v1572, 0
      %v2045 = vsel %vm366, %v1574, 0
      %v2047 = vsel %vm366, %v1576, 0
      %v2049 = vsel %vm366, %v1578, 0
      %v2051 = vsel %vm366, %v1580, 0
      %v2053 = vsel %vm366, %v1582, 0
      %v2055 = vsel %vm366, %v1584, 0
      %v2058 = vsel %vm705, %v2024, 0
      %2060 = vmatprep.subr.bf16.mxu0 0
      %2061 = vmatpush1.bf16.msra.mxu0 %v2058
      %2062 = vmatprep.subr.bf16.mxu0 0
      %2063 = vmatpush1.bf16.msra.mxu0 0
      %2064 = vmatprep.subr.bf16.mxu0 0
      %2065 = vmatpush1.bf16.msra.mxu0 0
      %2066 = vmatprep.subr.bf16.mxu0 0
      %2067 = vmatpush1.bf16.msra.mxu0 0
      %2068 = vmatprep.subr.bf16.mxu0 0
      %2069 = vmatpush1.bf16.msra.mxu0 0
      %2070 = vmatprep.subr.bf16.mxu0 0
      %2071 = vmatpush1.bf16.msra.mxu0 0
      %2072 = vmatprep.subr.bf16.mxu0 0
      %2073 = vmatpush1.bf16.msra.mxu0 0
      %2074 = vmatprep.subr.bf16.mxu0 0
      %2075 = vmatpush1.bf16.msra.mxu0 0
      %2076 = vmatprep.subr.bf16.mxu0 0
      %2077 = vmatpush1.bf16.msra.mxu0 0
      %2078 = vmatprep.subr.bf16.mxu0 0
      %2079 = vmatpush1.bf16.msra.mxu0 0
      %2080 = vmatprep.subr.bf16.mxu0 0
      %2081 = vmatpush1.bf16.msra.mxu0 0
      %2082 = vmatprep.subr.bf16.mxu0 0
      %2083 = vmatpush1.bf16.msra.mxu0 0
      %2084 = vmatprep.subr.bf16.mxu0 0
      %2085 = vmatpush1.bf16.msra.mxu0 0
      %2086 = vmatprep.subr.bf16.mxu0 0
      %2087 = vmatpush1.bf16.msra.mxu0 0
      %2088 = vmatprep.subr.bf16.mxu0 0
      %2089 = vmatpush1.bf16.msra.mxu0 0
      %2090 = vmatprep.subr.bf16.mxu0 0
      %2091 = vmatpush1.bf16.msra.mxu0 0
      %2092 = vmatprep.mubr.bf16.mxu0 0
      %2093 = vmatmul.mubr.bf16.gmra.mrb[0].mxu0 %v2025
      %v2094 = vpop.f32.mrb[0].mxu0
      %v2095 = vadd.f32 0.0, %v2094
      %v2096 = vpop.f32.mrb[0].mxu0
      %v2097 = vpop.f32.mrb[0].mxu0
      %v2098 = vadd.f32 0.0, %v2097
      %v2099 = vpop.f32.mrb[0].mxu0
      %2100 = vmatprep.mubr.bf16.mxu0 0
      %2101 = vmatmul.mubr.bf16.gmra.mrb[0].mxu0 %v2027
      %v2102 = vpop.f32.mrb[0].mxu0
      %v2103 = vadd.f32 0.0, %v2102
      %v2104 = vpop.f32.mrb[0].mxu0
      %v2105 = vpop.f32.mrb[0].mxu0
      %v2106 = vadd.f32 0.0, %v2105
      %v2107 = vpop.f32.mrb[0].mxu0
      %2108 = vmatprep.mubr.bf16.mxu0 0
      %2109 = vmatmul.mubr.bf16.gmra.mrb[0].mxu0 %v2029
      %v2110 = vpop.f32.mrb[0].mxu0
      %v2111 = vadd.f32 0.0, %v2110
      %v2112 = vpop.f32.mrb[0].mxu0
      %v2113 = vpop.f32.mrb[0].mxu0
      %v2114 = vadd.f32 0.0, %v2113
      %v2115 = vpop.f32.mrb[0].mxu0
      %2116 = vmatprep.mubr.bf16.mxu0 0
      %2117 = vmatmul.mubr.bf16.gmra.mrb[0].mxu0 %v2031
      %v2118 = vpop.f32.mrb[0].mxu0
      %v2119 = vadd.f32 0.0, %v2118
      %v2120 = vpop.f32.mrb[0].mxu0
      %v2121 = vpop.f32.mrb[0].mxu0
      %v2122 = vadd.f32 0.0, %v2121
      %v2123 = vpop.f32.mrb[0].mxu0
      %2124 = vmatprep.mubr.bf16.mxu0 0
      %2125 = vmatmul.mubr.bf16.gmra.mrb[0].mxu0 %v2033
      %v2126 = vpop.f32.mrb[0].mxu0
      %v2127 = vadd.f32 0.0, %v2126
      %v2128 = vpop.f32.mrb[0].mxu0
      %v2129 = vpop.f32.mrb[0].mxu0
      %v2130 = vadd.f32 0.0, %v2129
      %v2131 = vpop.f32.mrb[0].mxu0
      %2132 = vmatprep.mubr.bf16.mxu0 0
      %2133 = vmatmul.mubr.bf16.gmra.mrb[0].mxu0 %v2035
      %v2134 = vpop.f32.mrb[0].mxu0
      %v2135 = vadd.f32 0.0, %v2134
      %v2136 = vpop.f32.mrb[0].mxu0
      %v2137 = vpop.f32.mrb[0].mxu0
      %v2138 = vadd.f32 0.0, %v2137
      %v2139 = vpop.f32.mrb[0].mxu0
      %2140 = vmatprep.mubr.bf16.mxu0 0
      %2141 = vmatmul.mubr.bf16.gmra.mrb[0].mxu0 %v2037
      %v2142 = vpop.f32.mrb[0].mxu0
      %v2143 = vadd.f32 0.0, %v2142
      %v2144 = vpop.f32.mrb[0].mxu0
      %v2145 = vpop.f32.mrb[0].mxu0
      %v2146 = vadd.f32 0.0, %v2145
      %v2147 = vpop.f32.mrb[0].mxu0
      %2148 = vmatprep.mubr.bf16.mxu0 0
      %2149 = vmatmul.mubr.bf16.gmra.mrb[0].mxu0 %v2039
      %v2150 = vpop.f32.mrb[0].mxu0
      %v2151 = vadd.f32 0.0, %v2150
      %v2152 = vpop.f32.mrb[0].mxu0
      %v2153 = vpop.f32.mrb[0].mxu0
      %v2154 = vadd.f32 0.0, %v2153
      %v2155 = vpop.f32.mrb[0].mxu0
      %2156 = vmatprep.mubr.bf16.mxu0 0
      %2157 = vmatmul.mubr.bf16.gmra.mrb[0].mxu0 %v2041
      %v2158 = vpop.f32.mrb[0].mxu0
      %v2159 = vadd.f32 0.0, %v2158
      %v2160 = vpop.f32.mrb[0].mxu0
      %v2161 = vpop.f32.mrb[0].mxu0
      %v2162 = vadd.f32 0.0, %v2161
      %v2163 = vpop.f32.mrb[0].mxu0
      %2164 = vmatprep.mubr.bf16.mxu0 0
      %2165 = vmatmul.mubr.bf16.gmra.mrb[0].mxu0 %v2043
      %v2166 = vpop.f32.mrb[0].mxu0
      %v2167 = vadd.f32 0.0, %v2166
      %v2168 = vpop.f32.mrb[0].mxu0
      %v2169 = vpop.f32.mrb[0].mxu0
      %v2170 = vadd.f32 0.0, %v2169
      %v2171 = vpop.f32.mrb[0].mxu0
      %2172 = vmatprep.mubr.bf16.mxu0 0
      %2173 = vmatmul.mubr.bf16.gmra.mrb[0].mxu0 %v2045
      %v2174 = vpop.f32.mrb[0].mxu0
      %v2175 = vadd.f32 0.0, %v2174
      %v2176 = vpop.f32.mrb[0].mxu0
      %v2177 = vpop.f32.mrb[0].mxu0
      %v2178 = vadd.f32 0.0, %v2177
      %v2179 = vpop.f32.mrb[0].mxu0
      %2180 = vmatprep.mubr.bf16.mxu0 0
      %2181 = vmatmul.mubr.bf16.gmra.mrb[0].mxu0 %v2047
      %v2182 = vpop.f32.mrb[0].mxu0
      %v2183 = vadd.f32 0.0, %v2182
      %v2184 = vpop.f32.mrb[0].mxu0
      %v2185 = vpop.f32.mrb[0].mxu0
      %v2186 = vadd.f32 0.0, %v2185
      %v2187 = vpop.f32.mrb[0].mxu0
      %2188 = vmatprep.mubr.bf16.mxu0 0
      %2189 = vmatmul.mubr.bf16.gmra.mrb[0].mxu0 %v2049
      %v2190 = vpop.f32.mrb[0].mxu0
      %v2191 = vadd.f32 0.0, %v2190
      %v2192 = vpop.f32.mrb[0].mxu0
      %v2193 = vpop.f32.mrb[0].mxu0
      %v2194 = vadd.f32 0.0, %v2193
      %v2195 = vpop.f32.mrb[0].mxu0
      %2196 = vmatprep.mubr.bf16.mxu0 0
      %2197 = vmatmul.mubr.bf16.gmra.mrb[0].mxu0 %v2051
      %v2198 = vpop.f32.mrb[0].mxu0
      %v2199 = vadd.f32 0.0, %v2198
      %v2200 = vpop.f32.mrb[0].mxu0
      %v2201 = vpop.f32.mrb[0].mxu0
      %v2202 = vadd.f32 0.0, %v2201
      %v2203 = vpop.f32.mrb[0].mxu0
      %2204 = vmatprep.mubr.bf16.mxu0 0
      %2205 = vmatmul.mubr.bf16.gmra.mrb[0].mxu0 %v2053
      %v2206 = vpop.f32.mrb[0].mxu0
      %v2207 = vadd.f32 0.0, %v2206
      %v2208 = vpop.f32.mrb[0].mxu0
      %v2209 = vpop.f32.mrb[0].mxu0
      %v2210 = vadd.f32 0.0, %v2209
      %v2211 = vpop.f32.mrb[0].mxu0
      %2212 = vmatprep.mubr.bf16.mxu0 0
      %2213 = vmatmul.mubr.bf16.gmra.mrb[0].mxu0 %v2055
      %v2214 = vpop.f32.mrb[0].mxu0
      %v2215 = vadd.f32 0.0, %v2214
      %v2216 = vpop.f32.mrb[0].mxu0
      %v2217 = vpop.f32.mrb[0].mxu0
      %v2218 = vadd.f32 0.0, %v2217
      %v2219 = vpop.f32.mrb[0].mxu0
      %2220 = vdwg.mxu0
      %v2221 = vadd.f32 %v1991, %v2095
      %v2222 = vadd.f32 %v1992, %v2098
      %v2223 = vadd.f32 %v1993, %v2103
      %v2224 = vadd.f32 %v1994, %v2106
      %v2225 = vadd.f32 %v1995, %v2111
      %v2226 = vadd.f32 %v1996, %v2114
      %v2227 = vadd.f32 %v1997, %v2119
      %v2228 = vadd.f32 %v1998, %v2122
      %v2229 = vadd.f32 %v1999, %v2127
      %v2230 = vadd.f32 %v2000, %v2130
      %v2231 = vadd.f32 %v2001, %v2135
      %v2232 = vadd.f32 %v2002, %v2138
      %v2233 = vadd.f32 %v2003, %v2143
      %v2234 = vadd.f32 %v2004, %v2146
      %v2235 = vadd.f32 %v2005, %v2151
      %v2236 = vadd.f32 %v2006, %v2154
      %v2237 = vadd.f32 %v2007, %v2159
      %v2238 = vadd.f32 %v2008, %v2162
      %v2239 = vadd.f32 %v2009, %v2167
      %v2240 = vadd.f32 %v2010, %v2170
      %v2241 = vadd.f32 %v2011, %v2175
      %v2242 = vadd.f32 %v2012, %v2178
      %v2243 = vadd.f32 %v2013, %v2183
      %v2244 = vadd.f32 %v2014, %v2186
      %v2245 = vadd.f32 %v2015, %v2191
      %v2246 = vadd.f32 %v2016, %v2194
      %v2247 = vadd.f32 %v2017, %v2199
      %v2248 = vadd.f32 %v2018, %v2202
      %v2249 = vadd.f32 %v2019, %v2207
      %v2250 = vadd.f32 %v2020, %v2210
      %v2251 = vadd.f32 %v2021, %v2215
      %v2252 = vadd.f32 %v2022, %v2218
      %v2253 = vld [vmem:[%s428 + $0x8] sm:$0xff]
      %v2254 = vld [vmem:[%s428 + $0x10] sm:$0x1]
      %v2255 = vld [vmem:[%s428 + $0x20] sm:$0xff]
      %v2256 = vld [vmem:[%s428 + $0x28] sm:$0x1]
      %v2257 = vld [vmem:[%s428 + $0x38] sm:$0xff]
      %v2258 = vld [vmem:[%s428 + $0x40] sm:$0x1]
      %v2259 = vld [vmem:[%s428 + $0x50] sm:$0xff]
      %v2260 = vld [vmem:[%s428 + $0x58] sm:$0x1]
      %v2261 = vld [vmem:[%s428 + $0x68] sm:$0xff]
      %v2262 = vld [vmem:[%s428 + $0x70] sm:$0x1]
      %v2263 = vld [vmem:[%s428 + $0x80] sm:$0xff]
      %v2264 = vld [vmem:[%s428 + $0x88] sm:$0x1]
      %v2265 = vld [vmem:[%s428 + $0x98] sm:$0xff]
      %v2266 = vld [vmem:[%s428 + $0xa0] sm:$0x1]
      %v2267 = vld [vmem:[%s428 + $0xb0] sm:$0xff]
      %v2268 = vld [vmem:[%s428 + $0xb8] sm:$0x1]
      %v2269 = vld [vmem:[%s428 + $0xc8] sm:$0xff]
      %v2270 = vld [vmem:[%s428 + $0xd0] sm:$0x1]
      %v2271 = vld [vmem:[%s428 + $0xe0] sm:$0xff]
      %v2272 = vld [vmem:[%s428 + $0xe8] sm:$0x1]
      %v2273 = vld [vmem:[%s428 + $0xf8] sm:$0xff]
      %v2274 = vld [vmem:[%s428 + $0x100] sm:$0x1]
      %v2275 = vld [vmem:[%s428 + $0x110] sm:$0xff]
      %v2276 = vld [vmem:[%s428 + $0x118] sm:$0x1]
      %v2277 = vld [vmem:[%s428 + $0x128] sm:$0xff]
      %v2278 = vld [vmem:[%s428 + $0x130] sm:$0x1]
      %v2279 = vld [vmem:[%s428 + $0x140] sm:$0xff]
      %v2280 = vld [vmem:[%s428 + $0x148] sm:$0x1]
      %v2281 = vld [vmem:[%s428 + $0x158] sm:$0xff]
      %v2282 = vld [vmem:[%s428 + $0x160] sm:$0x1]
      %v2283 = vld [vmem:[%s428 + $0x170] sm:$0xff]
      %v2284 = vld [vmem:[%s428 + $0x178] sm:$0x1]
      %v2286 = vshrl.u32 %v2253, 16
      %v2288 = vshll.u32 %v2253, 16
      %v2290 = vrot.slane %v2288, 1
      %v2291 = vor.u32 %v2286, %v2290
      %v2293 = vshll.u32 %v2254, 16
      %v2295 = vrot.slane %v2293, 1
      %v2296 = vsel %vm1114, %v2291, %v2295
      %v2298 = vshrl.u32 %v2255, 16
      %v2300 = vshll.u32 %v2255, 16
      %v2302 = vrot.slane %v2300, 1
      %v2303 = vor.u32 %v2298, %v2302
      %v2305 = vshll.u32 %v2256, 16
      %v2307 = vrot.slane %v2305, 1
      %v2308 = vsel %vm1114, %v2303, %v2307
      %v2310 = vshrl.u32 %v2257, 16
      %v2312 = vshll.u32 %v2257, 16
      %v2314 = vrot.slane %v2312, 1
      %v2315 = vor.u32 %v2310, %v2314
      %v2317 = vshll.u32 %v2258, 16
      %v2319 = vrot.slane %v2317, 1
      %v2320 = vsel %vm1114, %v2315, %v2319
      %v2322 = vshrl.u32 %v2259, 16
      %v2324 = vshll.u32 %v2259, 16
      %v2326 = vrot.slane %v2324, 1
      %v2327 = vor.u32 %v2322, %v2326
      %v2329 = vshll.u32 %v2260, 16
      %v2331 = vrot.slane %v2329, 1
      %v2332 = vsel %vm1114, %v2327, %v2331
      %v2334 = vshrl.u32 %v2261, 16
      %v2336 = vshll.u32 %v2261, 16
      %v2338 = vrot.slane %v2336, 1
      %v2339 = vor.u32 %v2334, %v2338
      %v2341 = vshll.u32 %v2262, 16
      %v2343 = vrot.slane %v2341, 1
      %v2344 = vsel %vm1114, %v2339, %v2343
      %v2346 = vshrl.u32 %v2263, 16
      %v2348 = vshll.u32 %v2263, 16
      %v2350 = vrot.slane %v2348, 1
      %v2351 = vor.u32 %v2346, %v2350
      %v2353 = vshll.u32 %v2264, 16
      %v2355 = vrot.slane %v2353, 1
      %v2356 = vsel %vm1114, %v2351, %v2355
      %v2358 = vshrl.u32 %v2265, 16
      %v2360 = vshll.u32 %v2265, 16
      %v2362 = vrot.slane %v2360, 1
      %v2363 = vor.u32 %v2358, %v2362
      %v2365 = vshll.u32 %v2266, 16
      %v2367 = vrot.slane %v2365, 1
      %v2368 = vsel %vm1114, %v2363, %v2367
      %v2370 = vshrl.u32 %v2267, 16
      %v2372 = vshll.u32 %v2267, 16
      %v2374 = vrot.slane %v2372, 1
      %v2375 = vor.u32 %v2370, %v2374
      %v2377 = vshll.u32 %v2268, 16
      %v2379 = vrot.slane %v2377, 1
      %v2380 = vsel %vm1114, %v2375, %v2379
      %v2382 = vshrl.u32 %v2269, 16
      %v2384 = vshll.u32 %v2269, 16
      %v2386 = vrot.slane %v2384, 1
      %v2387 = vor.u32 %v2382, %v2386
      %v2389 = vshll.u32 %v2270, 16
      %v2391 = vrot.slane %v2389, 1
      %v2392 = vsel %vm1114, %v2387, %v2391
      %v2394 = vshrl.u32 %v2271, 16
      %v2396 = vshll.u32 %v2271, 16
      %v2398 = vrot.slane %v2396, 1
      %v2399 = vor.u32 %v2394, %v2398
      %v2401 = vshll.u32 %v2272, 16
      %v2403 = vrot.slane %v2401, 1
      %v2404 = vsel %vm1114, %v2399, %v2403
      %v2406 = vshrl.u32 %v2273, 16
      %v2408 = vshll.u32 %v2273, 16
      %v2410 = vrot.slane %v2408, 1
      %v2411 = vor.u32 %v2406, %v2410
      %v2413 = vshll.u32 %v2274, 16
      %v2415 = vrot.slane %v2413, 1
      %v2416 = vsel %vm1114, %v2411, %v2415
      %v2418 = vshrl.u32 %v2275, 16
      %v2420 = vshll.u32 %v2275, 16
      %v2422 = vrot.slane %v2420, 1
      %v2423 = vor.u32 %v2418, %v2422
      %v2425 = vshll.u32 %v2276, 16
      %v2427 = vrot.slane %v2425, 1
      %v2428 = vsel %vm1114, %v2423, %v2427
      %v2430 = vshrl.u32 %v2277, 16
      %v2432 = vshll.u32 %v2277, 16
      %v2434 = vrot.slane %v2432, 1
      %v2435 = vor.u32 %v2430, %v2434
      %v2437 = vshll.u32 %v2278, 16
      %v2439 = vrot.slane %v2437, 1
      %v2440 = vsel %vm1114, %v2435, %v2439
      %v2442 = vshrl.u32 %v2279, 16
      %v2444 = vshll.u32 %v2279, 16
      %v2446 = vrot.slane %v2444, 1
      %v2447 = vor.u32 %v2442, %v2446
      %v2449 = vshll.u32 %v2280, 16
      %v2451 = vrot.slane %v2449, 1
      %v2452 = vsel %vm1114, %v2447, %v2451
      %v2454 = vshrl.u32 %v2281, 16
      %v2456 = vshll.u32 %v2281, 16
      %v2458 = vrot.slane %v2456, 1
      %v2459 = vor.u32 %v2454, %v2458
      %v2461 = vshll.u32 %v2282, 16
      %v2463 = vrot.slane %v2461, 1
      %v2464 = vsel %vm1114, %v2459, %v2463
      %v2466 = vshrl.u32 %v2283, 16
      %v2468 = vshll.u32 %v2283, 16
      %v2470 = vrot.slane %v2468, 1
      %v2471 = vor.u32 %v2466, %v2470
      %v2473 = vshll.u32 %v2284, 16
      %v2475 = vrot.slane %v2473, 1
      %v2476 = vsel %vm1114, %v2471, %v2475
      %s2477 = scalar_lea.vmem %s1, 10
      %v2478 = vld [vmem:[%s2477] sm:$0x3]
      %v2480 = vsel %vm366, %v2296, 0
      %v2483 = vsel %vm366, %v2308, 0
      %v2486 = vsel %vm366, %v2320, 0
      %v2489 = vsel %vm366, %v2332, 0
      %v2492 = vsel %vm366, %v2344, 0
      %v2495 = vsel %vm366, %v2356, 0
      %v2498 = vsel %vm366, %v2368, 0
      %v2501 = vsel %vm366, %v2380, 0
      %v2504 = vsel %vm366, %v2392, 0
      %v2507 = vsel %vm366, %v2404, 0
      %v2510 = vsel %vm366, %v2416, 0
      %v2513 = vsel %vm366, %v2428, 0
      %v2516 = vsel %vm366, %v2440, 0
      %v2519 = vsel %vm366, %v2452, 0
      %v2522 = vsel %vm366, %v2464, 0
      %v2525 = vsel %vm366, %v2476, 0
      %v2528 = vsel %vm705, %v2478, 0
      %2530 = vmatprep.subr.bf16.mxu0 0
      %2531 = vmatpush1.bf16.msra.mxu0 %v2528
      %2532 = vmatprep.subr.bf16.mxu0 0
      %2533 = vmatpush1.bf16.msra.mxu0 0
      %2534 = vmatprep.subr.bf16.mxu0 0
      %2535 = vmatpush1.bf16.msra.mxu0 0
      %2536 = vmatprep.subr.bf16.mxu0 0
      %2537 = vmatpush1.bf16.msra.mxu0 0
      %2538 = vmatprep.subr.bf16.mxu0 0
      %2539 = vmatpush1.bf16.msra.mxu0 0
      %2540 = vmatprep.subr.bf16.mxu0 0
      %2541 = vmatpush1.bf16.msra.mxu0 0
      %2542 = vmatprep.subr.bf16.mxu0 0
      %2543 = vmatpush1.bf16.msra.mxu0 0
      %2544 = vmatprep.subr.bf16.mxu0 0
      %2545 = vmatpush1.bf16.msra.mxu0 0
      %2546 = vmatprep.subr.bf16.mxu0 0
      %2547 = vmatpush1.bf16.msra.mxu0 0
      %2548 = vmatprep.subr.bf16.mxu0 0
      %2549 = vmatpush1.bf16.msra.mxu0 0
      %2550 = vmatprep.subr.bf16.mxu0 0
      %2551 = vmatpush1.bf16.msra.mxu0 0
      %2552 = vmatprep.subr.bf16.mxu0 0
      %2553 = vmatpush1.bf16.msra.mxu0 0
      %2554 = vmatprep.subr.bf16.mxu0 0
      %2555 = vmatpush1.bf16.msra.mxu0 0
      %2556 = vmatprep.subr.bf16.mxu0 0
      %2557 = vmatpush1.bf16.msra.mxu0 0
      %2558 = vmatprep.subr.bf16.mxu0 0
      %2559 = vmatpush1.bf16.msra.mxu0 0
      %2560 = vmatprep.subr.bf16.mxu0 0
      %2561 = vmatpush1.bf16.msra.mxu0 0
      %2562 = vmatprep.mubr.bf16.mxu0 0
      %2563 = vmatmul.mubr.bf16.gmra.mrb[0].mxu0 %v2480
      %v2564 = vpop.f32.mrb[0].mxu0
      %v2565 = vadd.f32 0.0, %v2564
      %v2566 = vpop.f32.mrb[0].mxu0
      %v2567 = vpop.f32.mrb[0].mxu0
      %v2568 = vadd.f32 0.0, %v2567
      %v2569 = vpop.f32.mrb[0].mxu0
      %2570 = vmatprep.mubr.bf16.mxu0 0
      %2571 = vmatmul.mubr.bf16.gmra.mrb[0].mxu0 %v2483
      %v2572 = vpop.f32.mrb[0].mxu0
      %v2573 = vadd.f32 0.0, %v2572
      %v2574 = vpop.f32.mrb[0].mxu0
      %v2575 = vpop.f32.mrb[0].mxu0
      %v2576 = vadd.f32 0.0, %v2575
      %v2577 = vpop.f32.mrb[0].mxu0
      %2578 = vmatprep.mubr.bf16.mxu0 0
      %2579 = vmatmul.mubr.bf16.gmra.mrb[0].mxu0 %v2486
      %v2580 = vpop.f32.mrb[0].mxu0
      %v2581 = vadd.f32 0.0, %v2580
      %v2582 = vpop.f32.mrb[0].mxu0
      %v2583 = vpop.f32.mrb[0].mxu0
      %v2584 = vadd.f32 0.0, %v2583
      %v2585 = vpop.f32.mrb[0].mxu0
      %2586 = vmatprep.mubr.bf16.mxu0 0
      %2587 = vmatmul.mubr.bf16.gmra.mrb[0].mxu0 %v2489
      %v2588 = vpop.f32.mrb[0].mxu0
      %v2589 = vadd.f32 0.0, %v2588
      %v2590 = vpop.f32.mrb[0].mxu0
      %v2591 = vpop.f32.mrb[0].mxu0
      %v2592 = vadd.f32 0.0, %v2591
      %v2593 = vpop.f32.mrb[0].mxu0
      %2594 = vmatprep.mubr.bf16.mxu0 0
      %2595 = vmatmul.mubr.bf16.gmra.mrb[0].mxu0 %v2492
      %v2596 = vpop.f32.mrb[0].mxu0
      %v2597 = vadd.f32 0.0, %v2596
      %v2598 = vpop.f32.mrb[0].mxu0
      %v2599 = vpop.f32.mrb[0].mxu0
      %v2600 = vadd.f32 0.0, %v2599
      %v2601 = vpop.f32.mrb[0].mxu0
      %2602 = vmatprep.mubr.bf16.mxu0 0
      %2603 = vmatmul.mubr.bf16.gmra.mrb[0].mxu0 %v2495
      %v2604 = vpop.f32.mrb[0].mxu0
      %v2605 = vadd.f32 0.0, %v2604
      %v2606 = vpop.f32.mrb[0].mxu0
      %v2607 = vpop.f32.mrb[0].mxu0
      %v2608 = vadd.f32 0.0, %v2607
      %v2609 = vpop.f32.mrb[0].mxu0
      %2610 = vmatprep.mubr.bf16.mxu0 0
      %2611 = vmatmul.mubr.bf16.gmra.mrb[0].mxu0 %v2498
      %v2612 = vpop.f32.mrb[0].mxu0
      %v2613 = vadd.f32 0.0, %v2612
      %v2614 = vpop.f32.mrb[0].mxu0
      %v2615 = vpop.f32.mrb[0].mxu0
      %v2616 = vadd.f32 0.0, %v2615
      %v2617 = vpop.f32.mrb[0].mxu0
      %2618 = vmatprep.mubr.bf16.mxu0 0
      %2619 = vmatmul.mubr.bf16.gmra.mrb[0].mxu0 %v2501
      %v2620 = vpop.f32.mrb[0].mxu0
      %v2621 = vadd.f32 0.0, %v2620
      %v2622 = vpop.f32.mrb[0].mxu0
      %v2623 = vpop.f32.mrb[0].mxu0
      %v2624 = vadd.f32 0.0, %v2623
      %v2625 = vpop.f32.mrb[0].mxu0
      %2626 = vmatprep.mubr.bf16.mxu0 0
      %2627 = vmatmul.mubr.bf16.gmra.mrb[0].mxu0 %v2504
      %v2628 = vpop.f32.mrb[0].mxu0
      %v2629 = vadd.f32 0.0, %v2628
      %v2630 = vpop.f32.mrb[0].mxu0
      %v2631 = vpop.f32.mrb[0].mxu0
      %v2632 = vadd.f32 0.0, %v2631
      %v2633 = vpop.f32.mrb[0].mxu0
      %2634 = vmatprep.mubr.bf16.mxu0 0
      %2635 = vmatmul.mubr.bf16.gmra.mrb[0].mxu0 %v2507
      %v2636 = vpop.f32.mrb[0].mxu0
      %v2637 = vadd.f32 0.0, %v2636
      %v2638 = vpop.f32.mrb[0].mxu0
      %v2639 = vpop.f32.mrb[0].mxu0
      %v2640 = vadd.f32 0.0, %v2639
      %v2641 = vpop.f32.mrb[0].mxu0
      %2642 = vmatprep.mubr.bf16.mxu0 0
      %2643 = vmatmul.mubr.bf16.gmra.mrb[0].mxu0 %v2510
      %v2644 = vpop.f32.mrb[0].mxu0
      %v2645 = vadd.f32 0.0, %v2644
      %v2646 = vpop.f32.mrb[0].mxu0
      %v2647 = vpop.f32.mrb[0].mxu0
      %v2648 = vadd.f32 0.0, %v2647
      %v2649 = vpop.f32.mrb[0].mxu0
      %2650 = vmatprep.mubr.bf16.mxu0 0
      %2651 = vmatmul.mubr.bf16.gmra.mrb[0].mxu0 %v2513
      %v2652 = vpop.f32.mrb[0].mxu0
      %v2653 = vadd.f32 0.0, %v2652
      %v2654 = vpop.f32.mrb[0].mxu0
      %v2655 = vpop.f32.mrb[0].mxu0
      %v2656 = vadd.f32 0.0, %v2655
      %v2657 = vpop.f32.mrb[0].mxu0
      %2658 = vmatprep.mubr.bf16.mxu0 0
      %2659 = vmatmul.mubr.bf16.gmra.mrb[0].mxu0 %v2516
      %v2660 = vpop.f32.mrb[0].mxu0
      %v2661 = vadd.f32 0.0, %v2660
      %v2662 = vpop.f32.mrb[0].mxu0
      %v2663 = vpop.f32.mrb[0].mxu0
      %v2664 = vadd.f32 0.0, %v2663
      %v2665 = vpop.f32.mrb[0].mxu0
      %2666 = vmatprep.mubr.bf16.mxu0 0
      %2667 = vmatmul.mubr.bf16.gmra.mrb[0].mxu0 %v2519
      %v2668 = vpop.f32.mrb[0].mxu0
      %v2669 = vadd.f32 0.0, %v2668
      %v2670 = vpop.f32.mrb[0].mxu0
      %v2671 = vpop.f32.mrb[0].mxu0
      %v2672 = vadd.f32 0.0, %v2671
      %v2673 = vpop.f32.mrb[0].mxu0
      %2674 = vmatprep.mubr.bf16.mxu0 0
      %2675 = vmatmul.mubr.bf16.gmra.mrb[0].mxu0 %v2522
      %v2676 = vpop.f32.mrb[0].mxu0
      %v2677 = vadd.f32 0.0, %v2676
      %v2678 = vpop.f32.mrb[0].mxu0
      %v2679 = vpop.f32.mrb[0].mxu0
      %v2680 = vadd.f32 0.0, %v2679
      %v2681 = vpop.f32.mrb[0].mxu0
      %2682 = vmatprep.mubr.bf16.mxu0 0
      %2683 = vmatmul.mubr.bf16.gmra.mrb[0].mxu0 %v2525
      %v2684 = vpop.f32.mrb[0].mxu0
      %v2685 = vadd.f32 0.0, %v2684
      %v2686 = vpop.f32.mrb[0].mxu0
      %v2687 = vpop.f32.mrb[0].mxu0
      %v2688 = vadd.f32 0.0, %v2687
      %v2689 = vpop.f32.mrb[0].mxu0
      %2690 = vdwg.mxu0
      %v2691 = vadd.f32 %v2221, %v2565
      %v2692 = vadd.f32 %v2222, %v2568
      %v2693 = vadd.f32 %v2223, %v2573
      %v2694 = vadd.f32 %v2224, %v2576
      %v2695 = vadd.f32 %v2225, %v2581
      %v2696 = vadd.f32 %v2226, %v2584
      %v2697 = vadd.f32 %v2227, %v2589
      %v2698 = vadd.f32 %v2228, %v2592
      %v2699 = vadd.f32 %v2229, %v2597
      %v2700 = vadd.f32 %v2230, %v2600
      %v2701 = vadd.f32 %v2231, %v2605
      %v2702 = vadd.f32 %v2232, %v2608
      %v2703 = vadd.f32 %v2233, %v2613
      %v2704 = vadd.f32 %v2234, %v2616
      %v2705 = vadd.f32 %v2235, %v2621
      %v2706 = vadd.f32 %v2236, %v2624
      %v2707 = vadd.f32 %v2237, %v2629
      %v2708 = vadd.f32 %v2238, %v2632
      %v2709 = vadd.f32 %v2239, %v2637
      %v2710 = vadd.f32 %v2240, %v2640
      %v2711 = vadd.f32 %v2241, %v2645
      %v2712 = vadd.f32 %v2242, %v2648
      %v2713 = vadd.f32 %v2243, %v2653
      %v2714 = vadd.f32 %v2244, %v2656
      %v2715 = vadd.f32 %v2245, %v2661
      %v2716 = vadd.f32 %v2246, %v2664
      %v2717 = vadd.f32 %v2247, %v2669
      %v2718 = vadd.f32 %v2248, %v2672
      %v2719 = vadd.f32 %v2249, %v2677
      %v2720 = vadd.f32 %v2250, %v2680
      %v2721 = vadd.f32 %v2251, %v2685
      %v2722 = vadd.f32 %v2252, %v2688
      %s2723 = scalar_lea.vmem [#allocation2], 48
      %v2724 = vld [vmem:[%s2723] sm:$0x80]
      %v2725 = vld [vmem:[%s2723 + $0x8] sm:$0xff]
      %v2726 = vld [vmem:[%s2723 + $0x18] sm:$0x80]
      %v2727 = vld [vmem:[%s2723 + $0x20] sm:$0xff]
      %v2728 = vld [vmem:[%s2723 + $0x30] sm:$0x80]
      %v2729 = vld [vmem:[%s2723 + $0x38] sm:$0xff]
      %v2730 = vld [vmem:[%s2723 + $0x48] sm:$0x80]
      %v2731 = vld [vmem:[%s2723 + $0x50] sm:$0xff]
      %v2732 = vld [vmem:[%s2723 + $0x60] sm:$0x80]
      %v2733 = vld [vmem:[%s2723 + $0x68] sm:$0xff]
      %v2734 = vld [vmem:[%s2723 + $0x78] sm:$0x80]
      %v2735 = vld [vmem:[%s2723 + $0x80] sm:$0xff]
      %v2736 = vld [vmem:[%s2723 + $0x90] sm:$0x80]
      %v2737 = vld [vmem:[%s2723 + $0x98] sm:$0xff]
      %v2738 = vld [vmem:[%s2723 + $0xa8] sm:$0x80]
      %v2739 = vld [vmem:[%s2723 + $0xb0] sm:$0xff]
      %v2740 = vld [vmem:[%s2723 + $0xc0] sm:$0x80]
      %v2741 = vld [vmem:[%s2723 + $0xc8] sm:$0xff]
      %v2742 = vld [vmem:[%s2723 + $0xd8] sm:$0x80]
      %v2743 = vld [vmem:[%s2723 + $0xe0] sm:$0xff]
      %v2744 = vld [vmem:[%s2723 + $0xf0] sm:$0x80]
      %v2745 = vld [vmem:[%s2723 + $0xf8] sm:$0xff]
      %v2746 = vld [vmem:[%s2723 + $0x108] sm:$0x80]
      %v2747 = vld [vmem:[%s2723 + $0x110] sm:$0xff]
      %v2748 = vld [vmem:[%s2723 + $0x120] sm:$0x80]
      %v2749 = vld [vmem:[%s2723 + $0x128] sm:$0xff]
      %v2750 = vld [vmem:[%s2723 + $0x138] sm:$0x80]
      %v2751 = vld [vmem:[%s2723 + $0x140] sm:$0xff]
      %v2752 = vld [vmem:[%s2723 + $0x150] sm:$0x80]
      %v2753 = vld [vmem:[%s2723 + $0x158] sm:$0xff]
      %v2754 = vld [vmem:[%s2723 + $0x168] sm:$0x80]
      %v2755 = vld [vmem:[%s2723 + $0x170] sm:$0xff]
      %v2757 = vshrl.u32 %v2724, 16
      %v2759 = vrot.slane %v2757, 7
      %v2761 = vshrl.u32 %v2725, 16
      %v2763 = vrot.slane %v2761, 7
      %v2764 = vshll.u32 %v2725, 16
      %v2766 = vor.u32 %v2763, %v2764
      %v2767 = vsel %vm477, %v2759, %v2766
      %v2769 = vshrl.u32 %v2726, 16
      %v2771 = vrot.slane %v2769, 7
      %v2773 = vshrl.u32 %v2727, 16
      %v2775 = vrot.slane %v2773, 7
      %v2776 = vshll.u32 %v2727, 16
      %v2778 = vor.u32 %v2775, %v2776
      %v2779 = vsel %vm477, %v2771, %v2778
      %v2781 = vshrl.u32 %v2728, 16
      %v2783 = vrot.slane %v2781, 7
      %v2785 = vshrl.u32 %v2729, 16
      %v2787 = vrot.slane %v2785, 7
      %v2788 = vshll.u32 %v2729, 16
      %v2790 = vor.u32 %v2787, %v2788
      %v2791 = vsel %vm477, %v2783, %v2790
      %v2793 = vshrl.u32 %v2730, 16
      %v2795 = vrot.slane %v2793, 7
      %v2797 = vshrl.u32 %v2731, 16
      %v2799 = vrot.slane %v2797, 7
      %v2800 = vshll.u32 %v2731, 16
      %v2802 = vor.u32 %v2799, %v2800
      %v2803 = vsel %vm477, %v2795, %v2802
      %v2805 = vshrl.u32 %v2732, 16
      %v2807 = vrot.slane %v2805, 7
      %v2809 = vshrl.u32 %v2733, 16
      %v2811 = vrot.slane %v2809, 7
      %v2812 = vshll.u32 %v2733, 16
      %v2814 = vor.u32 %v2811, %v2812
      %v2815 = vsel %vm477, %v2807, %v2814
      %v2817 = vshrl.u32 %v2734, 16
      %v2819 = vrot.slane %v2817, 7
      %v2821 = vshrl.u32 %v2735, 16
      %v2823 = vrot.slane %v2821, 7
      %v2824 = vshll.u32 %v2735, 16
      %v2826 = vor.u32 %v2823, %v2824
      %v2827 = vsel %vm477, %v2819, %v2826
      %v2829 = vshrl.u32 %v2736, 16
      %v2831 = vrot.slane %v2829, 7
      %v2833 = vshrl.u32 %v2737, 16
      %v2835 = vrot.slane %v2833, 7
      %v2836 = vshll.u32 %v2737, 16
      %v2838 = vor.u32 %v2835, %v2836
      %v2839 = vsel %vm477, %v2831, %v2838
      %v2841 = vshrl.u32 %v2738, 16
      %v2843 = vrot.slane %v2841, 7
      %v2845 = vshrl.u32 %v2739, 16
      %v2847 = vrot.slane %v2845, 7
      %v2848 = vshll.u32 %v2739, 16
      %v2850 = vor.u32 %v2847, %v2848
      %v2851 = vsel %vm477, %v2843, %v2850
      %v2853 = vshrl.u32 %v2740, 16
      %v2855 = vrot.slane %v2853, 7
      %v2857 = vshrl.u32 %v2741, 16
      %v2859 = vrot.slane %v2857, 7
      %v2860 = vshll.u32 %v2741, 16
      %v2862 = vor.u32 %v2859, %v2860
      %v2863 = vsel %vm477, %v2855, %v2862
      %v2865 = vshrl.u32 %v2742, 16
      %v2867 = vrot.slane %v2865, 7
      %v2869 = vshrl.u32 %v2743, 16
      %v2871 = vrot.slane %v2869, 7
      %v2872 = vshll.u32 %v2743, 16
      %v2874 = vor.u32 %v2871, %v2872
      %v2875 = vsel %vm477, %v2867, %v2874
      %v2877 = vshrl.u32 %v2744, 16
      %v2879 = vrot.slane %v2877, 7
      %v2881 = vshrl.u32 %v2745, 16
      %v2883 = vrot.slane %v2881, 7
      %v2884 = vshll.u32 %v2745, 16
      %v2886 = vor.u32 %v2883, %v2884
      %v2887 = vsel %vm477, %v2879, %v2886
      %v2889 = vshrl.u32 %v2746, 16
      %v2891 = vrot.slane %v2889, 7
      %v2893 = vshrl.u32 %v2747, 16
      %v2895 = vrot.slane %v2893, 7
      %v2896 = vshll.u32 %v2747, 16
      %v2898 = vor.u32 %v2895, %v2896
      %v2899 = vsel %vm477, %v2891, %v2898
      %v2901 = vshrl.u32 %v2748, 16
      %v2903 = vrot.slane %v2901, 7
      %v2905 = vshrl.u32 %v2749, 16
      %v2907 = vrot.slane %v2905, 7
      %v2908 = vshll.u32 %v2749, 16
      %v2910 = vor.u32 %v2907, %v2908
      %v2911 = vsel %vm477, %v2903, %v2910
      %v2913 = vshrl.u32 %v2750, 16
      %v2915 = vrot.slane %v2913, 7
      %v2917 = vshrl.u32 %v2751, 16
      %v2919 = vrot.slane %v2917, 7
      %v2920 = vshll.u32 %v2751, 16
      %v2922 = vor.u32 %v2919, %v2920
      %v2923 = vsel %vm477, %v2915, %v2922
      %v2925 = vshrl.u32 %v2752, 16
      %v2927 = vrot.slane %v2925, 7
      %v2929 = vshrl.u32 %v2753, 16
      %v2931 = vrot.slane %v2929, 7
      %v2932 = vshll.u32 %v2753, 16
      %v2934 = vor.u32 %v2931, %v2932
      %v2935 = vsel %vm477, %v2927, %v2934
      %v2937 = vshrl.u32 %v2754, 16
      %v2939 = vrot.slane %v2937, 7
      %v2941 = vshrl.u32 %v2755, 16
      %v2943 = vrot.slane %v2941, 7
      %v2944 = vshll.u32 %v2755, 16
      %v2946 = vor.u32 %v2943, %v2944
      %v2947 = vsel %vm477, %v2939, %v2946
      %s2948 = scalar_lea.vmem %s1, 12
      %v2949 = vld [vmem:[%s2948] sm:$0x3]
      %v2951 = vsel %vm366, %v2767, 0
      %v2954 = vsel %vm366, %v2779, 0
      %v2957 = vsel %vm366, %v2791, 0
      %v2960 = vsel %vm366, %v2803, 0
      %v2963 = vsel %vm366, %v2815, 0
      %v2966 = vsel %vm366, %v2827, 0
      %v2969 = vsel %vm366, %v2839, 0
      %v2972 = vsel %vm366, %v2851, 0
      %v2975 = vsel %vm366, %v2863, 0
      %v2978 = vsel %vm366, %v2875, 0
      %v2981 = vsel %vm366, %v2887, 0
      %v2984 = vsel %vm366, %v2899, 0
      %v2987 = vsel %vm366, %v2911, 0
      %v2990 = vsel %vm366, %v2923, 0
      %v2993 = vsel %vm366, %v2935, 0
      %v2996 = vsel %vm366, %v2947, 0
      %v2999 = vsel %vm705, %v2949, 0
      %3001 = vmatprep.subr.bf16.mxu0 0
      %3002 = vmatpush1.bf16.msra.mxu0 %v2999
      %3003 = vmatprep.subr.bf16.mxu0 0
      %3004 = vmatpush1.bf16.msra.mxu0 0
      %3005 = vmatprep.subr.bf16.mxu0 0
      %3006 = vmatpush1.bf16.msra.mxu0 0
      %3007 = vmatprep.subr.bf16.mxu0 0
      %3008 = vmatpush1.bf16.msra.mxu0 0
      %3009 = vmatprep.subr.bf16.mxu0 0
      %3010 = vmatpush1.bf16.msra.mxu0 0
      %3011 = vmatprep.subr.bf16.mxu0 0
      %3012 = vmatpush1.bf16.msra.mxu0 0
      %3013 = vmatprep.subr.bf16.mxu0 0
      %3014 = vmatpush1.bf16.msra.mxu0 0
      %3015 = vmatprep.subr.bf16.mxu0 0
      %3016 = vmatpush1.bf16.msra.mxu0 0
      %3017 = vmatprep.subr.bf16.mxu0 0
      %3018 = vmatpush1.bf16.msra.mxu0 0
      %3019 = vmatprep.subr.bf16.mxu0 0
      %3020 = vmatpush1.bf16.msra.mxu0 0
      %3021 = vmatprep.subr.bf16.mxu0 0
      %3022 = vmatpush1.bf16.msra.mxu0 0
      %3023 = vmatprep.subr.bf16.mxu0 0
      %3024 = vmatpush1.bf16.msra.mxu0 0
      %3025 = vmatprep.subr.bf16.mxu0 0
      %3026 = vmatpush1.bf16.msra.mxu0 0
      %3027 = vmatprep.subr.bf16.mxu0 0
      %3028 = vmatpush1.bf16.msra.mxu0 0
      %3029 = vmatprep.subr.bf16.mxu0 0
      %3030 = vmatpush1.bf16.msra.mxu0 0
      %3031 = vmatprep.subr.bf16.mxu0 0
      %3032 = vmatpush1.bf16.msra.mxu0 0
      %3033 = vmatprep.mubr.bf16.mxu0 0
      %3034 = vmatmul.mubr.bf16.gmra.mrb[0].mxu0 %v2951
      %v3035 = vpop.f32.mrb[0].mxu0
      %v3036 = vadd.f32 0.0, %v3035
      %v3037 = vpop.f32.mrb[0].mxu0
      %v3038 = vpop.f32.mrb[0].mxu0
      %v3039 = vadd.f32 0.0, %v3038
      %v3040 = vpop.f32.mrb[0].mxu0
      %3041 = vmatprep.mubr.bf16.mxu0 0
      %3042 = vmatmul.mubr.bf16.gmra.mrb[0].mxu0 %v2954
      %v3043 = vpop.f32.mrb[0].mxu0
      %v3044 = vadd.f32 0.0, %v3043
      %v3045 = vpop.f32.mrb[0].mxu0
      %v3046 = vpop.f32.mrb[0].mxu0
      %v3047 = vadd.f32 0.0, %v3046
      %v3048 = vpop.f32.mrb[0].mxu0
      %3049 = vmatprep.mubr.bf16.mxu0 0
      %3050 = vmatmul.mubr.bf16.gmra.mrb[0].mxu0 %v2957
      %v3051 = vpop.f32.mrb[0].mxu0
      %v3052 = vadd.f32 0.0, %v3051
      %v3053 = vpop.f32.mrb[0].mxu0
      %v3054 = vpop.f32.mrb[0].mxu0
      %v3055 = vadd.f32 0.0, %v3054
      %v3056 = vpop.f32.mrb[0].mxu0
      %3057 = vmatprep.mubr.bf16.mxu0 0
      %3058 = vmatmul.mubr.bf16.gmra.mrb[0].mxu0 %v2960
      %v3059 = vpop.f32.mrb[0].mxu0
      %v3060 = vadd.f32 0.0, %v3059
      %v3061 = vpop.f32.mrb[0].mxu0
      %v3062 = vpop.f32.mrb[0].mxu0
      %v3063 = vadd.f32 0.0, %v3062
      %v3064 = vpop.f32.mrb[0].mxu0
      %3065 = vmatprep.mubr.bf16.mxu0 0
      %3066 = vmatmul.mubr.bf16.gmra.mrb[0].mxu0 %v2963
      %v3067 = vpop.f32.mrb[0].mxu0
      %v3068 = vadd.f32 0.0, %v3067
      %v3069 = vpop.f32.mrb[0].mxu0
      %v3070 = vpop.f32.mrb[0].mxu0
      %v3071 = vadd.f32 0.0, %v3070
      %v3072 = vpop.f32.mrb[0].mxu0
      %3073 = vmatprep.mubr.bf16.mxu0 0
      %3074 = vmatmul.mubr.bf16.gmra.mrb[0].mxu0 %v2966
      %v3075 = vpop.f32.mrb[0].mxu0
      %v3076 = vadd.f32 0.0, %v3075
      %v3077 = vpop.f32.mrb[0].mxu0
      %v3078 = vpop.f32.mrb[0].mxu0
      %v3079 = vadd.f32 0.0, %v3078
      %v3080 = vpop.f32.mrb[0].mxu0
      %3081 = vmatprep.mubr.bf16.mxu0 0
      %3082 = vmatmul.mubr.bf16.gmra.mrb[0].mxu0 %v2969
      %v3083 = vpop.f32.mrb[0].mxu0
      %v3084 = vadd.f32 0.0, %v3083
      %v3085 = vpop.f32.mrb[0].mxu0
      %v3086 = vpop.f32.mrb[0].mxu0
      %v3087 = vadd.f32 0.0, %v3086
      %v3088 = vpop.f32.mrb[0].mxu0
      %3089 = vmatprep.mubr.bf16.mxu0 0
      %3090 = vmatmul.mubr.bf16.gmra.mrb[0].mxu0 %v2972
      %v3091 = vpop.f32.mrb[0].mxu0
      %v3092 = vadd.f32 0.0, %v3091
      %v3093 = vpop.f32.mrb[0].mxu0
      %v3094 = vpop.f32.mrb[0].mxu0
      %v3095 = vadd.f32 0.0, %v3094
      %v3096 = vpop.f32.mrb[0].mxu0
      %3097 = vmatprep.mubr.bf16.mxu0 0
      %3098 = vmatmul.mubr.bf16.gmra.mrb[0].mxu0 %v2975
      %v3099 = vpop.f32.mrb[0].mxu0
      %v3100 = vadd.f32 0.0, %v3099
      %v3101 = vpop.f32.mrb[0].mxu0
      %v3102 = vpop.f32.mrb[0].mxu0
      %v3103 = vadd.f32 0.0, %v3102
      %v3104 = vpop.f32.mrb[0].mxu0
      %3105 = vmatprep.mubr.bf16.mxu0 0
      %3106 = vmatmul.mubr.bf16.gmra.mrb[0].mxu0 %v2978
      %v3107 = vpop.f32.mrb[0].mxu0
      %v3108 = vadd.f32 0.0, %v3107
      %v3109 = vpop.f32.mrb[0].mxu0
      %v3110 = vpop.f32.mrb[0].mxu0
      %v3111 = vadd.f32 0.0, %v3110
      %v3112 = vpop.f32.mrb[0].mxu0
      %3113 = vmatprep.mubr.bf16.mxu0 0
      %3114 = vmatmul.mubr.bf16.gmra.mrb[0].mxu0 %v2981
      %v3115 = vpop.f32.mrb[0].mxu0
      %v3116 = vadd.f32 0.0, %v3115
      %v3117 = vpop.f32.mrb[0].mxu0
      %v3118 = vpop.f32.mrb[0].mxu0
      %v3119 = vadd.f32 0.0, %v3118
      %v3120 = vpop.f32.mrb[0].mxu0
      %3121 = vmatprep.mubr.bf16.mxu0 0
      %3122 = vmatmul.mubr.bf16.gmra.mrb[0].mxu0 %v2984
      %v3123 = vpop.f32.mrb[0].mxu0
      %v3124 = vadd.f32 0.0, %v3123
      %v3125 = vpop.f32.mrb[0].mxu0
      %v3126 = vpop.f32.mrb[0].mxu0
      %v3127 = vadd.f32 0.0, %v3126
      %v3128 = vpop.f32.mrb[0].mxu0
      %3129 = vmatprep.mubr.bf16.mxu0 0
      %3130 = vmatmul.mubr.bf16.gmra.mrb[0].mxu0 %v2987
      %v3131 = vpop.f32.mrb[0].mxu0
      %v3132 = vadd.f32 0.0, %v3131
      %v3133 = vpop.f32.mrb[0].mxu0
      %v3134 = vpop.f32.mrb[0].mxu0
      %v3135 = vadd.f32 0.0, %v3134
      %v3136 = vpop.f32.mrb[0].mxu0
      %3137 = vmatprep.mubr.bf16.mxu0 0
      %3138 = vmatmul.mubr.bf16.gmra.mrb[0].mxu0 %v2990
      %v3139 = vpop.f32.mrb[0].mxu0
      %v3140 = vadd.f32 0.0, %v3139
      %v3141 = vpop.f32.mrb[0].mxu0
      %v3142 = vpop.f32.mrb[0].mxu0
      %v3143 = vadd.f32 0.0, %v3142
      %v3144 = vpop.f32.mrb[0].mxu0
      %3145 = vmatprep.mubr.bf16.mxu0 0
      %3146 = vmatmul.mubr.bf16.gmra.mrb[0].mxu0 %v2993
      %v3147 = vpop.f32.mrb[0].mxu0
      %v3148 = vadd.f32 0.0, %v3147
      %v3149 = vpop.f32.mrb[0].mxu0
      %v3150 = vpop.f32.mrb[0].mxu0
      %v3151 = vadd.f32 0.0, %v3150
      %v3152 = vpop.f32.mrb[0].mxu0
      %3153 = vmatprep.mubr.bf16.mxu0 0
      %3154 = vmatmul.mubr.bf16.gmra.mrb[0].mxu0 %v2996
      %v3155 = vpop.f32.mrb[0].mxu0
      %v3156 = vadd.f32 0.0, %v3155
      %v3157 = vpop.f32.mrb[0].mxu0
      %v3158 = vpop.f32.mrb[0].mxu0
      %v3159 = vadd.f32 0.0, %v3158
      %v3160 = vpop.f32.mrb[0].mxu0
      %3161 = vdwg.mxu0
      %v3162 = vadd.f32 %v2691, %v3036
      %v3163 = vadd.f32 %v2692, %v3039
      %v3164 = vadd.f32 %v2693, %v3044
      %v3165 = vadd.f32 %v2694, %v3047
      %v3166 = vadd.f32 %v2695, %v3052
      %v3167 = vadd.f32 %v2696, %v3055
      %v3168 = vadd.f32 %v2697, %v3060
      %v3169 = vadd.f32 %v2698, %v3063
      %v3170 = vadd.f32 %v2699, %v3068
      %v3171 = vadd.f32 %v2700, %v3071
      %v3172 = vadd.f32 %v2701, %v3076
      %v3173 = vadd.f32 %v2702, %v3079
      %v3174 = vadd.f32 %v2703, %v3084
      %v3175 = vadd.f32 %v2704, %v3087
      %v3176 = vadd.f32 %v2705, %v3092
      %v3177 = vadd.f32 %v2706, %v3095
      %v3178 = vadd.f32 %v2707, %v3100
      %v3179 = vadd.f32 %v2708, %v3103
      %v3180 = vadd.f32 %v2709, %v3108
      %v3181 = vadd.f32 %v2710, %v3111
      %v3182 = vadd.f32 %v2711, %v3116
      %v3183 = vadd.f32 %v2712, %v3119
      %v3184 = vadd.f32 %v2713, %v3124
      %v3185 = vadd.f32 %v2714, %v3127
      %v3186 = vadd.f32 %v2715, %v3132
      %v3187 = vadd.f32 %v2716, %v3135
      %v3188 = vadd.f32 %v2717, %v3140
      %v3189 = vadd.f32 %v2718, %v3143
      %v3190 = vadd.f32 %v2719, %v3148
      %v3191 = vadd.f32 %v2720, %v3151
      %v3192 = vadd.f32 %v2721, %v3156
      %v3193 = vadd.f32 %v2722, %v3159
      %s3194 = scalar_lea.vmem %s1, 14
      %v3195 = vld [vmem:[%s3194] sm:$0x3]
      %v3196 = vsel %vm366, %v2725, 0
      %v3198 = vsel %vm366, %v2727, 0
      %v3200 = vsel %vm366, %v2729, 0
      %v3202 = vsel %vm366, %v2731, 0
      %v3204 = vsel %vm366, %v2733, 0
      %v3206 = vsel %vm366, %v2735, 0
      %v3208 = vsel %vm366, %v2737, 0
      %v3210 = vsel %vm366, %v2739, 0
      %v3212 = vsel %vm366, %v2741, 0
      %v3214 = vsel %vm366, %v2743, 0
      %v3216 = vsel %vm366, %v2745, 0
      %v3218 = vsel %vm366, %v2747, 0
      %v3220 = vsel %vm366, %v2749, 0
      %v3222 = vsel %vm366, %v2751, 0
      %v3224 = vsel %vm366, %v2753, 0
      %v3226 = vsel %vm366, %v2755, 0
      %v3229 = vsel %vm705, %v3195, 0
      %3231 = vmatprep.subr.bf16.mxu0 0
      %3232 = vmatpush1.bf16.msra.mxu0 %v3229
      %3233 = vmatprep.subr.bf16.mxu0 0
      %3234 = vmatpush1.bf16.msra.mxu0 0
      %3235 = vmatprep.subr.bf16.mxu0 0
      %3236 = vmatpush1.bf16.msra.mxu0 0
      %3237 = vmatprep.subr.bf16.mxu0 0
      %3238 = vmatpush1.bf16.msra.mxu0 0
      %3239 = vmatprep.subr.bf16.mxu0 0
      %3240 = vmatpush1.bf16.msra.mxu0 0
      %3241 = vmatprep.subr.bf16.mxu0 0
      %3242 = vmatpush1.bf16.msra.mxu0 0
      %3243 = vmatprep.subr.bf16.mxu0 0
      %3244 = vmatpush1.bf16.msra.mxu0 0
      %3245 = vmatprep.subr.bf16.mxu0 0
      %3246 = vmatpush1.bf16.msra.mxu0 0
      %3247 = vmatprep.subr.bf16.mxu0 0
      %3248 = vmatpush1.bf16.msra.mxu0 0
      %3249 = vmatprep.subr.bf16.mxu0 0
      %3250 = vmatpush1.bf16.msra.mxu0 0
      %3251 = vmatprep.subr.bf16.mxu0 0
      %3252 = vmatpush1.bf16.msra.mxu0 0
      %3253 = vmatprep.subr.bf16.mxu0 0
      %3254 = vmatpush1.bf16.msra.mxu0 0
      %3255 = vmatprep.subr.bf16.mxu0 0
      %3256 = vmatpush1.bf16.msra.mxu0 0
      %3257 = vmatprep.subr.bf16.mxu0 0
      %3258 = vmatpush1.bf16.msra.mxu0 0
      %3259 = vmatprep.subr.bf16.mxu0 0
      %3260 = vmatpush1.bf16.msra.mxu0 0
      %3261 = vmatprep.subr.bf16.mxu0 0
      %3262 = vmatpush1.bf16.msra.mxu0 0
      %3263 = vmatprep.mubr.bf16.mxu0 0
      %3264 = vmatmul.mubr.bf16.gmra.mrb[0].mxu0 %v3196
      %v3265 = vpop.f32.mrb[0].mxu0
      %v3266 = vadd.f32 0.0, %v3265
      %v3267 = vpop.f32.mrb[0].mxu0
      %v3268 = vpop.f32.mrb[0].mxu0
      %v3269 = vadd.f32 0.0, %v3268
      %v3270 = vpop.f32.mrb[0].mxu0
      %3271 = vmatprep.mubr.bf16.mxu0 0
      %3272 = vmatmul.mubr.bf16.gmra.mrb[0].mxu0 %v3198
      %v3273 = vpop.f32.mrb[0].mxu0
      %v3274 = vadd.f32 0.0, %v3273
      %v3275 = vpop.f32.mrb[0].mxu0
      %v3276 = vpop.f32.mrb[0].mxu0
      %v3277 = vadd.f32 0.0, %v3276
      %v3278 = vpop.f32.mrb[0].mxu0
      %3279 = vmatprep.mubr.bf16.mxu0 0
      %3280 = vmatmul.mubr.bf16.gmra.mrb[0].mxu0 %v3200
      %v3281 = vpop.f32.mrb[0].mxu0
      %v3282 = vadd.f32 0.0, %v3281
      %v3283 = vpop.f32.mrb[0].mxu0
      %v3284 = vpop.f32.mrb[0].mxu0
      %v3285 = vadd.f32 0.0, %v3284
      %v3286 = vpop.f32.mrb[0].mxu0
      %3287 = vmatprep.mubr.bf16.mxu0 0
      %3288 = vmatmul.mubr.bf16.gmra.mrb[0].mxu0 %v3202
      %v3289 = vpop.f32.mrb[0].mxu0
      %v3290 = vadd.f32 0.0, %v3289
      %v3291 = vpop.f32.mrb[0].mxu0
      %v3292 = vpop.f32.mrb[0].mxu0
      %v3293 = vadd.f32 0.0, %v3292
      %v3294 = vpop.f32.mrb[0].mxu0
      %3295 = vmatprep.mubr.bf16.mxu0 0
      %3296 = vmatmul.mubr.bf16.gmra.mrb[0].mxu0 %v3204
      %v3297 = vpop.f32.mrb[0].mxu0
      %v3298 = vadd.f32 0.0, %v3297
      %v3299 = vpop.f32.mrb[0].mxu0
      %v3300 = vpop.f32.mrb[0].mxu0
      %v3301 = vadd.f32 0.0, %v3300
      %v3302 = vpop.f32.mrb[0].mxu0
      %3303 = vmatprep.mubr.bf16.mxu0 0
      %3304 = vmatmul.mubr.bf16.gmra.mrb[0].mxu0 %v3206
      %v3305 = vpop.f32.mrb[0].mxu0
      %v3306 = vadd.f32 0.0, %v3305
      %v3307 = vpop.f32.mrb[0].mxu0
      %v3308 = vpop.f32.mrb[0].mxu0
      %v3309 = vadd.f32 0.0, %v3308
      %v3310 = vpop.f32.mrb[0].mxu0
      %3311 = vmatprep.mubr.bf16.mxu0 0
      %3312 = vmatmul.mubr.bf16.gmra.mrb[0].mxu0 %v3208
      %v3313 = vpop.f32.mrb[0].mxu0
      %v3314 = vadd.f32 0.0, %v3313
      %v3315 = vpop.f32.mrb[0].mxu0
      %v3316 = vpop.f32.mrb[0].mxu0
      %v3317 = vadd.f32 0.0, %v3316
      %v3318 = vpop.f32.mrb[0].mxu0
      %3319 = vmatprep.mubr.bf16.mxu0 0
      %3320 = vmatmul.mubr.bf16.gmra.mrb[0].mxu0 %v3210
      %v3321 = vpop.f32.mrb[0].mxu0
      %v3322 = vadd.f32 0.0, %v3321
      %v3323 = vpop.f32.mrb[0].mxu0
      %v3324 = vpop.f32.mrb[0].mxu0
      %v3325 = vadd.f32 0.0, %v3324
      %v3326 = vpop.f32.mrb[0].mxu0
      %3327 = vmatprep.mubr.bf16.mxu0 0
      %3328 = vmatmul.mubr.bf16.gmra.mrb[0].mxu0 %v3212
      %v3329 = vpop.f32.mrb[0].mxu0
      %v3330 = vadd.f32 0.0, %v3329
      %v3331 = vpop.f32.mrb[0].mxu0
      %v3332 = vpop.f32.mrb[0].mxu0
      %v3333 = vadd.f32 0.0, %v3332
      %v3334 = vpop.f32.mrb[0].mxu0
      %3335 = vmatprep.mubr.bf16.mxu0 0
      %3336 = vmatmul.mubr.bf16.gmra.mrb[0].mxu0 %v3214
      %v3337 = vpop.f32.mrb[0].mxu0
      %v3338 = vadd.f32 0.0, %v3337
      %v3339 = vpop.f32.mrb[0].mxu0
      %v3340 = vpop.f32.mrb[0].mxu0
      %v3341 = vadd.f32 0.0, %v3340
      %v3342 = vpop.f32.mrb[0].mxu0
      %3343 = vmatprep.mubr.bf16.mxu0 0
      %3344 = vmatmul.mubr.bf16.gmra.mrb[0].mxu0 %v3216
      %v3345 = vpop.f32.mrb[0].mxu0
      %v3346 = vadd.f32 0.0, %v3345
      %v3347 = vpop.f32.mrb[0].mxu0
      %v3348 = vpop.f32.mrb[0].mxu0
      %v3349 = vadd.f32 0.0, %v3348
      %v3350 = vpop.f32.mrb[0].mxu0
      %3351 = vmatprep.mubr.bf16.mxu0 0
      %3352 = vmatmul.mubr.bf16.gmra.mrb[0].mxu0 %v3218
      %v3353 = vpop.f32.mrb[0].mxu0
      %v3354 = vadd.f32 0.0, %v3353
      %v3355 = vpop.f32.mrb[0].mxu0
      %v3356 = vpop.f32.mrb[0].mxu0
      %v3357 = vadd.f32 0.0, %v3356
      %v3358 = vpop.f32.mrb[0].mxu0
      %3359 = vmatprep.mubr.bf16.mxu0 0
      %3360 = vmatmul.mubr.bf16.gmra.mrb[0].mxu0 %v3220
      %v3361 = vpop.f32.mrb[0].mxu0
      %v3362 = vadd.f32 0.0, %v3361
      %v3363 = vpop.f32.mrb[0].mxu0
      %v3364 = vpop.f32.mrb[0].mxu0
      %v3365 = vadd.f32 0.0, %v3364
      %v3366 = vpop.f32.mrb[0].mxu0
      %3367 = vmatprep.mubr.bf16.mxu0 0
      %3368 = vmatmul.mubr.bf16.gmra.mrb[0].mxu0 %v3222
      %v3369 = vpop.f32.mrb[0].mxu0
      %v3370 = vadd.f32 0.0, %v3369
      %v3371 = vpop.f32.mrb[0].mxu0
      %v3372 = vpop.f32.mrb[0].mxu0
      %v3373 = vadd.f32 0.0, %v3372
      %v3374 = vpop.f32.mrb[0].mxu0
      %3375 = vmatprep.mubr.bf16.mxu0 0
      %3376 = vmatmul.mubr.bf16.gmra.mrb[0].mxu0 %v3224
      %v3377 = vpop.f32.mrb[0].mxu0
      %v3378 = vadd.f32 0.0, %v3377
      %v3379 = vpop.f32.mrb[0].mxu0
      %v3380 = vpop.f32.mrb[0].mxu0
      %v3381 = vadd.f32 0.0, %v3380
      %v3382 = vpop.f32.mrb[0].mxu0
      %3383 = vmatprep.mubr.bf16.mxu0 0
      %3384 = vmatmul.mubr.bf16.gmra.mrb[0].mxu0 %v3226
      %v3385 = vpop.f32.mrb[0].mxu0
      %v3386 = vadd.f32 0.0, %v3385
      %v3387 = vpop.f32.mrb[0].mxu0
      %v3388 = vpop.f32.mrb[0].mxu0
      %v3389 = vadd.f32 0.0, %v3388
      %v3390 = vpop.f32.mrb[0].mxu0
      %3391 = vdwg.mxu0
      %v3392 = vadd.f32 %v3162, %v3266
      %v3393 = vadd.f32 %v3163, %v3269
      %v3394 = vadd.f32 %v3164, %v3274
      %v3395 = vadd.f32 %v3165, %v3277
      %v3396 = vadd.f32 %v3166, %v3282
      %v3397 = vadd.f32 %v3167, %v3285
      %v3398 = vadd.f32 %v3168, %v3290
      %v3399 = vadd.f32 %v3169, %v3293
      %v3400 = vadd.f32 %v3170, %v3298
      %v3401 = vadd.f32 %v3171, %v3301
      %v3402 = vadd.f32 %v3172, %v3306
      %v3403 = vadd.f32 %v3173, %v3309
      %v3404 = vadd.f32 %v3174, %v3314
      %v3405 = vadd.f32 %v3175, %v3317
      %v3406 = vadd.f32 %v3176, %v3322
      %v3407 = vadd.f32 %v3177, %v3325
      %v3408 = vadd.f32 %v3178, %v3330
      %v3409 = vadd.f32 %v3179, %v3333
      %v3410 = vadd.f32 %v3180, %v3338
      %v3411 = vadd.f32 %v3181, %v3341
      %v3412 = vadd.f32 %v3182, %v3346
      %v3413 = vadd.f32 %v3183, %v3349
      %v3414 = vadd.f32 %v3184, %v3354
      %v3415 = vadd.f32 %v3185, %v3357
      %v3416 = vadd.f32 %v3186, %v3362
      %v3417 = vadd.f32 %v3187, %v3365
      %v3418 = vadd.f32 %v3188, %v3370
      %v3419 = vadd.f32 %v3189, %v3373
      %v3420 = vadd.f32 %v3190, %v3378
      %v3421 = vadd.f32 %v3191, %v3381
      %v3422 = vadd.f32 %v3192, %v3386
      %v3423 = vadd.f32 %v3193, %v3389
      %v3424 = vld [vmem:[%s2723 + $0x8] sm:$0xff]
      %v3425 = vld [vmem:[%s2723 + $0x10] sm:$0x1]
      %v3426 = vld [vmem:[%s2723 + $0x20] sm:$0xff]
      %v3427 = vld [vmem:[%s2723 + $0x28] sm:$0x1]
      %v3428 = vld [vmem:[%s2723 + $0x38] sm:$0xff]
      %v3429 = vld [vmem:[%s2723 + $0x40] sm:$0x1]
      %v3430 = vld [vmem:[%s2723 + $0x50] sm:$0xff]
      %v3431 = vld [vmem:[%s2723 + $0x58] sm:$0x1]
      %v3432 = vld [vmem:[%s2723 + $0x68] sm:$0xff]
      %v3433 = vld [vmem:[%s2723 + $0x70] sm:$0x1]
      %v3434 = vld [vmem:[%s2723 + $0x80] sm:$0xff]
      %v3435 = vld [vmem:[%s2723 + $0x88] sm:$0x1]
      %v3436 = vld [vmem:[%s2723 + $0x98] sm:$0xff]
      %v3437 = vld [vmem:[%s2723 + $0xa0] sm:$0x1]
      %v3438 = vld [vmem:[%s2723 + $0xb0] sm:$0xff]
      %v3439 = vld [vmem:[%s2723 + $0xb8] sm:$0x1]
      %v3440 = vld [vmem:[%s2723 + $0xc8] sm:$0xff]
      %v3441 = vld [vmem:[%s2723 + $0xd0] sm:$0x1]
      %v3442 = vld [vmem:[%s2723 + $0xe0] sm:$0xff]
      %v3443 = vld [vmem:[%s2723 + $0xe8] sm:$0x1]
      %v3444 = vld [vmem:[%s2723 + $0xf8] sm:$0xff]
      %v3445 = vld [vmem:[%s2723 + $0x100] sm:$0x1]
      %v3446 = vld [vmem:[%s2723 + $0x110] sm:$0xff]
      %v3447 = vld [vmem:[%s2723 + $0x118] sm:$0x1]
      %v3448 = vld [vmem:[%s2723 + $0x128] sm:$0xff]
      %v3449 = vld [vmem:[%s2723 + $0x130] sm:$0x1]
      %v3450 = vld [vmem:[%s2723 + $0x140] sm:$0xff]
      %v3451 = vld [vmem:[%s2723 + $0x148] sm:$0x1]
      %v3452 = vld [vmem:[%s2723 + $0x158] sm:$0xff]
      %v3453 = vld [vmem:[%s2723 + $0x160] sm:$0x1]
      %v3454 = vld [vmem:[%s2723 + $0x170] sm:$0xff]
      %v3455 = vld [vmem:[%s2723 + $0x178] sm:$0x1]
      %v3457 = vshrl.u32 %v3424, 16
      %v3459 = vshll.u32 %v3424, 16
      %v3461 = vrot.slane %v3459, 1
      %v3462 = vor.u32 %v3457, %v3461
      %v3464 = vshll.u32 %v3425, 16
      %v3466 = vrot.slane %v3464, 1
      %v3467 = vsel %vm1114, %v3462, %v3466
      %v3469 = vshrl.u32 %v3426, 16
      %v3471 = vshll.u32 %v3426, 16
      %v3473 = vrot.slane %v3471, 1
      %v3474 = vor.u32 %v3469, %v3473
      %v3476 = vshll.u32 %v3427, 16
      %v3478 = vrot.slane %v3476, 1
      %v3479 = vsel %vm1114, %v3474, %v3478
      %v3481 = vshrl.u32 %v3428, 16
      %v3483 = vshll.u32 %v3428, 16
      %v3485 = vrot.slane %v3483, 1
      %v3486 = vor.u32 %v3481, %v3485
      %v3488 = vshll.u32 %v3429, 16
      %v3490 = vrot.slane %v3488, 1
      %v3491 = vsel %vm1114, %v3486, %v3490
      %v3493 = vshrl.u32 %v3430, 16
      %v3495 = vshll.u32 %v3430, 16
      %v3497 = vrot.slane %v3495, 1
      %v3498 = vor.u32 %v3493, %v3497
      %v3500 = vshll.u32 %v3431, 16
      %v3502 = vrot.slane %v3500, 1
      %v3503 = vsel %vm1114, %v3498, %v3502
      %v3505 = vshrl.u32 %v3432, 16
      %v3507 = vshll.u32 %v3432, 16
      %v3509 = vrot.slane %v3507, 1
      %v3510 = vor.u32 %v3505, %v3509
      %v3512 = vshll.u32 %v3433, 16
      %v3514 = vrot.slane %v3512, 1
      %v3515 = vsel %vm1114, %v3510, %v3514
      %v3517 = vshrl.u32 %v3434, 16
      %v3519 = vshll.u32 %v3434, 16
      %v3521 = vrot.slane %v3519, 1
      %v3522 = vor.u32 %v3517, %v3521
      %v3524 = vshll.u32 %v3435, 16
      %v3526 = vrot.slane %v3524, 1
      %v3527 = vsel %vm1114, %v3522, %v3526
      %v3529 = vshrl.u32 %v3436, 16
      %v3531 = vshll.u32 %v3436, 16
      %v3533 = vrot.slane %v3531, 1
      %v3534 = vor.u32 %v3529, %v3533
      %v3536 = vshll.u32 %v3437, 16
      %v3538 = vrot.slane %v3536, 1
      %v3539 = vsel %vm1114, %v3534, %v3538
      %v3541 = vshrl.u32 %v3438, 16
      %v3543 = vshll.u32 %v3438, 16
      %v3545 = vrot.slane %v3543, 1
      %v3546 = vor.u32 %v3541, %v3545
      %v3548 = vshll.u32 %v3439, 16
      %v3550 = vrot.slane %v3548, 1
      %v3551 = vsel %vm1114, %v3546, %v3550
      %v3553 = vshrl.u32 %v3440, 16
      %v3555 = vshll.u32 %v3440, 16
      %v3557 = vrot.slane %v3555, 1
      %v3558 = vor.u32 %v3553, %v3557
      %v3560 = vshll.u32 %v3441, 16
      %v3562 = vrot.slane %v3560, 1
      %v3563 = vsel %vm1114, %v3558, %v3562
      %v3565 = vshrl.u32 %v3442, 16
      %v3567 = vshll.u32 %v3442, 16
      %v3569 = vrot.slane %v3567, 1
      %v3570 = vor.u32 %v3565, %v3569
      %v3572 = vshll.u32 %v3443, 16
      %v3574 = vrot.slane %v3572, 1
      %v3575 = vsel %vm1114, %v3570, %v3574
      %v3577 = vshrl.u32 %v3444, 16
      %v3579 = vshll.u32 %v3444, 16
      %v3581 = vrot.slane %v3579, 1
      %v3582 = vor.u32 %v3577, %v3581
      %v3584 = vshll.u32 %v3445, 16
      %v3586 = vrot.slane %v3584, 1
      %v3587 = vsel %vm1114, %v3582, %v3586
      %v3589 = vshrl.u32 %v3446, 16
      %v3591 = vshll.u32 %v3446, 16
      %v3593 = vrot.slane %v3591, 1
      %v3594 = vor.u32 %v3589, %v3593
      %v3596 = vshll.u32 %v3447, 16
      %v3598 = vrot.slane %v3596, 1
      %v3599 = vsel %vm1114, %v3594, %v3598
      %v3601 = vshrl.u32 %v3448, 16
      %v3603 = vshll.u32 %v3448, 16
      %v3605 = vrot.slane %v3603, 1
      %v3606 = vor.u32 %v3601, %v3605
      %v3608 = vshll.u32 %v3449, 16
      %v3610 = vrot.slane %v3608, 1
      %v3611 = vsel %vm1114, %v3606, %v3610
      %v3613 = vshrl.u32 %v3450, 16
      %v3615 = vshll.u32 %v3450, 16
      %v3617 = vrot.slane %v3615, 1
      %v3618 = vor.u32 %v3613, %v3617
      %v3620 = vshll.u32 %v3451, 16
      %v3622 = vrot.slane %v3620, 1
      %v3623 = vsel %vm1114, %v3618, %v3622
      %v3625 = vshrl.u32 %v3452, 16
      %v3627 = vshll.u32 %v3452, 16
      %v3629 = vrot.slane %v3627, 1
      %v3630 = vor.u32 %v3625, %v3629
      %v3632 = vshll.u32 %v3453, 16
      %v3634 = vrot.slane %v3632, 1
      %v3635 = vsel %vm1114, %v3630, %v3634
      %v3637 = vshrl.u32 %v3454, 16
      %v3639 = vshll.u32 %v3454, 16
      %v3641 = vrot.slane %v3639, 1
      %v3642 = vor.u32 %v3637, %v3641
      %v3644 = vshll.u32 %v3455, 16
      %v3646 = vrot.slane %v3644, 1
      %v3647 = vsel %vm1114, %v3642, %v3646
      %s3648 = scalar_lea.vmem %s1, 16
      %v3649 = vld [vmem:[%s3648] sm:$0x3]
      %v3651 = vsel %vm366, %v3467, 0
      %v3654 = vsel %vm366, %v3479, 0
      %v3657 = vsel %vm366, %v3491, 0
      %v3660 = vsel %vm366, %v3503, 0
      %v3663 = vsel %vm366, %v3515, 0
      %v3666 = vsel %vm366, %v3527, 0
      %v3669 = vsel %vm366, %v3539, 0
      %v3672 = vsel %vm366, %v3551, 0
      %v3675 = vsel %vm366, %v3563, 0
      %v3678 = vsel %vm366, %v3575, 0
      %v3681 = vsel %vm366, %v3587, 0
      %v3684 = vsel %vm366, %v3599, 0
      %v3687 = vsel %vm366, %v3611, 0
      %v3690 = vsel %vm366, %v3623, 0
      %v3693 = vsel %vm366, %v3635, 0
      %v3696 = vsel %vm366, %v3647, 0
      %v3699 = vsel %vm705, %v3649, 0
      %3701 = vmatprep.subr.bf16.mxu0 0
      %3702 = vmatpush1.bf16.msra.mxu0 %v3699
      %3703 = vmatprep.subr.bf16.mxu0 0
      %3704 = vmatpush1.bf16.msra.mxu0 0
      %3705 = vmatprep.subr.bf16.mxu0 0
      %3706 = vmatpush1.bf16.msra.mxu0 0
      %3707 = vmatprep.subr.bf16.mxu0 0
      %3708 = vmatpush1.bf16.msra.mxu0 0
      %3709 = vmatprep.subr.bf16.mxu0 0
      %3710 = vmatpush1.bf16.msra.mxu0 0
      %3711 = vmatprep.subr.bf16.mxu0 0
      %3712 = vmatpush1.bf16.msra.mxu0 0
      %3713 = vmatprep.subr.bf16.mxu0 0
      %3714 = vmatpush1.bf16.msra.mxu0 0
      %3715 = vmatprep.subr.bf16.mxu0 0
      %3716 = vmatpush1.bf16.msra.mxu0 0
      %3717 = vmatprep.subr.bf16.mxu0 0
      %3718 = vmatpush1.bf16.msra.mxu0 0
      %3719 = vmatprep.subr.bf16.mxu0 0
      %3720 = vmatpush1.bf16.msra.mxu0 0
      %3721 = vmatprep.subr.bf16.mxu0 0
      %3722 = vmatpush1.bf16.msra.mxu0 0
      %3723 = vmatprep.subr.bf16.mxu0 0
      %3724 = vmatpush1.bf16.msra.mxu0 0
      %3725 = vmatprep.subr.bf16.mxu0 0
      %3726 = vmatpush1.bf16.msra.mxu0 0
      %3727 = vmatprep.subr.bf16.mxu0 0
      %3728 = vmatpush1.bf16.msra.mxu0 0
      %3729 = vmatprep.subr.bf16.mxu0 0
      %3730 = vmatpush1.bf16.msra.mxu0 0
      %3731 = vmatprep.subr.bf16.mxu0 0
      %3732 = vmatpush1.bf16.msra.mxu0 0
      %3733 = vmatprep.mubr.bf16.mxu0 0
      %3734 = vmatmul.mubr.bf16.gmra.mrb[0].mxu0 %v3651
      %v3735 = vpop.f32.mrb[0].mxu0
      %v3736 = vadd.f32 0.0, %v3735
      %v3737 = vpop.f32.mrb[0].mxu0
      %v3738 = vpop.f32.mrb[0].mxu0
      %v3739 = vadd.f32 0.0, %v3738
      %v3740 = vpop.f32.mrb[0].mxu0
      %3741 = vmatprep.mubr.bf16.mxu0 0
      %3742 = vmatmul.mubr.bf16.gmra.mrb[0].mxu0 %v3654
      %v3743 = vpop.f32.mrb[0].mxu0
      %v3744 = vadd.f32 0.0, %v3743
      %v3745 = vpop.f32.mrb[0].mxu0
      %v3746 = vpop.f32.mrb[0].mxu0
      %v3747 = vadd.f32 0.0, %v3746
      %v3748 = vpop.f32.mrb[0].mxu0
      %3749 = vmatprep.mubr.bf16.mxu0 0
      %3750 = vmatmul.mubr.bf16.gmra.mrb[0].mxu0 %v3657
      %v3751 = vpop.f32.mrb[0].mxu0
      %v3752 = vadd.f32 0.0, %v3751
      %v3753 = vpop.f32.mrb[0].mxu0
      %v3754 = vpop.f32.mrb[0].mxu0
      %v3755 = vadd.f32 0.0, %v3754
      %v3756 = vpop.f32.mrb[0].mxu0
      %3757 = vmatprep.mubr.bf16.mxu0 0
      %3758 = vmatmul.mubr.bf16.gmra.mrb[0].mxu0 %v3660
      %v3759 = vpop.f32.mrb[0].mxu0
      %v3760 = vadd.f32 0.0, %v3759
      %v3761 = vpop.f32.mrb[0].mxu0
      %v3762 = vpop.f32.mrb[0].mxu0
      %v3763 = vadd.f32 0.0, %v3762
      %v3764 = vpop.f32.mrb[0].mxu0
      %3765 = vmatprep.mubr.bf16.mxu0 0
      %3766 = vmatmul.mubr.bf16.gmra.mrb[0].mxu0 %v3663
      %v3767 = vpop.f32.mrb[0].mxu0
      %v3768 = vadd.f32 0.0, %v3767
      %v3769 = vpop.f32.mrb[0].mxu0
      %v3770 = vpop.f32.mrb[0].mxu0
      %v3771 = vadd.f32 0.0, %v3770
      %v3772 = vpop.f32.mrb[0].mxu0
      %3773 = vmatprep.mubr.bf16.mxu0 0
      %3774 = vmatmul.mubr.bf16.gmra.mrb[0].mxu0 %v3666
      %v3775 = vpop.f32.mrb[0].mxu0
      %v3776 = vadd.f32 0.0, %v3775
      %v3777 = vpop.f32.mrb[0].mxu0
      %v3778 = vpop.f32.mrb[0].mxu0
      %v3779 = vadd.f32 0.0, %v3778
      %v3780 = vpop.f32.mrb[0].mxu0
      %3781 = vmatprep.mubr.bf16.mxu0 0
      %3782 = vmatmul.mubr.bf16.gmra.mrb[0].mxu0 %v3669
      %v3783 = vpop.f32.mrb[0].mxu0
      %v3784 = vadd.f32 0.0, %v3783
      %v3785 = vpop.f32.mrb[0].mxu0
      %v3786 = vpop.f32.mrb[0].mxu0
      %v3787 = vadd.f32 0.0, %v3786
      %v3788 = vpop.f32.mrb[0].mxu0
      %3789 = vmatprep.mubr.bf16.mxu0 0
      %3790 = vmatmul.mubr.bf16.gmra.mrb[0].mxu0 %v3672
      %v3791 = vpop.f32.mrb[0].mxu0
      %v3792 = vadd.f32 0.0, %v3791
      %v3793 = vpop.f32.mrb[0].mxu0
      %v3794 = vpop.f32.mrb[0].mxu0
      %v3795 = vadd.f32 0.0, %v3794
      %v3796 = vpop.f32.mrb[0].mxu0
      %3797 = vmatprep.mubr.bf16.mxu0 0
      %3798 = vmatmul.mubr.bf16.gmra.mrb[0].mxu0 %v3675
      %v3799 = vpop.f32.mrb[0].mxu0
      %v3800 = vadd.f32 0.0, %v3799
      %v3801 = vpop.f32.mrb[0].mxu0
      %v3802 = vpop.f32.mrb[0].mxu0
      %v3803 = vadd.f32 0.0, %v3802
      %v3804 = vpop.f32.mrb[0].mxu0
      %3805 = vmatprep.mubr.bf16.mxu0 0
      %3806 = vmatmul.mubr.bf16.gmra.mrb[0].mxu0 %v3678
      %v3807 = vpop.f32.mrb[0].mxu0
      %v3808 = vadd.f32 0.0, %v3807
      %v3809 = vpop.f32.mrb[0].mxu0
      %v3810 = vpop.f32.mrb[0].mxu0
      %v3811 = vadd.f32 0.0, %v3810
      %v3812 = vpop.f32.mrb[0].mxu0
      %3813 = vmatprep.mubr.bf16.mxu0 0
      %3814 = vmatmul.mubr.bf16.gmra.mrb[0].mxu0 %v3681
      %v3815 = vpop.f32.mrb[0].mxu0
      %v3816 = vadd.f32 0.0, %v3815
      %v3817 = vpop.f32.mrb[0].mxu0
      %v3818 = vpop.f32.mrb[0].mxu0
      %v3819 = vadd.f32 0.0, %v3818
      %v3820 = vpop.f32.mrb[0].mxu0
      %3821 = vmatprep.mubr.bf16.mxu0 0
      %3822 = vmatmul.mubr.bf16.gmra.mrb[0].mxu0 %v3684
      %v3823 = vpop.f32.mrb[0].mxu0
      %v3824 = vadd.f32 0.0, %v3823
      %v3825 = vpop.f32.mrb[0].mxu0
      %v3826 = vpop.f32.mrb[0].mxu0
      %v3827 = vadd.f32 0.0, %v3826
      %v3828 = vpop.f32.mrb[0].mxu0
      %3829 = vmatprep.mubr.bf16.mxu0 0
      %3830 = vmatmul.mubr.bf16.gmra.mrb[0].mxu0 %v3687
      %v3831 = vpop.f32.mrb[0].mxu0
      %v3832 = vadd.f32 0.0, %v3831
      %v3833 = vpop.f32.mrb[0].mxu0
      %v3834 = vpop.f32.mrb[0].mxu0
      %v3835 = vadd.f32 0.0, %v3834
      %v3836 = vpop.f32.mrb[0].mxu0
      %3837 = vmatprep.mubr.bf16.mxu0 0
      %3838 = vmatmul.mubr.bf16.gmra.mrb[0].mxu0 %v3690
      %v3839 = vpop.f32.mrb[0].mxu0
      %v3840 = vadd.f32 0.0, %v3839
      %v3841 = vpop.f32.mrb[0].mxu0
      %v3842 = vpop.f32.mrb[0].mxu0
      %v3843 = vadd.f32 0.0, %v3842
      %v3844 = vpop.f32.mrb[0].mxu0
      %3845 = vmatprep.mubr.bf16.mxu0 0
      %3846 = vmatmul.mubr.bf16.gmra.mrb[0].mxu0 %v3693
      %v3847 = vpop.f32.mrb[0].mxu0
      %v3848 = vadd.f32 0.0, %v3847
      %v3849 = vpop.f32.mrb[0].mxu0
      %v3850 = vpop.f32.mrb[0].mxu0
      %v3851 = vadd.f32 0.0, %v3850
      %v3852 = vpop.f32.mrb[0].mxu0
      %3853 = vmatprep.mubr.bf16.mxu0 0
      %3854 = vmatmul.mubr.bf16.gmra.mrb[0].mxu0 %v3696
      %v3855 = vpop.f32.mrb[0].mxu0
      %v3856 = vadd.f32 0.0, %v3855
      %v3857 = vpop.f32.mrb[0].mxu0
      %v3858 = vpop.f32.mrb[0].mxu0
      %v3859 = vadd.f32 0.0, %v3858
      %v3860 = vpop.f32.mrb[0].mxu0
      %3861 = vdwg.mxu0
      %v3862 = vadd.f32 %v3392, %v3736
      %v3863 = vadd.f32 %v3393, %v3739
      %v3864 = vadd.f32 %v3394, %v3744
      %v3865 = vadd.f32 %v3395, %v3747
      %v3866 = vadd.f32 %v3396, %v3752
      %v3867 = vadd.f32 %v3397, %v3755
      %v3868 = vadd.f32 %v3398, %v3760
      %v3869 = vadd.f32 %v3399, %v3763
      %v3870 = vadd.f32 %v3400, %v3768
      %v3871 = vadd.f32 %v3401, %v3771
      %v3872 = vadd.f32 %v3402, %v3776
      %v3873 = vadd.f32 %v3403, %v3779
      %v3874 = vadd.f32 %v3404, %v3784
      %v3875 = vadd.f32 %v3405, %v3787
      %v3876 = vadd.f32 %v3406, %v3792
      %v3877 = vadd.f32 %v3407, %v3795
      %v3878 = vadd.f32 %v3408, %v3800
      %v3879 = vadd.f32 %v3409, %v3803
      %v3880 = vadd.f32 %v3410, %v3808
      %v3881 = vadd.f32 %v3411, %v3811
      %v3882 = vadd.f32 %v3412, %v3816
      %v3883 = vadd.f32 %v3413, %v3819
      %v3884 = vadd.f32 %v3414, %v3824
      %v3885 = vadd.f32 %v3415, %v3827
      %v3886 = vadd.f32 %v3416, %v3832
      %v3887 = vadd.f32 %v3417, %v3835
      %v3888 = vadd.f32 %v3418, %v3840
      %v3889 = vadd.f32 %v3419, %v3843
      %v3890 = vadd.f32 %v3420, %v3848
      %v3891 = vadd.f32 %v3421, %v3851
      %v3892 = vadd.f32 %v3422, %v3856
      %v3893 = vadd.f32 %v3423, %v3859
      %v3894 = vld [vmem:[%s2] sm:$0x1]
      %v3896 = vlaneseq
      %v3897 = vshrl.u32 %v3896, 7
      %v3898 = vsub.s32 0, %v3897
      %v3899 = vrot.slane %v3894, %v3898
      %v3901 = vadd.f32 %v3862, %v3899
      %v3902 = vadd.f32 %v3863, %v3899
      %v3903 = vadd.f32 %v3864, %v3899
      %v3904 = vadd.f32 %v3865, %v3899
      %v3905 = vadd.f32 %v3866, %v3899
      %v3906 = vadd.f32 %v3867, %v3899
      %v3907 = vadd.f32 %v3868, %v3899
      %v3908 = vadd.f32 %v3869, %v3899
      %v3909 = vadd.f32 %v3870, %v3899
      %v3910 = vadd.f32 %v3871, %v3899
      %v3911 = vadd.f32 %v3872, %v3899
      %v3912 = vadd.f32 %v3873, %v3899
      %v3913 = vadd.f32 %v3874, %v3899
      %v3914 = vadd.f32 %v3875, %v3899
      %v3915 = vadd.f32 %v3876, %v3899
      %v3916 = vadd.f32 %v3877, %v3899
      %v3917 = vadd.f32 %v3878, %v3899
      %v3918 = vadd.f32 %v3879, %v3899
      %v3919 = vadd.f32 %v3880, %v3899
      %v3920 = vadd.f32 %v3881, %v3899
      %v3921 = vadd.f32 %v3882, %v3899
      %v3922 = vadd.f32 %v3883, %v3899
      %v3923 = vadd.f32 %v3884, %v3899
      %v3924 = vadd.f32 %v3885, %v3899
      %v3925 = vadd.f32 %v3886, %v3899
      %v3926 = vadd.f32 %v3887, %v3899
      %v3927 = vadd.f32 %v3888, %v3899
      %v3928 = vadd.f32 %v3889, %v3899
      %v3929 = vadd.f32 %v3890, %v3899
      %v3930 = vadd.f32 %v3891, %v3899
      %v3931 = vadd.f32 %v3892, %v3899
      %v3932 = vadd.f32 %v3893, %v3899
      %v3933 = vmax.f32 %v3901, 0.0
      %v3934 = vmax.f32 %v3902, 0.0
      %v3935 = vmax.f32 %v3903, 0.0
      %v3936 = vmax.f32 %v3904, 0.0
      %v3937 = vmax.f32 %v3905, 0.0
      %v3938 = vmax.f32 %v3906, 0.0
      %v3939 = vmax.f32 %v3907, 0.0
      %v3940 = vmax.f32 %v3908, 0.0
      %v3941 = vmax.f32 %v3909, 0.0
      %v3942 = vmax.f32 %v3910, 0.0
      %v3943 = vmax.f32 %v3911, 0.0
      %v3944 = vmax.f32 %v3912, 0.0
      %v3945 = vmax.f32 %v3913, 0.0
      %v3946 = vmax.f32 %v3914, 0.0
      %v3947 = vmax.f32 %v3915, 0.0
      %v3948 = vmax.f32 %v3916, 0.0
      %v3949 = vmax.f32 %v3917, 0.0
      %v3950 = vmax.f32 %v3918, 0.0
      %v3951 = vmax.f32 %v3919, 0.0
      %v3952 = vmax.f32 %v3920, 0.0
      %v3953 = vmax.f32 %v3921, 0.0
      %v3954 = vmax.f32 %v3922, 0.0
      %v3955 = vmax.f32 %v3923, 0.0
      %v3956 = vmax.f32 %v3924, 0.0
      %v3957 = vmax.f32 %v3925, 0.0
      %v3958 = vmax.f32 %v3926, 0.0
      %v3959 = vmax.f32 %v3927, 0.0
      %v3960 = vmax.f32 %v3928, 0.0
      %v3961 = vmax.f32 %v3929, 0.0
      %v3962 = vmax.f32 %v3930, 0.0
      %v3963 = vmax.f32 %v3931, 0.0
      %v3964 = vmax.f32 %v3932, 0.0
      %v3965 = vpack.c.bf16 %v3934, %v3933
      %v3966 = vpack.c.bf16 %v3936, %v3935
      %v3967 = vpack.c.bf16 %v3938, %v3937
      %v3968 = vpack.c.bf16 %v3940, %v3939
      %v3969 = vpack.c.bf16 %v3942, %v3941
      %v3970 = vpack.c.bf16 %v3944, %v3943
      %v3971 = vpack.c.bf16 %v3946, %v3945
      %v3972 = vpack.c.bf16 %v3948, %v3947
      %v3973 = vpack.c.bf16 %v3950, %v3949
      %v3974 = vpack.c.bf16 %v3952, %v3951
      %v3975 = vpack.c.bf16 %v3954, %v3953
      %v3976 = vpack.c.bf16 %v3956, %v3955
      %v3977 = vpack.c.bf16 %v3958, %v3957
      %v3978 = vpack.c.bf16 %v3960, %v3959
      %v3979 = vpack.c.bf16 %v3962, %v3961
      %v3980 = vpack.c.bf16 %v3964, %v3963
      %3981 = vst.msk [vmem:[%s428 + $0x8] sm:$0xff] %vm366, %v3965
      %3982 = vst.msk [vmem:[%s428 + $0x20] sm:$0xff] %vm366, %v3966
      %3983 = vst.msk [vmem:[%s428 + $0x38] sm:$0xff] %vm366, %v3967
      %3984 = vst.msk [vmem:[%s428 + $0x50] sm:$0xff] %vm366, %v3968
      %3985 = vst.msk [vmem:[%s428 + $0x68] sm:$0xff] %vm366, %v3969
      %3986 = vst.msk [vmem:[%s428 + $0x80] sm:$0xff] %vm366, %v3970
      %3987 = vst.msk [vmem:[%s428 + $0x98] sm:$0xff] %vm366, %v3971
      %3988 = vst.msk [vmem:[%s428 + $0xb0] sm:$0xff] %vm366, %v3972
      %3989 = vst.msk [vmem:[%s428 + $0xc8] sm:$0xff] %vm366, %v3973
      %3990 = vst.msk [vmem:[%s428 + $0xe0] sm:$0xff] %vm366, %v3974
      %3991 = vst.msk [vmem:[%s428 + $0xf8] sm:$0xff] %vm366, %v3975
      %3992 = vst.msk [vmem:[%s428 + $0x110] sm:$0xff] %vm366, %v3976
      %3993 = vst.msk [vmem:[%s428 + $0x128] sm:$0xff] %vm366, %v3977
      %3994 = vst.msk [vmem:[%s428 + $0x140] sm:$0xff] %vm366, %v3978
      %3995 = vst.msk [vmem:[%s428 + $0x158] sm:$0xff] %vm366, %v3979
      %3996 = vst.msk [vmem:[%s428 + $0x170] sm:$0xff] %vm366, %v3980
      %v3997 = vld [vmem:[#allocation2] sm:$0x80]
      %v3998 = vld [vmem:[#allocation2 + $0x8] sm:$0xff]
      %v3999 = vld [vmem:[#allocation2 + $0x18] sm:$0x80]
      %v4000 = vld [vmem:[#allocation2 + $0x20] sm:$0xff]
      %v4001 = vld [vmem:[#allocation2 + $0x30] sm:$0x80]
      %v4002 = vld [vmem:[#allocation2 + $0x38] sm:$0xff]
      %v4003 = vld [vmem:[#allocation2 + $0x48] sm:$0x80]
      %v4004 = vld [vmem:[#allocation2 + $0x50] sm:$0xff]
      %v4005 = vld [vmem:[#allocation2 + $0x60] sm:$0x80]
      %v4006 = vld [vmem:[#allocation2 + $0x68] sm:$0xff]
      %v4007 = vld [vmem:[#allocation2 + $0x78] sm:$0x80]
      %v4008 = vld [vmem:[#allocation2 + $0x80] sm:$0xff]
      %v4009 = vld [vmem:[#allocation2 + $0x90] sm:$0x80]
      %v4010 = vld [vmem:[#allocation2 + $0x98] sm:$0xff]
      %v4011 = vld [vmem:[#allocation2 + $0xa8] sm:$0x80]
      %v4012 = vld [vmem:[#allocation2 + $0xb0] sm:$0xff]
      %v4013 = vld [vmem:[#allocation2 + $0xc0] sm:$0x80]
      %v4014 = vld [vmem:[#allocation2 + $0xc8] sm:$0xff]
      %v4015 = vld [vmem:[#allocation2 + $0xd8] sm:$0x80]
      %v4016 = vld [vmem:[#allocation2 + $0xe0] sm:$0xff]
      %v4017 = vld [vmem:[#allocation2 + $0xf0] sm:$0x80]
      %v4018 = vld [vmem:[#allocation2 + $0xf8] sm:$0xff]
      %v4019 = vld [vmem:[#allocation2 + $0x108] sm:$0x80]
      %v4020 = vld [vmem:[#allocation2 + $0x110] sm:$0xff]
      %v4021 = vld [vmem:[#allocation2 + $0x120] sm:$0x80]
      %v4022 = vld [vmem:[#allocation2 + $0x128] sm:$0xff]
      %v4023 = vld [vmem:[#allocation2 + $0x138] sm:$0x80]
      %v4024 = vld [vmem:[#allocation2 + $0x140] sm:$0xff]
      %v4025 = vld [vmem:[#allocation2 + $0x150] sm:$0x80]
      %v4026 = vld [vmem:[#allocation2 + $0x158] sm:$0xff]
      %v4027 = vld [vmem:[#allocation2 + $0x168] sm:$0x80]
      %v4028 = vld [vmem:[#allocation2 + $0x170] sm:$0xff]
      %v4030 = vshrl.u32 %v3997, 16
      %v4032 = vrot.slane %v4030, 7
      %v4034 = vshrl.u32 %v3998, 16
      %v4036 = vrot.slane %v4034, 7
      %v4037 = vshll.u32 %v3998, 16
      %v4039 = vor.u32 %v4036, %v4037
      %v4040 = vsel %vm477, %v4032, %v4039
      %v4042 = vshrl.u32 %v3999, 16
      %v4044 = vrot.slane %v4042, 7
      %v4046 = vshrl.u32 %v4000, 16
      %v4048 = vrot.slane %v4046, 7
      %v4049 = vshll.u32 %v4000, 16
      %v4051 = vor.u32 %v4048, %v4049
      %v4052 = vsel %vm477, %v4044, %v4051
      %v4054 = vshrl.u32 %v4001, 16
      %v4056 = vrot.slane %v4054, 7
      %v4058 = vshrl.u32 %v4002, 16
      %v4060 = vrot.slane %v4058, 7
      %v4061 = vshll.u32 %v4002, 16
      %v4063 = vor.u32 %v4060, %v4061
      %v4064 = vsel %vm477, %v4056, %v4063
      %v4066 = vshrl.u32 %v4003, 16
      %v4068 = vrot.slane %v4066, 7
      %v4070 = vshrl.u32 %v4004, 16
      %v4072 = vrot.slane %v4070, 7
      %v4073 = vshll.u32 %v4004, 16
      %v4075 = vor.u32 %v4072, %v4073
      %v4076 = vsel %vm477, %v4068, %v4075
      %v4078 = vshrl.u32 %v4005, 16
      %v4080 = vrot.slane %v4078, 7
      %v4082 = vshrl.u32 %v4006, 16
      %v4084 = vrot.slane %v4082, 7
      %v4085 = vshll.u32 %v4006, 16
      %v4087 = vor.u32 %v4084, %v4085
      %v4088 = vsel %vm477, %v4080, %v4087
      %v4090 = vshrl.u32 %v4007, 16
      %v4092 = vrot.slane %v4090, 7
      %v4094 = vshrl.u32 %v4008, 16
      %v4096 = vrot.slane %v4094, 7
      %v4097 = vshll.u32 %v4008, 16
      %v4099 = vor.u32 %v4096, %v4097
      %v4100 = vsel %vm477, %v4092, %v4099
      %v4102 = vshrl.u32 %v4009, 16
      %v4104 = vrot.slane %v4102, 7
      %v4106 = vshrl.u32 %v4010, 16
      %v4108 = vrot.slane %v4106, 7
      %v4109 = vshll.u32 %v4010, 16
      %v4111 = vor.u32 %v4108, %v4109
      %v4112 = vsel %vm477, %v4104, %v4111
      %v4114 = vshrl.u32 %v4011, 16
      %v4116 = vrot.slane %v4114, 7
      %v4118 = vshrl.u32 %v4012, 16
      %v4120 = vrot.slane %v4118, 7
      %v4121 = vshll.u32 %v4012, 16
      %v4123 = vor.u32 %v4120, %v4121
      %v4124 = vsel %vm477, %v4116, %v4123
      %v4126 = vshrl.u32 %v4013, 16
      %v4128 = vrot.slane %v4126, 7
      %v4130 = vshrl.u32 %v4014, 16
      %v4132 = vrot.slane %v4130, 7
      %v4133 = vshll.u32 %v4014, 16
      %v4135 = vor.u32 %v4132, %v4133
      %v4136 = vsel %vm477, %v4128, %v4135
      %v4138 = vshrl.u32 %v4015, 16
      %v4140 = vrot.slane %v4138, 7
      %v4142 = vshrl.u32 %v4016, 16
      %v4144 = vrot.slane %v4142, 7
      %v4145 = vshll.u32 %v4016, 16
      %v4147 = vor.u32 %v4144, %v4145
      %v4148 = vsel %vm477, %v4140, %v4147
      %v4150 = vshrl.u32 %v4017, 16
      %v4152 = vrot.slane %v4150, 7
      %v4154 = vshrl.u32 %v4018, 16
      %v4156 = vrot.slane %v4154, 7
      %v4157 = vshll.u32 %v4018, 16
      %v4159 = vor.u32 %v4156, %v4157
      %v4160 = vsel %vm477, %v4152, %v4159
      %v4162 = vshrl.u32 %v4019, 16
      %v4164 = vrot.slane %v4162, 7
      %v4166 = vshrl.u32 %v4020, 16
      %v4168 = vrot.slane %v4166, 7
      %v4169 = vshll.u32 %v4020, 16
      %v4171 = vor.u32 %v4168, %v4169
      %v4172 = vsel %vm477, %v4164, %v4171
      %v4174 = vshrl.u32 %v4021, 16
      %v4176 = vrot.slane %v4174, 7
      %v4178 = vshrl.u32 %v4022, 16
      %v4180 = vrot.slane %v4178, 7
      %v4181 = vshll.u32 %v4022, 16
      %v4183 = vor.u32 %v4180, %v4181
      %v4184 = vsel %vm477, %v4176, %v4183
      %v4186 = vshrl.u32 %v4023, 16
      %v4188 = vrot.slane %v4186, 7
      %v4190 = vshrl.u32 %v4024, 16
      %v4192 = vrot.slane %v4190, 7
      %v4193 = vshll.u32 %v4024, 16
      %v4195 = vor.u32 %v4192, %v4193
      %v4196 = vsel %vm477, %v4188, %v4195
      %v4198 = vshrl.u32 %v4025, 16
      %v4200 = vrot.slane %v4198, 7
      %v4202 = vshrl.u32 %v4026, 16
      %v4204 = vrot.slane %v4202, 7
      %v4205 = vshll.u32 %v4026, 16
      %v4207 = vor.u32 %v4204, %v4205
      %v4208 = vsel %vm477, %v4200, %v4207
      %v4210 = vshrl.u32 %v4027, 16
      %v4212 = vrot.slane %v4210, 7
      %v4214 = vshrl.u32 %v4028, 16
      %v4216 = vrot.slane %v4214, 7
      %v4217 = vshll.u32 %v4028, 16
      %v4219 = vor.u32 %v4216, %v4217
      %v4220 = vsel %vm477, %v4212, %v4219
      %v4221 = vld [vmem:[%s3] sm:$0x3]
      %s4222 = scalar_lea.vmem %s3, 2
      %v4223 = vld [vmem:[%s4222] sm:$0x3]
      %v4224 = vsel %vm366, %v3998, 0
      %v4226 = vsel %vm366, %v4000, 0
      %v4228 = vsel %vm366, %v4002, 0
      %v4230 = vsel %vm366, %v4004, 0
      %v4232 = vsel %vm366, %v4006, 0
      %v4234 = vsel %vm366, %v4008, 0
      %v4236 = vsel %vm366, %v4010, 0
      %v4238 = vsel %vm366, %v4012, 0
      %v4240 = vsel %vm366, %v4014, 0
      %v4242 = vsel %vm366, %v4016, 0
      %v4244 = vsel %vm366, %v4018, 0
      %v4246 = vsel %vm366, %v4020, 0
      %v4248 = vsel %vm366, %v4022, 0
      %v4250 = vsel %vm366, %v4024, 0
      %v4252 = vsel %vm366, %v4026, 0
      %v4254 = vsel %vm366, %v4028, 0
      %v4257 = vsel %vm705, %v4223, 0
      %4259 = vmatprep.subr.bf16.mxu0 0
      %4260 = vmatpush1.bf16.msra.mxu0 %v4257
      %4261 = vmatprep.subr.bf16.mxu0 0
      %4262 = vmatpush1.bf16.msra.mxu0 0
      %4263 = vmatprep.subr.bf16.mxu0 0
      %4264 = vmatpush1.bf16.msra.mxu0 0
      %4265 = vmatprep.subr.bf16.mxu0 0
      %4266 = vmatpush1.bf16.msra.mxu0 0
      %4267 = vmatprep.subr.bf16.mxu0 0
      %4268 = vmatpush1.bf16.msra.mxu0 0
      %4269 = vmatprep.subr.bf16.mxu0 0
      %4270 = vmatpush1.bf16.msra.mxu0 0
      %4271 = vmatprep.subr.bf16.mxu0 0
      %4272 = vmatpush1.bf16.msra.mxu0 0
      %4273 = vmatprep.subr.bf16.mxu0 0
      %4274 = vmatpush1.bf16.msra.mxu0 0
      %4275 = vmatprep.subr.bf16.mxu0 0
      %4276 = vmatpush1.bf16.msra.mxu0 0
      %4277 = vmatprep.subr.bf16.mxu0 0
      %4278 = vmatpush1.bf16.msra.mxu0 0
      %4279 = vmatprep.subr.bf16.mxu0 0
      %4280 = vmatpush1.bf16.msra.mxu0 0
      %4281 = vmatprep.subr.bf16.mxu0 0
      %4282 = vmatpush1.bf16.msra.mxu0 0
      %4283 = vmatprep.subr.bf16.mxu0 0
      %4284 = vmatpush1.bf16.msra.mxu0 0
      %4285 = vmatprep.subr.bf16.mxu0 0
      %4286 = vmatpush1.bf16.msra.mxu0 0
      %4287 = vmatprep.subr.bf16.mxu0 0
      %4288 = vmatpush1.bf16.msra.mxu0 0
      %4289 = vmatprep.subr.bf16.mxu0 0
      %4290 = vmatpush1.bf16.msra.mxu0 0
      %4291 = vmatprep.mubr.bf16.mxu0 0
      %4292 = vmatmul.mubr.bf16.gmra.mrb[0].mxu0 %v4224
      %v4293 = vpop.f32.mrb[0].mxu0
      %v4294 = vadd.f32 0.0, %v4293
      %v4295 = vpop.f32.mrb[0].mxu0
      %v4296 = vpop.f32.mrb[0].mxu0
      %v4297 = vadd.f32 0.0, %v4296
      %v4298 = vpop.f32.mrb[0].mxu0
      %4299 = vmatprep.mubr.bf16.mxu0 0
      %4300 = vmatmul.mubr.bf16.gmra.mrb[0].mxu0 %v4226
      %v4301 = vpop.f32.mrb[0].mxu0
      %v4302 = vadd.f32 0.0, %v4301
      %v4303 = vpop.f32.mrb[0].mxu0
      %v4304 = vpop.f32.mrb[0].mxu0
      %v4305 = vadd.f32 0.0, %v4304
      %v4306 = vpop.f32.mrb[0].mxu0
      %4307 = vmatprep.mubr.bf16.mxu0 0
      %4308 = vmatmul.mubr.bf16.gmra.mrb[0].mxu0 %v4228
      %v4309 = vpop.f32.mrb[0].mxu0
      %v4310 = vadd.f32 0.0, %v4309
      %v4311 = vpop.f32.mrb[0].mxu0
      %v4312 = vpop.f32.mrb[0].mxu0
      %v4313 = vadd.f32 0.0, %v4312
      %v4314 = vpop.f32.mrb[0].mxu0
      %4315 = vmatprep.mubr.bf16.mxu0 0
      %4316 = vmatmul.mubr.bf16.gmra.mrb[0].mxu0 %v4230
      %v4317 = vpop.f32.mrb[0].mxu0
      %v4318 = vadd.f32 0.0, %v4317
      %v4319 = vpop.f32.mrb[0].mxu0
      %v4320 = vpop.f32.mrb[0].mxu0
      %v4321 = vadd.f32 0.0, %v4320
      %v4322 = vpop.f32.mrb[0].mxu0
      %4323 = vmatprep.mubr.bf16.mxu0 0
      %4324 = vmatmul.mubr.bf16.gmra.mrb[0].mxu0 %v4232
      %v4325 = vpop.f32.mrb[0].mxu0
      %v4326 = vadd.f32 0.0, %v4325
      %v4327 = vpop.f32.mrb[0].mxu0
      %v4328 = vpop.f32.mrb[0].mxu0
      %v4329 = vadd.f32 0.0, %v4328
      %v4330 = vpop.f32.mrb[0].mxu0
      %4331 = vmatprep.mubr.bf16.mxu0 0
      %4332 = vmatmul.mubr.bf16.gmra.mrb[0].mxu0 %v4234
      %v4333 = vpop.f32.mrb[0].mxu0
      %v4334 = vadd.f32 0.0, %v4333
      %v4335 = vpop.f32.mrb[0].mxu0
      %v4336 = vpop.f32.mrb[0].mxu0
      %v4337 = vadd.f32 0.0, %v4336
      %v4338 = vpop.f32.mrb[0].mxu0
      %4339 = vmatprep.mubr.bf16.mxu0 0
      %4340 = vmatmul.mubr.bf16.gmra.mrb[0].mxu0 %v4236
      %v4341 = vpop.f32.mrb[0].mxu0
      %v4342 = vadd.f32 0.0, %v4341
      %v4343 = vpop.f32.mrb[0].mxu0
      %v4344 = vpop.f32.mrb[0].mxu0
      %v4345 = vadd.f32 0.0, %v4344
      %v4346 = vpop.f32.mrb[0].mxu0
      %4347 = vmatprep.mubr.bf16.mxu0 0
      %4348 = vmatmul.mubr.bf16.gmra.mrb[0].mxu0 %v4238
      %v4349 = vpop.f32.mrb[0].mxu0
      %v4350 = vadd.f32 0.0, %v4349
      %v4351 = vpop.f32.mrb[0].mxu0
      %v4352 = vpop.f32.mrb[0].mxu0
      %v4353 = vadd.f32 0.0, %v4352
      %v4354 = vpop.f32.mrb[0].mxu0
      %4355 = vmatprep.mubr.bf16.mxu0 0
      %4356 = vmatmul.mubr.bf16.gmra.mrb[0].mxu0 %v4240
      %v4357 = vpop.f32.mrb[0].mxu0
      %v4358 = vadd.f32 0.0, %v4357
      %v4359 = vpop.f32.mrb[0].mxu0
      %v4360 = vpop.f32.mrb[0].mxu0
      %v4361 = vadd.f32 0.0, %v4360
      %v4362 = vpop.f32.mrb[0].mxu0
      %4363 = vmatprep.mubr.bf16.mxu0 0
      %4364 = vmatmul.mubr.bf16.gmra.mrb[0].mxu0 %v4242
      %v4365 = vpop.f32.mrb[0].mxu0
      %v4366 = vadd.f32 0.0, %v4365
      %v4367 = vpop.f32.mrb[0].mxu0
      %v4368 = vpop.f32.mrb[0].mxu0
      %v4369 = vadd.f32 0.0, %v4368
      %v4370 = vpop.f32.mrb[0].mxu0
      %4371 = vmatprep.mubr.bf16.mxu0 0
      %4372 = vmatmul.mubr.bf16.gmra.mrb[0].mxu0 %v4244
      %v4373 = vpop.f32.mrb[0].mxu0
      %v4374 = vadd.f32 0.0, %v4373
      %v4375 = vpop.f32.mrb[0].mxu0
      %v4376 = vpop.f32.mrb[0].mxu0
      %v4377 = vadd.f32 0.0, %v4376
      %v4378 = vpop.f32.mrb[0].mxu0
      %4379 = vmatprep.mubr.bf16.mxu0 0
      %4380 = vmatmul.mubr.bf16.gmra.mrb[0].mxu0 %v4246
      %v4381 = vpop.f32.mrb[0].mxu0
      %v4382 = vadd.f32 0.0, %v4381
      %v4383 = vpop.f32.mrb[0].mxu0
      %v4384 = vpop.f32.mrb[0].mxu0
      %v4385 = vadd.f32 0.0, %v4384
      %v4386 = vpop.f32.mrb[0].mxu0
      %4387 = vmatprep.mubr.bf16.mxu0 0
      %4388 = vmatmul.mubr.bf16.gmra.mrb[0].mxu0 %v4248
      %v4389 = vpop.f32.mrb[0].mxu0
      %v4390 = vadd.f32 0.0, %v4389
      %v4391 = vpop.f32.mrb[0].mxu0
      %v4392 = vpop.f32.mrb[0].mxu0
      %v4393 = vadd.f32 0.0, %v4392
      %v4394 = vpop.f32.mrb[0].mxu0
      %4395 = vmatprep.mubr.bf16.mxu0 0
      %4396 = vmatmul.mubr.bf16.gmra.mrb[0].mxu0 %v4250
      %v4397 = vpop.f32.mrb[0].mxu0
      %v4398 = vadd.f32 0.0, %v4397
      %v4399 = vpop.f32.mrb[0].mxu0
      %v4400 = vpop.f32.mrb[0].mxu0
      %v4401 = vadd.f32 0.0, %v4400
      %v4402 = vpop.f32.mrb[0].mxu0
      %4403 = vmatprep.mubr.bf16.mxu0 0
      %4404 = vmatmul.mubr.bf16.gmra.mrb[0].mxu0 %v4252
      %v4405 = vpop.f32.mrb[0].mxu0
      %v4406 = vadd.f32 0.0, %v4405
      %v4407 = vpop.f32.mrb[0].mxu0
      %v4408 = vpop.f32.mrb[0].mxu0
      %v4409 = vadd.f32 0.0, %v4408
      %v4410 = vpop.f32.mrb[0].mxu0
      %4411 = vmatprep.mubr.bf16.mxu0 0
      %4412 = vmatmul.mubr.bf16.gmra.mrb[0].mxu0 %v4254
      %v4413 = vpop.f32.mrb[0].mxu0
      %v4414 = vadd.f32 0.0, %v4413
      %v4415 = vpop.f32.mrb[0].mxu0
      %v4416 = vpop.f32.mrb[0].mxu0
      %v4417 = vadd.f32 0.0, %v4416
      %v4418 = vpop.f32.mrb[0].mxu0
      %4419 = vdwg.mxu0
      %v4421 = vsel %vm366, %v4040, 0
      %v4424 = vsel %vm366, %v4052, 0
      %v4427 = vsel %vm366, %v4064, 0
      %v4430 = vsel %vm366, %v4076, 0
      %v4433 = vsel %vm366, %v4088, 0
      %v4436 = vsel %vm366, %v4100, 0
      %v4439 = vsel %vm366, %v4112, 0
      %v4442 = vsel %vm366, %v4124, 0
      %v4445 = vsel %vm366, %v4136, 0
      %v4448 = vsel %vm366, %v4148, 0
      %v4451 = vsel %vm366, %v4160, 0
      %v4454 = vsel %vm366, %v4172, 0
      %v4457 = vsel %vm366, %v4184, 0
      %v4460 = vsel %vm366, %v4196, 0
      %v4463 = vsel %vm366, %v4208, 0
      %v4466 = vsel %vm366, %v4220, 0
      %v4469 = vsel %vm705, %v4221, 0
      %4471 = vmatprep.subr.bf16.mxu0 0
      %4472 = vmatpush1.bf16.msra.mxu0 %v4469
      %4473 = vmatprep.subr.bf16.mxu0 0
      %4474 = vmatpush1.bf16.msra.mxu0 0
      %4475 = vmatprep.subr.bf16.mxu0 0
      %4476 = vmatpush1.bf16.msra.mxu0 0
      %4477 = vmatprep.subr.bf16.mxu0 0
      %4478 = vmatpush1.bf16.msra.mxu0 0
      %4479 = vmatprep.subr.bf16.mxu0 0
      %4480 = vmatpush1.bf16.msra.mxu0 0
      %4481 = vmatprep.subr.bf16.mxu0 0
      %4482 = vmatpush1.bf16.msra.mxu0 0
      %4483 = vmatprep.subr.bf16.mxu0 0
      %4484 = vmatpush1.bf16.msra.mxu0 0
      %4485 = vmatprep.subr.bf16.mxu0 0
      %4486 = vmatpush1.bf16.msra.mxu0 0
      %4487 = vmatprep.subr.bf16.mxu0 0
      %4488 = vmatpush1.bf16.msra.mxu0 0
      %4489 = vmatprep.subr.bf16.mxu0 0
      %4490 = vmatpush1.bf16.msra.mxu0 0
      %4491 = vmatprep.subr.bf16.mxu0 0
      %4492 = vmatpush1.bf16.msra.mxu0 0
      %4493 = vmatprep.subr.bf16.mxu0 0
      %4494 = vmatpush1.bf16.msra.mxu0 0
      %4495 = vmatprep.subr.bf16.mxu0 0
      %4496 = vmatpush1.bf16.msra.mxu0 0
      %4497 = vmatprep.subr.bf16.mxu0 0
      %4498 = vmatpush1.bf16.msra.mxu0 0
      %4499 = vmatprep.subr.bf16.mxu0 0
      %4500 = vmatpush1.bf16.msra.mxu0 0
      %4501 = vmatprep.subr.bf16.mxu0 0
      %4502 = vmatpush1.bf16.msra.mxu0 0
      %4503 = vmatprep.mubr.bf16.mxu0 0
      %4504 = vmatmul.mubr.bf16.gmra.mrb[0].mxu0 %v4421
      %v4505 = vpop.f32.mrb[0].mxu0
      %v4506 = vadd.f32 %v4294, %v4505
      %v4507 = vpop.f32.mrb[0].mxu0
      %v4508 = vpop.f32.mrb[0].mxu0
      %v4509 = vadd.f32 %v4297, %v4508
      %v4510 = vpop.f32.mrb[0].mxu0
      %4511 = vmatprep.mubr.bf16.mxu0 0
      %4512 = vmatmul.mubr.bf16.gmra.mrb[0].mxu0 %v4424
      %v4513 = vpop.f32.mrb[0].mxu0
      %v4514 = vadd.f32 %v4302, %v4513
      %v4515 = vpop.f32.mrb[0].mxu0
      %v4516 = vpop.f32.mrb[0].mxu0
      %v4517 = vadd.f32 %v4305, %v4516
      %v4518 = vpop.f32.mrb[0].mxu0
      %4519 = vmatprep.mubr.bf16.mxu0 0
      %4520 = vmatmul.mubr.bf16.gmra.mrb[0].mxu0 %v4427
      %v4521 = vpop.f32.mrb[0].mxu0
      %v4522 = vadd.f32 %v4310, %v4521
      %v4523 = vpop.f32.mrb[0].mxu0
      %v4524 = vpop.f32.mrb[0].mxu0
      %v4525 = vadd.f32 %v4313, %v4524
      %v4526 = vpop.f32.mrb[0].mxu0
      %4527 = vmatprep.mubr.bf16.mxu0 0
      %4528 = vmatmul.mubr.bf16.gmra.mrb[0].mxu0 %v4430
      %v4529 = vpop.f32.mrb[0].mxu0
      %v4530 = vadd.f32 %v4318, %v4529
      %v4531 = vpop.f32.mrb[0].mxu0
      %v4532 = vpop.f32.mrb[0].mxu0
      %v4533 = vadd.f32 %v4321, %v4532
      %v4534 = vpop.f32.mrb[0].mxu0
      %4535 = vmatprep.mubr.bf16.mxu0 0
      %4536 = vmatmul.mubr.bf16.gmra.mrb[0].mxu0 %v4433
      %v4537 = vpop.f32.mrb[0].mxu0
      %v4538 = vadd.f32 %v4326, %v4537
      %v4539 = vpop.f32.mrb[0].mxu0
      %v4540 = vpop.f32.mrb[0].mxu0
      %v4541 = vadd.f32 %v4329, %v4540
      %v4542 = vpop.f32.mrb[0].mxu0
      %4543 = vmatprep.mubr.bf16.mxu0 0
      %4544 = vmatmul.mubr.bf16.gmra.mrb[0].mxu0 %v4436
      %v4545 = vpop.f32.mrb[0].mxu0
      %v4546 = vadd.f32 %v4334, %v4545
      %v4547 = vpop.f32.mrb[0].mxu0
      %v4548 = vpop.f32.mrb[0].mxu0
      %v4549 = vadd.f32 %v4337, %v4548
      %v4550 = vpop.f32.mrb[0].mxu0
      %4551 = vmatprep.mubr.bf16.mxu0 0
      %4552 = vmatmul.mubr.bf16.gmra.mrb[0].mxu0 %v4439
      %v4553 = vpop.f32.mrb[0].mxu0
      %v4554 = vadd.f32 %v4342, %v4553
      %v4555 = vpop.f32.mrb[0].mxu0
      %v4556 = vpop.f32.mrb[0].mxu0
      %v4557 = vadd.f32 %v4345, %v4556
      %v4558 = vpop.f32.mrb[0].mxu0
      %4559 = vmatprep.mubr.bf16.mxu0 0
      %4560 = vmatmul.mubr.bf16.gmra.mrb[0].mxu0 %v4442
      %v4561 = vpop.f32.mrb[0].mxu0
      %v4562 = vadd.f32 %v4350, %v4561
      %v4563 = vpop.f32.mrb[0].mxu0
      %v4564 = vpop.f32.mrb[0].mxu0
      %v4565 = vadd.f32 %v4353, %v4564
      %v4566 = vpop.f32.mrb[0].mxu0
      %4567 = vmatprep.mubr.bf16.mxu0 0
      %4568 = vmatmul.mubr.bf16.gmra.mrb[0].mxu0 %v4445
      %v4569 = vpop.f32.mrb[0].mxu0
      %v4570 = vadd.f32 %v4358, %v4569
      %v4571 = vpop.f32.mrb[0].mxu0
      %v4572 = vpop.f32.mrb[0].mxu0
      %v4573 = vadd.f32 %v4361, %v4572
      %v4574 = vpop.f32.mrb[0].mxu0
      %4575 = vmatprep.mubr.bf16.mxu0 0
      %4576 = vmatmul.mubr.bf16.gmra.mrb[0].mxu0 %v4448
      %v4577 = vpop.f32.mrb[0].mxu0
      %v4578 = vadd.f32 %v4366, %v4577
      %v4579 = vpop.f32.mrb[0].mxu0
      %v4580 = vpop.f32.mrb[0].mxu0
      %v4581 = vadd.f32 %v4369, %v4580
      %v4582 = vpop.f32.mrb[0].mxu0
      %4583 = vmatprep.mubr.bf16.mxu0 0
      %4584 = vmatmul.mubr.bf16.gmra.mrb[0].mxu0 %v4451
      %v4585 = vpop.f32.mrb[0].mxu0
      %v4586 = vadd.f32 %v4374, %v4585
      %v4587 = vpop.f32.mrb[0].mxu0
      %v4588 = vpop.f32.mrb[0].mxu0
      %v4589 = vadd.f32 %v4377, %v4588
      %v4590 = vpop.f32.mrb[0].mxu0
      %4591 = vmatprep.mubr.bf16.mxu0 0
      %4592 = vmatmul.mubr.bf16.gmra.mrb[0].mxu0 %v4454
      %v4593 = vpop.f32.mrb[0].mxu0
      %v4594 = vadd.f32 %v4382, %v4593
      %v4595 = vpop.f32.mrb[0].mxu0
      %v4596 = vpop.f32.mrb[0].mxu0
      %v4597 = vadd.f32 %v4385, %v4596
      %v4598 = vpop.f32.mrb[0].mxu0
      %4599 = vmatprep.mubr.bf16.mxu0 0
      %4600 = vmatmul.mubr.bf16.gmra.mrb[0].mxu0 %v4457
      %v4601 = vpop.f32.mrb[0].mxu0
      %v4602 = vadd.f32 %v4390, %v4601
      %v4603 = vpop.f32.mrb[0].mxu0
      %v4604 = vpop.f32.mrb[0].mxu0
      %v4605 = vadd.f32 %v4393, %v4604
      %v4606 = vpop.f32.mrb[0].mxu0
      %4607 = vmatprep.mubr.bf16.mxu0 0
      %4608 = vmatmul.mubr.bf16.gmra.mrb[0].mxu0 %v4460
      %v4609 = vpop.f32.mrb[0].mxu0
      %v4610 = vadd.f32 %v4398, %v4609
      %v4611 = vpop.f32.mrb[0].mxu0
      %v4612 = vpop.f32.mrb[0].mxu0
      %v4613 = vadd.f32 %v4401, %v4612
      %v4614 = vpop.f32.mrb[0].mxu0
      %4615 = vmatprep.mubr.bf16.mxu0 0
      %4616 = vmatmul.mubr.bf16.gmra.mrb[0].mxu0 %v4463
      %v4617 = vpop.f32.mrb[0].mxu0
      %v4618 = vadd.f32 %v4406, %v4617
      %v4619 = vpop.f32.mrb[0].mxu0
      %v4620 = vpop.f32.mrb[0].mxu0
      %v4621 = vadd.f32 %v4409, %v4620
      %v4622 = vpop.f32.mrb[0].mxu0
      %4623 = vmatprep.mubr.bf16.mxu0 0
      %4624 = vmatmul.mubr.bf16.gmra.mrb[0].mxu0 %v4466
      %v4625 = vpop.f32.mrb[0].mxu0
      %v4626 = vadd.f32 %v4414, %v4625
      %v4627 = vpop.f32.mrb[0].mxu0
      %v4628 = vpop.f32.mrb[0].mxu0
      %v4629 = vadd.f32 %v4417, %v4628
      %v4630 = vpop.f32.mrb[0].mxu0
      %4631 = vdwg.mxu0
      %v4632 = vld [vmem:[#allocation2 + $0x8] sm:$0xff]
      %v4633 = vld [vmem:[#allocation2 + $0x10] sm:$0x1]
      %v4634 = vld [vmem:[#allocation2 + $0x20] sm:$0xff]
      %v4635 = vld [vmem:[#allocation2 + $0x28] sm:$0x1]
      %v4636 = vld [vmem:[#allocation2 + $0x38] sm:$0xff]
      %v4637 = vld [vmem:[#allocation2 + $0x40] sm:$0x1]
      %v4638 = vld [vmem:[#allocation2 + $0x50] sm:$0xff]
      %v4639 = vld [vmem:[#allocation2 + $0x58] sm:$0x1]
      %v4640 = vld [vmem:[#allocation2 + $0x68] sm:$0xff]
      %v4641 = vld [vmem:[#allocation2 + $0x70] sm:$0x1]
      %v4642 = vld [vmem:[#allocation2 + $0x80] sm:$0xff]
      %v4643 = vld [vmem:[#allocation2 + $0x88] sm:$0x1]
      %v4644 = vld [vmem:[#allocation2 + $0x98] sm:$0xff]
      %v4645 = vld [vmem:[#allocation2 + $0xa0] sm:$0x1]
      %v4646 = vld [vmem:[#allocation2 + $0xb0] sm:$0xff]
      %v4647 = vld [vmem:[#allocation2 + $0xb8] sm:$0x1]
      %v4648 = vld [vmem:[#allocation2 + $0xc8] sm:$0xff]
      %v4649 = vld [vmem:[#allocation2 + $0xd0] sm:$0x1]
      %v4650 = vld [vmem:[#allocation2 + $0xe0] sm:$0xff]
      %v4651 = vld [vmem:[#allocation2 + $0xe8] sm:$0x1]
      %v4652 = vld [vmem:[#allocation2 + $0xf8] sm:$0xff]
      %v4653 = vld [vmem:[#allocation2 + $0x100] sm:$0x1]
      %v4654 = vld [vmem:[#allocation2 + $0x110] sm:$0xff]
      %v4655 = vld [vmem:[#allocation2 + $0x118] sm:$0x1]
      %v4656 = vld [vmem:[#allocation2 + $0x128] sm:$0xff]
      %v4657 = vld [vmem:[#allocation2 + $0x130] sm:$0x1]
      %v4658 = vld [vmem:[#allocation2 + $0x140] sm:$0xff]
      %v4659 = vld [vmem:[#allocation2 + $0x148] sm:$0x1]
      %v4660 = vld [vmem:[#allocation2 + $0x158] sm:$0xff]
      %v4661 = vld [vmem:[#allocation2 + $0x160] sm:$0x1]
      %v4662 = vld [vmem:[#allocation2 + $0x170] sm:$0xff]
      %v4663 = vld [vmem:[#allocation2 + $0x178] sm:$0x1]
      %v4665 = vshrl.u32 %v4632, 16
      %v4667 = vshll.u32 %v4632, 16
      %v4669 = vrot.slane %v4667, 1
      %v4670 = vor.u32 %v4665, %v4669
      %v4672 = vshll.u32 %v4633, 16
      %v4674 = vrot.slane %v4672, 1
      %v4675 = vsel %vm1114, %v4670, %v4674
      %v4677 = vshrl.u32 %v4634, 16
      %v4679 = vshll.u32 %v4634, 16
      %v4681 = vrot.slane %v4679, 1
      %v4682 = vor.u32 %v4677, %v4681
      %v4684 = vshll.u32 %v4635, 16
      %v4686 = vrot.slane %v4684, 1
      %v4687 = vsel %vm1114, %v4682, %v4686
      %v4689 = vshrl.u32 %v4636, 16
      %v4691 = vshll.u32 %v4636, 16
      %v4693 = vrot.slane %v4691, 1
      %v4694 = vor.u32 %v4689, %v4693
      %v4696 = vshll.u32 %v4637, 16
      %v4698 = vrot.slane %v4696, 1
      %v4699 = vsel %vm1114, %v4694, %v4698
      %v4701 = vshrl.u32 %v4638, 16
      %v4703 = vshll.u32 %v4638, 16
      %v4705 = vrot.slane %v4703, 1
      %v4706 = vor.u32 %v4701, %v4705
      %v4708 = vshll.u32 %v4639, 16
      %v4710 = vrot.slane %v4708, 1
      %v4711 = vsel %vm1114, %v4706, %v4710
      %v4713 = vshrl.u32 %v4640, 16
      %v4715 = vshll.u32 %v4640, 16
      %v4717 = vrot.slane %v4715, 1
      %v4718 = vor.u32 %v4713, %v4717
      %v4720 = vshll.u32 %v4641, 16
      %v4722 = vrot.slane %v4720, 1
      %v4723 = vsel %vm1114, %v4718, %v4722
      %v4725 = vshrl.u32 %v4642, 16
      %v4727 = vshll.u32 %v4642, 16
      %v4729 = vrot.slane %v4727, 1
      %v4730 = vor.u32 %v4725, %v4729
      %v4732 = vshll.u32 %v4643, 16
      %v4734 = vrot.slane %v4732, 1
      %v4735 = vsel %vm1114, %v4730, %v4734
      %v4737 = vshrl.u32 %v4644, 16
      %v4739 = vshll.u32 %v4644, 16
      %v4741 = vrot.slane %v4739, 1
      %v4742 = vor.u32 %v4737, %v4741
      %v4744 = vshll.u32 %v4645, 16
      %v4746 = vrot.slane %v4744, 1
      %v4747 = vsel %vm1114, %v4742, %v4746
      %v4749 = vshrl.u32 %v4646, 16
      %v4751 = vshll.u32 %v4646, 16
      %v4753 = vrot.slane %v4751, 1
      %v4754 = vor.u32 %v4749, %v4753
      %v4756 = vshll.u32 %v4647, 16
      %v4758 = vrot.slane %v4756, 1
      %v4759 = vsel %vm1114, %v4754, %v4758
      %v4761 = vshrl.u32 %v4648, 16
      %v4763 = vshll.u32 %v4648, 16
      %v4765 = vrot.slane %v4763, 1
      %v4766 = vor.u32 %v4761, %v4765
      %v4768 = vshll.u32 %v4649, 16
      %v4770 = vrot.slane %v4768, 1
      %v4771 = vsel %vm1114, %v4766, %v4770
      %v4773 = vshrl.u32 %v4650, 16
      %v4775 = vshll.u32 %v4650, 16
      %v4777 = vrot.slane %v4775, 1
      %v4778 = vor.u32 %v4773, %v4777
      %v4780 = vshll.u32 %v4651, 16
      %v4782 = vrot.slane %v4780, 1
      %v4783 = vsel %vm1114, %v4778, %v4782
      %v4785 = vshrl.u32 %v4652, 16
      %v4787 = vshll.u32 %v4652, 16
      %v4789 = vrot.slane %v4787, 1
      %v4790 = vor.u32 %v4785, %v4789
      %v4792 = vshll.u32 %v4653, 16
      %v4794 = vrot.slane %v4792, 1
      %v4795 = vsel %vm1114, %v4790, %v4794
      %v4797 = vshrl.u32 %v4654, 16
      %v4799 = vshll.u32 %v4654, 16
      %v4801 = vrot.slane %v4799, 1
      %v4802 = vor.u32 %v4797, %v4801
      %v4804 = vshll.u32 %v4655, 16
      %v4806 = vrot.slane %v4804, 1
      %v4807 = vsel %vm1114, %v4802, %v4806
      %v4809 = vshrl.u32 %v4656, 16
      %v4811 = vshll.u32 %v4656, 16
      %v4813 = vrot.slane %v4811, 1
      %v4814 = vor.u32 %v4809, %v4813
      %v4816 = vshll.u32 %v4657, 16
      %v4818 = vrot.slane %v4816, 1
      %v4819 = vsel %vm1114, %v4814, %v4818
      %v4821 = vshrl.u32 %v4658, 16
      %v4823 = vshll.u32 %v4658, 16
      %v4825 = vrot.slane %v4823, 1
      %v4826 = vor.u32 %v4821, %v4825
      %v4828 = vshll.u32 %v4659, 16
      %v4830 = vrot.slane %v4828, 1
      %v4831 = vsel %vm1114, %v4826, %v4830
      %v4833 = vshrl.u32 %v4660, 16
      %v4835 = vshll.u32 %v4660, 16
      %v4837 = vrot.slane %v4835, 1
      %v4838 = vor.u32 %v4833, %v4837
      %v4840 = vshll.u32 %v4661, 16
      %v4842 = vrot.slane %v4840, 1
      %v4843 = vsel %vm1114, %v4838, %v4842
      %v4845 = vshrl.u32 %v4662, 16
      %v4847 = vshll.u32 %v4662, 16
      %v4849 = vrot.slane %v4847, 1
      %v4850 = vor.u32 %v4845, %v4849
      %v4852 = vshll.u32 %v4663, 16
      %v4854 = vrot.slane %v4852, 1
      %v4855 = vsel %vm1114, %v4850, %v4854
      %s4856 = scalar_lea.vmem %s3, 4
      %v4857 = vld [vmem:[%s4856] sm:$0x3]
      %v4859 = vsel %vm366, %v4675, 0
      %v4862 = vsel %vm366, %v4687, 0
      %v4865 = vsel %vm366, %v4699, 0
      %v4868 = vsel %vm366, %v4711, 0
      %v4871 = vsel %vm366, %v4723, 0
      %v4874 = vsel %vm366, %v4735, 0
      %v4877 = vsel %vm366, %v4747, 0
      %v4880 = vsel %vm366, %v4759, 0
      %v4883 = vsel %vm366, %v4771, 0
      %v4886 = vsel %vm366, %v4783, 0
      %v4889 = vsel %vm366, %v4795, 0
      %v4892 = vsel %vm366, %v4807, 0
      %v4895 = vsel %vm366, %v4819, 0
      %v4898 = vsel %vm366, %v4831, 0
      %v4901 = vsel %vm366, %v4843, 0
      %v4904 = vsel %vm366, %v4855, 0
      %v4907 = vsel %vm705, %v4857, 0
      %4909 = vmatprep.subr.bf16.mxu0 0
      %4910 = vmatpush1.bf16.msra.mxu0 %v4907
      %4911 = vmatprep.subr.bf16.mxu0 0
      %4912 = vmatpush1.bf16.msra.mxu0 0
      %4913 = vmatprep.subr.bf16.mxu0 0
      %4914 = vmatpush1.bf16.msra.mxu0 0
      %4915 = vmatprep.subr.bf16.mxu0 0
      %4916 = vmatpush1.bf16.msra.mxu0 0
      %4917 = vmatprep.subr.bf16.mxu0 0
      %4918 = vmatpush1.bf16.msra.mxu0 0
      %4919 = vmatprep.subr.bf16.mxu0 0
      %4920 = vmatpush1.bf16.msra.mxu0 0
      %4921 = vmatprep.subr.bf16.mxu0 0
      %4922 = vmatpush1.bf16.msra.mxu0 0
      %4923 = vmatprep.subr.bf16.mxu0 0
      %4924 = vmatpush1.bf16.msra.mxu0 0
      %4925 = vmatprep.subr.bf16.mxu0 0
      %4926 = vmatpush1.bf16.msra.mxu0 0
      %4927 = vmatprep.subr.bf16.mxu0 0
      %4928 = vmatpush1.bf16.msra.mxu0 0
      %4929 = vmatprep.subr.bf16.mxu0 0
      %4930 = vmatpush1.bf16.msra.mxu0 0
      %4931 = vmatprep.subr.bf16.mxu0 0
      %4932 = vmatpush1.bf16.msra.mxu0 0
      %4933 = vmatprep.subr.bf16.mxu0 0
      %4934 = vmatpush1.bf16.msra.mxu0 0
      %4935 = vmatprep.subr.bf16.mxu0 0
      %4936 = vmatpush1.bf16.msra.mxu0 0
      %4937 = vmatprep.subr.bf16.mxu0 0
      %4938 = vmatpush1.bf16.msra.mxu0 0
      %4939 = vmatprep.subr.bf16.mxu0 0
      %4940 = vmatpush1.bf16.msra.mxu0 0
      %4941 = vmatprep.mubr.bf16.mxu0 0
      %4942 = vmatmul.mubr.bf16.gmra.mrb[0].mxu0 %v4859
      %v4943 = vpop.f32.mrb[0].mxu0
      %v4944 = vadd.f32 0.0, %v4943
      %v4945 = vpop.f32.mrb[0].mxu0
      %v4946 = vpop.f32.mrb[0].mxu0
      %v4947 = vadd.f32 0.0, %v4946
      %v4948 = vpop.f32.mrb[0].mxu0
      %4949 = vmatprep.mubr.bf16.mxu0 0
      %4950 = vmatmul.mubr.bf16.gmra.mrb[0].mxu0 %v4862
      %v4951 = vpop.f32.mrb[0].mxu0
      %v4952 = vadd.f32 0.0, %v4951
      %v4953 = vpop.f32.mrb[0].mxu0
      %v4954 = vpop.f32.mrb[0].mxu0
      %v4955 = vadd.f32 0.0, %v4954
      %v4956 = vpop.f32.mrb[0].mxu0
      %4957 = vmatprep.mubr.bf16.mxu0 0
      %4958 = vmatmul.mubr.bf16.gmra.mrb[0].mxu0 %v4865
      %v4959 = vpop.f32.mrb[0].mxu0
      %v4960 = vadd.f32 0.0, %v4959
      %v4961 = vpop.f32.mrb[0].mxu0
      %v4962 = vpop.f32.mrb[0].mxu0
      %v4963 = vadd.f32 0.0, %v4962
      %v4964 = vpop.f32.mrb[0].mxu0
      %4965 = vmatprep.mubr.bf16.mxu0 0
      %4966 = vmatmul.mubr.bf16.gmra.mrb[0].mxu0 %v4868
      %v4967 = vpop.f32.mrb[0].mxu0
      %v4968 = vadd.f32 0.0, %v4967
      %v4969 = vpop.f32.mrb[0].mxu0
      %v4970 = vpop.f32.mrb[0].mxu0
      %v4971 = vadd.f32 0.0, %v4970
      %v4972 = vpop.f32.mrb[0].mxu0
      %4973 = vmatprep.mubr.bf16.mxu0 0
      %4974 = vmatmul.mubr.bf16.gmra.mrb[0].mxu0 %v4871
      %v4975 = vpop.f32.mrb[0].mxu0
      %v4976 = vadd.f32 0.0, %v4975
      %v4977 = vpop.f32.mrb[0].mxu0
      %v4978 = vpop.f32.mrb[0].mxu0
      %v4979 = vadd.f32 0.0, %v4978
      %v4980 = vpop.f32.mrb[0].mxu0
      %4981 = vmatprep.mubr.bf16.mxu0 0
      %4982 = vmatmul.mubr.bf16.gmra.mrb[0].mxu0 %v4874
      %v4983 = vpop.f32.mrb[0].mxu0
      %v4984 = vadd.f32 0.0, %v4983
      %v4985 = vpop.f32.mrb[0].mxu0
      %v4986 = vpop.f32.mrb[0].mxu0
      %v4987 = vadd.f32 0.0, %v4986
      %v4988 = vpop.f32.mrb[0].mxu0
      %4989 = vmatprep.mubr.bf16.mxu0 0
      %4990 = vmatmul.mubr.bf16.gmra.mrb[0].mxu0 %v4877
      %v4991 = vpop.f32.mrb[0].mxu0
      %v4992 = vadd.f32 0.0, %v4991
      %v4993 = vpop.f32.mrb[0].mxu0
      %v4994 = vpop.f32.mrb[0].mxu0
      %v4995 = vadd.f32 0.0, %v4994
      %v4996 = vpop.f32.mrb[0].mxu0
      %4997 = vmatprep.mubr.bf16.mxu0 0
      %4998 = vmatmul.mubr.bf16.gmra.mrb[0].mxu0 %v4880
      %v4999 = vpop.f32.mrb[0].mxu0
      %v5000 = vadd.f32 0.0, %v4999
      %v5001 = vpop.f32.mrb[0].mxu0
      %v5002 = vpop.f32.mrb[0].mxu0
      %v5003 = vadd.f32 0.0, %v5002
      %v5004 = vpop.f32.mrb[0].mxu0
      %5005 = vmatprep.mubr.bf16.mxu0 0
      %5006 = vmatmul.mubr.bf16.gmra.mrb[0].mxu0 %v4883
      %v5007 = vpop.f32.mrb[0].mxu0
      %v5008 = vadd.f32 0.0, %v5007
      %v5009 = vpop.f32.mrb[0].mxu0
      %v5010 = vpop.f32.mrb[0].mxu0
      %v5011 = vadd.f32 0.0, %v5010
      %v5012 = vpop.f32.mrb[0].mxu0
      %5013 = vmatprep.mubr.bf16.mxu0 0
      %5014 = vmatmul.mubr.bf16.gmra.mrb[0].mxu0 %v4886
      %v5015 = vpop.f32.mrb[0].mxu0
      %v5016 = vadd.f32 0.0, %v5015
      %v5017 = vpop.f32.mrb[0].mxu0
      %v5018 = vpop.f32.mrb[0].mxu0
      %v5019 = vadd.f32 0.0, %v5018
      %v5020 = vpop.f32.mrb[0].mxu0
      %5021 = vmatprep.mubr.bf16.mxu0 0
      %5022 = vmatmul.mubr.bf16.gmra.mrb[0].mxu0 %v4889
      %v5023 = vpop.f32.mrb[0].mxu0
      %v5024 = vadd.f32 0.0, %v5023
      %v5025 = vpop.f32.mrb[0].mxu0
      %v5026 = vpop.f32.mrb[0].mxu0
      %v5027 = vadd.f32 0.0, %v5026
      %v5028 = vpop.f32.mrb[0].mxu0
      %5029 = vmatprep.mubr.bf16.mxu0 0
      %5030 = vmatmul.mubr.bf16.gmra.mrb[0].mxu0 %v4892
      %v5031 = vpop.f32.mrb[0].mxu0
      %v5032 = vadd.f32 0.0, %v5031
      %v5033 = vpop.f32.mrb[0].mxu0
      %v5034 = vpop.f32.mrb[0].mxu0
      %v5035 = vadd.f32 0.0, %v5034
      %v5036 = vpop.f32.mrb[0].mxu0
      %5037 = vmatprep.mubr.bf16.mxu0 0
      %5038 = vmatmul.mubr.bf16.gmra.mrb[0].mxu0 %v4895
      %v5039 = vpop.f32.mrb[0].mxu0
      %v5040 = vadd.f32 0.0, %v5039
      %v5041 = vpop.f32.mrb[0].mxu0
      %v5042 = vpop.f32.mrb[0].mxu0
      %v5043 = vadd.f32 0.0, %v5042
      %v5044 = vpop.f32.mrb[0].mxu0
      %5045 = vmatprep.mubr.bf16.mxu0 0
      %5046 = vmatmul.mubr.bf16.gmra.mrb[0].mxu0 %v4898
      %v5047 = vpop.f32.mrb[0].mxu0
      %v5048 = vadd.f32 0.0, %v5047
      %v5049 = vpop.f32.mrb[0].mxu0
      %v5050 = vpop.f32.mrb[0].mxu0
      %v5051 = vadd.f32 0.0, %v5050
      %v5052 = vpop.f32.mrb[0].mxu0
      %5053 = vmatprep.mubr.bf16.mxu0 0
      %5054 = vmatmul.mubr.bf16.gmra.mrb[0].mxu0 %v4901
      %v5055 = vpop.f32.mrb[0].mxu0
      %v5056 = vadd.f32 0.0, %v5055
      %v5057 = vpop.f32.mrb[0].mxu0
      %v5058 = vpop.f32.mrb[0].mxu0
      %v5059 = vadd.f32 0.0, %v5058
      %v5060 = vpop.f32.mrb[0].mxu0
      %5061 = vmatprep.mubr.bf16.mxu0 0
      %5062 = vmatmul.mubr.bf16.gmra.mrb[0].mxu0 %v4904
      %v5063 = vpop.f32.mrb[0].mxu0
      %v5064 = vadd.f32 0.0, %v5063
      %v5065 = vpop.f32.mrb[0].mxu0
      %v5066 = vpop.f32.mrb[0].mxu0
      %v5067 = vadd.f32 0.0, %v5066
      %v5068 = vpop.f32.mrb[0].mxu0
      %5069 = vdwg.mxu0
      %v5070 = vadd.f32 %v4506, %v4944
      %v5071 = vadd.f32 %v4509, %v4947
      %v5072 = vadd.f32 %v4514, %v4952
      %v5073 = vadd.f32 %v4517, %v4955
      %v5074 = vadd.f32 %v4522, %v4960
      %v5075 = vadd.f32 %v4525, %v4963
      %v5076 = vadd.f32 %v4530, %v4968
      %v5077 = vadd.f32 %v4533, %v4971
      %v5078 = vadd.f32 %v4538, %v4976
      %v5079 = vadd.f32 %v4541, %v4979
      %v5080 = vadd.f32 %v4546, %v4984
      %v5081 = vadd.f32 %v4549, %v4987
      %v5082 = vadd.f32 %v4554, %v4992
      %v5083 = vadd.f32 %v4557, %v4995
      %v5084 = vadd.f32 %v4562, %v5000
      %v5085 = vadd.f32 %v4565, %v5003
      %v5086 = vadd.f32 %v4570, %v5008
      %v5087 = vadd.f32 %v4573, %v5011
      %v5088 = vadd.f32 %v4578, %v5016
      %v5089 = vadd.f32 %v4581, %v5019
      %v5090 = vadd.f32 %v4586, %v5024
      %v5091 = vadd.f32 %v4589, %v5027
      %v5092 = vadd.f32 %v4594, %v5032
      %v5093 = vadd.f32 %v4597, %v5035
      %v5094 = vadd.f32 %v4602, %v5040
      %v5095 = vadd.f32 %v4605, %v5043
      %v5096 = vadd.f32 %v4610, %v5048
      %v5097 = vadd.f32 %v4613, %v5051
      %v5098 = vadd.f32 %v4618, %v5056
      %v5099 = vadd.f32 %v4621, %v5059
      %v5100 = vadd.f32 %v4626, %v5064
      %v5101 = vadd.f32 %v4629, %v5067
      %v5102 = vld [vmem:[%s428] sm:$0x80]
      %v5103 = vld [vmem:[%s428 + $0x8] sm:$0xff]
      %v5104 = vld [vmem:[%s428 + $0x18] sm:$0x80]
      %v5105 = vld [vmem:[%s428 + $0x20] sm:$0xff]
      %v5106 = vld [vmem:[%s428 + $0x30] sm:$0x80]
      %v5107 = vld [vmem:[%s428 + $0x38] sm:$0xff]
      %v5108 = vld [vmem:[%s428 + $0x48] sm:$0x80]
      %v5109 = vld [vmem:[%s428 + $0x50] sm:$0xff]
      %v5110 = vld [vmem:[%s428 + $0x60] sm:$0x80]
      %v5111 = vld [vmem:[%s428 + $0x68] sm:$0xff]
      %v5112 = vld [vmem:[%s428 + $0x78] sm:$0x80]
      %v5113 = vld [vmem:[%s428 + $0x80] sm:$0xff]
      %v5114 = vld [vmem:[%s428 + $0x90] sm:$0x80]
      %v5115 = vld [vmem:[%s428 + $0x98] sm:$0xff]
      %v5116 = vld [vmem:[%s428 + $0xa8] sm:$0x80]
      %v5117 = vld [vmem:[%s428 + $0xb0] sm:$0xff]
      %v5118 = vld [vmem:[%s428 + $0xc0] sm:$0x80]
      %v5119 = vld [vmem:[%s428 + $0xc8] sm:$0xff]
      %v5120 = vld [vmem:[%s428 + $0xd8] sm:$0x80]
      %v5121 = vld [vmem:[%s428 + $0xe0] sm:$0xff]
      %v5122 = vld [vmem:[%s428 + $0xf0] sm:$0x80]
      %v5123 = vld [vmem:[%s428 + $0xf8] sm:$0xff]
      %v5124 = vld [vmem:[%s428 + $0x108] sm:$0x80]
      %v5125 = vld [vmem:[%s428 + $0x110] sm:$0xff]
      %v5126 = vld [vmem:[%s428 + $0x120] sm:$0x80]
      %v5127 = vld [vmem:[%s428 + $0x128] sm:$0xff]
      %v5128 = vld [vmem:[%s428 + $0x138] sm:$0x80]
      %v5129 = vld [vmem:[%s428 + $0x140] sm:$0xff]
      %v5130 = vld [vmem:[%s428 + $0x150] sm:$0x80]
      %v5131 = vld [vmem:[%s428 + $0x158] sm:$0xff]
      %v5132 = vld [vmem:[%s428 + $0x168] sm:$0x80]
      %v5133 = vld [vmem:[%s428 + $0x170] sm:$0xff]
      %v5135 = vshrl.u32 %v5102, 16
      %v5137 = vrot.slane %v5135, 7
      %v5139 = vshrl.u32 %v5103, 16
      %v5141 = vrot.slane %v5139, 7
      %v5142 = vshll.u32 %v5103, 16
      %v5144 = vor.u32 %v5141, %v5142
      %v5145 = vsel %vm477, %v5137, %v5144
      %v5147 = vshrl.u32 %v5104, 16
      %v5149 = vrot.slane %v5147, 7
      %v5151 = vshrl.u32 %v5105, 16
      %v5153 = vrot.slane %v5151, 7
      %v5154 = vshll.u32 %v5105, 16
      %v5156 = vor.u32 %v5153, %v5154
      %v5157 = vsel %vm477, %v5149, %v5156
      %v5159 = vshrl.u32 %v5106, 16
      %v5161 = vrot.slane %v5159, 7
      %v5163 = vshrl.u32 %v5107, 16
      %v5165 = vrot.slane %v5163, 7
      %v5166 = vshll.u32 %v5107, 16
      %v5168 = vor.u32 %v5165, %v5166
      %v5169 = vsel %vm477, %v5161, %v5168
      %v5171 = vshrl.u32 %v5108, 16
      %v5173 = vrot.slane %v5171, 7
      %v5175 = vshrl.u32 %v5109, 16
      %v5177 = vrot.slane %v5175, 7
      %v5178 = vshll.u32 %v5109, 16
      %v5180 = vor.u32 %v5177, %v5178
      %v5181 = vsel %vm477, %v5173, %v5180
      %v5183 = vshrl.u32 %v5110, 16
      %v5185 = vrot.slane %v5183, 7
      %v5187 = vshrl.u32 %v5111, 16
      %v5189 = vrot.slane %v5187, 7
      %v5190 = vshll.u32 %v5111, 16
      %v5192 = vor.u32 %v5189, %v5190
      %v5193 = vsel %vm477, %v5185, %v5192
      %v5195 = vshrl.u32 %v5112, 16
      %v5197 = vrot.slane %v5195, 7
      %v5199 = vshrl.u32 %v5113, 16
      %v5201 = vrot.slane %v5199, 7
      %v5202 = vshll.u32 %v5113, 16
      %v5204 = vor.u32 %v5201, %v5202
      %v5205 = vsel %vm477, %v5197, %v5204
      %v5207 = vshrl.u32 %v5114, 16
      %v5209 = vrot.slane %v5207, 7
      %v5211 = vshrl.u32 %v5115, 16
      %v5213 = vrot.slane %v5211, 7
      %v5214 = vshll.u32 %v5115, 16
      %v5216 = vor.u32 %v5213, %v5214
      %v5217 = vsel %vm477, %v5209, %v5216
      %v5219 = vshrl.u32 %v5116, 16
      %v5221 = vrot.slane %v5219, 7
      %v5223 = vshrl.u32 %v5117, 16
      %v5225 = vrot.slane %v5223, 7
      %v5226 = vshll.u32 %v5117, 16
      %v5228 = vor.u32 %v5225, %v5226
      %v5229 = vsel %vm477, %v5221, %v5228
      %v5231 = vshrl.u32 %v5118, 16
      %v5233 = vrot.slane %v5231, 7
      %v5235 = vshrl.u32 %v5119, 16
      %v5237 = vrot.slane %v5235, 7
      %v5238 = vshll.u32 %v5119, 16
      %v5240 = vor.u32 %v5237, %v5238
      %v5241 = vsel %vm477, %v5233, %v5240
      %v5243 = vshrl.u32 %v5120, 16
      %v5245 = vrot.slane %v5243, 7
      %v5247 = vshrl.u32 %v5121, 16
      %v5249 = vrot.slane %v5247, 7
      %v5250 = vshll.u32 %v5121, 16
      %v5252 = vor.u32 %v5249, %v5250
      %v5253 = vsel %vm477, %v5245, %v5252
      %v5255 = vshrl.u32 %v5122, 16
      %v5257 = vrot.slane %v5255, 7
      %v5259 = vshrl.u32 %v5123, 16
      %v5261 = vrot.slane %v5259, 7
      %v5262 = vshll.u32 %v5123, 16
      %v5264 = vor.u32 %v5261, %v5262
      %v5265 = vsel %vm477, %v5257, %v5264
      %v5267 = vshrl.u32 %v5124, 16
      %v5269 = vrot.slane %v5267, 7
      %v5271 = vshrl.u32 %v5125, 16
      %v5273 = vrot.slane %v5271, 7
      %v5274 = vshll.u32 %v5125, 16
      %v5276 = vor.u32 %v5273, %v5274
      %v5277 = vsel %vm477, %v5269, %v5276
      %v5279 = vshrl.u32 %v5126, 16
      %v5281 = vrot.slane %v5279, 7
      %v5283 = vshrl.u32 %v5127, 16
      %v5285 = vrot.slane %v5283, 7
      %v5286 = vshll.u32 %v5127, 16
      %v5288 = vor.u32 %v5285, %v5286
      %v5289 = vsel %vm477, %v5281, %v5288
      %v5291 = vshrl.u32 %v5128, 16
      %v5293 = vrot.slane %v5291, 7
      %v5295 = vshrl.u32 %v5129, 16
      %v5297 = vrot.slane %v5295, 7
      %v5298 = vshll.u32 %v5129, 16
      %v5300 = vor.u32 %v5297, %v5298
      %v5301 = vsel %vm477, %v5293, %v5300
      %v5303 = vshrl.u32 %v5130, 16
      %v5305 = vrot.slane %v5303, 7
      %v5307 = vshrl.u32 %v5131, 16
      %v5309 = vrot.slane %v5307, 7
      %v5310 = vshll.u32 %v5131, 16
      %v5312 = vor.u32 %v5309, %v5310
      %v5313 = vsel %vm477, %v5305, %v5312
      %v5315 = vshrl.u32 %v5132, 16
      %v5317 = vrot.slane %v5315, 7
      %v5319 = vshrl.u32 %v5133, 16
      %v5321 = vrot.slane %v5319, 7
      %v5322 = vshll.u32 %v5133, 16
      %v5324 = vor.u32 %v5321, %v5322
      %v5325 = vsel %vm477, %v5317, %v5324
      %s5326 = scalar_lea.vmem %s3, 6
      %v5327 = vld [vmem:[%s5326] sm:$0x3]
      %v5329 = vsel %vm366, %v5145, 0
      %v5332 = vsel %vm366, %v5157, 0
      %v5335 = vsel %vm366, %v5169, 0
      %v5338 = vsel %vm366, %v5181, 0
      %v5341 = vsel %vm366, %v5193, 0
      %v5344 = vsel %vm366, %v5205, 0
      %v5347 = vsel %vm366, %v5217, 0
      %v5350 = vsel %vm366, %v5229, 0
      %v5353 = vsel %vm366, %v5241, 0
      %v5356 = vsel %vm366, %v5253, 0
      %v5359 = vsel %vm366, %v5265, 0
      %v5362 = vsel %vm366, %v5277, 0
      %v5365 = vsel %vm366, %v5289, 0
      %v5368 = vsel %vm366, %v5301, 0
      %v5371 = vsel %vm366, %v5313, 0
      %v5374 = vsel %vm366, %v5325, 0
      %v5377 = vsel %vm705, %v5327, 0
      %5379 = vmatprep.subr.bf16.mxu0 0
      %5380 = vmatpush1.bf16.msra.mxu0 %v5377
      %5381 = vmatprep.subr.bf16.mxu0 0
      %5382 = vmatpush1.bf16.msra.mxu0 0
      %5383 = vmatprep.subr.bf16.mxu0 0
      %5384 = vmatpush1.bf16.msra.mxu0 0
      %5385 = vmatprep.subr.bf16.mxu0 0
      %5386 = vmatpush1.bf16.msra.mxu0 0
      %5387 = vmatprep.subr.bf16.mxu0 0
      %5388 = vmatpush1.bf16.msra.mxu0 0
      %5389 = vmatprep.subr.bf16.mxu0 0
      %5390 = vmatpush1.bf16.msra.mxu0 0
      %5391 = vmatprep.subr.bf16.mxu0 0
      %5392 = vmatpush1.bf16.msra.mxu0 0
      %5393 = vmatprep.subr.bf16.mxu0 0
      %5394 = vmatpush1.bf16.msra.mxu0 0
      %5395 = vmatprep.subr.bf16.mxu0 0
      %5396 = vmatpush1.bf16.msra.mxu0 0
      %5397 = vmatprep.subr.bf16.mxu0 0
      %5398 = vmatpush1.bf16.msra.mxu0 0
      %5399 = vmatprep.subr.bf16.mxu0 0
      %5400 = vmatpush1.bf16.msra.mxu0 0
      %5401 = vmatprep.subr.bf16.mxu0 0
      %5402 = vmatpush1.bf16.msra.mxu0 0
      %5403 = vmatprep.subr.bf16.mxu0 0
      %5404 = vmatpush1.bf16.msra.mxu0 0
      %5405 = vmatprep.subr.bf16.mxu0 0
      %5406 = vmatpush1.bf16.msra.mxu0 0
      %5407 = vmatprep.subr.bf16.mxu0 0
      %5408 = vmatpush1.bf16.msra.mxu0 0
      %5409 = vmatprep.subr.bf16.mxu0 0
      %5410 = vmatpush1.bf16.msra.mxu0 0
      %5411 = vmatprep.mubr.bf16.mxu0 0
      %5412 = vmatmul.mubr.bf16.gmra.mrb[0].mxu0 %v5329
      %v5413 = vpop.f32.mrb[0].mxu0
      %v5414 = vadd.f32 0.0, %v5413
      %v5415 = vpop.f32.mrb[0].mxu0
      %v5416 = vpop.f32.mrb[0].mxu0
      %v5417 = vadd.f32 0.0, %v5416
      %v5418 = vpop.f32.mrb[0].mxu0
      %5419 = vmatprep.mubr.bf16.mxu0 0
      %5420 = vmatmul.mubr.bf16.gmra.mrb[0].mxu0 %v5332
      %v5421 = vpop.f32.mrb[0].mxu0
      %v5422 = vadd.f32 0.0, %v5421
      %v5423 = vpop.f32.mrb[0].mxu0
      %v5424 = vpop.f32.mrb[0].mxu0
      %v5425 = vadd.f32 0.0, %v5424
      %v5426 = vpop.f32.mrb[0].mxu0
      %5427 = vmatprep.mubr.bf16.mxu0 0
      %5428 = vmatmul.mubr.bf16.gmra.mrb[0].mxu0 %v5335
      %v5429 = vpop.f32.mrb[0].mxu0
      %v5430 = vadd.f32 0.0, %v5429
      %v5431 = vpop.f32.mrb[0].mxu0
      %v5432 = vpop.f32.mrb[0].mxu0
      %v5433 = vadd.f32 0.0, %v5432
      %v5434 = vpop.f32.mrb[0].mxu0
      %5435 = vmatprep.mubr.bf16.mxu0 0
      %5436 = vmatmul.mubr.bf16.gmra.mrb[0].mxu0 %v5338
      %v5437 = vpop.f32.mrb[0].mxu0
      %v5438 = vadd.f32 0.0, %v5437
      %v5439 = vpop.f32.mrb[0].mxu0
      %v5440 = vpop.f32.mrb[0].mxu0
      %v5441 = vadd.f32 0.0, %v5440
      %v5442 = vpop.f32.mrb[0].mxu0
      %5443 = vmatprep.mubr.bf16.mxu0 0
      %5444 = vmatmul.mubr.bf16.gmra.mrb[0].mxu0 %v5341
      %v5445 = vpop.f32.mrb[0].mxu0
      %v5446 = vadd.f32 0.0, %v5445
      %v5447 = vpop.f32.mrb[0].mxu0
      %v5448 = vpop.f32.mrb[0].mxu0
      %v5449 = vadd.f32 0.0, %v5448
      %v5450 = vpop.f32.mrb[0].mxu0
      %5451 = vmatprep.mubr.bf16.mxu0 0
      %5452 = vmatmul.mubr.bf16.gmra.mrb[0].mxu0 %v5344
      %v5453 = vpop.f32.mrb[0].mxu0
      %v5454 = vadd.f32 0.0, %v5453
      %v5455 = vpop.f32.mrb[0].mxu0
      %v5456 = vpop.f32.mrb[0].mxu0
      %v5457 = vadd.f32 0.0, %v5456
      %v5458 = vpop.f32.mrb[0].mxu0
      %5459 = vmatprep.mubr.bf16.mxu0 0
      %5460 = vmatmul.mubr.bf16.gmra.mrb[0].mxu0 %v5347
      %v5461 = vpop.f32.mrb[0].mxu0
      %v5462 = vadd.f32 0.0, %v5461
      %v5463 = vpop.f32.mrb[0].mxu0
      %v5464 = vpop.f32.mrb[0].mxu0
      %v5465 = vadd.f32 0.0, %v5464
      %v5466 = vpop.f32.mrb[0].mxu0
      %5467 = vmatprep.mubr.bf16.mxu0 0
      %5468 = vmatmul.mubr.bf16.gmra.mrb[0].mxu0 %v5350
      %v5469 = vpop.f32.mrb[0].mxu0
      %v5470 = vadd.f32 0.0, %v5469
      %v5471 = vpop.f32.mrb[0].mxu0
      %v5472 = vpop.f32.mrb[0].mxu0
      %v5473 = vadd.f32 0.0, %v5472
      %v5474 = vpop.f32.mrb[0].mxu0
      %5475 = vmatprep.mubr.bf16.mxu0 0
      %5476 = vmatmul.mubr.bf16.gmra.mrb[0].mxu0 %v5353
      %v5477 = vpop.f32.mrb[0].mxu0
      %v5478 = vadd.f32 0.0, %v5477
      %v5479 = vpop.f32.mrb[0].mxu0
      %v5480 = vpop.f32.mrb[0].mxu0
      %v5481 = vadd.f32 0.0, %v5480
      %v5482 = vpop.f32.mrb[0].mxu0
      %5483 = vmatprep.mubr.bf16.mxu0 0
      %5484 = vmatmul.mubr.bf16.gmra.mrb[0].mxu0 %v5356
      %v5485 = vpop.f32.mrb[0].mxu0
      %v5486 = vadd.f32 0.0, %v5485
      %v5487 = vpop.f32.mrb[0].mxu0
      %v5488 = vpop.f32.mrb[0].mxu0
      %v5489 = vadd.f32 0.0, %v5488
      %v5490 = vpop.f32.mrb[0].mxu0
      %5491 = vmatprep.mubr.bf16.mxu0 0
      %5492 = vmatmul.mubr.bf16.gmra.mrb[0].mxu0 %v5359
      %v5493 = vpop.f32.mrb[0].mxu0
      %v5494 = vadd.f32 0.0, %v5493
      %v5495 = vpop.f32.mrb[0].mxu0
      %v5496 = vpop.f32.mrb[0].mxu0
      %v5497 = vadd.f32 0.0, %v5496
      %v5498 = vpop.f32.mrb[0].mxu0
      %5499 = vmatprep.mubr.bf16.mxu0 0
      %5500 = vmatmul.mubr.bf16.gmra.mrb[0].mxu0 %v5362
      %v5501 = vpop.f32.mrb[0].mxu0
      %v5502 = vadd.f32 0.0, %v5501
      %v5503 = vpop.f32.mrb[0].mxu0
      %v5504 = vpop.f32.mrb[0].mxu0
      %v5505 = vadd.f32 0.0, %v5504
      %v5506 = vpop.f32.mrb[0].mxu0
      %5507 = vmatprep.mubr.bf16.mxu0 0
      %5508 = vmatmul.mubr.bf16.gmra.mrb[0].mxu0 %v5365
      %v5509 = vpop.f32.mrb[0].mxu0
      %v5510 = vadd.f32 0.0, %v5509
      %v5511 = vpop.f32.mrb[0].mxu0
      %v5512 = vpop.f32.mrb[0].mxu0
      %v5513 = vadd.f32 0.0, %v5512
      %v5514 = vpop.f32.mrb[0].mxu0
      %5515 = vmatprep.mubr.bf16.mxu0 0
      %5516 = vmatmul.mubr.bf16.gmra.mrb[0].mxu0 %v5368
      %v5517 = vpop.f32.mrb[0].mxu0
      %v5518 = vadd.f32 0.0, %v5517
      %v5519 = vpop.f32.mrb[0].mxu0
      %v5520 = vpop.f32.mrb[0].mxu0
      %v5521 = vadd.f32 0.0, %v5520
      %v5522 = vpop.f32.mrb[0].mxu0
      %5523 = vmatprep.mubr.bf16.mxu0 0
      %5524 = vmatmul.mubr.bf16.gmra.mrb[0].mxu0 %v5371
      %v5525 = vpop.f32.mrb[0].mxu0
      %v5526 = vadd.f32 0.0, %v5525
      %v5527 = vpop.f32.mrb[0].mxu0
      %v5528 = vpop.f32.mrb[0].mxu0
      %v5529 = vadd.f32 0.0, %v5528
      %v5530 = vpop.f32.mrb[0].mxu0
      %5531 = vmatprep.mubr.bf16.mxu0 0
      %5532 = vmatmul.mubr.bf16.gmra.mrb[0].mxu0 %v5374
      %v5533 = vpop.f32.mrb[0].mxu0
      %v5534 = vadd.f32 0.0, %v5533
      %v5535 = vpop.f32.mrb[0].mxu0
      %v5536 = vpop.f32.mrb[0].mxu0
      %v5537 = vadd.f32 0.0, %v5536
      %v5538 = vpop.f32.mrb[0].mxu0
      %5539 = vdwg.mxu0
      %v5540 = vadd.f32 %v5070, %v5414
      %v5541 = vadd.f32 %v5071, %v5417
      %v5542 = vadd.f32 %v5072, %v5422
      %v5543 = vadd.f32 %v5073, %v5425
      %v5544 = vadd.f32 %v5074, %v5430
      %v5545 = vadd.f32 %v5075, %v5433
      %v5546 = vadd.f32 %v5076, %v5438
      %v5547 = vadd.f32 %v5077, %v5441
      %v5548 = vadd.f32 %v5078, %v5446
      %v5549 = vadd.f32 %v5079, %v5449
      %v5550 = vadd.f32 %v5080, %v5454
      %v5551 = vadd.f32 %v5081, %v5457
      %v5552 = vadd.f32 %v5082, %v5462
      %v5553 = vadd.f32 %v5083, %v5465
      %v5554 = vadd.f32 %v5084, %v5470
      %v5555 = vadd.f32 %v5085, %v5473
      %v5556 = vadd.f32 %v5086, %v5478
      %v5557 = vadd.f32 %v5087, %v5481
      %v5558 = vadd.f32 %v5088, %v5486
      %v5559 = vadd.f32 %v5089, %v5489
      %v5560 = vadd.f32 %v5090, %v5494
      %v5561 = vadd.f32 %v5091, %v5497
      %v5562 = vadd.f32 %v5092, %v5502
      %v5563 = vadd.f32 %v5093, %v5505
      %v5564 = vadd.f32 %v5094, %v5510
      %v5565 = vadd.f32 %v5095, %v5513
      %v5566 = vadd.f32 %v5096, %v5518
      %v5567 = vadd.f32 %v5097, %v5521
      %v5568 = vadd.f32 %v5098, %v5526
      %v5569 = vadd.f32 %v5099, %v5529
      %v5570 = vadd.f32 %v5100, %v5534
      %v5571 = vadd.f32 %v5101, %v5537
      %s5572 = scalar_lea.vmem %s3, 8
      %v5573 = vld [vmem:[%s5572] sm:$0x3]
      %v5574 = vsel %vm366, %v5103, 0
      %v5576 = vsel %vm366, %v5105, 0
      %v5578 = vsel %vm366, %v5107, 0
      %v5580 = vsel %vm366, %v5109, 0
      %v5582 = vsel %vm366, %v5111, 0
      %v5584 = vsel %vm366, %v5113, 0
      %v5586 = vsel %vm366, %v5115, 0
      %v5588 = vsel %vm366, %v5117, 0
      %v5590 = vsel %vm366, %v5119, 0
      %v5592 = vsel %vm366, %v5121, 0
      %v5594 = vsel %vm366, %v5123, 0
      %v5596 = vsel %vm366, %v5125, 0
      %v5598 = vsel %vm366, %v5127, 0
      %v5600 = vsel %vm366, %v5129, 0
      %v5602 = vsel %vm366, %v5131, 0
      %v5604 = vsel %vm366, %v5133, 0
      %v5607 = vsel %vm705, %v5573, 0
      %5609 = vmatprep.subr.bf16.mxu0 0
      %5610 = vmatpush1.bf16.msra.mxu0 %v5607
      %5611 = vmatprep.subr.bf16.mxu0 0
      %5612 = vmatpush1.bf16.msra.mxu0 0
      %5613 = vmatprep.subr.bf16.mxu0 0
      %5614 = vmatpush1.bf16.msra.mxu0 0
      %5615 = vmatprep.subr.bf16.mxu0 0
      %5616 = vmatpush1.bf16.msra.mxu0 0
      %5617 = vmatprep.subr.bf16.mxu0 0
      %5618 = vmatpush1.bf16.msra.mxu0 0
      %5619 = vmatprep.subr.bf16.mxu0 0
      %5620 = vmatpush1.bf16.msra.mxu0 0
      %5621 = vmatprep.subr.bf16.mxu0 0
      %5622 = vmatpush1.bf16.msra.mxu0 0
      %5623 = vmatprep.subr.bf16.mxu0 0
      %5624 = vmatpush1.bf16.msra.mxu0 0
      %5625 = vmatprep.subr.bf16.mxu0 0
      %5626 = vmatpush1.bf16.msra.mxu0 0
      %5627 = vmatprep.subr.bf16.mxu0 0
      %5628 = vmatpush1.bf16.msra.mxu0 0
      %5629 = vmatprep.subr.bf16.mxu0 0
      %5630 = vmatpush1.bf16.msra.mxu0 0
      %5631 = vmatprep.subr.bf16.mxu0 0
      %5632 = vmatpush1.bf16.msra.mxu0 0
      %5633 = vmatprep.subr.bf16.mxu0 0
      %5634 = vmatpush1.bf16.msra.mxu0 0
      %5635 = vmatprep.subr.bf16.mxu0 0
      %5636 = vmatpush1.bf16.msra.mxu0 0
      %5637 = vmatprep.subr.bf16.mxu0 0
      %5638 = vmatpush1.bf16.msra.mxu0 0
      %5639 = vmatprep.subr.bf16.mxu0 0
      %5640 = vmatpush1.bf16.msra.mxu0 0
      %5641 = vmatprep.mubr.bf16.mxu0 0
      %5642 = vmatmul.mubr.bf16.gmra.mrb[0].mxu0 %v5574
      %v5643 = vpop.f32.mrb[0].mxu0
      %v5644 = vadd.f32 0.0, %v5643
      %v5645 = vpop.f32.mrb[0].mxu0
      %v5646 = vpop.f32.mrb[0].mxu0
      %v5647 = vadd.f32 0.0, %v5646
      %v5648 = vpop.f32.mrb[0].mxu0
      %5649 = vmatprep.mubr.bf16.mxu0 0
      %5650 = vmatmul.mubr.bf16.gmra.mrb[0].mxu0 %v5576
      %v5651 = vpop.f32.mrb[0].mxu0
      %v5652 = vadd.f32 0.0, %v5651
      %v5653 = vpop.f32.mrb[0].mxu0
      %v5654 = vpop.f32.mrb[0].mxu0
      %v5655 = vadd.f32 0.0, %v5654
      %v5656 = vpop.f32.mrb[0].mxu0
      %5657 = vmatprep.mubr.bf16.mxu0 0
      %5658 = vmatmul.mubr.bf16.gmra.mrb[0].mxu0 %v5578
      %v5659 = vpop.f32.mrb[0].mxu0
      %v5660 = vadd.f32 0.0, %v5659
      %v5661 = vpop.f32.mrb[0].mxu0
      %v5662 = vpop.f32.mrb[0].mxu0
      %v5663 = vadd.f32 0.0, %v5662
      %v5664 = vpop.f32.mrb[0].mxu0
      %5665 = vmatprep.mubr.bf16.mxu0 0
      %5666 = vmatmul.mubr.bf16.gmra.mrb[0].mxu0 %v5580
      %v5667 = vpop.f32.mrb[0].mxu0
      %v5668 = vadd.f32 0.0, %v5667
      %v5669 = vpop.f32.mrb[0].mxu0
      %v5670 = vpop.f32.mrb[0].mxu0
      %v5671 = vadd.f32 0.0, %v5670
      %v5672 = vpop.f32.mrb[0].mxu0
      %5673 = vmatprep.mubr.bf16.mxu0 0
      %5674 = vmatmul.mubr.bf16.gmra.mrb[0].mxu0 %v5582
      %v5675 = vpop.f32.mrb[0].mxu0
      %v5676 = vadd.f32 0.0, %v5675
      %v5677 = vpop.f32.mrb[0].mxu0
      %v5678 = vpop.f32.mrb[0].mxu0
      %v5679 = vadd.f32 0.0, %v5678
      %v5680 = vpop.f32.mrb[0].mxu0
      %5681 = vmatprep.mubr.bf16.mxu0 0
      %5682 = vmatmul.mubr.bf16.gmra.mrb[0].mxu0 %v5584
      %v5683 = vpop.f32.mrb[0].mxu0
      %v5684 = vadd.f32 0.0, %v5683
      %v5685 = vpop.f32.mrb[0].mxu0
      %v5686 = vpop.f32.mrb[0].mxu0
      %v5687 = vadd.f32 0.0, %v5686
      %v5688 = vpop.f32.mrb[0].mxu0
      %5689 = vmatprep.mubr.bf16.mxu0 0
      %5690 = vmatmul.mubr.bf16.gmra.mrb[0].mxu0 %v5586
      %v5691 = vpop.f32.mrb[0].mxu0
      %v5692 = vadd.f32 0.0, %v5691
      %v5693 = vpop.f32.mrb[0].mxu0
      %v5694 = vpop.f32.mrb[0].mxu0
      %v5695 = vadd.f32 0.0, %v5694
      %v5696 = vpop.f32.mrb[0].mxu0
      %5697 = vmatprep.mubr.bf16.mxu0 0
      %5698 = vmatmul.mubr.bf16.gmra.mrb[0].mxu0 %v5588
      %v5699 = vpop.f32.mrb[0].mxu0
      %v5700 = vadd.f32 0.0, %v5699
      %v5701 = vpop.f32.mrb[0].mxu0
      %v5702 = vpop.f32.mrb[0].mxu0
      %v5703 = vadd.f32 0.0, %v5702
      %v5704 = vpop.f32.mrb[0].mxu0
      %5705 = vmatprep.mubr.bf16.mxu0 0
      %5706 = vmatmul.mubr.bf16.gmra.mrb[0].mxu0 %v5590
      %v5707 = vpop.f32.mrb[0].mxu0
      %v5708 = vadd.f32 0.0, %v5707
      %v5709 = vpop.f32.mrb[0].mxu0
      %v5710 = vpop.f32.mrb[0].mxu0
      %v5711 = vadd.f32 0.0, %v5710
      %v5712 = vpop.f32.mrb[0].mxu0
      %5713 = vmatprep.mubr.bf16.mxu0 0
      %5714 = vmatmul.mubr.bf16.gmra.mrb[0].mxu0 %v5592
      %v5715 = vpop.f32.mrb[0].mxu0
      %v5716 = vadd.f32 0.0, %v5715
      %v5717 = vpop.f32.mrb[0].mxu0
      %v5718 = vpop.f32.mrb[0].mxu0
      %v5719 = vadd.f32 0.0, %v5718
      %v5720 = vpop.f32.mrb[0].mxu0
      %5721 = vmatprep.mubr.bf16.mxu0 0
      %5722 = vmatmul.mubr.bf16.gmra.mrb[0].mxu0 %v5594
      %v5723 = vpop.f32.mrb[0].mxu0
      %v5724 = vadd.f32 0.0, %v5723
      %v5725 = vpop.f32.mrb[0].mxu0
      %v5726 = vpop.f32.mrb[0].mxu0
      %v5727 = vadd.f32 0.0, %v5726
      %v5728 = vpop.f32.mrb[0].mxu0
      %5729 = vmatprep.mubr.bf16.mxu0 0
      %5730 = vmatmul.mubr.bf16.gmra.mrb[0].mxu0 %v5596
      %v5731 = vpop.f32.mrb[0].mxu0
      %v5732 = vadd.f32 0.0, %v5731
      %v5733 = vpop.f32.mrb[0].mxu0
      %v5734 = vpop.f32.mrb[0].mxu0
      %v5735 = vadd.f32 0.0, %v5734
      %v5736 = vpop.f32.mrb[0].mxu0
      %5737 = vmatprep.mubr.bf16.mxu0 0
      %5738 = vmatmul.mubr.bf16.gmra.mrb[0].mxu0 %v5598
      %v5739 = vpop.f32.mrb[0].mxu0
      %v5740 = vadd.f32 0.0, %v5739
      %v5741 = vpop.f32.mrb[0].mxu0
      %v5742 = vpop.f32.mrb[0].mxu0
      %v5743 = vadd.f32 0.0, %v5742
      %v5744 = vpop.f32.mrb[0].mxu0
      %5745 = vmatprep.mubr.bf16.mxu0 0
      %5746 = vmatmul.mubr.bf16.gmra.mrb[0].mxu0 %v5600
      %v5747 = vpop.f32.mrb[0].mxu0
      %v5748 = vadd.f32 0.0, %v5747
      %v5749 = vpop.f32.mrb[0].mxu0
      %v5750 = vpop.f32.mrb[0].mxu0
      %v5751 = vadd.f32 0.0, %v5750
      %v5752 = vpop.f32.mrb[0].mxu0
      %5753 = vmatprep.mubr.bf16.mxu0 0
      %5754 = vmatmul.mubr.bf16.gmra.mrb[0].mxu0 %v5602
      %v5755 = vpop.f32.mrb[0].mxu0
      %v5756 = vadd.f32 0.0, %v5755
      %v5757 = vpop.f32.mrb[0].mxu0
      %v5758 = vpop.f32.mrb[0].mxu0
      %v5759 = vadd.f32 0.0, %v5758
      %v5760 = vpop.f32.mrb[0].mxu0
      %5761 = vmatprep.mubr.bf16.mxu0 0
      %5762 = vmatmul.mubr.bf16.gmra.mrb[0].mxu0 %v5604
      %v5763 = vpop.f32.mrb[0].mxu0
      %v5764 = vadd.f32 0.0, %v5763
      %v5765 = vpop.f32.mrb[0].mxu0
      %v5766 = vpop.f32.mrb[0].mxu0
      %v5767 = vadd.f32 0.0, %v5766
      %v5768 = vpop.f32.mrb[0].mxu0
      %5769 = vdwg.mxu0
      %v5770 = vadd.f32 %v5540, %v5644
      %v5771 = vadd.f32 %v5541, %v5647
      %v5772 = vadd.f32 %v5542, %v5652
      %v5773 = vadd.f32 %v5543, %v5655
      %v5774 = vadd.f32 %v5544, %v5660
      %v5775 = vadd.f32 %v5545, %v5663
      %v5776 = vadd.f32 %v5546, %v5668
      %v5777 = vadd.f32 %v5547, %v5671
      %v5778 = vadd.f32 %v5548, %v5676
      %v5779 = vadd.f32 %v5549, %v5679
      %v5780 = vadd.f32 %v5550, %v5684
      %v5781 = vadd.f32 %v5551, %v5687
      %v5782 = vadd.f32 %v5552, %v5692
      %v5783 = vadd.f32 %v5553, %v5695
      %v5784 = vadd.f32 %v5554, %v5700
      %v5785 = vadd.f32 %v5555, %v5703
      %v5786 = vadd.f32 %v5556, %v5708
      %v5787 = vadd.f32 %v5557, %v5711
      %v5788 = vadd.f32 %v5558, %v5716
      %v5789 = vadd.f32 %v5559, %v5719
      %v5790 = vadd.f32 %v5560, %v5724
      %v5791 = vadd.f32 %v5561, %v5727
      %v5792 = vadd.f32 %v5562, %v5732
      %v5793 = vadd.f32 %v5563, %v5735
      %v5794 = vadd.f32 %v5564, %v5740
      %v5795 = vadd.f32 %v5565, %v5743
      %v5796 = vadd.f32 %v5566, %v5748
      %v5797 = vadd.f32 %v5567, %v5751
      %v5798 = vadd.f32 %v5568, %v5756
      %v5799 = vadd.f32 %v5569, %v5759
      %v5800 = vadd.f32 %v5570, %v5764
      %v5801 = vadd.f32 %v5571, %v5767
      %v5802 = vld [vmem:[%s428 + $0x8] sm:$0xff]
      %v5803 = vld [vmem:[%s428 + $0x10] sm:$0x1]
      %v5804 = vld [vmem:[%s428 + $0x20] sm:$0xff]
      %v5805 = vld [vmem:[%s428 + $0x28] sm:$0x1]
      %v5806 = vld [vmem:[%s428 + $0x38] sm:$0xff]
      %v5807 = vld [vmem:[%s428 + $0x40] sm:$0x1]
      %v5808 = vld [vmem:[%s428 + $0x50] sm:$0xff]
      %v5809 = vld [vmem:[%s428 + $0x58] sm:$0x1]
      %v5810 = vld [vmem:[%s428 + $0x68] sm:$0xff]
      %v5811 = vld [vmem:[%s428 + $0x70] sm:$0x1]
      %v5812 = vld [vmem:[%s428 + $0x80] sm:$0xff]
      %v5813 = vld [vmem:[%s428 + $0x88] sm:$0x1]
      %v5814 = vld [vmem:[%s428 + $0x98] sm:$0xff]
      %v5815 = vld [vmem:[%s428 + $0xa0] sm:$0x1]
      %v5816 = vld [vmem:[%s428 + $0xb0] sm:$0xff]
      %v5817 = vld [vmem:[%s428 + $0xb8] sm:$0x1]
      %v5818 = vld [vmem:[%s428 + $0xc8] sm:$0xff]
      %v5819 = vld [vmem:[%s428 + $0xd0] sm:$0x1]
      %v5820 = vld [vmem:[%s428 + $0xe0] sm:$0xff]
      %v5821 = vld [vmem:[%s428 + $0xe8] sm:$0x1]
      %v5822 = vld [vmem:[%s428 + $0xf8] sm:$0xff]
      %v5823 = vld [vmem:[%s428 + $0x100] sm:$0x1]
      %v5824 = vld [vmem:[%s428 + $0x110] sm:$0xff]
      %v5825 = vld [vmem:[%s428 + $0x118] sm:$0x1]
      %v5826 = vld [vmem:[%s428 + $0x128] sm:$0xff]
      %v5827 = vld [vmem:[%s428 + $0x130] sm:$0x1]
      %v5828 = vld [vmem:[%s428 + $0x140] sm:$0xff]
      %v5829 = vld [vmem:[%s428 + $0x148] sm:$0x1]
      %v5830 = vld [vmem:[%s428 + $0x158] sm:$0xff]
      %v5831 = vld [vmem:[%s428 + $0x160] sm:$0x1]
      %v5832 = vld [vmem:[%s428 + $0x170] sm:$0xff]
      %v5833 = vld [vmem:[%s428 + $0x178] sm:$0x1]
      %v5835 = vshrl.u32 %v5802, 16
      %v5837 = vshll.u32 %v5802, 16
      %v5839 = vrot.slane %v5837, 1
      %v5840 = vor.u32 %v5835, %v5839
      %v5842 = vshll.u32 %v5803, 16
      %v5844 = vrot.slane %v5842, 1
      %v5845 = vsel %vm1114, %v5840, %v5844
      %v5847 = vshrl.u32 %v5804, 16
      %v5849 = vshll.u32 %v5804, 16
      %v5851 = vrot.slane %v5849, 1
      %v5852 = vor.u32 %v5847, %v5851
      %v5854 = vshll.u32 %v5805, 16
      %v5856 = vrot.slane %v5854, 1
      %v5857 = vsel %vm1114, %v5852, %v5856
      %v5859 = vshrl.u32 %v5806, 16
      %v5861 = vshll.u32 %v5806, 16
      %v5863 = vrot.slane %v5861, 1
      %v5864 = vor.u32 %v5859, %v5863
      %v5866 = vshll.u32 %v5807, 16
      %v5868 = vrot.slane %v5866, 1
      %v5869 = vsel %vm1114, %v5864, %v5868
      %v5871 = vshrl.u32 %v5808, 16
      %v5873 = vshll.u32 %v5808, 16
      %v5875 = vrot.slane %v5873, 1
      %v5876 = vor.u32 %v5871, %v5875
      %v5878 = vshll.u32 %v5809, 16
      %v5880 = vrot.slane %v5878, 1
      %v5881 = vsel %vm1114, %v5876, %v5880
      %v5883 = vshrl.u32 %v5810, 16
      %v5885 = vshll.u32 %v5810, 16
      %v5887 = vrot.slane %v5885, 1
      %v5888 = vor.u32 %v5883, %v5887
      %v5890 = vshll.u32 %v5811, 16
      %v5892 = vrot.slane %v5890, 1
      %v5893 = vsel %vm1114, %v5888, %v5892
      %v5895 = vshrl.u32 %v5812, 16
      %v5897 = vshll.u32 %v5812, 16
      %v5899 = vrot.slane %v5897, 1
      %v5900 = vor.u32 %v5895, %v5899
      %v5902 = vshll.u32 %v5813, 16
      %v5904 = vrot.slane %v5902, 1
      %v5905 = vsel %vm1114, %v5900, %v5904
      %v5907 = vshrl.u32 %v5814, 16
      %v5909 = vshll.u32 %v5814, 16
      %v5911 = vrot.slane %v5909, 1
      %v5912 = vor.u32 %v5907, %v5911
      %v5914 = vshll.u32 %v5815, 16
      %v5916 = vrot.slane %v5914, 1
      %v5917 = vsel %vm1114, %v5912, %v5916
      %v5919 = vshrl.u32 %v5816, 16
      %v5921 = vshll.u32 %v5816, 16
      %v5923 = vrot.slane %v5921, 1
      %v5924 = vor.u32 %v5919, %v5923
      %v5926 = vshll.u32 %v5817, 16
      %v5928 = vrot.slane %v5926, 1
      %v5929 = vsel %vm1114, %v5924, %v5928
      %v5931 = vshrl.u32 %v5818, 16
      %v5933 = vshll.u32 %v5818, 16
      %v5935 = vrot.slane %v5933, 1
      %v5936 = vor.u32 %v5931, %v5935
      %v5938 = vshll.u32 %v5819, 16
      %v5940 = vrot.slane %v5938, 1
      %v5941 = vsel %vm1114, %v5936, %v5940
      %v5943 = vshrl.u32 %v5820, 16
      %v5945 = vshll.u32 %v5820, 16
      %v5947 = vrot.slane %v5945, 1
      %v5948 = vor.u32 %v5943, %v5947
      %v5950 = vshll.u32 %v5821, 16
      %v5952 = vrot.slane %v5950, 1
      %v5953 = vsel %vm1114, %v5948, %v5952
      %v5955 = vshrl.u32 %v5822, 16
      %v5957 = vshll.u32 %v5822, 16
      %v5959 = vrot.slane %v5957, 1
      %v5960 = vor.u32 %v5955, %v5959
      %v5962 = vshll.u32 %v5823, 16
      %v5964 = vrot.slane %v5962, 1
      %v5965 = vsel %vm1114, %v5960, %v5964
      %v5967 = vshrl.u32 %v5824, 16
      %v5969 = vshll.u32 %v5824, 16
      %v5971 = vrot.slane %v5969, 1
      %v5972 = vor.u32 %v5967, %v5971
      %v5974 = vshll.u32 %v5825, 16
      %v5976 = vrot.slane %v5974, 1
      %v5977 = vsel %vm1114, %v5972, %v5976
      %v5979 = vshrl.u32 %v5826, 16
      %v5981 = vshll.u32 %v5826, 16
      %v5983 = vrot.slane %v5981, 1
      %v5984 = vor.u32 %v5979, %v5983
      %v5986 = vshll.u32 %v5827, 16
      %v5988 = vrot.slane %v5986, 1
      %v5989 = vsel %vm1114, %v5984, %v5988
      %v5991 = vshrl.u32 %v5828, 16
      %v5993 = vshll.u32 %v5828, 16
      %v5995 = vrot.slane %v5993, 1
      %v5996 = vor.u32 %v5991, %v5995
      %v5998 = vshll.u32 %v5829, 16
      %v6000 = vrot.slane %v5998, 1
      %v6001 = vsel %vm1114, %v5996, %v6000
      %v6003 = vshrl.u32 %v5830, 16
      %v6005 = vshll.u32 %v5830, 16
      %v6007 = vrot.slane %v6005, 1
      %v6008 = vor.u32 %v6003, %v6007
      %v6010 = vshll.u32 %v5831, 16
      %v6012 = vrot.slane %v6010, 1
      %v6013 = vsel %vm1114, %v6008, %v6012
      %v6015 = vshrl.u32 %v5832, 16
      %v6017 = vshll.u32 %v5832, 16
      %v6019 = vrot.slane %v6017, 1
      %v6020 = vor.u32 %v6015, %v6019
      %v6022 = vshll.u32 %v5833, 16
      %v6024 = vrot.slane %v6022, 1
      %v6025 = vsel %vm1114, %v6020, %v6024
      %s6026 = scalar_lea.vmem %s3, 10
      %v6027 = vld [vmem:[%s6026] sm:$0x3]
      %v6029 = vsel %vm366, %v5845, 0
      %v6032 = vsel %vm366, %v5857, 0
      %v6035 = vsel %vm366, %v5869, 0
      %v6038 = vsel %vm366, %v5881, 0
      %v6041 = vsel %vm366, %v5893, 0
      %v6044 = vsel %vm366, %v5905, 0
      %v6047 = vsel %vm366, %v5917, 0
      %v6050 = vsel %vm366, %v5929, 0
      %v6053 = vsel %vm366, %v5941, 0
      %v6056 = vsel %vm366, %v5953, 0
      %v6059 = vsel %vm366, %v5965, 0
      %v6062 = vsel %vm366, %v5977, 0
      %v6065 = vsel %vm366, %v5989, 0
      %v6068 = vsel %vm366, %v6001, 0
      %v6071 = vsel %vm366, %v6013, 0
      %v6074 = vsel %vm366, %v6025, 0
      %v6077 = vsel %vm705, %v6027, 0
      %6079 = vmatprep.subr.bf16.mxu0 0
      %6080 = vmatpush1.bf16.msra.mxu0 %v6077
      %6081 = vmatprep.subr.bf16.mxu0 0
      %6082 = vmatpush1.bf16.msra.mxu0 0
      %6083 = vmatprep.subr.bf16.mxu0 0
      %6084 = vmatpush1.bf16.msra.mxu0 0
      %6085 = vmatprep.subr.bf16.mxu0 0
      %6086 = vmatpush1.bf16.msra.mxu0 0
      %6087 = vmatprep.subr.bf16.mxu0 0
      %6088 = vmatpush1.bf16.msra.mxu0 0
      %6089 = vmatprep.subr.bf16.mxu0 0
      %6090 = vmatpush1.bf16.msra.mxu0 0
      %6091 = vmatprep.subr.bf16.mxu0 0
      %6092 = vmatpush1.bf16.msra.mxu0 0
      %6093 = vmatprep.subr.bf16.mxu0 0
      %6094 = vmatpush1.bf16.msra.mxu0 0
      %6095 = vmatprep.subr.bf16.mxu0 0
      %6096 = vmatpush1.bf16.msra.mxu0 0
      %6097 = vmatprep.subr.bf16.mxu0 0
      %6098 = vmatpush1.bf16.msra.mxu0 0
      %6099 = vmatprep.subr.bf16.mxu0 0
      %6100 = vmatpush1.bf16.msra.mxu0 0
      %6101 = vmatprep.subr.bf16.mxu0 0
      %6102 = vmatpush1.bf16.msra.mxu0 0
      %6103 = vmatprep.subr.bf16.mxu0 0
      %6104 = vmatpush1.bf16.msra.mxu0 0
      %6105 = vmatprep.subr.bf16.mxu0 0
      %6106 = vmatpush1.bf16.msra.mxu0 0
      %6107 = vmatprep.subr.bf16.mxu0 0
      %6108 = vmatpush1.bf16.msra.mxu0 0
      %6109 = vmatprep.subr.bf16.mxu0 0
      %6110 = vmatpush1.bf16.msra.mxu0 0
      %6111 = vmatprep.mubr.bf16.mxu0 0
      %6112 = vmatmul.mubr.bf16.gmra.mrb[0].mxu0 %v6029
      %v6113 = vpop.f32.mrb[0].mxu0
      %v6114 = vadd.f32 0.0, %v6113
      %v6115 = vpop.f32.mrb[0].mxu0
      %v6116 = vpop.f32.mrb[0].mxu0
      %v6117 = vadd.f32 0.0, %v6116
      %v6118 = vpop.f32.mrb[0].mxu0
      %6119 = vmatprep.mubr.bf16.mxu0 0
      %6120 = vmatmul.mubr.bf16.gmra.mrb[0].mxu0 %v6032
      %v6121 = vpop.f32.mrb[0].mxu0
      %v6122 = vadd.f32 0.0, %v6121
      %v6123 = vpop.f32.mrb[0].mxu0
      %v6124 = vpop.f32.mrb[0].mxu0
      %v6125 = vadd.f32 0.0, %v6124
      %v6126 = vpop.f32.mrb[0].mxu0
      %6127 = vmatprep.mubr.bf16.mxu0 0
      %6128 = vmatmul.mubr.bf16.gmra.mrb[0].mxu0 %v6035
      %v6129 = vpop.f32.mrb[0].mxu0
      %v6130 = vadd.f32 0.0, %v6129
      %v6131 = vpop.f32.mrb[0].mxu0
      %v6132 = vpop.f32.mrb[0].mxu0
      %v6133 = vadd.f32 0.0, %v6132
      %v6134 = vpop.f32.mrb[0].mxu0
      %6135 = vmatprep.mubr.bf16.mxu0 0
      %6136 = vmatmul.mubr.bf16.gmra.mrb[0].mxu0 %v6038
      %v6137 = vpop.f32.mrb[0].mxu0
      %v6138 = vadd.f32 0.0, %v6137
      %v6139 = vpop.f32.mrb[0].mxu0
      %v6140 = vpop.f32.mrb[0].mxu0
      %v6141 = vadd.f32 0.0, %v6140
      %v6142 = vpop.f32.mrb[0].mxu0
      %6143 = vmatprep.mubr.bf16.mxu0 0
      %6144 = vmatmul.mubr.bf16.gmra.mrb[0].mxu0 %v6041
      %v6145 = vpop.f32.mrb[0].mxu0
      %v6146 = vadd.f32 0.0, %v6145
      %v6147 = vpop.f32.mrb[0].mxu0
      %v6148 = vpop.f32.mrb[0].mxu0
      %v6149 = vadd.f32 0.0, %v6148
      %v6150 = vpop.f32.mrb[0].mxu0
      %6151 = vmatprep.mubr.bf16.mxu0 0
      %6152 = vmatmul.mubr.bf16.gmra.mrb[0].mxu0 %v6044
      %v6153 = vpop.f32.mrb[0].mxu0
      %v6154 = vadd.f32 0.0, %v6153
      %v6155 = vpop.f32.mrb[0].mxu0
      %v6156 = vpop.f32.mrb[0].mxu0
      %v6157 = vadd.f32 0.0, %v6156
      %v6158 = vpop.f32.mrb[0].mxu0
      %6159 = vmatprep.mubr.bf16.mxu0 0
      %6160 = vmatmul.mubr.bf16.gmra.mrb[0].mxu0 %v6047
      %v6161 = vpop.f32.mrb[0].mxu0
      %v6162 = vadd.f32 0.0, %v6161
      %v6163 = vpop.f32.mrb[0].mxu0
      %v6164 = vpop.f32.mrb[0].mxu0
      %v6165 = vadd.f32 0.0, %v6164
      %v6166 = vpop.f32.mrb[0].mxu0
      %6167 = vmatprep.mubr.bf16.mxu0 0
      %6168 = vmatmul.mubr.bf16.gmra.mrb[0].mxu0 %v6050
      %v6169 = vpop.f32.mrb[0].mxu0
      %v6170 = vadd.f32 0.0, %v6169
      %v6171 = vpop.f32.mrb[0].mxu0
      %v6172 = vpop.f32.mrb[0].mxu0
      %v6173 = vadd.f32 0.0, %v6172
      %v6174 = vpop.f32.mrb[0].mxu0
      %6175 = vmatprep.mubr.bf16.mxu0 0
      %6176 = vmatmul.mubr.bf16.gmra.mrb[0].mxu0 %v6053
      %v6177 = vpop.f32.mrb[0].mxu0
      %v6178 = vadd.f32 0.0, %v6177
      %v6179 = vpop.f32.mrb[0].mxu0
      %v6180 = vpop.f32.mrb[0].mxu0
      %v6181 = vadd.f32 0.0, %v6180
      %v6182 = vpop.f32.mrb[0].mxu0
      %6183 = vmatprep.mubr.bf16.mxu0 0
      %6184 = vmatmul.mubr.bf16.gmra.mrb[0].mxu0 %v6056
      %v6185 = vpop.f32.mrb[0].mxu0
      %v6186 = vadd.f32 0.0, %v6185
      %v6187 = vpop.f32.mrb[0].mxu0
      %v6188 = vpop.f32.mrb[0].mxu0
      %v6189 = vadd.f32 0.0, %v6188
      %v6190 = vpop.f32.mrb[0].mxu0
      %6191 = vmatprep.mubr.bf16.mxu0 0
      %6192 = vmatmul.mubr.bf16.gmra.mrb[0].mxu0 %v6059
      %v6193 = vpop.f32.mrb[0].mxu0
      %v6194 = vadd.f32 0.0, %v6193
      %v6195 = vpop.f32.mrb[0].mxu0
      %v6196 = vpop.f32.mrb[0].mxu0
      %v6197 = vadd.f32 0.0, %v6196
      %v6198 = vpop.f32.mrb[0].mxu0
      %6199 = vmatprep.mubr.bf16.mxu0 0
      %6200 = vmatmul.mubr.bf16.gmra.mrb[0].mxu0 %v6062
      %v6201 = vpop.f32.mrb[0].mxu0
      %v6202 = vadd.f32 0.0, %v6201
      %v6203 = vpop.f32.mrb[0].mxu0
      %v6204 = vpop.f32.mrb[0].mxu0
      %v6205 = vadd.f32 0.0, %v6204
      %v6206 = vpop.f32.mrb[0].mxu0
      %6207 = vmatprep.mubr.bf16.mxu0 0
      %6208 = vmatmul.mubr.bf16.gmra.mrb[0].mxu0 %v6065
      %v6209 = vpop.f32.mrb[0].mxu0
      %v6210 = vadd.f32 0.0, %v6209
      %v6211 = vpop.f32.mrb[0].mxu0
      %v6212 = vpop.f32.mrb[0].mxu0
      %v6213 = vadd.f32 0.0, %v6212
      %v6214 = vpop.f32.mrb[0].mxu0
      %6215 = vmatprep.mubr.bf16.mxu0 0
      %6216 = vmatmul.mubr.bf16.gmra.mrb[0].mxu0 %v6068
      %v6217 = vpop.f32.mrb[0].mxu0
      %v6218 = vadd.f32 0.0, %v6217
      %v6219 = vpop.f32.mrb[0].mxu0
      %v6220 = vpop.f32.mrb[0].mxu0
      %v6221 = vadd.f32 0.0, %v6220
      %v6222 = vpop.f32.mrb[0].mxu0
      %6223 = vmatprep.mubr.bf16.mxu0 0
      %6224 = vmatmul.mubr.bf16.gmra.mrb[0].mxu0 %v6071
      %v6225 = vpop.f32.mrb[0].mxu0
      %v6226 = vadd.f32 0.0, %v6225
      %v6227 = vpop.f32.mrb[0].mxu0
      %v6228 = vpop.f32.mrb[0].mxu0
      %v6229 = vadd.f32 0.0, %v6228
      %v6230 = vpop.f32.mrb[0].mxu0
      %6231 = vmatprep.mubr.bf16.mxu0 0
      %6232 = vmatmul.mubr.bf16.gmra.mrb[0].mxu0 %v6074
      %v6233 = vpop.f32.mrb[0].mxu0
      %v6234 = vadd.f32 0.0, %v6233
      %v6235 = vpop.f32.mrb[0].mxu0
      %v6236 = vpop.f32.mrb[0].mxu0
      %v6237 = vadd.f32 0.0, %v6236
      %v6238 = vpop.f32.mrb[0].mxu0
      %6239 = vdwg.mxu0
      %v6240 = vadd.f32 %v5770, %v6114
      %v6241 = vadd.f32 %v5771, %v6117
      %v6242 = vadd.f32 %v5772, %v6122
      %v6243 = vadd.f32 %v5773, %v6125
      %v6244 = vadd.f32 %v5774, %v6130
      %v6245 = vadd.f32 %v5775, %v6133
      %v6246 = vadd.f32 %v5776, %v6138
      %v6247 = vadd.f32 %v5777, %v6141
      %v6248 = vadd.f32 %v5778, %v6146
      %v6249 = vadd.f32 %v5779, %v6149
      %v6250 = vadd.f32 %v5780, %v6154
      %v6251 = vadd.f32 %v5781, %v6157
      %v6252 = vadd.f32 %v5782, %v6162
      %v6253 = vadd.f32 %v5783, %v6165
      %v6254 = vadd.f32 %v5784, %v6170
      %v6255 = vadd.f32 %v5785, %v6173
      %v6256 = vadd.f32 %v5786, %v6178
      %v6257 = vadd.f32 %v5787, %v6181
      %v6258 = vadd.f32 %v5788, %v6186
      %v6259 = vadd.f32 %v5789, %v6189
      %v6260 = vadd.f32 %v5790, %v6194
      %v6261 = vadd.f32 %v5791, %v6197
      %v6262 = vadd.f32 %v5792, %v6202
      %v6263 = vadd.f32 %v5793, %v6205
      %v6264 = vadd.f32 %v5794, %v6210
      %v6265 = vadd.f32 %v5795, %v6213
      %v6266 = vadd.f32 %v5796, %v6218
      %v6267 = vadd.f32 %v5797, %v6221
      %v6268 = vadd.f32 %v5798, %v6226
      %v6269 = vadd.f32 %v5799, %v6229
      %v6270 = vadd.f32 %v5800, %v6234
      %v6271 = vadd.f32 %v5801, %v6237
      %v6272 = vld [vmem:[%s2723] sm:$0x80]
      %v6273 = vld [vmem:[%s2723 + $0x8] sm:$0xff]
      %v6274 = vld [vmem:[%s2723 + $0x18] sm:$0x80]
      %v6275 = vld [vmem:[%s2723 + $0x20] sm:$0xff]
      %v6276 = vld [vmem:[%s2723 + $0x30] sm:$0x80]
      %v6277 = vld [vmem:[%s2723 + $0x38] sm:$0xff]
      %v6278 = vld [vmem:[%s2723 + $0x48] sm:$0x80]
      %v6279 = vld [vmem:[%s2723 + $0x50] sm:$0xff]
      %v6280 = vld [vmem:[%s2723 + $0x60] sm:$0x80]
      %v6281 = vld [vmem:[%s2723 + $0x68] sm:$0xff]
      %v6282 = vld [vmem:[%s2723 + $0x78] sm:$0x80]
      %v6283 = vld [vmem:[%s2723 + $0x80] sm:$0xff]
      %v6284 = vld [vmem:[%s2723 + $0x90] sm:$0x80]
      %v6285 = vld [vmem:[%s2723 + $0x98] sm:$0xff]
      %v6286 = vld [vmem:[%s2723 + $0xa8] sm:$0x80]
      %v6287 = vld [vmem:[%s2723 + $0xb0] sm:$0xff]
      %v6288 = vld [vmem:[%s2723 + $0xc0] sm:$0x80]
      %v6289 = vld [vmem:[%s2723 + $0xc8] sm:$0xff]
      %v6290 = vld [vmem:[%s2723 + $0xd8] sm:$0x80]
      %v6291 = vld [vmem:[%s2723 + $0xe0] sm:$0xff]
      %v6292 = vld [vmem:[%s2723 + $0xf0] sm:$0x80]
      %v6293 = vld [vmem:[%s2723 + $0xf8] sm:$0xff]
      %v6294 = vld [vmem:[%s2723 + $0x108] sm:$0x80]
      %v6295 = vld [vmem:[%s2723 + $0x110] sm:$0xff]
      %v6296 = vld [vmem:[%s2723 + $0x120] sm:$0x80]
      %v6297 = vld [vmem:[%s2723 + $0x128] sm:$0xff]
      %v6298 = vld [vmem:[%s2723 + $0x138] sm:$0x80]
      %v6299 = vld [vmem:[%s2723 + $0x140] sm:$0xff]
      %v6300 = vld [vmem:[%s2723 + $0x150] sm:$0x80]
      %v6301 = vld [vmem:[%s2723 + $0x158] sm:$0xff]
      %v6302 = vld [vmem:[%s2723 + $0x168] sm:$0x80]
      %v6303 = vld [vmem:[%s2723 + $0x170] sm:$0xff]
      %v6305 = vshrl.u32 %v6272, 16
      %v6307 = vrot.slane %v6305, 7
      %v6309 = vshrl.u32 %v6273, 16
      %v6311 = vrot.slane %v6309, 7
      %v6312 = vshll.u32 %v6273, 16
      %v6314 = vor.u32 %v6311, %v6312
      %v6315 = vsel %vm477, %v6307, %v6314
      %v6317 = vshrl.u32 %v6274, 16
      %v6319 = vrot.slane %v6317, 7
      %v6321 = vshrl.u32 %v6275, 16
      %v6323 = vrot.slane %v6321, 7
      %v6324 = vshll.u32 %v6275, 16
      %v6326 = vor.u32 %v6323, %v6324
      %v6327 = vsel %vm477, %v6319, %v6326
      %v6329 = vshrl.u32 %v6276, 16
      %v6331 = vrot.slane %v6329, 7
      %v6333 = vshrl.u32 %v6277, 16
      %v6335 = vrot.slane %v6333, 7
      %v6336 = vshll.u32 %v6277, 16
      %v6338 = vor.u32 %v6335, %v6336
      %v6339 = vsel %vm477, %v6331, %v6338
      %v6341 = vshrl.u32 %v6278, 16
      %v6343 = vrot.slane %v6341, 7
      %v6345 = vshrl.u32 %v6279, 16
      %v6347 = vrot.slane %v6345, 7
      %v6348 = vshll.u32 %v6279, 16
      %v6350 = vor.u32 %v6347, %v6348
      %v6351 = vsel %vm477, %v6343, %v6350
      %v6353 = vshrl.u32 %v6280, 16
      %v6355 = vrot.slane %v6353, 7
      %v6357 = vshrl.u32 %v6281, 16
      %v6359 = vrot.slane %v6357, 7
      %v6360 = vshll.u32 %v6281, 16
      %v6362 = vor.u32 %v6359, %v6360
      %v6363 = vsel %vm477, %v6355, %v6362
      %v6365 = vshrl.u32 %v6282, 16
      %v6367 = vrot.slane %v6365, 7
      %v6369 = vshrl.u32 %v6283, 16
      %v6371 = vrot.slane %v6369, 7
      %v6372 = vshll.u32 %v6283, 16
      %v6374 = vor.u32 %v6371, %v6372
      %v6375 = vsel %vm477, %v6367, %v6374
      %v6377 = vshrl.u32 %v6284, 16
      %v6379 = vrot.slane %v6377, 7
      %v6381 = vshrl.u32 %v6285, 16
      %v6383 = vrot.slane %v6381, 7
      %v6384 = vshll.u32 %v6285, 16
      %v6386 = vor.u32 %v6383, %v6384
      %v6387 = vsel %vm477, %v6379, %v6386
      %v6389 = vshrl.u32 %v6286, 16
      %v6391 = vrot.slane %v6389, 7
      %v6393 = vshrl.u32 %v6287, 16
      %v6395 = vrot.slane %v6393, 7
      %v6396 = vshll.u32 %v6287, 16
      %v6398 = vor.u32 %v6395, %v6396
      %v6399 = vsel %vm477, %v6391, %v6398
      %v6401 = vshrl.u32 %v6288, 16
      %v6403 = vrot.slane %v6401, 7
      %v6405 = vshrl.u32 %v6289, 16
      %v6407 = vrot.slane %v6405, 7
      %v6408 = vshll.u32 %v6289, 16
      %v6410 = vor.u32 %v6407, %v6408
      %v6411 = vsel %vm477, %v6403, %v6410
      %v6413 = vshrl.u32 %v6290, 16
      %v6415 = vrot.slane %v6413, 7
      %v6417 = vshrl.u32 %v6291, 16
      %v6419 = vrot.slane %v6417, 7
      %v6420 = vshll.u32 %v6291, 16
      %v6422 = vor.u32 %v6419, %v6420
      %v6423 = vsel %vm477, %v6415, %v6422
      %v6425 = vshrl.u32 %v6292, 16
      %v6427 = vrot.slane %v6425, 7
      %v6429 = vshrl.u32 %v6293, 16
      %v6431 = vrot.slane %v6429, 7
      %v6432 = vshll.u32 %v6293, 16
      %v6434 = vor.u32 %v6431, %v6432
      %v6435 = vsel %vm477, %v6427, %v6434
      %v6437 = vshrl.u32 %v6294, 16
      %v6439 = vrot.slane %v6437, 7
      %v6441 = vshrl.u32 %v6295, 16
      %v6443 = vrot.slane %v6441, 7
      %v6444 = vshll.u32 %v6295, 16
      %v6446 = vor.u32 %v6443, %v6444
      %v6447 = vsel %vm477, %v6439, %v6446
      %v6449 = vshrl.u32 %v6296, 16
      %v6451 = vrot.slane %v6449, 7
      %v6453 = vshrl.u32 %v6297, 16
      %v6455 = vrot.slane %v6453, 7
      %v6456 = vshll.u32 %v6297, 16
      %v6458 = vor.u32 %v6455, %v6456
      %v6459 = vsel %vm477, %v6451, %v6458
      %v6461 = vshrl.u32 %v6298, 16
      %v6463 = vrot.slane %v6461, 7
      %v6465 = vshrl.u32 %v6299, 16
      %v6467 = vrot.slane %v6465, 7
      %v6468 = vshll.u32 %v6299, 16
      %v6470 = vor.u32 %v6467, %v6468
      %v6471 = vsel %vm477, %v6463, %v6470
      %v6473 = vshrl.u32 %v6300, 16
      %v6475 = vrot.slane %v6473, 7
      %v6477 = vshrl.u32 %v6301, 16
      %v6479 = vrot.slane %v6477, 7
      %v6480 = vshll.u32 %v6301, 16
      %v6482 = vor.u32 %v6479, %v6480
      %v6483 = vsel %vm477, %v6475, %v6482
      %v6485 = vshrl.u32 %v6302, 16
      %v6487 = vrot.slane %v6485, 7
      %v6489 = vshrl.u32 %v6303, 16
      %v6491 = vrot.slane %v6489, 7
      %v6492 = vshll.u32 %v6303, 16
      %v6494 = vor.u32 %v6491, %v6492
      %v6495 = vsel %vm477, %v6487, %v6494
      %s6496 = scalar_lea.vmem %s3, 12
      %v6497 = vld [vmem:[%s6496] sm:$0x3]
      %v6499 = vsel %vm366, %v6315, 0
      %v6502 = vsel %vm366, %v6327, 0
      %v6505 = vsel %vm366, %v6339, 0
      %v6508 = vsel %vm366, %v6351, 0
      %v6511 = vsel %vm366, %v6363, 0
      %v6514 = vsel %vm366, %v6375, 0
      %v6517 = vsel %vm366, %v6387, 0
      %v6520 = vsel %vm366, %v6399, 0
      %v6523 = vsel %vm366, %v6411, 0
      %v6526 = vsel %vm366, %v6423, 0
      %v6529 = vsel %vm366, %v6435, 0
      %v6532 = vsel %vm366, %v6447, 0
      %v6535 = vsel %vm366, %v6459, 0
      %v6538 = vsel %vm366, %v6471, 0
      %v6541 = vsel %vm366, %v6483, 0
      %v6544 = vsel %vm366, %v6495, 0
      %v6547 = vsel %vm705, %v6497, 0
      %6549 = vmatprep.subr.bf16.mxu0 0
      %6550 = vmatpush1.bf16.msra.mxu0 %v6547
      %6551 = vmatprep.subr.bf16.mxu0 0
      %6552 = vmatpush1.bf16.msra.mxu0 0
      %6553 = vmatprep.subr.bf16.mxu0 0
      %6554 = vmatpush1.bf16.msra.mxu0 0
      %6555 = vmatprep.subr.bf16.mxu0 0
      %6556 = vmatpush1.bf16.msra.mxu0 0
      %6557 = vmatprep.subr.bf16.mxu0 0
      %6558 = vmatpush1.bf16.msra.mxu0 0
      %6559 = vmatprep.subr.bf16.mxu0 0
      %6560 = vmatpush1.bf16.msra.mxu0 0
      %6561 = vmatprep.subr.bf16.mxu0 0
      %6562 = vmatpush1.bf16.msra.mxu0 0
      %6563 = vmatprep.subr.bf16.mxu0 0
      %6564 = vmatpush1.bf16.msra.mxu0 0
      %6565 = vmatprep.subr.bf16.mxu0 0
      %6566 = vmatpush1.bf16.msra.mxu0 0
      %6567 = vmatprep.subr.bf16.mxu0 0
      %6568 = vmatpush1.bf16.msra.mxu0 0
      %6569 = vmatprep.subr.bf16.mxu0 0
      %6570 = vmatpush1.bf16.msra.mxu0 0
      %6571 = vmatprep.subr.bf16.mxu0 0
      %6572 = vmatpush1.bf16.msra.mxu0 0
      %6573 = vmatprep.subr.bf16.mxu0 0
      %6574 = vmatpush1.bf16.msra.mxu0 0
      %6575 = vmatprep.subr.bf16.mxu0 0
      %6576 = vmatpush1.bf16.msra.mxu0 0
      %6577 = vmatprep.subr.bf16.mxu0 0
      %6578 = vmatpush1.bf16.msra.mxu0 0
      %6579 = vmatprep.subr.bf16.mxu0 0
      %6580 = vmatpush1.bf16.msra.mxu0 0
      %6581 = vmatprep.mubr.bf16.mxu0 0
      %6582 = vmatmul.mubr.bf16.gmra.mrb[0].mxu0 %v6499
      %v6583 = vpop.f32.mrb[0].mxu0
      %v6584 = vadd.f32 0.0, %v6583
      %v6585 = vpop.f32.mrb[0].mxu0
      %v6586 = vpop.f32.mrb[0].mxu0
      %v6587 = vadd.f32 0.0, %v6586
      %v6588 = vpop.f32.mrb[0].mxu0
      %6589 = vmatprep.mubr.bf16.mxu0 0
      %6590 = vmatmul.mubr.bf16.gmra.mrb[0].mxu0 %v6502
      %v6591 = vpop.f32.mrb[0].mxu0
      %v6592 = vadd.f32 0.0, %v6591
      %v6593 = vpop.f32.mrb[0].mxu0
      %v6594 = vpop.f32.mrb[0].mxu0
      %v6595 = vadd.f32 0.0, %v6594
      %v6596 = vpop.f32.mrb[0].mxu0
      %6597 = vmatprep.mubr.bf16.mxu0 0
      %6598 = vmatmul.mubr.bf16.gmra.mrb[0].mxu0 %v6505
      %v6599 = vpop.f32.mrb[0].mxu0
      %v6600 = vadd.f32 0.0, %v6599
      %v6601 = vpop.f32.mrb[0].mxu0
      %v6602 = vpop.f32.mrb[0].mxu0
      %v6603 = vadd.f32 0.0, %v6602
      %v6604 = vpop.f32.mrb[0].mxu0
      %6605 = vmatprep.mubr.bf16.mxu0 0
      %6606 = vmatmul.mubr.bf16.gmra.mrb[0].mxu0 %v6508
      %v6607 = vpop.f32.mrb[0].mxu0
      %v6608 = vadd.f32 0.0, %v6607
      %v6609 = vpop.f32.mrb[0].mxu0
      %v6610 = vpop.f32.mrb[0].mxu0
      %v6611 = vadd.f32 0.0, %v6610
      %v6612 = vpop.f32.mrb[0].mxu0
      %6613 = vmatprep.mubr.bf16.mxu0 0
      %6614 = vmatmul.mubr.bf16.gmra.mrb[0].mxu0 %v6511
      %v6615 = vpop.f32.mrb[0].mxu0
      %v6616 = vadd.f32 0.0, %v6615
      %v6617 = vpop.f32.mrb[0].mxu0
      %v6618 = vpop.f32.mrb[0].mxu0
      %v6619 = vadd.f32 0.0, %v6618
      %v6620 = vpop.f32.mrb[0].mxu0
      %6621 = vmatprep.mubr.bf16.mxu0 0
      %6622 = vmatmul.mubr.bf16.gmra.mrb[0].mxu0 %v6514
      %v6623 = vpop.f32.mrb[0].mxu0
      %v6624 = vadd.f32 0.0, %v6623
      %v6625 = vpop.f32.mrb[0].mxu0
      %v6626 = vpop.f32.mrb[0].mxu0
      %v6627 = vadd.f32 0.0, %v6626
      %v6628 = vpop.f32.mrb[0].mxu0
      %6629 = vmatprep.mubr.bf16.mxu0 0
      %6630 = vmatmul.mubr.bf16.gmra.mrb[0].mxu0 %v6517
      %v6631 = vpop.f32.mrb[0].mxu0
      %v6632 = vadd.f32 0.0, %v6631
      %v6633 = vpop.f32.mrb[0].mxu0
      %v6634 = vpop.f32.mrb[0].mxu0
      %v6635 = vadd.f32 0.0, %v6634
      %v6636 = vpop.f32.mrb[0].mxu0
      %6637 = vmatprep.mubr.bf16.mxu0 0
      %6638 = vmatmul.mubr.bf16.gmra.mrb[0].mxu0 %v6520
      %v6639 = vpop.f32.mrb[0].mxu0
      %v6640 = vadd.f32 0.0, %v6639
      %v6641 = vpop.f32.mrb[0].mxu0
      %v6642 = vpop.f32.mrb[0].mxu0
      %v6643 = vadd.f32 0.0, %v6642
      %v6644 = vpop.f32.mrb[0].mxu0
      %6645 = vmatprep.mubr.bf16.mxu0 0
      %6646 = vmatmul.mubr.bf16.gmra.mrb[0].mxu0 %v6523
      %v6647 = vpop.f32.mrb[0].mxu0
      %v6648 = vadd.f32 0.0, %v6647
      %v6649 = vpop.f32.mrb[0].mxu0
      %v6650 = vpop.f32.mrb[0].mxu0
      %v6651 = vadd.f32 0.0, %v6650
      %v6652 = vpop.f32.mrb[0].mxu0
      %6653 = vmatprep.mubr.bf16.mxu0 0
      %6654 = vmatmul.mubr.bf16.gmra.mrb[0].mxu0 %v6526
      %v6655 = vpop.f32.mrb[0].mxu0
      %v6656 = vadd.f32 0.0, %v6655
      %v6657 = vpop.f32.mrb[0].mxu0
      %v6658 = vpop.f32.mrb[0].mxu0
      %v6659 = vadd.f32 0.0, %v6658
      %v6660 = vpop.f32.mrb[0].mxu0
      %6661 = vmatprep.mubr.bf16.mxu0 0
      %6662 = vmatmul.mubr.bf16.gmra.mrb[0].mxu0 %v6529
      %v6663 = vpop.f32.mrb[0].mxu0
      %v6664 = vadd.f32 0.0, %v6663
      %v6665 = vpop.f32.mrb[0].mxu0
      %v6666 = vpop.f32.mrb[0].mxu0
      %v6667 = vadd.f32 0.0, %v6666
      %v6668 = vpop.f32.mrb[0].mxu0
      %6669 = vmatprep.mubr.bf16.mxu0 0
      %6670 = vmatmul.mubr.bf16.gmra.mrb[0].mxu0 %v6532
      %v6671 = vpop.f32.mrb[0].mxu0
      %v6672 = vadd.f32 0.0, %v6671
      %v6673 = vpop.f32.mrb[0].mxu0
      %v6674 = vpop.f32.mrb[0].mxu0
      %v6675 = vadd.f32 0.0, %v6674
      %v6676 = vpop.f32.mrb[0].mxu0
      %6677 = vmatprep.mubr.bf16.mxu0 0
      %6678 = vmatmul.mubr.bf16.gmra.mrb[0].mxu0 %v6535
      %v6679 = vpop.f32.mrb[0].mxu0
      %v6680 = vadd.f32 0.0, %v6679
      %v6681 = vpop.f32.mrb[0].mxu0
      %v6682 = vpop.f32.mrb[0].mxu0
      %v6683 = vadd.f32 0.0, %v6682
      %v6684 = vpop.f32.mrb[0].mxu0
      %6685 = vmatprep.mubr.bf16.mxu0 0
      %6686 = vmatmul.mubr.bf16.gmra.mrb[0].mxu0 %v6538
      %v6687 = vpop.f32.mrb[0].mxu0
      %v6688 = vadd.f32 0.0, %v6687
      %v6689 = vpop.f32.mrb[0].mxu0
      %v6690 = vpop.f32.mrb[0].mxu0
      %v6691 = vadd.f32 0.0, %v6690
      %v6692 = vpop.f32.mrb[0].mxu0
      %6693 = vmatprep.mubr.bf16.mxu0 0
      %6694 = vmatmul.mubr.bf16.gmra.mrb[0].mxu0 %v6541
      %v6695 = vpop.f32.mrb[0].mxu0
      %v6696 = vadd.f32 0.0, %v6695
      %v6697 = vpop.f32.mrb[0].mxu0
      %v6698 = vpop.f32.mrb[0].mxu0
      %v6699 = vadd.f32 0.0, %v6698
      %v6700 = vpop.f32.mrb[0].mxu0
      %6701 = vmatprep.mubr.bf16.mxu0 0
      %6702 = vmatmul.mubr.bf16.gmra.mrb[0].mxu0 %v6544
      %v6703 = vpop.f32.mrb[0].mxu0
      %v6704 = vadd.f32 0.0, %v6703
      %v6705 = vpop.f32.mrb[0].mxu0
      %v6706 = vpop.f32.mrb[0].mxu0
      %v6707 = vadd.f32 0.0, %v6706
      %v6708 = vpop.f32.mrb[0].mxu0
      %6709 = vdwg.mxu0
      %v6710 = vadd.f32 %v6240, %v6584
      %v6711 = vadd.f32 %v6241, %v6587
      %v6712 = vadd.f32 %v6242, %v6592
      %v6713 = vadd.f32 %v6243, %v6595
      %v6714 = vadd.f32 %v6244, %v6600
      %v6715 = vadd.f32 %v6245, %v6603
      %v6716 = vadd.f32 %v6246, %v6608
      %v6717 = vadd.f32 %v6247, %v6611
      %v6718 = vadd.f32 %v6248, %v6616
      %v6719 = vadd.f32 %v6249, %v6619
      %v6720 = vadd.f32 %v6250, %v6624
      %v6721 = vadd.f32 %v6251, %v6627
      %v6722 = vadd.f32 %v6252, %v6632
      %v6723 = vadd.f32 %v6253, %v6635
      %v6724 = vadd.f32 %v6254, %v6640
      %v6725 = vadd.f32 %v6255, %v6643
      %v6726 = vadd.f32 %v6256, %v6648
      %v6727 = vadd.f32 %v6257, %v6651
      %v6728 = vadd.f32 %v6258, %v6656
      %v6729 = vadd.f32 %v6259, %v6659
      %v6730 = vadd.f32 %v6260, %v6664
      %v6731 = vadd.f32 %v6261, %v6667
      %v6732 = vadd.f32 %v6262, %v6672
      %v6733 = vadd.f32 %v6263, %v6675
      %v6734 = vadd.f32 %v6264, %v6680
      %v6735 = vadd.f32 %v6265, %v6683
      %v6736 = vadd.f32 %v6266, %v6688
      %v6737 = vadd.f32 %v6267, %v6691
      %v6738 = vadd.f32 %v6268, %v6696
      %v6739 = vadd.f32 %v6269, %v6699
      %v6740 = vadd.f32 %v6270, %v6704
      %v6741 = vadd.f32 %v6271, %v6707
      %s6742 = scalar_lea.vmem %s3, 14
      %v6743 = vld [vmem:[%s6742] sm:$0x3]
      %v6744 = vsel %vm366, %v6273, 0
      %v6746 = vsel %vm366, %v6275, 0
      %v6748 = vsel %vm366, %v6277, 0
      %v6750 = vsel %vm366, %v6279, 0
      %v6752 = vsel %vm366, %v6281, 0
      %v6754 = vsel %vm366, %v6283, 0
      %v6756 = vsel %vm366, %v6285, 0
      %v6758 = vsel %vm366, %v6287, 0
      %v6760 = vsel %vm366, %v6289, 0
      %v6762 = vsel %vm366, %v6291, 0
      %v6764 = vsel %vm366, %v6293, 0
      %v6766 = vsel %vm366, %v6295, 0
      %v6768 = vsel %vm366, %v6297, 0
      %v6770 = vsel %vm366, %v6299, 0
      %v6772 = vsel %vm366, %v6301, 0
      %v6774 = vsel %vm366, %v6303, 0
      %v6777 = vsel %vm705, %v6743, 0
      %6779 = vmatprep.subr.bf16.mxu0 0
      %6780 = vmatpush1.bf16.msra.mxu0 %v6777
      %6781 = vmatprep.subr.bf16.mxu0 0
      %6782 = vmatpush1.bf16.msra.mxu0 0
      %6783 = vmatprep.subr.bf16.mxu0 0
      %6784 = vmatpush1.bf16.msra.mxu0 0
      %6785 = vmatprep.subr.bf16.mxu0 0
      %6786 = vmatpush1.bf16.msra.mxu0 0
      %6787 = vmatprep.subr.bf16.mxu0 0
      %6788 = vmatpush1.bf16.msra.mxu0 0
      %6789 = vmatprep.subr.bf16.mxu0 0
      %6790 = vmatpush1.bf16.msra.mxu0 0
      %6791 = vmatprep.subr.bf16.mxu0 0
      %6792 = vmatpush1.bf16.msra.mxu0 0
      %6793 = vmatprep.subr.bf16.mxu0 0
      %6794 = vmatpush1.bf16.msra.mxu0 0
      %6795 = vmatprep.subr.bf16.mxu0 0
      %6796 = vmatpush1.bf16.msra.mxu0 0
      %6797 = vmatprep.subr.bf16.mxu0 0
      %6798 = vmatpush1.bf16.msra.mxu0 0
      %6799 = vmatprep.subr.bf16.mxu0 0
      %6800 = vmatpush1.bf16.msra.mxu0 0
      %6801 = vmatprep.subr.bf16.mxu0 0
      %6802 = vmatpush1.bf16.msra.mxu0 0
      %6803 = vmatprep.subr.bf16.mxu0 0
      %6804 = vmatpush1.bf16.msra.mxu0 0
      %6805 = vmatprep.subr.bf16.mxu0 0
      %6806 = vmatpush1.bf16.msra.mxu0 0
      %6807 = vmatprep.subr.bf16.mxu0 0
      %6808 = vmatpush1.bf16.msra.mxu0 0
      %6809 = vmatprep.subr.bf16.mxu0 0
      %6810 = vmatpush1.bf16.msra.mxu0 0
      %6811 = vmatprep.mubr.bf16.mxu0 0
      %6812 = vmatmul.mubr.bf16.gmra.mrb[0].mxu0 %v6744
      %v6813 = vpop.f32.mrb[0].mxu0
      %v6814 = vadd.f32 0.0, %v6813
      %v6815 = vpop.f32.mrb[0].mxu0
      %v6816 = vpop.f32.mrb[0].mxu0
      %v6817 = vadd.f32 0.0, %v6816
      %v6818 = vpop.f32.mrb[0].mxu0
      %6819 = vmatprep.mubr.bf16.mxu0 0
      %6820 = vmatmul.mubr.bf16.gmra.mrb[0].mxu0 %v6746
      %v6821 = vpop.f32.mrb[0].mxu0
      %v6822 = vadd.f32 0.0, %v6821
      %v6823 = vpop.f32.mrb[0].mxu0
      %v6824 = vpop.f32.mrb[0].mxu0
      %v6825 = vadd.f32 0.0, %v6824
      %v6826 = vpop.f32.mrb[0].mxu0
      %6827 = vmatprep.mubr.bf16.mxu0 0
      %6828 = vmatmul.mubr.bf16.gmra.mrb[0].mxu0 %v6748
      %v6829 = vpop.f32.mrb[0].mxu0
      %v6830 = vadd.f32 0.0, %v6829
      %v6831 = vpop.f32.mrb[0].mxu0
      %v6832 = vpop.f32.mrb[0].mxu0
      %v6833 = vadd.f32 0.0, %v6832
      %v6834 = vpop.f32.mrb[0].mxu0
      %6835 = vmatprep.mubr.bf16.mxu0 0
      %6836 = vmatmul.mubr.bf16.gmra.mrb[0].mxu0 %v6750
      %v6837 = vpop.f32.mrb[0].mxu0
      %v6838 = vadd.f32 0.0, %v6837
      %v6839 = vpop.f32.mrb[0].mxu0
      %v6840 = vpop.f32.mrb[0].mxu0
      %v6841 = vadd.f32 0.0, %v6840
      %v6842 = vpop.f32.mrb[0].mxu0
      %6843 = vmatprep.mubr.bf16.mxu0 0
      %6844 = vmatmul.mubr.bf16.gmra.mrb[0].mxu0 %v6752
      %v6845 = vpop.f32.mrb[0].mxu0
      %v6846 = vadd.f32 0.0, %v6845
      %v6847 = vpop.f32.mrb[0].mxu0
      %v6848 = vpop.f32.mrb[0].mxu0
      %v6849 = vadd.f32 0.0, %v6848
      %v6850 = vpop.f32.mrb[0].mxu0
      %6851 = vmatprep.mubr.bf16.mxu0 0
      %6852 = vmatmul.mubr.bf16.gmra.mrb[0].mxu0 %v6754
      %v6853 = vpop.f32.mrb[0].mxu0
      %v6854 = vadd.f32 0.0, %v6853
      %v6855 = vpop.f32.mrb[0].mxu0
      %v6856 = vpop.f32.mrb[0].mxu0
      %v6857 = vadd.f32 0.0, %v6856
      %v6858 = vpop.f32.mrb[0].mxu0
      %6859 = vmatprep.mubr.bf16.mxu0 0
      %6860 = vmatmul.mubr.bf16.gmra.mrb[0].mxu0 %v6756
      %v6861 = vpop.f32.mrb[0].mxu0
      %v6862 = vadd.f32 0.0, %v6861
      %v6863 = vpop.f32.mrb[0].mxu0
      %v6864 = vpop.f32.mrb[0].mxu0
      %v6865 = vadd.f32 0.0, %v6864
      %v6866 = vpop.f32.mrb[0].mxu0
      %6867 = vmatprep.mubr.bf16.mxu0 0
      %6868 = vmatmul.mubr.bf16.gmra.mrb[0].mxu0 %v6758
      %v6869 = vpop.f32.mrb[0].mxu0
      %v6870 = vadd.f32 0.0, %v6869
      %v6871 = vpop.f32.mrb[0].mxu0
      %v6872 = vpop.f32.mrb[0].mxu0
      %v6873 = vadd.f32 0.0, %v6872
      %v6874 = vpop.f32.mrb[0].mxu0
      %6875 = vmatprep.mubr.bf16.mxu0 0
      %6876 = vmatmul.mubr.bf16.gmra.mrb[0].mxu0 %v6760
      %v6877 = vpop.f32.mrb[0].mxu0
      %v6878 = vadd.f32 0.0, %v6877
      %v6879 = vpop.f32.mrb[0].mxu0
      %v6880 = vpop.f32.mrb[0].mxu0
      %v6881 = vadd.f32 0.0, %v6880
      %v6882 = vpop.f32.mrb[0].mxu0
      %6883 = vmatprep.mubr.bf16.mxu0 0
      %6884 = vmatmul.mubr.bf16.gmra.mrb[0].mxu0 %v6762
      %v6885 = vpop.f32.mrb[0].mxu0
      %v6886 = vadd.f32 0.0, %v6885
      %v6887 = vpop.f32.mrb[0].mxu0
      %v6888 = vpop.f32.mrb[0].mxu0
      %v6889 = vadd.f32 0.0, %v6888
      %v6890 = vpop.f32.mrb[0].mxu0
      %6891 = vmatprep.mubr.bf16.mxu0 0
      %6892 = vmatmul.mubr.bf16.gmra.mrb[0].mxu0 %v6764
      %v6893 = vpop.f32.mrb[0].mxu0
      %v6894 = vadd.f32 0.0, %v6893
      %v6895 = vpop.f32.mrb[0].mxu0
      %v6896 = vpop.f32.mrb[0].mxu0
      %v6897 = vadd.f32 0.0, %v6896
      %v6898 = vpop.f32.mrb[0].mxu0
      %6899 = vmatprep.mubr.bf16.mxu0 0
      %6900 = vmatmul.mubr.bf16.gmra.mrb[0].mxu0 %v6766
      %v6901 = vpop.f32.mrb[0].mxu0
      %v6902 = vadd.f32 0.0, %v6901
      %v6903 = vpop.f32.mrb[0].mxu0
      %v6904 = vpop.f32.mrb[0].mxu0
      %v6905 = vadd.f32 0.0, %v6904
      %v6906 = vpop.f32.mrb[0].mxu0
      %6907 = vmatprep.mubr.bf16.mxu0 0
      %6908 = vmatmul.mubr.bf16.gmra.mrb[0].mxu0 %v6768
      %v6909 = vpop.f32.mrb[0].mxu0
      %v6910 = vadd.f32 0.0, %v6909
      %v6911 = vpop.f32.mrb[0].mxu0
      %v6912 = vpop.f32.mrb[0].mxu0
      %v6913 = vadd.f32 0.0, %v6912
      %v6914 = vpop.f32.mrb[0].mxu0
      %6915 = vmatprep.mubr.bf16.mxu0 0
      %6916 = vmatmul.mubr.bf16.gmra.mrb[0].mxu0 %v6770
      %v6917 = vpop.f32.mrb[0].mxu0
      %v6918 = vadd.f32 0.0, %v6917
      %v6919 = vpop.f32.mrb[0].mxu0
      %v6920 = vpop.f32.mrb[0].mxu0
      %v6921 = vadd.f32 0.0, %v6920
      %v6922 = vpop.f32.mrb[0].mxu0
      %6923 = vmatprep.mubr.bf16.mxu0 0
      %6924 = vmatmul.mubr.bf16.gmra.mrb[0].mxu0 %v6772
      %v6925 = vpop.f32.mrb[0].mxu0
      %v6926 = vadd.f32 0.0, %v6925
      %v6927 = vpop.f32.mrb[0].mxu0
      %v6928 = vpop.f32.mrb[0].mxu0
      %v6929 = vadd.f32 0.0, %v6928
      %v6930 = vpop.f32.mrb[0].mxu0
      %6931 = vmatprep.mubr.bf16.mxu0 0
      %6932 = vmatmul.mubr.bf16.gmra.mrb[0].mxu0 %v6774
      %v6933 = vpop.f32.mrb[0].mxu0
      %v6934 = vadd.f32 0.0, %v6933
      %v6935 = vpop.f32.mrb[0].mxu0
      %v6936 = vpop.f32.mrb[0].mxu0
      %v6937 = vadd.f32 0.0, %v6936
      %v6938 = vpop.f32.mrb[0].mxu0
      %6939 = vdwg.mxu0
      %v6940 = vadd.f32 %v6710, %v6814
      %v6941 = vadd.f32 %v6711, %v6817
      %v6942 = vadd.f32 %v6712, %v6822
      %v6943 = vadd.f32 %v6713, %v6825
      %v6944 = vadd.f32 %v6714, %v6830
      %v6945 = vadd.f32 %v6715, %v6833
      %v6946 = vadd.f32 %v6716, %v6838
      %v6947 = vadd.f32 %v6717, %v6841
      %v6948 = vadd.f32 %v6718, %v6846
      %v6949 = vadd.f32 %v6719, %v6849
      %v6950 = vadd.f32 %v6720, %v6854
      %v6951 = vadd.f32 %v6721, %v6857
      %v6952 = vadd.f32 %v6722, %v6862
      %v6953 = vadd.f32 %v6723, %v6865
      %v6954 = vadd.f32 %v6724, %v6870
      %v6955 = vadd.f32 %v6725, %v6873
      %v6956 = vadd.f32 %v6726, %v6878
      %v6957 = vadd.f32 %v6727, %v6881
      %v6958 = vadd.f32 %v6728, %v6886
      %v6959 = vadd.f32 %v6729, %v6889
      %v6960 = vadd.f32 %v6730, %v6894
      %v6961 = vadd.f32 %v6731, %v6897
      %v6962 = vadd.f32 %v6732, %v6902
      %v6963 = vadd.f32 %v6733, %v6905
      %v6964 = vadd.f32 %v6734, %v6910
      %v6965 = vadd.f32 %v6735, %v6913
      %v6966 = vadd.f32 %v6736, %v6918
      %v6967 = vadd.f32 %v6737, %v6921
      %v6968 = vadd.f32 %v6738, %v6926
      %v6969 = vadd.f32 %v6739, %v6929
      %v6970 = vadd.f32 %v6740, %v6934
      %v6971 = vadd.f32 %v6741, %v6937
      %v6972 = vld [vmem:[%s2723 + $0x8] sm:$0xff]
      %v6973 = vld [vmem:[%s2723 + $0x10] sm:$0x1]
      %v6974 = vld [vmem:[%s2723 + $0x20] sm:$0xff]
      %v6975 = vld [vmem:[%s2723 + $0x28] sm:$0x1]
      %v6976 = vld [vmem:[%s2723 + $0x38] sm:$0xff]
      %v6977 = vld [vmem:[%s2723 + $0x40] sm:$0x1]
      %v6978 = vld [vmem:[%s2723 + $0x50] sm:$0xff]
      %v6979 = vld [vmem:[%s2723 + $0x58] sm:$0x1]
      %v6980 = vld [vmem:[%s2723 + $0x68] sm:$0xff]
      %v6981 = vld [vmem:[%s2723 + $0x70] sm:$0x1]
      %v6982 = vld [vmem:[%s2723 + $0x80] sm:$0xff]
      %v6983 = vld [vmem:[%s2723 + $0x88] sm:$0x1]
      %v6984 = vld [vmem:[%s2723 + $0x98] sm:$0xff]
      %v6985 = vld [vmem:[%s2723 + $0xa0] sm:$0x1]
      %v6986 = vld [vmem:[%s2723 + $0xb0] sm:$0xff]
      %v6987 = vld [vmem:[%s2723 + $0xb8] sm:$0x1]
      %v6988 = vld [vmem:[%s2723 + $0xc8] sm:$0xff]
      %v6989 = vld [vmem:[%s2723 + $0xd0] sm:$0x1]
      %v6990 = vld [vmem:[%s2723 + $0xe0] sm:$0xff]
      %v6991 = vld [vmem:[%s2723 + $0xe8] sm:$0x1]
      %v6992 = vld [vmem:[%s2723 + $0xf8] sm:$0xff]
      %v6993 = vld [vmem:[%s2723 + $0x100] sm:$0x1]
      %v6994 = vld [vmem:[%s2723 + $0x110] sm:$0xff]
      %v6995 = vld [vmem:[%s2723 + $0x118] sm:$0x1]
      %v6996 = vld [vmem:[%s2723 + $0x128] sm:$0xff]
      %v6997 = vld [vmem:[%s2723 + $0x130] sm:$0x1]
      %v6998 = vld [vmem:[%s2723 + $0x140] sm:$0xff]
      %v6999 = vld [vmem:[%s2723 + $0x148] sm:$0x1]
      %v7000 = vld [vmem:[%s2723 + $0x158] sm:$0xff]
      %v7001 = vld [vmem:[%s2723 + $0x160] sm:$0x1]
      %v7002 = vld [vmem:[%s2723 + $0x170] sm:$0xff]
      %v7003 = vld [vmem:[%s2723 + $0x178] sm:$0x1]
      %v7005 = vshrl.u32 %v6972, 16
      %v7007 = vshll.u32 %v6972, 16
      %v7009 = vrot.slane %v7007, 1
      %v7010 = vor.u32 %v7005, %v7009
      %v7012 = vshll.u32 %v6973, 16
      %v7014 = vrot.slane %v7012, 1
      %v7015 = vsel %vm1114, %v7010, %v7014
      %v7017 = vshrl.u32 %v6974, 16
      %v7019 = vshll.u32 %v6974, 16
      %v7021 = vrot.slane %v7019, 1
      %v7022 = vor.u32 %v7017, %v7021
      %v7024 = vshll.u32 %v6975, 16
      %v7026 = vrot.slane %v7024, 1
      %v7027 = vsel %vm1114, %v7022, %v7026
      %v7029 = vshrl.u32 %v6976, 16
      %v7031 = vshll.u32 %v6976, 16
      %v7033 = vrot.slane %v7031, 1
      %v7034 = vor.u32 %v7029, %v7033
      %v7036 = vshll.u32 %v6977, 16
      %v7038 = vrot.slane %v7036, 1
      %v7039 = vsel %vm1114, %v7034, %v7038
      %v7041 = vshrl.u32 %v6978, 16
      %v7043 = vshll.u32 %v6978, 16
      %v7045 = vrot.slane %v7043, 1
      %v7046 = vor.u32 %v7041, %v7045
      %v7048 = vshll.u32 %v6979, 16
      %v7050 = vrot.slane %v7048, 1
      %v7051 = vsel %vm1114, %v7046, %v7050
      %v7053 = vshrl.u32 %v6980, 16
      %v7055 = vshll.u32 %v6980, 16
      %v7057 = vrot.slane %v7055, 1
      %v7058 = vor.u32 %v7053, %v7057
      %v7060 = vshll.u32 %v6981, 16
      %v7062 = vrot.slane %v7060, 1
      %v7063 = vsel %vm1114, %v7058, %v7062
      %v7065 = vshrl.u32 %v6982, 16
      %v7067 = vshll.u32 %v6982, 16
      %v7069 = vrot.slane %v7067, 1
      %v7070 = vor.u32 %v7065, %v7069
      %v7072 = vshll.u32 %v6983, 16
      %v7074 = vrot.slane %v7072, 1
      %v7075 = vsel %vm1114, %v7070, %v7074
      %v7077 = vshrl.u32 %v6984, 16
      %v7079 = vshll.u32 %v6984, 16
      %v7081 = vrot.slane %v7079, 1
      %v7082 = vor.u32 %v7077, %v7081
      %v7084 = vshll.u32 %v6985, 16
      %v7086 = vrot.slane %v7084, 1
      %v7087 = vsel %vm1114, %v7082, %v7086
      %v7089 = vshrl.u32 %v6986, 16
      %v7091 = vshll.u32 %v6986, 16
      %v7093 = vrot.slane %v7091, 1
      %v7094 = vor.u32 %v7089, %v7093
      %v7096 = vshll.u32 %v6987, 16
      %v7098 = vrot.slane %v7096, 1
      %v7099 = vsel %vm1114, %v7094, %v7098
      %v7101 = vshrl.u32 %v6988, 16
      %v7103 = vshll.u32 %v6988, 16
      %v7105 = vrot.slane %v7103, 1
      %v7106 = vor.u32 %v7101, %v7105
      %v7108 = vshll.u32 %v6989, 16
      %v7110 = vrot.slane %v7108, 1
      %v7111 = vsel %vm1114, %v7106, %v7110
      %v7113 = vshrl.u32 %v6990, 16
      %v7115 = vshll.u32 %v6990, 16
      %v7117 = vrot.slane %v7115, 1
      %v7118 = vor.u32 %v7113, %v7117
      %v7120 = vshll.u32 %v6991, 16
      %v7122 = vrot.slane %v7120, 1
      %v7123 = vsel %vm1114, %v7118, %v7122
      %v7125 = vshrl.u32 %v6992, 16
      %v7127 = vshll.u32 %v6992, 16
      %v7129 = vrot.slane %v7127, 1
      %v7130 = vor.u32 %v7125, %v7129
      %v7132 = vshll.u32 %v6993, 16
      %v7134 = vrot.slane %v7132, 1
      %v7135 = vsel %vm1114, %v7130, %v7134
      %v7137 = vshrl.u32 %v6994, 16
      %v7139 = vshll.u32 %v6994, 16
      %v7141 = vrot.slane %v7139, 1
      %v7142 = vor.u32 %v7137, %v7141
      %v7144 = vshll.u32 %v6995, 16
      %v7146 = vrot.slane %v7144, 1
      %v7147 = vsel %vm1114, %v7142, %v7146
      %v7149 = vshrl.u32 %v6996, 16
      %v7151 = vshll.u32 %v6996, 16
      %v7153 = vrot.slane %v7151, 1
      %v7154 = vor.u32 %v7149, %v7153
      %v7156 = vshll.u32 %v6997, 16
      %v7158 = vrot.slane %v7156, 1
      %v7159 = vsel %vm1114, %v7154, %v7158
      %v7161 = vshrl.u32 %v6998, 16
      %v7163 = vshll.u32 %v6998, 16
      %v7165 = vrot.slane %v7163, 1
      %v7166 = vor.u32 %v7161, %v7165
      %v7168 = vshll.u32 %v6999, 16
      %v7170 = vrot.slane %v7168, 1
      %v7171 = vsel %vm1114, %v7166, %v7170
      %v7173 = vshrl.u32 %v7000, 16
      %v7175 = vshll.u32 %v7000, 16
      %v7177 = vrot.slane %v7175, 1
      %v7178 = vor.u32 %v7173, %v7177
      %v7180 = vshll.u32 %v7001, 16
      %v7182 = vrot.slane %v7180, 1
      %v7183 = vsel %vm1114, %v7178, %v7182
      %v7185 = vshrl.u32 %v7002, 16
      %v7187 = vshll.u32 %v7002, 16
      %v7189 = vrot.slane %v7187, 1
      %v7190 = vor.u32 %v7185, %v7189
      %v7192 = vshll.u32 %v7003, 16
      %v7194 = vrot.slane %v7192, 1
      %v7195 = vsel %vm1114, %v7190, %v7194
      %s7196 = scalar_lea.vmem %s3, 16
      %v7197 = vld [vmem:[%s7196] sm:$0x3]
      %v7199 = vsel %vm366, %v7015, 0
      %v7202 = vsel %vm366, %v7027, 0
      %v7205 = vsel %vm366, %v7039, 0
      %v7208 = vsel %vm366, %v7051, 0
      %v7211 = vsel %vm366, %v7063, 0
      %v7214 = vsel %vm366, %v7075, 0
      %v7217 = vsel %vm366, %v7087, 0
      %v7220 = vsel %vm366, %v7099, 0
      %v7223 = vsel %vm366, %v7111, 0
      %v7226 = vsel %vm366, %v7123, 0
      %v7229 = vsel %vm366, %v7135, 0
      %v7232 = vsel %vm366, %v7147, 0
      %v7235 = vsel %vm366, %v7159, 0
      %v7238 = vsel %vm366, %v7171, 0
      %v7241 = vsel %vm366, %v7183, 0
      %v7244 = vsel %vm366, %v7195, 0
      %v7247 = vsel %vm705, %v7197, 0
      %7249 = vmatprep.subr.bf16.mxu0 0
      %7250 = vmatpush1.bf16.msra.mxu0 %v7247
      %7251 = vmatprep.subr.bf16.mxu0 0
      %7252 = vmatpush1.bf16.msra.mxu0 0
      %7253 = vmatprep.subr.bf16.mxu0 0
      %7254 = vmatpush1.bf16.msra.mxu0 0
      %7255 = vmatprep.subr.bf16.mxu0 0
      %7256 = vmatpush1.bf16.msra.mxu0 0
      %7257 = vmatprep.subr.bf16.mxu0 0
      %7258 = vmatpush1.bf16.msra.mxu0 0
      %7259 = vmatprep.subr.bf16.mxu0 0
      %7260 = vmatpush1.bf16.msra.mxu0 0
      %7261 = vmatprep.subr.bf16.mxu0 0
      %7262 = vmatpush1.bf16.msra.mxu0 0
      %7263 = vmatprep.subr.bf16.mxu0 0
      %7264 = vmatpush1.bf16.msra.mxu0 0
      %7265 = vmatprep.subr.bf16.mxu0 0
      %7266 = vmatpush1.bf16.msra.mxu0 0
      %7267 = vmatprep.subr.bf16.mxu0 0
      %7268 = vmatpush1.bf16.msra.mxu0 0
      %7269 = vmatprep.subr.bf16.mxu0 0
      %7270 = vmatpush1.bf16.msra.mxu0 0
      %7271 = vmatprep.subr.bf16.mxu0 0
      %7272 = vmatpush1.bf16.msra.mxu0 0
      %7273 = vmatprep.subr.bf16.mxu0 0
      %7274 = vmatpush1.bf16.msra.mxu0 0
      %7275 = vmatprep.subr.bf16.mxu0 0
      %7276 = vmatpush1.bf16.msra.mxu0 0
      %7277 = vmatprep.subr.bf16.mxu0 0
      %7278 = vmatpush1.bf16.msra.mxu0 0
      %7279 = vmatprep.subr.bf16.mxu0 0
      %7280 = vmatpush1.bf16.msra.mxu0 0
      %7281 = vmatprep.mubr.bf16.mxu0 0
      %7282 = vmatmul.mubr.bf16.gmra.mrb[0].mxu0 %v7199
      %v7283 = vpop.f32.mrb[0].mxu0
      %v7284 = vadd.f32 0.0, %v7283
      %v7285 = vpop.f32.mrb[0].mxu0
      %v7286 = vpop.f32.mrb[0].mxu0
      %v7287 = vadd.f32 0.0, %v7286
      %v7288 = vpop.f32.mrb[0].mxu0
      %7289 = vmatprep.mubr.bf16.mxu0 0
      %7290 = vmatmul.mubr.bf16.gmra.mrb[0].mxu0 %v7202
      %v7291 = vpop.f32.mrb[0].mxu0
      %v7292 = vadd.f32 0.0, %v7291
      %v7293 = vpop.f32.mrb[0].mxu0
      %v7294 = vpop.f32.mrb[0].mxu0
      %v7295 = vadd.f32 0.0, %v7294
      %v7296 = vpop.f32.mrb[0].mxu0
      %7297 = vmatprep.mubr.bf16.mxu0 0
      %7298 = vmatmul.mubr.bf16.gmra.mrb[0].mxu0 %v7205
      %v7299 = vpop.f32.mrb[0].mxu0
      %v7300 = vadd.f32 0.0, %v7299
      %v7301 = vpop.f32.mrb[0].mxu0
      %v7302 = vpop.f32.mrb[0].mxu0
      %v7303 = vadd.f32 0.0, %v7302
      %v7304 = vpop.f32.mrb[0].mxu0
      %7305 = vmatprep.mubr.bf16.mxu0 0
      %7306 = vmatmul.mubr.bf16.gmra.mrb[0].mxu0 %v7208
      %v7307 = vpop.f32.mrb[0].mxu0
      %v7308 = vadd.f32 0.0, %v7307
      %v7309 = vpop.f32.mrb[0].mxu0
      %v7310 = vpop.f32.mrb[0].mxu0
      %v7311 = vadd.f32 0.0, %v7310
      %v7312 = vpop.f32.mrb[0].mxu0
      %7313 = vmatprep.mubr.bf16.mxu0 0
      %7314 = vmatmul.mubr.bf16.gmra.mrb[0].mxu0 %v7211
      %v7315 = vpop.f32.mrb[0].mxu0
      %v7316 = vadd.f32 0.0, %v7315
      %v7317 = vpop.f32.mrb[0].mxu0
      %v7318 = vpop.f32.mrb[0].mxu0
      %v7319 = vadd.f32 0.0, %v7318
      %v7320 = vpop.f32.mrb[0].mxu0
      %7321 = vmatprep.mubr.bf16.mxu0 0
      %7322 = vmatmul.mubr.bf16.gmra.mrb[0].mxu0 %v7214
      %v7323 = vpop.f32.mrb[0].mxu0
      %v7324 = vadd.f32 0.0, %v7323
      %v7325 = vpop.f32.mrb[0].mxu0
      %v7326 = vpop.f32.mrb[0].mxu0
      %v7327 = vadd.f32 0.0, %v7326
      %v7328 = vpop.f32.mrb[0].mxu0
      %7329 = vmatprep.mubr.bf16.mxu0 0
      %7330 = vmatmul.mubr.bf16.gmra.mrb[0].mxu0 %v7217
      %v7331 = vpop.f32.mrb[0].mxu0
      %v7332 = vadd.f32 0.0, %v7331
      %v7333 = vpop.f32.mrb[0].mxu0
      %v7334 = vpop.f32.mrb[0].mxu0
      %v7335 = vadd.f32 0.0, %v7334
      %v7336 = vpop.f32.mrb[0].mxu0
      %7337 = vmatprep.mubr.bf16.mxu0 0
      %7338 = vmatmul.mubr.bf16.gmra.mrb[0].mxu0 %v7220
      %v7339 = vpop.f32.mrb[0].mxu0
      %v7340 = vadd.f32 0.0, %v7339
      %v7341 = vpop.f32.mrb[0].mxu0
      %v7342 = vpop.f32.mrb[0].mxu0
      %v7343 = vadd.f32 0.0, %v7342
      %v7344 = vpop.f32.mrb[0].mxu0
      %7345 = vmatprep.mubr.bf16.mxu0 0
      %7346 = vmatmul.mubr.bf16.gmra.mrb[0].mxu0 %v7223
      %v7347 = vpop.f32.mrb[0].mxu0
      %v7348 = vadd.f32 0.0, %v7347
      %v7349 = vpop.f32.mrb[0].mxu0
      %v7350 = vpop.f32.mrb[0].mxu0
      %v7351 = vadd.f32 0.0, %v7350
      %v7352 = vpop.f32.mrb[0].mxu0
      %7353 = vmatprep.mubr.bf16.mxu0 0
      %7354 = vmatmul.mubr.bf16.gmra.mrb[0].mxu0 %v7226
      %v7355 = vpop.f32.mrb[0].mxu0
      %v7356 = vadd.f32 0.0, %v7355
      %v7357 = vpop.f32.mrb[0].mxu0
      %v7358 = vpop.f32.mrb[0].mxu0
      %v7359 = vadd.f32 0.0, %v7358
      %v7360 = vpop.f32.mrb[0].mxu0
      %7361 = vmatprep.mubr.bf16.mxu0 0
      %7362 = vmatmul.mubr.bf16.gmra.mrb[0].mxu0 %v7229
      %v7363 = vpop.f32.mrb[0].mxu0
      %v7364 = vadd.f32 0.0, %v7363
      %v7365 = vpop.f32.mrb[0].mxu0
      %v7366 = vpop.f32.mrb[0].mxu0
      %v7367 = vadd.f32 0.0, %v7366
      %v7368 = vpop.f32.mrb[0].mxu0
      %7369 = vmatprep.mubr.bf16.mxu0 0
      %7370 = vmatmul.mubr.bf16.gmra.mrb[0].mxu0 %v7232
      %v7371 = vpop.f32.mrb[0].mxu0
      %v7372 = vadd.f32 0.0, %v7371
      %v7373 = vpop.f32.mrb[0].mxu0
      %v7374 = vpop.f32.mrb[0].mxu0
      %v7375 = vadd.f32 0.0, %v7374
      %v7376 = vpop.f32.mrb[0].mxu0
      %7377 = vmatprep.mubr.bf16.mxu0 0
      %7378 = vmatmul.mubr.bf16.gmra.mrb[0].mxu0 %v7235
      %v7379 = vpop.f32.mrb[0].mxu0
      %v7380 = vadd.f32 0.0, %v7379
      %v7381 = vpop.f32.mrb[0].mxu0
      %v7382 = vpop.f32.mrb[0].mxu0
      %v7383 = vadd.f32 0.0, %v7382
      %v7384 = vpop.f32.mrb[0].mxu0
      %7385 = vmatprep.mubr.bf16.mxu0 0
      %7386 = vmatmul.mubr.bf16.gmra.mrb[0].mxu0 %v7238
      %v7387 = vpop.f32.mrb[0].mxu0
      %v7388 = vadd.f32 0.0, %v7387
      %v7389 = vpop.f32.mrb[0].mxu0
      %v7390 = vpop.f32.mrb[0].mxu0
      %v7391 = vadd.f32 0.0, %v7390
      %v7392 = vpop.f32.mrb[0].mxu0
      %7393 = vmatprep.mubr.bf16.mxu0 0
      %7394 = vmatmul.mubr.bf16.gmra.mrb[0].mxu0 %v7241
      %v7395 = vpop.f32.mrb[0].mxu0
      %v7396 = vadd.f32 0.0, %v7395
      %v7397 = vpop.f32.mrb[0].mxu0
      %v7398 = vpop.f32.mrb[0].mxu0
      %v7399 = vadd.f32 0.0, %v7398
      %v7400 = vpop.f32.mrb[0].mxu0
      %7401 = vmatprep.mubr.bf16.mxu0 0
      %7402 = vmatmul.mubr.bf16.gmra.mrb[0].mxu0 %v7244
      %v7403 = vpop.f32.mrb[0].mxu0
      %v7404 = vadd.f32 0.0, %v7403
      %v7405 = vpop.f32.mrb[0].mxu0
      %v7406 = vpop.f32.mrb[0].mxu0
      %v7407 = vadd.f32 0.0, %v7406
      %v7408 = vpop.f32.mrb[0].mxu0
      %7409 = vdwg.mxu0
      %v7410 = vadd.f32 %v6940, %v7284
      %v7411 = vadd.f32 %v6941, %v7287
      %v7412 = vadd.f32 %v6942, %v7292
      %v7413 = vadd.f32 %v6943, %v7295
      %v7414 = vadd.f32 %v6944, %v7300
      %v7415 = vadd.f32 %v6945, %v7303
      %v7416 = vadd.f32 %v6946, %v7308
      %v7417 = vadd.f32 %v6947, %v7311
      %v7418 = vadd.f32 %v6948, %v7316
      %v7419 = vadd.f32 %v6949, %v7319
      %v7420 = vadd.f32 %v6950, %v7324
      %v7421 = vadd.f32 %v6951, %v7327
      %v7422 = vadd.f32 %v6952, %v7332
      %v7423 = vadd.f32 %v6953, %v7335
      %v7424 = vadd.f32 %v6954, %v7340
      %v7425 = vadd.f32 %v6955, %v7343
      %v7426 = vadd.f32 %v6956, %v7348
      %v7427 = vadd.f32 %v6957, %v7351
      %v7428 = vadd.f32 %v6958, %v7356
      %v7429 = vadd.f32 %v6959, %v7359
      %v7430 = vadd.f32 %v6960, %v7364
      %v7431 = vadd.f32 %v6961, %v7367
      %v7432 = vadd.f32 %v6962, %v7372
      %v7433 = vadd.f32 %v6963, %v7375
      %v7434 = vadd.f32 %v6964, %v7380
      %v7435 = vadd.f32 %v6965, %v7383
      %v7436 = vadd.f32 %v6966, %v7388
      %v7437 = vadd.f32 %v6967, %v7391
      %v7438 = vadd.f32 %v6968, %v7396
      %v7439 = vadd.f32 %v6969, %v7399
      %v7440 = vadd.f32 %v6970, %v7404
      %v7441 = vadd.f32 %v6971, %v7407
      %v7442 = vsel %vm366, %v7410, 0.0
      %v7443 = vsel %vm366, %v7411, 0.0
      %v7444 = vadd.f32 %v7442, %v7443
      %v7445 = vsel %vm366, %v7412, 0.0
      %v7446 = vadd.f32 %v7444, %v7445
      %v7447 = vsel %vm366, %v7413, 0.0
      %v7448 = vadd.f32 %v7446, %v7447
      %v7449 = vsel %vm366, %v7414, 0.0
      %v7450 = vadd.f32 %v7448, %v7449
      %v7451 = vsel %vm366, %v7415, 0.0
      %v7452 = vadd.f32 %v7450, %v7451
      %v7453 = vsel %vm366, %v7416, 0.0
      %v7454 = vadd.f32 %v7452, %v7453
      %v7455 = vsel %vm366, %v7417, 0.0
      %v7456 = vadd.f32 %v7454, %v7455
      %v7457 = vsel %vm366, %v7418, 0.0
      %v7458 = vadd.f32 %v7456, %v7457
      %v7459 = vsel %vm366, %v7419, 0.0
      %v7460 = vadd.f32 %v7458, %v7459
      %v7461 = vsel %vm366, %v7420, 0.0
      %v7462 = vadd.f32 %v7460, %v7461
      %v7463 = vsel %vm366, %v7421, 0.0
      %v7464 = vadd.f32 %v7462, %v7463
      %v7465 = vsel %vm366, %v7422, 0.0
      %v7466 = vadd.f32 %v7464, %v7465
      %v7467 = vsel %vm366, %v7423, 0.0
      %v7468 = vadd.f32 %v7466, %v7467
      %v7469 = vsel %vm366, %v7424, 0.0
      %v7470 = vadd.f32 %v7468, %v7469
      %v7471 = vsel %vm366, %v7425, 0.0
      %v7472 = vadd.f32 %v7470, %v7471
      %v7473 = vsel %vm366, %v7426, 0.0
      %v7474 = vadd.f32 %v7472, %v7473
      %v7475 = vsel %vm366, %v7427, 0.0
      %v7476 = vadd.f32 %v7474, %v7475
      %v7477 = vsel %vm366, %v7428, 0.0
      %v7478 = vadd.f32 %v7476, %v7477
      %v7479 = vsel %vm366, %v7429, 0.0
      %v7480 = vadd.f32 %v7478, %v7479
      %v7481 = vsel %vm366, %v7430, 0.0
      %v7482 = vadd.f32 %v7480, %v7481
      %v7483 = vsel %vm366, %v7431, 0.0
      %v7484 = vadd.f32 %v7482, %v7483
      %v7485 = vsel %vm366, %v7432, 0.0
      %v7486 = vadd.f32 %v7484, %v7485
      %v7487 = vsel %vm366, %v7433, 0.0
      %v7488 = vadd.f32 %v7486, %v7487
      %v7489 = vsel %vm366, %v7434, 0.0
      %v7490 = vadd.f32 %v7488, %v7489
      %v7491 = vsel %vm366, %v7435, 0.0
      %v7492 = vadd.f32 %v7490, %v7491
      %v7493 = vsel %vm366, %v7436, 0.0
      %v7494 = vadd.f32 %v7492, %v7493
      %v7495 = vsel %vm366, %v7437, 0.0
      %v7496 = vadd.f32 %v7494, %v7495
      %v7497 = vsel %vm366, %v7438, 0.0
      %v7498 = vadd.f32 %v7496, %v7497
      %v7499 = vsel %vm366, %v7439, 0.0
      %v7500 = vadd.f32 %v7498, %v7499
      %v7501 = vsel %vm366, %v7440, 0.0
      %v7502 = vadd.f32 %v7500, %v7501
      %v7503 = vsel %vm366, %v7441, 0.0
      %v7504 = vadd.f32 %v7502, %v7503
      %v7505 = vrot.slane %v7504, 4
      %v7506 = vadd.f32 %v7504, %v7505
      %v7507 = vrot.slane %v7506, 2
      %v7508 = vadd.f32 %v7506, %v7507
      %v7509 = vrot.slane %v7508, 1
      %v7510 = vadd.f32 %v7508, %v7509
      %v7511 = vmul.f32 %v7510, 0.00390625
      %v7512 = vld [vmem:[%s4] sm:$0x1]
      %v7513 = vadd.f32 %v7511, %v7512
      %v7514 = vld [vmem:[%s5] sm:$0xf]
      %v7515 = vld [vmem:[%s6] sm:$0x1]
      %v7517 = vsel %vm366, %v7513, 0
      %vm7519 = vcmask 1043456
      %v7521 = vsel %vm7519, %v7514, 0
      %7523 = vmatprep.subr.mxu0 0.0
      %7524 = vmatpush1.msra.mxu0 %v7521
      %7525 = vmatprep.subr.mxu0 0.0
      %7526 = vmatpush1.msra.mxu0 0.0
      %7527 = vmatprep.subr.mxu0 0.0
      %7528 = vmatpush1.msra.mxu0 0.0
      %7529 = vmatprep.subr.mxu0 0.0
      %7530 = vmatpush1.msra.mxu0 0.0
      %7531 = vmatprep.subr.mxu0 0.0
      %7532 = vmatpush1.msra.mxu0 0.0
      %7533 = vmatprep.subr.mxu0 0.0
      %7534 = vmatpush1.msra.mxu0 0.0
      %7535 = vmatprep.subr.mxu0 0.0
      %7536 = vmatpush1.msra.mxu0 0.0
      %7537 = vmatprep.subr.mxu0 0.0
      %7538 = vmatpush1.msra.mxu0 0.0
      %7539 = vmatprep.subr.mxu0 0.0
      %7540 = vmatpush1.msra.mxu0 0.0
      %7541 = vmatprep.subr.mxu0 0.0
      %7542 = vmatpush1.msra.mxu0 0.0
      %7543 = vmatprep.subr.mxu0 0.0
      %7544 = vmatpush1.msra.mxu0 0.0
      %7545 = vmatprep.subr.mxu0 0.0
      %7546 = vmatpush1.msra.mxu0 0.0
      %7547 = vmatprep.subr.mxu0 0.0
      %7548 = vmatpush1.msra.mxu0 0.0
      %7549 = vmatprep.subr.mxu0 0.0
      %7550 = vmatpush1.msra.mxu0 0.0
      %7551 = vmatprep.subr.mxu0 0.0
      %7552 = vmatpush1.msra.mxu0 0.0
      %7553 = vmatprep.subr.mxu0 0.0
      %7554 = vmatpush1.msra.mxu0 0.0
      %7555 = vmatprep.subr.mxu0 0.0
      %7556 = vmatpush1.msra.mxu0 0.0
      %7557 = vmatprep.subr.mxu0 0.0
      %7558 = vmatpush1.msra.mxu0 0.0
      %7559 = vmatprep.subr.mxu0 0.0
      %7560 = vmatpush1.msra.mxu0 0.0
      %7561 = vmatprep.subr.mxu0 0.0
      %7562 = vmatpush1.msra.mxu0 0.0
      %7563 = vmatprep.subr.mxu0 0.0
      %7564 = vmatpush1.msra.mxu0 0.0
      %7565 = vmatprep.subr.mxu0 0.0
      %7566 = vmatpush1.msra.mxu0 0.0
      %7567 = vmatprep.subr.mxu0 0.0
      %7568 = vmatpush1.msra.mxu0 0.0
      %7569 = vmatprep.subr.mxu0 0.0
      %7570 = vmatpush1.msra.mxu0 0.0
      %7571 = vmatprep.subr.mxu0 0.0
      %7572 = vmatpush1.msra.mxu0 0.0
      %7573 = vmatprep.subr.mxu0 0.0
      %7574 = vmatpush1.msra.mxu0 0.0
      %7575 = vmatprep.subr.mxu0 0.0
      %7576 = vmatpush1.msra.mxu0 0.0
      %7577 = vmatprep.subr.mxu0 0.0
      %7578 = vmatpush1.msra.mxu0 0.0
      %7579 = vmatprep.subr.mxu0 0.0
      %7580 = vmatpush1.msra.mxu0 0.0
      %7581 = vmatprep.subr.mxu0 0.0
      %7582 = vmatpush1.msra.mxu0 0.0
      %7583 = vmatprep.subr.mxu0 0.0
      %7584 = vmatpush1.msra.mxu0 0.0
      %7585 = vmatprep.subr.mxu0 0.0
      %7586 = vmatpush1.msra.mxu0 0.0
      %7587 = vmatprep.mubr.f32.mxu0 0.0
      %7588 = vmatmul.mubr.f32.gmra.mrb[0].mxu0 %v7517
      %v7589 = vpop.f32.mrb[0].mxu0
      %v7590 = vadd.f32 %v7515, %v7589
      %v7591 = vpop.f32.mrb[0].mxu0
      %7592 = vdwg.mxu0
      %v7593 = vmax.f32 %v7590, 0.0
      %v7594 = vld [vmem:[%s7] sm:$0x3]
      %v7595 = vld [vmem:[%s8] sm:$0x1]
      %vm7596 = vcmask 15360
      %v7598 = vsel %vm7596, %v7593, 0
      %v7601 = vsel %vm705, %v7594, 0
      %7603 = vmatprep.subr.mxu0 0.0
      %7604 = vmatpush1.msra.mxu0 %v7601
      %7605 = vmatprep.subr.mxu0 0.0
      %7606 = vmatpush1.msra.mxu0 0.0
      %7607 = vmatprep.subr.mxu0 0.0
      %7608 = vmatpush1.msra.mxu0 0.0
      %7609 = vmatprep.subr.mxu0 0.0
      %7610 = vmatpush1.msra.mxu0 0.0
      %7611 = vmatprep.subr.mxu0 0.0
      %7612 = vmatpush1.msra.mxu0 0.0
      %7613 = vmatprep.subr.mxu0 0.0
      %7614 = vmatpush1.msra.mxu0 0.0
      %7615 = vmatprep.subr.mxu0 0.0
      %7616 = vmatpush1.msra.mxu0 0.0
      %7617 = vmatprep.subr.mxu0 0.0
      %7618 = vmatpush1.msra.mxu0 0.0
      %7619 = vmatprep.subr.mxu0 0.0
      %7620 = vmatpush1.msra.mxu0 0.0
      %7621 = vmatprep.subr.mxu0 0.0
      %7622 = vmatpush1.msra.mxu0 0.0
      %7623 = vmatprep.subr.mxu0 0.0
      %7624 = vmatpush1.msra.mxu0 0.0
      %7625 = vmatprep.subr.mxu0 0.0
      %7626 = vmatpush1.msra.mxu0 0.0
      %7627 = vmatprep.subr.mxu0 0.0
      %7628 = vmatpush1.msra.mxu0 0.0
      %7629 = vmatprep.subr.mxu0 0.0
      %7630 = vmatpush1.msra.mxu0 0.0
      %7631 = vmatprep.subr.mxu0 0.0
      %7632 = vmatpush1.msra.mxu0 0.0
      %7633 = vmatprep.subr.mxu0 0.0
      %7634 = vmatpush1.msra.mxu0 0.0
      %7635 = vmatprep.subr.mxu0 0.0
      %7636 = vmatpush1.msra.mxu0 0.0
      %7637 = vmatprep.subr.mxu0 0.0
      %7638 = vmatpush1.msra.mxu0 0.0
      %7639 = vmatprep.subr.mxu0 0.0
      %7640 = vmatpush1.msra.mxu0 0.0
      %7641 = vmatprep.subr.mxu0 0.0
      %7642 = vmatpush1.msra.mxu0 0.0
      %7643 = vmatprep.subr.mxu0 0.0
      %7644 = vmatpush1.msra.mxu0 0.0
      %7645 = vmatprep.subr.mxu0 0.0
      %7646 = vmatpush1.msra.mxu0 0.0
      %7647 = vmatprep.subr.mxu0 0.0
      %7648 = vmatpush1.msra.mxu0 0.0
      %7649 = vmatprep.subr.mxu0 0.0
      %7650 = vmatpush1.msra.mxu0 0.0
      %7651 = vmatprep.subr.mxu0 0.0
      %7652 = vmatpush1.msra.mxu0 0.0
      %7653 = vmatprep.subr.mxu0 0.0
      %7654 = vmatpush1.msra.mxu0 0.0
      %7655 = vmatprep.subr.mxu0 0.0
      %7656 = vmatpush1.msra.mxu0 0.0
      %7657 = vmatprep.subr.mxu0 0.0
      %7658 = vmatpush1.msra.mxu0 0.0
      %7659 = vmatprep.subr.mxu0 0.0
      %7660 = vmatpush1.msra.mxu0 0.0
      %7661 = vmatprep.subr.mxu0 0.0
      %7662 = vmatpush1.msra.mxu0 0.0
      %7663 = vmatprep.subr.mxu0 0.0
      %7664 = vmatpush1.msra.mxu0 0.0
      %7665 = vmatprep.subr.mxu0 0.0
      %7666 = vmatpush1.msra.mxu0 0.0
      %7667 = vmatprep.mubr.f32.mxu0 0.0
      %7668 = vmatmul.mubr.f32.gmra.mrb[0].mxu0 %v7598
      %v7669 = vpop.f32.mrb[0].mxu0
      %v7670 = vadd.f32 %v7595, %v7669
      %v7671 = vpop.f32.mrb[0].mxu0
      %7672 = vdwg.mxu0
      %v7673 = vsub.f32 0.0, %v7670
      %v7674 = vmul.f32 %v7673, 1.442695
      %v7675 = vpow.pop %v7674
      %v7676 = vadd.f32 %v7675, 1.0
      %v7677 = vrcp.pop %v7676
      %v7678 = vmul.f32 1.0, %v7677
      %v7679 = vmul.f32 %v7678, %v7513
      %v7680 = vlaneseq
      %v7681 = vshrl.u32 %v7680, 7
      %v7682 = vsub.s32 0, %v7681
      %v7683 = vrot.slane %v7679, %v7682
      %v7684 = vadd.f32 %v334, %v7683
      %v7685 = vadd.f32 %v335, %v7683
      %v7686 = vadd.f32 %v336, %v7683
      %v7687 = vadd.f32 %v337, %v7683
      %v7688 = vadd.f32 %v338, %v7683
      %v7689 = vadd.f32 %v339, %v7683
      %v7690 = vadd.f32 %v340, %v7683
      %v7691 = vadd.f32 %v341, %v7683
      %v7692 = vadd.f32 %v342, %v7683
      %v7693 = vadd.f32 %v343, %v7683
      %v7694 = vadd.f32 %v344, %v7683
      %v7695 = vadd.f32 %v345, %v7683
      %v7696 = vadd.f32 %v346, %v7683
      %v7697 = vadd.f32 %v347, %v7683
      %v7698 = vadd.f32 %v348, %v7683
      %v7699 = vadd.f32 %v349, %v7683
      %v7700 = vadd.f32 %v350, %v7683
      %v7701 = vadd.f32 %v351, %v7683
      %v7702 = vadd.f32 %v352, %v7683
      %v7703 = vadd.f32 %v353, %v7683
      %v7704 = vadd.f32 %v354, %v7683
      %v7705 = vadd.f32 %v355, %v7683
      %v7706 = vadd.f32 %v356, %v7683
      %v7707 = vadd.f32 %v357, %v7683
      %v7708 = vadd.f32 %v358, %v7683
      %v7709 = vadd.f32 %v359, %v7683
      %v7710 = vadd.f32 %v360, %v7683
      %v7711 = vadd.f32 %v361, %v7683
      %v7712 = vadd.f32 %v362, %v7683
      %v7713 = vadd.f32 %v363, %v7683
      %v7714 = vadd.f32 %v364, %v7683
      %v7715 = vadd.f32 %v365, %v7683
      %7716 = vst.msk [vmem:[%s332] sm:$0xff] %vm366, %v7684
      %7717 = vst.msk [vmem:[%s332 + $0x8] sm:$0xff] %vm366, %v7685
      %7718 = vst.msk [vmem:[%s332 + $0x10] sm:$0xff] %vm366, %v7686
      %7719 = vst.msk [vmem:[%s332 + $0x18] sm:$0xff] %vm366, %v7687
      %7720 = vst.msk [vmem:[%s332 + $0x20] sm:$0xff] %vm366, %v7688
      %7721 = vst.msk [vmem:[%s332 + $0x28] sm:$0xff] %vm366, %v7689
      %7722 = vst.msk [vmem:[%s332 + $0x30] sm:$0xff] %vm366, %v7690
      %7723 = vst.msk [vmem:[%s332 + $0x38] sm:$0xff] %vm366, %v7691
      %7724 = vst.msk [vmem:[%s332 + $0x40] sm:$0xff] %vm366, %v7692
      %7725 = vst.msk [vmem:[%s332 + $0x48] sm:$0xff] %vm366, %v7693
      %7726 = vst.msk [vmem:[%s332 + $0x50] sm:$0xff] %vm366, %v7694
      %7727 = vst.msk [vmem:[%s332 + $0x58] sm:$0xff] %vm366, %v7695
      %7728 = vst.msk [vmem:[%s332 + $0x60] sm:$0xff] %vm366, %v7696
      %7729 = vst.msk [vmem:[%s332 + $0x68] sm:$0xff] %vm366, %v7697
      %7730 = vst.msk [vmem:[%s332 + $0x70] sm:$0xff] %vm366, %v7698
      %7731 = vst.msk [vmem:[%s332 + $0x78] sm:$0xff] %vm366, %v7699
      %7732 = vst.msk [vmem:[%s332 + $0x80] sm:$0xff] %vm366, %v7700
      %7733 = vst.msk [vmem:[%s332 + $0x88] sm:$0xff] %vm366, %v7701
      %7734 = vst.msk [vmem:[%s332 + $0x90] sm:$0xff] %vm366, %v7702
      %7735 = vst.msk [vmem:[%s332 + $0x98] sm:$0xff] %vm366, %v7703
      %7736 = vst.msk [vmem:[%s332 + $0xa0] sm:$0xff] %vm366, %v7704
      %7737 = vst.msk [vmem:[%s332 + $0xa8] sm:$0xff] %vm366, %v7705
      %7738 = vst.msk [vmem:[%s332 + $0xb0] sm:$0xff] %vm366, %v7706
      %7739 = vst.msk [vmem:[%s332 + $0xb8] sm:$0xff] %vm366, %v7707
      %7740 = vst.msk [vmem:[%s332 + $0xc0] sm:$0xff] %vm366, %v7708
      %7741 = vst.msk [vmem:[%s332 + $0xc8] sm:$0xff] %vm366, %v7709
      %7742 = vst.msk [vmem:[%s332 + $0xd0] sm:$0xff] %vm366, %v7710
      %7743 = vst.msk [vmem:[%s332 + $0xd8] sm:$0xff] %vm366, %v7711
      %7744 = vst.msk [vmem:[%s332 + $0xe0] sm:$0xff] %vm366, %v7712
      %7745 = vst.msk [vmem:[%s332 + $0xe8] sm:$0xff] %vm366, %v7713
      %7746 = vst.msk [vmem:[%s332 + $0xf0] sm:$0xff] %vm366, %v7714
      %7747 = vst.msk [vmem:[%s332 + $0xf8] sm:$0xff] %vm366, %v7715
      %p7748 = scmp.lt.s32.totalorder %s20, 1
      %s7749 = scalar_select %p7748, %s20, 1
      %s7750 = smul.addr %s7749, 32
      %s7751 = smul.addr %s7750, 8
      %s7752 = scalar_lea.vmem %s9, %s7751
      // Predicated region
      $region57: #{tpu_custom_call.1} parent=55 // pred_check
        %p7753 = pneg %p232
      $region58: #{tpu_custom_call.1} parent=55 // pred_check_branch
        %7755 = sbr.rel (%p7753) target = $region60
      $region59: #{tpu_custom_call.1} parent=55 // pred_region
        _
      $region60: #{tpu_custom_call.1} parent=55 // pred_fallthru
        _
    $region56: #{tpu_custom_call.1} parent=5 // pred_fallthru
      _
    %p7756 = scmp.le.s32.totalorder 2, %s15
    // Predicated region
    $region61: #{tpu_custom_call.1} parent=5 // pred_check
      %p7757 = pneg %p7756
    $region62: #{tpu_custom_call.1} parent=5 // pred_check_branch
      %7759 = sbr.rel (%p7757) target = $region64
    $region63: #{tpu_custom_call.1} parent=5 // pred_region
      %s7760 = ssub.s32 %s15, 2
      // Predicated region
      $region65: #{tpu_custom_call.1} parent=63 // pred_check
        %p7761 = pneg %p238
      $region66: #{tpu_custom_call.1} parent=63 // pred_check_branch
        %7763 = sbr.rel (%p7761) target = $region68
      $region67: #{tpu_custom_call.1} parent=63 // pred_region
        %p7764 = scmp.lt.s32.totalorder %s21, 1
        %s7765 = scalar_select %p7764, %s21, 1
        %s7766 = smul.addr %s7765, 32
        %s7767 = smul.addr %s7766, 8
        %s7768 = scalar_lea.vmem %s9, %s7767
      $region68: #{tpu_custom_call.1} parent=63 // pred_fallthru
        _
    $region64: #{tpu_custom_call.1} parent=5 // pred_fallthru
      _
  $region6: #{tpu_custom_call.1} parent=0 // loop_footer
    %s19 = sadd.s32 1, %s15
  $region7: #{tpu_custom_call.1} parent=0 // loop_footer_branch
    %14 = sbr.rel target = $region3
  $region8: #{tpu_custom_call.1} parent=0 // loop_exit
    _

</llo_original>
